<compile_context>
chip_gen: v7x
topology: tpu7x:2x2x1
jax: 0.10.0
libtpu: 0.0.40
codegen_flags: <defaults>
</compile_context>

<pallas_src>
import functools

import jax
import jax.numpy as jnp
from jax.experimental import pallas as pl
from jax.experimental.pallas import tpu as pltpu

NEG_SLOPE = 0.2
BN_EPS = 1e-5
K = 3  # kernel size
VMEM_LIMIT = 48 * 1024 * 1024  # <= v7x's 64 MiB physical VMEM

# (Ci, Co, stride) per layer — static Python.
LAYER_DEFS = (
    (3, 3, 1), (3, 3, 1), (3, 3, 1),
    (3, 8, 2), (8, 16, 2), (16, 32, 2),
)


# --------------------------------------------------------------------------
# Parameter glue (pure JAX)
# --------------------------------------------------------------------------
def _pack_w_taps(w):
    """(Co, Ci, 3, 3) -> (9, Co, Ci) bf16, tap index t = dh*3 + dw."""
    co, ci = w.shape[0], w.shape[1]
    return jnp.transpose(w, (2, 3, 0, 1)).reshape(9, co, ci).astype(jnp.bfloat16)


def _fold_scale_bias(p):
    """Fold conv bias + eval-mode BatchNorm into per-channel (scale, bias)."""
    w, b, gamma, beta, mean, var = p
    scale = gamma / jnp.sqrt(var + BN_EPS)
    bias = (b - mean) * scale + beta
    return jnp.stack([scale, bias], axis=1).astype(jnp.float32)  # (Co, 2)


# --------------------------------------------------------------------------
# Kernel A: fused stride-1 stack (3 x [conv3x3 s1 p1 + BN + LeakyReLU])
# --------------------------------------------------------------------------
def _s1_stack_kernel(x_ref, w_ref, sb_ref, mask_ref, out_ref, pact_ref, *, hh, ww):
    """One image per grid step.

    x_ref   : (3, Hp*Wp)  bf16, zero-padded input, rows flattened (pitch Wp)
    w_ref   : (3, 9, 3, 3) bf16, [layer, tap(dh*3+dw), co, ci]
    sb_ref  : (3, 3, 2)    f32,  [layer, co, {scale, bias}]
    mask_ref: (1, L)       f32,  1.0 on valid columns, 0.0 on the 2 wrap cols
    out_ref : (3, Hp*Wp)   bf16, zero-padded output of layer 3
    pact_ref: (3, Hp*Wp)   bf16 VMEM scratch (padded inter-layer activation)
    """
    wp = ww + 2
    L = (hh - 1) * wp + ww      # flat output window length
    lo = wp + 1                 # interior start offset in the padded flat slab
    mask = mask_ref[...]

    pact_ref[...] = jnp.zeros_like(pact_ref)
    a = x_ref[...]                                   # (3, Hp*Wp)
    for l in range(3):
        acc = jnp.zeros((3, L), jnp.float32)
        for dh in range(K):
            for dw in range(K):
                off = dh * wp + dw
                tap = a[:, off:off + L]              # (3, L) unit-stride window
                acc = acc + jnp.dot(w_ref[l, dh * K + dw], tap,
                                    preferred_element_type=jnp.float32)
        sb = sb_ref[l]                               # (3, 2)
        y = acc * sb[:, 0:1] + sb[:, 1:2]            # folded BN affine
        y = jnp.where(y > 0, y, NEG_SLOPE * y)       # LeakyReLU(0.2)
        y = (y * mask).astype(pact_ref.dtype)        # zero the wrap columns
        pact_ref[:, lo:lo + L] = y                   # write padded interior
        if l < 2:
            a = pact_ref[...]                        # padded input of next layer
    out_ref[...] = pact_ref[...]


def _fused_stride1_stack(x_nchw, params3):
    """x: (N, 3, H, W) f32 -> (N, 3, H, W) bf16 after 3 fused layers."""
    n, c, h, w = x_nchw.shape
    hp, wp = h + 2, w + 2
    L = (h - 1) * wp + w

    xa = jnp.pad(x_nchw.astype(jnp.bfloat16), ((0, 0), (0, 0), (1, 1), (1, 1)))
    xa = xa.reshape(n, c, hp * wp)

    w_all = jnp.stack([_pack_w_taps(p[0]) for p in params3], axis=0)    # (3,9,3,3)
    sb_all = jnp.stack([_fold_scale_bias(p) for p in params3], axis=0)  # (3,3,2)
    mask = ((jnp.arange(L) % wp) < w).astype(jnp.float32).reshape(1, L)

    out = pl.pallas_call(
        functools.partial(_s1_stack_kernel, hh=h, ww=w),
        out_shape=jax.ShapeDtypeStruct((n, c, hp * wp), jnp.bfloat16),
        grid=(n,),
        in_specs=[
            pl.BlockSpec((None, c, hp * wp), lambda i: (i, 0, 0)),
            pl.BlockSpec((3, 9, 3, 3), lambda i: (0, 0, 0, 0)),  # VMEM-resident
            pl.BlockSpec((3, 3, 2), lambda i: (0, 0, 0)),
            pl.BlockSpec((1, L), lambda i: (0, 0)),
        ],
        out_specs=pl.BlockSpec((None, c, hp * wp), lambda i: (i, 0, 0)),
        scratch_shapes=[pltpu.VMEM((c, hp * wp), jnp.bfloat16)],
        compiler_params=pltpu.CompilerParams(
            dimension_semantics=("parallel",),
            vmem_limit_bytes=VMEM_LIMIT,
        ),
    )(xa, w_all, sb_all, mask)

    # padded flat -> unpadded NCHW (still bf16)
    return out.reshape(n, c, hp, wp)[:, :, 1:1 + h, 1:1 + w]


# --------------------------------------------------------------------------
# Kernel B: one stride-2 conv3x3 p1 + BN + LeakyReLU layer
# (input pre-split into 4 spatial phases so all in-kernel taps are unit-stride)
# --------------------------------------------------------------------------
def _s2_layer_kernel(xf_ref, w_ref, sb_ref, out_ref, *, wh):
    """One image per grid step.

    xf_ref : (4*Ci, (Hh+1)*Wh) bf16 — phase planes of the padded input,
             phase-major (p = ph*2+pw), rows flattened with pitch Wh,
             plus one extra zero row so all windows stay in bounds.
    w_ref  : (9, Co, Ci) bf16, tap index t = dh*3 + dw
    sb_ref : (Co, 2) f32
    out_ref: (Co, Ho*Wh) bf16 (one junk column per row, dropped in XLA glue)
    """
    ci = w_ref.shape[2]
    co = w_ref.shape[1]
    mout = out_ref.shape[-1]

    xf = xf_ref[...]
    acc = jnp.zeros((co, mout), jnp.float32)
    for dh in range(K):
        sh_h, ph = dh // 2, dh % 2
        for dw in range(K):
            sh_w, pw = dw // 2, dw % 2
            r0 = (ph * 2 + pw) * ci
            off = sh_h * wh + sh_w
            tap = xf[r0:r0 + ci, off:off + mout]     # (Ci, Ho*Wh) unit stride
            acc = acc + jnp.dot(w_ref[dh * K + dw], tap,
                                preferred_element_type=jnp.float32)
    sb = sb_ref[...]
    y = acc * sb[:, 0:1] + sb[:, 1:2]
    y = jnp.where(y > 0, y, NEG_SLOPE * y)
    out_ref[...] = y.astype(out_ref.dtype)


def _stride2_layer(x, p):
    """x: (N, Ci, Hi, Wi) bf16 -> (N, Co, Hi/2, Wi/2) bf16."""
    n, ci, hi, wi = x.shape
    co = p[0].shape[0]
    ho, wo = hi // 2, wi // 2
    hh, wh = (hi + 2) // 2, (wi + 2) // 2
    mout = ho * wh
    lin = (hh + 1) * wh

    # XLA glue: zero-pad, split into the 4 (ph, pw) spatial phases, add one
    # extra zero row, flatten rows.  This is the only HBM copy per layer.
    xp = jnp.pad(x, ((0, 0), (0, 0), (1, 1), (1, 1)))
    phases = [xp[:, :, ph::2, pw::2] for ph in range(2) for pw in range(2)]
    xs = jnp.concatenate(phases, axis=1)                 # (N, 4Ci, Hh, Wh)
    xs = jnp.pad(xs, ((0, 0), (0, 0), (0, 1), (0, 0)))   # (N, 4Ci, Hh+1, Wh)
    xs = xs.reshape(n, 4 * ci, lin)

    w_t = _pack_w_taps(p[0])          # (9, Co, Ci)
    sb = _fold_scale_bias(p)          # (Co, 2)

    out = pl.pallas_call(
        functools.partial(_s2_layer_kernel, wh=wh),
        out_shape=jax.ShapeDtypeStruct((n, co, mout), jnp.bfloat16),
        grid=(n,),
        in_specs=[
            pl.BlockSpec((None, 4 * ci, lin), lambda i: (i, 0, 0)),
            pl.BlockSpec((9, co, ci), lambda i: (0, 0, 0)),   # VMEM-resident
            pl.BlockSpec((co, 2), lambda i: (0, 0)),
        ],
        out_specs=pl.BlockSpec((None, co, mout), lambda i: (i, 0, 0)),
        compiler_params=pltpu.CompilerParams(
            dimension_semantics=("parallel",),
            vmem_limit_bytes=VMEM_LIMIT,
        ),
    )(xs, w_t, sb)

    # drop the per-row junk column, back to NCHW
    return out.reshape(n, co, ho, wh)[:, :, :, :wo]


# --------------------------------------------------------------------------
# Full forward pass
# --------------------------------------------------------------------------
def self_embedding_block(x_nchw, params):
    """x: (N, 3, H, W) f32 NCHW -> (N, 32, H/8, W/8) f32."""
    n, c, h, w = x_nchw.shape
    assert c == 3, "Self_embedding_block expects 3 input channels"
    assert h % 8 == 0 and w % 8 == 0, (
        "H and W must be divisible by 8 (three stride-2 stages)")
    x = _fused_stride1_stack(x_nchw, params[:3])      # (N, 3, H, W) bf16
    for li in range(3, 6):
        x = _stride2_layer(x, params[li])             # Dropout2d (eval) = identity
    return x.astype(jnp.float32)                      # tiny final cast outside kernel


# --------------------------------------------------------------------------
# Deterministic parameter init matching the module's shapes
# (conv biases zeroed as in _init_weights; BN params at PyTorch defaults).
# --------------------------------------------------------------------------
def init_params(key):
    params = []
    for ci, co, _stride in LAYER_DEFS:
        key, kw = jax.random.split(key)
        fan_in = ci * K * K
        bound = 1.0 / jnp.sqrt(float(fan_in))
        w = jax.random.uniform(kw, (co, ci, K, K), jnp.float32, -bound, bound)
        b = jnp.zeros((co,), jnp.float32)
        gamma = jnp.ones((co,), jnp.float32)
        beta = jnp.zeros((co,), jnp.float32)
        mean = jnp.zeros((co,), jnp.float32)
        var = jnp.ones((co,), jnp.float32)
        params.append((w, b, gamma, beta, mean, var))
    return params


if __name__ == "__main__":
    key = jax.random.PRNGKey(0)
    key, kx = jax.random.split(key)

    # NCHW input, same as the PyTorch module: (N, 3, H, W).
    x = jax.random.normal(kx, (2, 3, 16, 16), jnp.float32)
    params = init_params(key)

    fwd = jax.jit(self_embedding_block)
    out = jax.block_until_ready(fwd(x, params))

    assert out.shape == (2, 32, 2, 2), out.shape
    assert out.dtype == jnp.float32, out.dtype
    assert bool(jnp.all(jnp.isfinite(out)))
    print("KERNEL_OK")
</pallas_src>

<mosaic_0001>
module attributes {stable_mosaic.version = 11 : i64} {
  func.func @_s1_stack_kernel(%arg0: i32, %arg1: memref<1x3x324xbf16, #tpu.memory_space<vmem>>, %arg2: memref<3x9x3x3xbf16, #tpu.memory_space<vmem>>, %arg3: memref<3x3x2xf32, #tpu.memory_space<vmem>>, %arg4: memref<1x286xf32, #tpu.memory_space<vmem>>, %arg5: memref<1x3x324xbf16, #tpu.memory_space<vmem>>, %arg6: memref<3x324xbf16, #tpu.memory_space<vmem>>) attributes {dimension_semantics = [#tpu.dimension_semantics<parallel>], iteration_bounds = array<i64: 2>, scalar_prefetch = 0 : i64, scratch_operands = 1 : i64, tpu.core_type = #tpu.core_type<tc>, window_params = [{transform_indices = @transform_0, window_bounds = array<i64: 1, 3, 324>}, {pipeline_mode = #tpu.pipeline_mode<synchronous>, transform_indices = @transform_1, window_bounds = array<i64: 3, 9, 3, 3>}, {pipeline_mode = #tpu.pipeline_mode<synchronous>, transform_indices = @transform_2, window_bounds = array<i64: 3, 3, 2>}, {pipeline_mode = #tpu.pipeline_mode<synchronous>, transform_indices = @transform_3, window_bounds = array<i64: 1, 286>}, {transform_indices = @transform_4, window_bounds = array<i64: 1, 3, 324>}]} {
    %c0 = arith.constant 0 : index
    %c0_0 = arith.constant 0 : index
    %0 = vector.load %arg4[%c0, %c0_0] : memref<1x286xf32, #tpu.memory_space<vmem>>, vector<1x286xf32>
    %cst = arith.constant 0.000000e+00 : bf16
    %1 = vector.broadcast %cst : bf16 to vector<3x324xbf16>
    %c0_1 = arith.constant 0 : index
    %c0_2 = arith.constant 0 : index
    %2 = vector.load %arg6[%c0_1, %c0_2] : memref<3x324xbf16, #tpu.memory_space<vmem>>, vector<3x324xbf16>
    tpu.vector_store %arg6[%c0_1, %c0_2], %1 {strides = array<i32>} : memref<3x324xbf16, #tpu.memory_space<vmem>>, vector<3x324xbf16>,
    %c0_3 = arith.constant 0 : index
    %c0_4 = arith.constant 0 : index
    %c0_5 = arith.constant 0 : index
    %3 = vector.load %arg1[%c0_3, %c0_4, %c0_5] : memref<1x3x324xbf16, #tpu.memory_space<vmem>>, vector<1x3x324xbf16>
    %4 = vector.shape_cast %3 : vector<1x3x324xbf16> to vector<3x324xbf16>
    %cst_6 = arith.constant 0.000000e+00 : f32
    %5 = vector.broadcast %cst_6 : f32 to vector<3x286xf32>
    %6 = vector.extract_strided_slice %4 {offsets = [0, 0], sizes = [3, 286], strides = [1, 1]} : vector<3x324xbf16> to vector<3x286xbf16>
    %c0_7 = arith.constant 0 : index
    %c0_8 = arith.constant 0 : index
    %c0_9 = arith.constant 0 : index
    %c0_10 = arith.constant 0 : index
    %7 = vector.load %arg2[%c0_7, %c0_8, %c0_9, %c0_10] : memref<3x9x3x3xbf16, #tpu.memory_space<vmem>>, vector<1x1x3x3xbf16>
    %8 = vector.shape_cast %7 : vector<1x1x3x3xbf16> to vector<3x3xbf16>
    %cst_11 = arith.constant dense<0.000000e+00> : vector<3x286xf32>
    %9 = tpu.matmul %8, %6, %cst_11 {dimension_numbers = #tpu.dot_dimension_numbers<[1], [0], [0], [1], [0, 0, 1, 1], [], []>} : vector<3x3xbf16>, vector<3x286xbf16>, vector<3x286xf32> -> vector<3x286xf32>
    %10 = arith.addf %5, %9 : vector<3x286xf32>
    %11 = vector.extract_strided_slice %4 {offsets = [0, 1], sizes = [3, 286], strides = [1, 1]} : vector<3x324xbf16> to vector<3x286xbf16>
    %c0_12 = arith.constant 0 : index
    %c1 = arith.constant 1 : index
    %c0_13 = arith.constant 0 : index
    %c0_14 = arith.constant 0 : index
    %12 = vector.load %arg2[%c0_12, %c1, %c0_13, %c0_14] : memref<3x9x3x3xbf16, #tpu.memory_space<vmem>>, vector<1x1x3x3xbf16>
    %13 = vector.shape_cast %12 : vector<1x1x3x3xbf16> to vector<3x3xbf16>
    %cst_15 = arith.constant dense<0.000000e+00> : vector<3x286xf32>
    %14 = tpu.matmul %13, %11, %cst_15 {dimension_numbers = #tpu.dot_dimension_numbers<[1], [0], [0], [1], [0, 0, 1, 1], [], []>} : vector<3x3xbf16>, vector<3x286xbf16>, vector<3x286xf32> -> vector<3x286xf32>
    %15 = arith.addf %10, %14 : vector<3x286xf32>
    %16 = vector.extract_strided_slice %4 {offsets = [0, 2], sizes = [3, 286], strides = [1, 1]} : vector<3x324xbf16> to vector<3x286xbf16>
    %c0_16 = arith.constant 0 : index
    %c2 = arith.constant 2 : index
    %c0_17 = arith.constant 0 : index
    %c0_18 = arith.constant 0 : index
    %17 = vector.load %arg2[%c0_16, %c2, %c0_17, %c0_18] : memref<3x9x3x3xbf16, #tpu.memory_space<vmem>>, vector<1x1x3x3xbf16>
    %18 = vector.shape_cast %17 : vector<1x1x3x3xbf16> to vector<3x3xbf16>
    %cst_19 = arith.constant dense<0.000000e+00> : vector<3x286xf32>
    %19 = tpu.matmul %18, %16, %cst_19 {dimension_numbers = #tpu.dot_dimension_numbers<[1], [0], [0], [1], [0, 0, 1, 1], [], []>} : vector<3x3xbf16>, vector<3x286xbf16>, vector<3x286xf32> -> vector<3x286xf32>
    %20 = arith.addf %15, %19 : vector<3x286xf32>
    %21 = vector.extract_strided_slice %4 {offsets = [0, 18], sizes = [3, 286], strides = [1, 1]} : vector<3x324xbf16> to vector<3x286xbf16>
    %c0_20 = arith.constant 0 : index
    %c3 = arith.constant 3 : index
    %c0_21 = arith.constant 0 : index
    %c0_22 = arith.constant 0 : index
    %22 = vector.load %arg2[%c0_20, %c3, %c0_21, %c0_22] : memref<3x9x3x3xbf16, #tpu.memory_space<vmem>>, vector<1x1x3x3xbf16>
    %23 = vector.shape_cast %22 : vector<1x1x3x3xbf16> to vector<3x3xbf16>
    %cst_23 = arith.constant dense<0.000000e+00> : vector<3x286xf32>
    %24 = tpu.matmul %23, %21, %cst_23 {dimension_numbers = #tpu.dot_dimension_numbers<[1], [0], [0], [1], [0, 0, 1, 1], [], []>} : vector<3x3xbf16>, vector<3x286xbf16>, vector<3x286xf32> -> vector<3x286xf32>
    %25 = arith.addf %20, %24 : vector<3x286xf32>
    %26 = vector.extract_strided_slice %4 {offsets = [0, 19], sizes = [3, 286], strides = [1, 1]} : vector<3x324xbf16> to vector<3x286xbf16>
    %c0_24 = arith.constant 0 : index
    %c4 = arith.constant 4 : index
    %c0_25 = arith.constant 0 : index
    %c0_26 = arith.constant 0 : index
    %27 = vector.load %arg2[%c0_24, %c4, %c0_25, %c0_26] : memref<3x9x3x3xbf16, #tpu.memory_space<vmem>>, vector<1x1x3x3xbf16>
    %28 = vector.shape_cast %27 : vector<1x1x3x3xbf16> to vector<3x3xbf16>
    %cst_27 = arith.constant dense<0.000000e+00> : vector<3x286xf32>
    %29 = tpu.matmul %28, %26, %cst_27 {dimension_numbers = #tpu.dot_dimension_numbers<[1], [0], [0], [1], [0, 0, 1, 1], [], []>} : vector<3x3xbf16>, vector<3x286xbf16>, vector<3x286xf32> -> vector<3x286xf32>
    %30 = arith.addf %25, %29 : vector<3x286xf32>
    %31 = vector.extract_strided_slice %4 {offsets = [0, 20], sizes = [3, 286], strides = [1, 1]} : vector<3x324xbf16> to vector<3x286xbf16>
    %c0_28 = arith.constant 0 : index
    %c5 = arith.constant 5 : index
    %c0_29 = arith.constant 0 : index
    %c0_30 = arith.constant 0 : index
    %32 = vector.load %arg2[%c0_28, %c5, %c0_29, %c0_30] : memref<3x9x3x3xbf16, #tpu.memory_space<vmem>>, vector<1x1x3x3xbf16>
    %33 = vector.shape_cast %32 : vector<1x1x3x3xbf16> to vector<3x3xbf16>
    %cst_31 = arith.constant dense<0.000000e+00> : vector<3x286xf32>
    %34 = tpu.matmul %33, %31, %cst_31 {dimension_numbers = #tpu.dot_dimension_numbers<[1], [0], [0], [1], [0, 0, 1, 1], [], []>} : vector<3x3xbf16>, vector<3x286xbf16>, vector<3x286xf32> -> vector<3x286xf32>
    %35 = arith.addf %30, %34 : vector<3x286xf32>
    %36 = vector.extract_strided_slice %4 {offsets = [0, 36], sizes = [3, 286], strides = [1, 1]} : vector<3x324xbf16> to vector<3x286xbf16>
    %c0_32 = arith.constant 0 : index
    %c6 = arith.constant 6 : index
    %c0_33 = arith.constant 0 : index
    %c0_34 = arith.constant 0 : index
    %37 = vector.load %arg2[%c0_32, %c6, %c0_33, %c0_34] : memref<3x9x3x3xbf16, #tpu.memory_space<vmem>>, vector<1x1x3x3xbf16>
    %38 = vector.shape_cast %37 : vector<1x1x3x3xbf16> to vector<3x3xbf16>
    %cst_35 = arith.constant dense<0.000000e+00> : vector<3x286xf32>
    %39 = tpu.matmul %38, %36, %cst_35 {dimension_numbers = #tpu.dot_dimension_numbers<[1], [0], [0], [1], [0, 0, 1, 1], [], []>} : vector<3x3xbf16>, vector<3x286xbf16>, vector<3x286xf32> -> vector<3x286xf32>
    %40 = arith.addf %35, %39 : vector<3x286xf32>
    %41 = vector.extract_strided_slice %4 {offsets = [0, 37], sizes = [3, 286], strides = [1, 1]} : vector<3x324xbf16> to vector<3x286xbf16>
    %c0_36 = arith.constant 0 : index
    %c7 = arith.constant 7 : index
    %c0_37 = arith.constant 0 : index
    %c0_38 = arith.constant 0 : index
    %42 = vector.load %arg2[%c0_36, %c7, %c0_37, %c0_38] : memref<3x9x3x3xbf16, #tpu.memory_space<vmem>>, vector<1x1x3x3xbf16>
    %43 = vector.shape_cast %42 : vector<1x1x3x3xbf16> to vector<3x3xbf16>
    %cst_39 = arith.constant dense<0.000000e+00> : vector<3x286xf32>
    %44 = tpu.matmul %43, %41, %cst_39 {dimension_numbers = #tpu.dot_dimension_numbers<[1], [0], [0], [1], [0, 0, 1, 1], [], []>} : vector<3x3xbf16>, vector<3x286xbf16>, vector<3x286xf32> -> vector<3x286xf32>
    %45 = arith.addf %40, %44 : vector<3x286xf32>
    %46 = vector.extract_strided_slice %4 {offsets = [0, 38], sizes = [3, 286], strides = [1, 1]} : vector<3x324xbf16> to vector<3x286xbf16>
    %c0_40 = arith.constant 0 : index
    %c8 = arith.constant 8 : index
    %c0_41 = arith.constant 0 : index
    %c0_42 = arith.constant 0 : index
    %47 = vector.load %arg2[%c0_40, %c8, %c0_41, %c0_42] : memref<3x9x3x3xbf16, #tpu.memory_space<vmem>>, vector<1x1x3x3xbf16>
    %48 = vector.shape_cast %47 : vector<1x1x3x3xbf16> to vector<3x3xbf16>
    %cst_43 = arith.constant dense<0.000000e+00> : vector<3x286xf32>
    %49 = tpu.matmul %48, %46, %cst_43 {dimension_numbers = #tpu.dot_dimension_numbers<[1], [0], [0], [1], [0, 0, 1, 1], [], []>} : vector<3x3xbf16>, vector<3x286xbf16>, vector<3x286xf32> -> vector<3x286xf32>
    %50 = arith.addf %45, %49 : vector<3x286xf32>
    %c0_44 = arith.constant 0 : index
    %c0_45 = arith.constant 0 : index
    %c0_46 = arith.constant 0 : index
    %51 = vector.load %arg3[%c0_44, %c0_45, %c0_46] : memref<3x3x2xf32, #tpu.memory_space<vmem>>, vector<1x3x2xf32>
    %52 = vector.shape_cast %51 : vector<1x3x2xf32> to vector<3x2xf32>
    %53 = vector.extract_strided_slice %52 {offsets = [0, 0], sizes = [3, 1], strides = [1, 1]} : vector<3x2xf32> to vector<3x1xf32>
    %54 = vector.broadcast %53 : vector<3x1xf32> to vector<3x286xf32>
    %55 = arith.mulf %50, %54 : vector<3x286xf32>
    %56 = vector.extract_strided_slice %52 {offsets = [0, 1], sizes = [3, 1], strides = [1, 1]} : vector<3x2xf32> to vector<3x1xf32>
    %57 = vector.broadcast %56 : vector<3x1xf32> to vector<3x286xf32>
    %58 = arith.addf %55, %57 : vector<3x286xf32>
    %cst_47 = arith.constant 0.000000e+00 : f32
    %59 = vector.broadcast %cst_47 : f32 to vector<3x286xf32>
    %60 = arith.cmpf ogt, %58, %59 : vector<3x286xf32>
    %cst_48 = arith.constant 2.000000e-01 : f32
    %61 = vector.broadcast %cst_48 : f32 to vector<3x286xf32>
    %62 = arith.mulf %61, %58 : vector<3x286xf32>
    %63 = arith.select %60, %58, %62 : vector<3x286xi1>, vector<3x286xf32>
    %64 = vector.broadcast %0 : vector<1x286xf32> to vector<3x286xf32>
    %65 = arith.mulf %63, %64 : vector<3x286xf32>
    %66 = arith.truncf %65 : vector<3x286xf32> to vector<3x286xbf16>
    %c0_49 = arith.constant 0 : index
    %c19 = arith.constant 19 : index
    %67 = vector.load %arg6[%c0_49, %c19] : memref<3x324xbf16, #tpu.memory_space<vmem>>, vector<3x286xbf16>
    tpu.vector_store %arg6[%c0_49, %c19], %66 {strides = array<i32>} : memref<3x324xbf16, #tpu.memory_space<vmem>>, vector<3x286xbf16>,
    %c0_50 = arith.constant 0 : index
    %c0_51 = arith.constant 0 : index
    %68 = vector.load %arg6[%c0_50, %c0_51] : memref<3x324xbf16, #tpu.memory_space<vmem>>, vector<3x324xbf16>
    %cst_52 = arith.constant 0.000000e+00 : f32
    %69 = vector.broadcast %cst_52 : f32 to vector<3x286xf32>
    %70 = vector.extract_strided_slice %68 {offsets = [0, 0], sizes = [3, 286], strides = [1, 1]} : vector<3x324xbf16> to vector<3x286xbf16>
    %c1_53 = arith.constant 1 : index
    %c0_54 = arith.constant 0 : index
    %c0_55 = arith.constant 0 : index
    %c0_56 = arith.constant 0 : index
    %71 = vector.load %arg2[%c1_53, %c0_54, %c0_55, %c0_56] : memref<3x9x3x3xbf16, #tpu.memory_space<vmem>>, vector<1x1x3x3xbf16>
    %72 = vector.shape_cast %71 : vector<1x1x3x3xbf16> to vector<3x3xbf16>
    %cst_57 = arith.constant dense<0.000000e+00> : vector<3x286xf32>
    %73 = tpu.matmul %72, %70, %cst_57 {dimension_numbers = #tpu.dot_dimension_numbers<[1], [0], [0], [1], [0, 0, 1, 1], [], []>} : vector<3x3xbf16>, vector<3x286xbf16>, vector<3x286xf32> -> vector<3x286xf32>
    %74 = arith.addf %69, %73 : vector<3x286xf32>
    %75 = vector.extract_strided_slice %68 {offsets = [0, 1], sizes = [3, 286], strides = [1, 1]} : vector<3x324xbf16> to vector<3x286xbf16>
    %c1_58 = arith.constant 1 : index
    %c1_59 = arith.constant 1 : index
    %c0_60 = arith.constant 0 : index
    %c0_61 = arith.constant 0 : index
    %76 = vector.load %arg2[%c1_58, %c1_59, %c0_60, %c0_61] : memref<3x9x3x3xbf16, #tpu.memory_space<vmem>>, vector<1x1x3x3xbf16>
    %77 = vector.shape_cast %76 : vector<1x1x3x3xbf16> to vector<3x3xbf16>
    %cst_62 = arith.constant dense<0.000000e+00> : vector<3x286xf32>
    %78 = tpu.matmul %77, %75, %cst_62 {dimension_numbers = #tpu.dot_dimension_numbers<[1], [0], [0], [1], [0, 0, 1, 1], [], []>} : vector<3x3xbf16>, vector<3x286xbf16>, vector<3x286xf32> -> vector<3x286xf32>
    %79 = arith.addf %74, %78 : vector<3x286xf32>
    %80 = vector.extract_strided_slice %68 {offsets = [0, 2], sizes = [3, 286], strides = [1, 1]} : vector<3x324xbf16> to vector<3x286xbf16>
    %c1_63 = arith.constant 1 : index
    %c2_64 = arith.constant 2 : index
    %c0_65 = arith.constant 0 : index
    %c0_66 = arith.constant 0 : index
    %81 = vector.load %arg2[%c1_63, %c2_64, %c0_65, %c0_66] : memref<3x9x3x3xbf16, #tpu.memory_space<vmem>>, vector<1x1x3x3xbf16>
    %82 = vector.shape_cast %81 : vector<1x1x3x3xbf16> to vector<3x3xbf16>
    %cst_67 = arith.constant dense<0.000000e+00> : vector<3x286xf32>
    %83 = tpu.matmul %82, %80, %cst_67 {dimension_numbers = #tpu.dot_dimension_numbers<[1], [0], [0], [1], [0, 0, 1, 1], [], []>} : vector<3x3xbf16>, vector<3x286xbf16>, vector<3x286xf32> -> vector<3x286xf32>
    %84 = arith.addf %79, %83 : vector<3x286xf32>
    %85 = vector.extract_strided_slice %68 {offsets = [0, 18], sizes = [3, 286], strides = [1, 1]} : vector<3x324xbf16> to vector<3x286xbf16>
    %c1_68 = arith.constant 1 : index
    %c3_69 = arith.constant 3 : index
    %c0_70 = arith.constant 0 : index
    %c0_71 = arith.constant 0 : index
    %86 = vector.load %arg2[%c1_68, %c3_69, %c0_70, %c0_71] : memref<3x9x3x3xbf16, #tpu.memory_space<vmem>>, vector<1x1x3x3xbf16>
    %87 = vector.shape_cast %86 : vector<1x1x3x3xbf16> to vector<3x3xbf16>
    %cst_72 = arith.constant dense<0.000000e+00> : vector<3x286xf32>
    %88 = tpu.matmul %87, %85, %cst_72 {dimension_numbers = #tpu.dot_dimension_numbers<[1], [0], [0], [1], [0, 0, 1, 1], [], []>} : vector<3x3xbf16>, vector<3x286xbf16>, vector<3x286xf32> -> vector<3x286xf32>
    %89 = arith.addf %84, %88 : vector<3x286xf32>
    %90 = vector.extract_strided_slice %68 {offsets = [0, 19], sizes = [3, 286], strides = [1, 1]} : vector<3x324xbf16> to vector<3x286xbf16>
    %c1_73 = arith.constant 1 : index
    %c4_74 = arith.constant 4 : index
    %c0_75 = arith.constant 0 : index
    %c0_76 = arith.constant 0 : index
    %91 = vector.load %arg2[%c1_73, %c4_74, %c0_75, %c0_76] : memref<3x9x3x3xbf16, #tpu.memory_space<vmem>>, vector<1x1x3x3xbf16>
    %92 = vector.shape_cast %91 : vector<1x1x3x3xbf16> to vector<3x3xbf16>
    %cst_77 = arith.constant dense<0.000000e+00> : vector<3x286xf32>
    %93 = tpu.matmul %92, %90, %cst_77 {dimension_numbers = #tpu.dot_dimension_numbers<[1], [0], [0], [1], [0, 0, 1, 1], [], []>} : vector<3x3xbf16>, vector<3x286xbf16>, vector<3x286xf32> -> vector<3x286xf32>
    %94 = arith.addf %89, %93 : vector<3x286xf32>
    %95 = vector.extract_strided_slice %68 {offsets = [0, 20], sizes = [3, 286], strides = [1, 1]} : vector<3x324xbf16> to vector<3x286xbf16>
    %c1_78 = arith.constant 1 : index
    %c5_79 = arith.constant 5 : index
    %c0_80 = arith.constant 0 : index
    %c0_81 = arith.constant 0 : index
    %96 = vector.load %arg2[%c1_78, %c5_79, %c0_80, %c0_81] : memref<3x9x3x3xbf16, #tpu.memory_space<vmem>>, vector<1x1x3x3xbf16>
    %97 = vector.shape_cast %96 : vector<1x1x3x3xbf16> to vector<3x3xbf16>
    %cst_82 = arith.constant dense<0.000000e+00> : vector<3x286xf32>
    %98 = tpu.matmul %97, %95, %cst_82 {dimension_numbers = #tpu.dot_dimension_numbers<[1], [0], [0], [1], [0, 0, 1, 1], [], []>} : vector<3x3xbf16>, vector<3x286xbf16>, vector<3x286xf32> -> vector<3x286xf32>
    %99 = arith.addf %94, %98 : vector<3x286xf32>
    %100 = vector.extract_strided_slice %68 {offsets = [0, 36], sizes = [3, 286], strides = [1, 1]} : vector<3x324xbf16> to vector<3x286xbf16>
    %c1_83 = arith.constant 1 : index
    %c6_84 = arith.constant 6 : index
    %c0_85 = arith.constant 0 : index
    %c0_86 = arith.constant 0 : index
    %101 = vector.load %arg2[%c1_83, %c6_84, %c0_85, %c0_86] : memref<3x9x3x3xbf16, #tpu.memory_space<vmem>>, vector<1x1x3x3xbf16>
    %102 = vector.shape_cast %101 : vector<1x1x3x3xbf16> to vector<3x3xbf16>
    %cst_87 = arith.constant dense<0.000000e+00> : vector<3x286xf32>
    %103 = tpu.matmul %102, %100, %cst_87 {dimension_numbers = #tpu.dot_dimension_numbers<[1], [0], [0], [1], [0, 0, 1, 1], [], []>} : vector<3x3xbf16>, vector<3x286xbf16>, vector<3x286xf32> -> vector<3x286xf32>
    %104 = arith.addf %99, %103 : vector<3x286xf32>
    %105 = vector.extract_strided_slice %68 {offsets = [0, 37], sizes = [3, 286], strides = [1, 1]} : vector<3x324xbf16> to vector<3x286xbf16>
    %c1_88 = arith.constant 1 : index
    %c7_89 = arith.constant 7 : index
    %c0_90 = arith.constant 0 : index
    %c0_91 = arith.constant 0 : index
    %106 = vector.load %arg2[%c1_88, %c7_89, %c0_90, %c0_91] : memref<3x9x3x3xbf16, #tpu.memory_space<vmem>>, vector<1x1x3x3xbf16>
    %107 = vector.shape_cast %106 : vector<1x1x3x3xbf16> to vector<3x3xbf16>
    %cst_92 = arith.constant dense<0.000000e+00> : vector<3x286xf32>
    %108 = tpu.matmul %107, %105, %cst_92 {dimension_numbers = #tpu.dot_dimension_numbers<[1], [0], [0], [1], [0, 0, 1, 1], [], []>} : vector<3x3xbf16>, vector<3x286xbf16>, vector<3x286xf32> -> vector<3x286xf32>
    %109 = arith.addf %104, %108 : vector<3x286xf32>
    %110 = vector.extract_strided_slice %68 {offsets = [0, 38], sizes = [3, 286], strides = [1, 1]} : vector<3x324xbf16> to vector<3x286xbf16>
    %c1_93 = arith.constant 1 : index
    %c8_94 = arith.constant 8 : index
    %c0_95 = arith.constant 0 : index
    %c0_96 = arith.constant 0 : index
    %111 = vector.load %arg2[%c1_93, %c8_94, %c0_95, %c0_96] : memref<3x9x3x3xbf16, #tpu.memory_space<vmem>>, vector<1x1x3x3xbf16>
    %112 = vector.shape_cast %111 : vector<1x1x3x3xbf16> to vector<3x3xbf16>
    %cst_97 = arith.constant dense<0.000000e+00> : vector<3x286xf32>
    %113 = tpu.matmul %112, %110, %cst_97 {dimension_numbers = #tpu.dot_dimension_numbers<[1], [0], [0], [1], [0, 0, 1, 1], [], []>} : vector<3x3xbf16>, vector<3x286xbf16>, vector<3x286xf32> -> vector<3x286xf32>
    %114 = arith.addf %109, %113 : vector<3x286xf32>
    %c1_98 = arith.constant 1 : index
    %c0_99 = arith.constant 0 : index
    %c0_100 = arith.constant 0 : index
    %115 = vector.load %arg3[%c1_98, %c0_99, %c0_100] : memref<3x3x2xf32, #tpu.memory_space<vmem>>, vector<1x3x2xf32>
    %116 = vector.shape_cast %115 : vector<1x3x2xf32> to vector<3x2xf32>
    %117 = vector.extract_strided_slice %116 {offsets = [0, 0], sizes = [3, 1], strides = [1, 1]} : vector<3x2xf32> to vector<3x1xf32>
    %118 = vector.broadcast %117 : vector<3x1xf32> to vector<3x286xf32>
    %119 = arith.mulf %114, %118 : vector<3x286xf32>
    %120 = vector.extract_strided_slice %116 {offsets = [0, 1], sizes = [3, 1], strides = [1, 1]} : vector<3x2xf32> to vector<3x1xf32>
    %121 = vector.broadcast %120 : vector<3x1xf32> to vector<3x286xf32>
    %122 = arith.addf %119, %121 : vector<3x286xf32>
    %cst_101 = arith.constant 0.000000e+00 : f32
    %123 = vector.broadcast %cst_101 : f32 to vector<3x286xf32>
    %124 = arith.cmpf ogt, %122, %123 : vector<3x286xf32>
    %cst_102 = arith.constant 2.000000e-01 : f32
    %125 = vector.broadcast %cst_102 : f32 to vector<3x286xf32>
    %126 = arith.mulf %125, %122 : vector<3x286xf32>
    %127 = arith.select %124, %122, %126 : vector<3x286xi1>, vector<3x286xf32>
    %128 = vector.broadcast %0 : vector<1x286xf32> to vector<3x286xf32>
    %129 = arith.mulf %127, %128 : vector<3x286xf32>
    %130 = arith.truncf %129 : vector<3x286xf32> to vector<3x286xbf16>
    %c0_103 = arith.constant 0 : index
    %c19_104 = arith.constant 19 : index
    %131 = vector.load %arg6[%c0_103, %c19_104] : memref<3x324xbf16, #tpu.memory_space<vmem>>, vector<3x286xbf16>
    tpu.vector_store %arg6[%c0_103, %c19_104], %130 {strides = array<i32>} : memref<3x324xbf16, #tpu.memory_space<vmem>>, vector<3x286xbf16>,
    %c0_105 = arith.constant 0 : index
    %c0_106 = arith.constant 0 : index
    %132 = vector.load %arg6[%c0_105, %c0_106] : memref<3x324xbf16, #tpu.memory_space<vmem>>, vector<3x324xbf16>
    %cst_107 = arith.constant 0.000000e+00 : f32
    %133 = vector.broadcast %cst_107 : f32 to vector<3x286xf32>
    %134 = vector.extract_strided_slice %132 {offsets = [0, 0], sizes = [3, 286], strides = [1, 1]} : vector<3x324xbf16> to vector<3x286xbf16>
    %c2_108 = arith.constant 2 : index
    %c0_109 = arith.constant 0 : index
    %c0_110 = arith.constant 0 : index
    %c0_111 = arith.constant 0 : index
    %135 = vector.load %arg2[%c2_108, %c0_109, %c0_110, %c0_111] : memref<3x9x3x3xbf16, #tpu.memory_space<vmem>>, vector<1x1x3x3xbf16>
    %136 = vector.shape_cast %135 : vector<1x1x3x3xbf16> to vector<3x3xbf16>
    %cst_112 = arith.constant dense<0.000000e+00> : vector<3x286xf32>
    %137 = tpu.matmul %136, %134, %cst_112 {dimension_numbers = #tpu.dot_dimension_numbers<[1], [0], [0], [1], [0, 0, 1, 1], [], []>} : vector<3x3xbf16>, vector<3x286xbf16>, vector<3x286xf32> -> vector<3x286xf32>
    %138 = arith.addf %133, %137 : vector<3x286xf32>
    %139 = vector.extract_strided_slice %132 {offsets = [0, 1], sizes = [3, 286], strides = [1, 1]} : vector<3x324xbf16> to vector<3x286xbf16>
    %c2_113 = arith.constant 2 : index
    %c1_114 = arith.constant 1 : index
    %c0_115 = arith.constant 0 : index
    %c0_116 = arith.constant 0 : index
    %140 = vector.load %arg2[%c2_113, %c1_114, %c0_115, %c0_116] : memref<3x9x3x3xbf16, #tpu.memory_space<vmem>>, vector<1x1x3x3xbf16>
    %141 = vector.shape_cast %140 : vector<1x1x3x3xbf16> to vector<3x3xbf16>
    %cst_117 = arith.constant dense<0.000000e+00> : vector<3x286xf32>
    %142 = tpu.matmul %141, %139, %cst_117 {dimension_numbers = #tpu.dot_dimension_numbers<[1], [0], [0], [1], [0, 0, 1, 1], [], []>} : vector<3x3xbf16>, vector<3x286xbf16>, vector<3x286xf32> -> vector<3x286xf32>
    %143 = arith.addf %138, %142 : vector<3x286xf32>
    %144 = vector.extract_strided_slice %132 {offsets = [0, 2], sizes = [3, 286], strides = [1, 1]} : vector<3x324xbf16> to vector<3x286xbf16>
    %c2_118 = arith.constant 2 : index
    %c2_119 = arith.constant 2 : index
    %c0_120 = arith.constant 0 : index
    %c0_121 = arith.constant 0 : index
    %145 = vector.load %arg2[%c2_118, %c2_119, %c0_120, %c0_121] : memref<3x9x3x3xbf16, #tpu.memory_space<vmem>>, vector<1x1x3x3xbf16>
    %146 = vector.shape_cast %145 : vector<1x1x3x3xbf16> to vector<3x3xbf16>
    %cst_122 = arith.constant dense<0.000000e+00> : vector<3x286xf32>
    %147 = tpu.matmul %146, %144, %cst_122 {dimension_numbers = #tpu.dot_dimension_numbers<[1], [0], [0], [1], [0, 0, 1, 1], [], []>} : vector<3x3xbf16>, vector<3x286xbf16>, vector<3x286xf32> -> vector<3x286xf32>
    %148 = arith.addf %143, %147 : vector<3x286xf32>
    %149 = vector.extract_strided_slice %132 {offsets = [0, 18], sizes = [3, 286], strides = [1, 1]} : vector<3x324xbf16> to vector<3x286xbf16>
    %c2_123 = arith.constant 2 : index
    %c3_124 = arith.constant 3 : index
    %c0_125 = arith.constant 0 : index
    %c0_126 = arith.constant 0 : index
    %150 = vector.load %arg2[%c2_123, %c3_124, %c0_125, %c0_126] : memref<3x9x3x3xbf16, #tpu.memory_space<vmem>>, vector<1x1x3x3xbf16>
    %151 = vector.shape_cast %150 : vector<1x1x3x3xbf16> to vector<3x3xbf16>
    %cst_127 = arith.constant dense<0.000000e+00> : vector<3x286xf32>
    %152 = tpu.matmul %151, %149, %cst_127 {dimension_numbers = #tpu.dot_dimension_numbers<[1], [0], [0], [1], [0, 0, 1, 1], [], []>} : vector<3x3xbf16>, vector<3x286xbf16>, vector<3x286xf32> -> vector<3x286xf32>
    %153 = arith.addf %148, %152 : vector<3x286xf32>
    %154 = vector.extract_strided_slice %132 {offsets = [0, 19], sizes = [3, 286], strides = [1, 1]} : vector<3x324xbf16> to vector<3x286xbf16>
    %c2_128 = arith.constant 2 : index
    %c4_129 = arith.constant 4 : index
    %c0_130 = arith.constant 0 : index
    %c0_131 = arith.constant 0 : index
    %155 = vector.load %arg2[%c2_128, %c4_129, %c0_130, %c0_131] : memref<3x9x3x3xbf16, #tpu.memory_space<vmem>>, vector<1x1x3x3xbf16>
    %156 = vector.shape_cast %155 : vector<1x1x3x3xbf16> to vector<3x3xbf16>
    %cst_132 = arith.constant dense<0.000000e+00> : vector<3x286xf32>
    %157 = tpu.matmul %156, %154, %cst_132 {dimension_numbers = #tpu.dot_dimension_numbers<[1], [0], [0], [1], [0, 0, 1, 1], [], []>} : vector<3x3xbf16>, vector<3x286xbf16>, vector<3x286xf32> -> vector<3x286xf32>
    %158 = arith.addf %153, %157 : vector<3x286xf32>
    %159 = vector.extract_strided_slice %132 {offsets = [0, 20], sizes = [3, 286], strides = [1, 1]} : vector<3x324xbf16> to vector<3x286xbf16>
    %c2_133 = arith.constant 2 : index
    %c5_134 = arith.constant 5 : index
    %c0_135 = arith.constant 0 : index
    %c0_136 = arith.constant 0 : index
    %160 = vector.load %arg2[%c2_133, %c5_134, %c0_135, %c0_136] : memref<3x9x3x3xbf16, #tpu.memory_space<vmem>>, vector<1x1x3x3xbf16>
    %161 = vector.shape_cast %160 : vector<1x1x3x3xbf16> to vector<3x3xbf16>
    %cst_137 = arith.constant dense<0.000000e+00> : vector<3x286xf32>
    %162 = tpu.matmul %161, %159, %cst_137 {dimension_numbers = #tpu.dot_dimension_numbers<[1], [0], [0], [1], [0, 0, 1, 1], [], []>} : vector<3x3xbf16>, vector<3x286xbf16>, vector<3x286xf32> -> vector<3x286xf32>
    %163 = arith.addf %158, %162 : vector<3x286xf32>
    %164 = vector.extract_strided_slice %132 {offsets = [0, 36], sizes = [3, 286], strides = [1, 1]} : vector<3x324xbf16> to vector<3x286xbf16>
    %c2_138 = arith.constant 2 : index
    %c6_139 = arith.constant 6 : index
    %c0_140 = arith.constant 0 : index
    %c0_141 = arith.constant 0 : index
    %165 = vector.load %arg2[%c2_138, %c6_139, %c0_140, %c0_141] : memref<3x9x3x3xbf16, #tpu.memory_space<vmem>>, vector<1x1x3x3xbf16>
    %166 = vector.shape_cast %165 : vector<1x1x3x3xbf16> to vector<3x3xbf16>
    %cst_142 = arith.constant dense<0.000000e+00> : vector<3x286xf32>
    %167 = tpu.matmul %166, %164, %cst_142 {dimension_numbers = #tpu.dot_dimension_numbers<[1], [0], [0], [1], [0, 0, 1, 1], [], []>} : vector<3x3xbf16>, vector<3x286xbf16>, vector<3x286xf32> -> vector<3x286xf32>
    %168 = arith.addf %163, %167 : vector<3x286xf32>
    %169 = vector.extract_strided_slice %132 {offsets = [0, 37], sizes = [3, 286], strides = [1, 1]} : vector<3x324xbf16> to vector<3x286xbf16>
    %c2_143 = arith.constant 2 : index
    %c7_144 = arith.constant 7 : index
    %c0_145 = arith.constant 0 : index
    %c0_146 = arith.constant 0 : index
    %170 = vector.load %arg2[%c2_143, %c7_144, %c0_145, %c0_146] : memref<3x9x3x3xbf16, #tpu.memory_space<vmem>>, vector<1x1x3x3xbf16>
    %171 = vector.shape_cast %170 : vector<1x1x3x3xbf16> to vector<3x3xbf16>
    %cst_147 = arith.constant dense<0.000000e+00> : vector<3x286xf32>
    %172 = tpu.matmul %171, %169, %cst_147 {dimension_numbers = #tpu.dot_dimension_numbers<[1], [0], [0], [1], [0, 0, 1, 1], [], []>} : vector<3x3xbf16>, vector<3x286xbf16>, vector<3x286xf32> -> vector<3x286xf32>
    %173 = arith.addf %168, %172 : vector<3x286xf32>
    %174 = vector.extract_strided_slice %132 {offsets = [0, 38], sizes = [3, 286], strides = [1, 1]} : vector<3x324xbf16> to vector<3x286xbf16>
    %c2_148 = arith.constant 2 : index
    %c8_149 = arith.constant 8 : index
    %c0_150 = arith.constant 0 : index
    %c0_151 = arith.constant 0 : index
    %175 = vector.load %arg2[%c2_148, %c8_149, %c0_150, %c0_151] : memref<3x9x3x3xbf16, #tpu.memory_space<vmem>>, vector<1x1x3x3xbf16>
    %176 = vector.shape_cast %175 : vector<1x1x3x3xbf16> to vector<3x3xbf16>
    %cst_152 = arith.constant dense<0.000000e+00> : vector<3x286xf32>
    %177 = tpu.matmul %176, %174, %cst_152 {dimension_numbers = #tpu.dot_dimension_numbers<[1], [0], [0], [1], [0, 0, 1, 1], [], []>} : vector<3x3xbf16>, vector<3x286xbf16>, vector<3x286xf32> -> vector<3x286xf32>
    %178 = arith.addf %173, %177 : vector<3x286xf32>
    %c2_153 = arith.constant 2 : index
    %c0_154 = arith.constant 0 : index
    %c0_155 = arith.constant 0 : index
    %179 = vector.load %arg3[%c2_153, %c0_154, %c0_155] : memref<3x3x2xf32, #tpu.memory_space<vmem>>, vector<1x3x2xf32>
    %180 = vector.shape_cast %179 : vector<1x3x2xf32> to vector<3x2xf32>
    %181 = vector.extract_strided_slice %180 {offsets = [0, 0], sizes = [3, 1], strides = [1, 1]} : vector<3x2xf32> to vector<3x1xf32>
    %182 = vector.broadcast %181 : vector<3x1xf32> to vector<3x286xf32>
    %183 = arith.mulf %178, %182 : vector<3x286xf32>
    %184 = vector.extract_strided_slice %180 {offsets = [0, 1], sizes = [3, 1], strides = [1, 1]} : vector<3x2xf32> to vector<3x1xf32>
    %185 = vector.broadcast %184 : vector<3x1xf32> to vector<3x286xf32>
    %186 = arith.addf %183, %185 : vector<3x286xf32>
    %cst_156 = arith.constant 0.000000e+00 : f32
    %187 = vector.broadcast %cst_156 : f32 to vector<3x286xf32>
    %188 = arith.cmpf ogt, %186, %187 : vector<3x286xf32>
    %cst_157 = arith.constant 2.000000e-01 : f32
    %189 = vector.broadcast %cst_157 : f32 to vector<3x286xf32>
    %190 = arith.mulf %189, %186 : vector<3x286xf32>
    %191 = arith.select %188, %186, %190 : vector<3x286xi1>, vector<3x286xf32>
    %192 = vector.broadcast %0 : vector<1x286xf32> to vector<3x286xf32>
    %193 = arith.mulf %191, %192 : vector<3x286xf32>
    %194 = arith.truncf %193 : vector<3x286xf32> to vector<3x286xbf16>
    %c0_158 = arith.constant 0 : index
    %c19_159 = arith.constant 19 : index
    %195 = vector.load %arg6[%c0_158, %c19_159] : memref<3x324xbf16, #tpu.memory_space<vmem>>, vector<3x286xbf16>
    tpu.vector_store %arg6[%c0_158, %c19_159], %194 {strides = array<i32>} : memref<3x324xbf16, #tpu.memory_space<vmem>>, vector<3x286xbf16>,
    %c0_160 = arith.constant 0 : index
    %c0_161 = arith.constant 0 : index
    %196 = vector.load %arg6[%c0_160, %c0_161] : memref<3x324xbf16, #tpu.memory_space<vmem>>, vector<3x324xbf16>
    %c0_162 = arith.constant 0 : index
    %c0_163 = arith.constant 0 : index
    %c0_164 = arith.constant 0 : index
    %197 = vector.load %arg5[%c0_162, %c0_163, %c0_164] : memref<1x3x324xbf16, #tpu.memory_space<vmem>>, vector<1x3x324xbf16>
    %198 = vector.shape_cast %197 : vector<1x3x324xbf16> to vector<3x324xbf16>
    %199 = vector.shape_cast %196 : vector<3x324xbf16> to vector<1x3x324xbf16>
    tpu.vector_store %arg5[%c0_162, %c0_163, %c0_164], %199 {strides = array<i32>} : memref<1x3x324xbf16, #tpu.memory_space<vmem>>, vector<1x3x324xbf16>,
    return
  }
  func.func @transform_0(%arg0: i32) -> (i32, i32, i32) {
    %c0_i32 = arith.constant 0 : i32
    %c0_i32_0 = arith.constant 0 : i32
    %c0_i32_1 = arith.constant 0 : i32
    return %arg0, %c0_i32, %c0_i32_0 : i32, i32, i32
  }
  func.func @transform_1(%arg0: i32) -> (i32, i32, i32, i32) {
    %c0_i32 = arith.constant 0 : i32
    %c0_i32_0 = arith.constant 0 : i32
    %c0_i32_1 = arith.constant 0 : i32
    %c0_i32_2 = arith.constant 0 : i32
    %c0_i32_3 = arith.constant 0 : i32
    return %c0_i32, %c0_i32_0, %c0_i32_1, %c0_i32_2 : i32, i32, i32, i32
  }
  func.func @transform_2(%arg0: i32) -> (i32, i32, i32) {
    %c0_i32 = arith.constant 0 : i32
    %c0_i32_0 = arith.constant 0 : i32
    %c0_i32_1 = arith.constant 0 : i32
    %c0_i32_2 = arith.constant 0 : i32
    return %c0_i32, %c0_i32_0, %c0_i32_1 : i32, i32, i32
  }
  func.func @transform_3(%arg0: i32) -> (i32, i32) {
    %c0_i32 = arith.constant 0 : i32
    %c0_i32_0 = arith.constant 0 : i32
    %c0_i32_1 = arith.constant 0 : i32
    return %c0_i32, %c0_i32_0 : i32, i32
  }
  func.func @transform_4(%arg0: i32) -> (i32, i32, i32) {
    %c0_i32 = arith.constant 0 : i32
    %c0_i32_0 = arith.constant 0 : i32
    %c0_i32_1 = arith.constant 0 : i32
    return %arg0, %c0_i32, %c0_i32_0 : i32, i32, i32
  }
}

module attributes {stable_mosaic.version = 11 : i64} {
  func.func @_s2_layer_kernel(%arg0: i32, %arg1: memref<1x12x90xbf16, #tpu.memory_space<vmem>>, %arg2: memref<9x8x3xbf16, #tpu.memory_space<vmem>>, %arg3: memref<8x2xf32, #tpu.memory_space<vmem>>, %arg4: memref<1x8x72xbf16, #tpu.memory_space<vmem>>) attributes {dimension_semantics = [#tpu.dimension_semantics<parallel>], iteration_bounds = array<i64: 2>, scalar_prefetch = 0 : i64, scratch_operands = 0 : i64, tpu.core_type = #tpu.core_type<tc>, window_params = [{transform_indices = @transform_0, window_bounds = array<i64: 1, 12, 90>}, {pipeline_mode = #tpu.pipeline_mode<synchronous>, transform_indices = @transform_1, window_bounds = array<i64: 9, 8, 3>}, {pipeline_mode = #tpu.pipeline_mode<synchronous>, transform_indices = @transform_2, window_bounds = array<i64: 8, 2>}, {transform_indices = @transform_3, window_bounds = array<i64: 1, 8, 72>}]} {
    %c0 = arith.constant 0 : index
    %c0_0 = arith.constant 0 : index
    %c0_1 = arith.constant 0 : index
    %0 = vector.load %arg1[%c0, %c0_0, %c0_1] : memref<1x12x90xbf16, #tpu.memory_space<vmem>>, vector<1x12x90xbf16>
    %1 = vector.shape_cast %0 : vector<1x12x90xbf16> to vector<12x90xbf16>
    %cst = arith.constant 0.000000e+00 : f32
    %2 = vector.broadcast %cst : f32 to vector<8x72xf32>
    %3 = vector.extract_strided_slice %1 {offsets = [0, 0], sizes = [3, 72], strides = [1, 1]} : vector<12x90xbf16> to vector<3x72xbf16>
    %c0_2 = arith.constant 0 : index
    %c0_3 = arith.constant 0 : index
    %c0_4 = arith.constant 0 : index
    %4 = vector.load %arg2[%c0_2, %c0_3, %c0_4] : memref<9x8x3xbf16, #tpu.memory_space<vmem>>, vector<1x8x3xbf16>
    %5 = vector.shape_cast %4 : vector<1x8x3xbf16> to vector<8x3xbf16>
    %cst_5 = arith.constant dense<0.000000e+00> : vector<8x72xf32>
    %6 = tpu.matmul %5, %3, %cst_5 {dimension_numbers = #tpu.dot_dimension_numbers<[1], [0], [0], [1], [0, 0, 1, 1], [], []>} : vector<8x3xbf16>, vector<3x72xbf16>, vector<8x72xf32> -> vector<8x72xf32>
    %7 = arith.addf %2, %6 : vector<8x72xf32>
    %8 = vector.extract_strided_slice %1 {offsets = [3, 0], sizes = [3, 72], strides = [1, 1]} : vector<12x90xbf16> to vector<3x72xbf16>
    %c1 = arith.constant 1 : index
    %c0_6 = arith.constant 0 : index
    %c0_7 = arith.constant 0 : index
    %9 = vector.load %arg2[%c1, %c0_6, %c0_7] : memref<9x8x3xbf16, #tpu.memory_space<vmem>>, vector<1x8x3xbf16>
    %10 = vector.shape_cast %9 : vector<1x8x3xbf16> to vector<8x3xbf16>
    %cst_8 = arith.constant dense<0.000000e+00> : vector<8x72xf32>
    %11 = tpu.matmul %10, %8, %cst_8 {dimension_numbers = #tpu.dot_dimension_numbers<[1], [0], [0], [1], [0, 0, 1, 1], [], []>} : vector<8x3xbf16>, vector<3x72xbf16>, vector<8x72xf32> -> vector<8x72xf32>
    %12 = arith.addf %7, %11 : vector<8x72xf32>
    %13 = vector.extract_strided_slice %1 {offsets = [0, 1], sizes = [3, 72], strides = [1, 1]} : vector<12x90xbf16> to vector<3x72xbf16>
    %c2 = arith.constant 2 : index
    %c0_9 = arith.constant 0 : index
    %c0_10 = arith.constant 0 : index
    %14 = vector.load %arg2[%c2, %c0_9, %c0_10] : memref<9x8x3xbf16, #tpu.memory_space<vmem>>, vector<1x8x3xbf16>
    %15 = vector.shape_cast %14 : vector<1x8x3xbf16> to vector<8x3xbf16>
    %cst_11 = arith.constant dense<0.000000e+00> : vector<8x72xf32>
    %16 = tpu.matmul %15, %13, %cst_11 {dimension_numbers = #tpu.dot_dimension_numbers<[1], [0], [0], [1], [0, 0, 1, 1], [], []>} : vector<8x3xbf16>, vector<3x72xbf16>, vector<8x72xf32> -> vector<8x72xf32>
    %17 = arith.addf %12, %16 : vector<8x72xf32>
    %18 = vector.extract_strided_slice %1 {offsets = [6, 0], sizes = [3, 72], strides = [1, 1]} : vector<12x90xbf16> to vector<3x72xbf16>
    %c3 = arith.constant 3 : index
    %c0_12 = arith.constant 0 : index
    %c0_13 = arith.constant 0 : index
    %19 = vector.load %arg2[%c3, %c0_12, %c0_13] : memref<9x8x3xbf16, #tpu.memory_space<vmem>>, vector<1x8x3xbf16>
    %20 = vector.shape_cast %19 : vector<1x8x3xbf16> to vector<8x3xbf16>
    %cst_14 = arith.constant dense<0.000000e+00> : vector<8x72xf32>
    %21 = tpu.matmul %20, %18, %cst_14 {dimension_numbers = #tpu.dot_dimension_numbers<[1], [0], [0], [1], [0, 0, 1, 1], [], []>} : vector<8x3xbf16>, vector<3x72xbf16>, vector<8x72xf32> -> vector<8x72xf32>
    %22 = arith.addf %17, %21 : vector<8x72xf32>
    %23 = vector.extract_strided_slice %1 {offsets = [9, 0], sizes = [3, 72], strides = [1, 1]} : vector<12x90xbf16> to vector<3x72xbf16>
    %c4 = arith.constant 4 : index
    %c0_15 = arith.constant 0 : index
    %c0_16 = arith.constant 0 : index
    %24 = vector.load %arg2[%c4, %c0_15, %c0_16] : memref<9x8x3xbf16, #tpu.memory_space<vmem>>, vector<1x8x3xbf16>
    %25 = vector.shape_cast %24 : vector<1x8x3xbf16> to vector<8x3xbf16>
    %cst_17 = arith.constant dense<0.000000e+00> : vector<8x72xf32>
    %26 = tpu.matmul %25, %23, %cst_17 {dimension_numbers = #tpu.dot_dimension_numbers<[1], [0], [0], [1], [0, 0, 1, 1], [], []>} : vector<8x3xbf16>, vector<3x72xbf16>, vector<8x72xf32> -> vector<8x72xf32>
    %27 = arith.addf %22, %26 : vector<8x72xf32>
    %28 = vector.extract_strided_slice %1 {offsets = [6, 1], sizes = [3, 72], strides = [1, 1]} : vector<12x90xbf16> to vector<3x72xbf16>
    %c5 = arith.constant 5 : index
    %c0_18 = arith.constant 0 : index
    %c0_19 = arith.constant 0 : index
    %29 = vector.load %arg2[%c5, %c0_18, %c0_19] : memref<9x8x3xbf16, #tpu.memory_space<vmem>>, vector<1x8x3xbf16>
    %30 = vector.shape_cast %29 : vector<1x8x3xbf16> to vector<8x3xbf16>
    %cst_20 = arith.constant dense<0.000000e+00> : vector<8x72xf32>
    %31 = tpu.matmul %30, %28, %cst_20 {dimension_numbers = #tpu.dot_dimension_numbers<[1], [0], [0], [1], [0, 0, 1, 1], [], []>} : vector<8x3xbf16>, vector<3x72xbf16>, vector<8x72xf32> -> vector<8x72xf32>
    %32 = arith.addf %27, %31 : vector<8x72xf32>
    %33 = vector.extract_strided_slice %1 {offsets = [0, 9], sizes = [3, 72], strides = [1, 1]} : vector<12x90xbf16> to vector<3x72xbf16>
    %c6 = arith.constant 6 : index
    %c0_21 = arith.constant 0 : index
    %c0_22 = arith.constant 0 : index
    %34 = vector.load %arg2[%c6, %c0_21, %c0_22] : memref<9x8x3xbf16, #tpu.memory_space<vmem>>, vector<1x8x3xbf16>
    %35 = vector.shape_cast %34 : vector<1x8x3xbf16> to vector<8x3xbf16>
    %cst_23 = arith.constant dense<0.000000e+00> : vector<8x72xf32>
    %36 = tpu.matmul %35, %33, %cst_23 {dimension_numbers = #tpu.dot_dimension_numbers<[1], [0], [0], [1], [0, 0, 1, 1], [], []>} : vector<8x3xbf16>, vector<3x72xbf16>, vector<8x72xf32> -> vector<8x72xf32>
    %37 = arith.addf %32, %36 : vector<8x72xf32>
    %38 = vector.extract_strided_slice %1 {offsets = [3, 9], sizes = [3, 72], strides = [1, 1]} : vector<12x90xbf16> to vector<3x72xbf16>
    %c7 = arith.constant 7 : index
    %c0_24 = arith.constant 0 : index
    %c0_25 = arith.constant 0 : index
    %39 = vector.load %arg2[%c7, %c0_24, %c0_25] : memref<9x8x3xbf16, #tpu.memory_space<vmem>>, vector<1x8x3xbf16>
    %40 = vector.shape_cast %39 : vector<1x8x3xbf16> to vector<8x3xbf16>
    %cst_26 = arith.constant dense<0.000000e+00> : vector<8x72xf32>
    %41 = tpu.matmul %40, %38, %cst_26 {dimension_numbers = #tpu.dot_dimension_numbers<[1], [0], [0], [1], [0, 0, 1, 1], [], []>} : vector<8x3xbf16>, vector<3x72xbf16>, vector<8x72xf32> -> vector<8x72xf32>
    %42 = arith.addf %37, %41 : vector<8x72xf32>
    %43 = vector.extract_strided_slice %1 {offsets = [0, 10], sizes = [3, 72], strides = [1, 1]} : vector<12x90xbf16> to vector<3x72xbf16>
    %c8 = arith.constant 8 : index
    %c0_27 = arith.constant 0 : index
    %c0_28 = arith.constant 0 : index
    %44 = vector.load %arg2[%c8, %c0_27, %c0_28] : memref<9x8x3xbf16, #tpu.memory_space<vmem>>, vector<1x8x3xbf16>
    %45 = vector.shape_cast %44 : vector<1x8x3xbf16> to vector<8x3xbf16>
    %cst_29 = arith.constant dense<0.000000e+00> : vector<8x72xf32>
    %46 = tpu.matmul %45, %43, %cst_29 {dimension_numbers = #tpu.dot_dimension_numbers<[1], [0], [0], [1], [0, 0, 1, 1], [], []>} : vector<8x3xbf16>, vector<3x72xbf16>, vector<8x72xf32> -> vector<8x72xf32>
    %47 = arith.addf %42, %46 : vector<8x72xf32>
    %c0_30 = arith.constant 0 : index
    %c0_31 = arith.constant 0 : index
    %48 = vector.load %arg3[%c0_30, %c0_31] : memref<8x2xf32, #tpu.memory_space<vmem>>, vector<8x2xf32>
    %49 = vector.extract_strided_slice %48 {offsets = [0, 0], sizes = [8, 1], strides = [1, 1]} : vector<8x2xf32> to vector<8x1xf32>
    %50 = vector.broadcast %49 : vector<8x1xf32> to vector<8x72xf32>
    %51 = arith.mulf %47, %50 : vector<8x72xf32>
    %52 = vector.extract_strided_slice %48 {offsets = [0, 1], sizes = [8, 1], strides = [1, 1]} : vector<8x2xf32> to vector<8x1xf32>
    %53 = vector.broadcast %52 : vector<8x1xf32> to vector<8x72xf32>
    %54 = arith.addf %51, %53 : vector<8x72xf32>
    %cst_32 = arith.constant 0.000000e+00 : f32
    %55 = vector.broadcast %cst_32 : f32 to vector<8x72xf32>
    %56 = arith.cmpf ogt, %54, %55 : vector<8x72xf32>
    %cst_33 = arith.constant 2.000000e-01 : f32
    %57 = vector.broadcast %cst_33 : f32 to vector<8x72xf32>
    %58 = arith.mulf %57, %54 : vector<8x72xf32>
    %59 = arith.select %56, %54, %58 : vector<8x72xi1>, vector<8x72xf32>
    %60 = arith.truncf %59 : vector<8x72xf32> to vector<8x72xbf16>
    %c0_34 = arith.constant 0 : index
    %c0_35 = arith.constant 0 : index
    %c0_36 = arith.constant 0 : index
    %61 = vector.load %arg4[%c0_34, %c0_35, %c0_36] : memref<1x8x72xbf16, #tpu.memory_space<vmem>>, vector<1x8x72xbf16>
    %62 = vector.shape_cast %61 : vector<1x8x72xbf16> to vector<8x72xbf16>
    %63 = vector.shape_cast %60 : vector<8x72xbf16> to vector<1x8x72xbf16>
    tpu.vector_store %arg4[%c0_34, %c0_35, %c0_36], %63 {strides = array<i32>} : memref<1x8x72xbf16, #tpu.memory_space<vmem>>, vector<1x8x72xbf16>,
    return
  }
  func.func @transform_0(%arg0: i32) -> (i32, i32, i32) {
    %c0_i32 = arith.constant 0 : i32
    %c0_i32_0 = arith.constant 0 : i32
    %c0_i32_1 = arith.constant 0 : i32
    return %arg0, %c0_i32, %c0_i32_0 : i32, i32, i32
  }
  func.func @transform_1(%arg0: i32) -> (i32, i32, i32) {
    %c0_i32 = arith.constant 0 : i32
    %c0_i32_0 = arith.constant 0 : i32
    %c0_i32_1 = arith.constant 0 : i32
    %c0_i32_2 = arith.constant 0 : i32
    return %c0_i32, %c0_i32_0, %c0_i32_1 : i32, i32, i32
  }
  func.func @transform_2(%arg0: i32) -> (i32, i32) {
    %c0_i32 = arith.constant 0 : i32
    %c0_i32_0 = arith.constant 0 : i32
    %c0_i32_1 = arith.constant 0 : i32
    return %c0_i32, %c0_i32_0 : i32, i32
  }
  func.func @transform_3(%arg0: i32) -> (i32, i32, i32) {
    %c0_i32 = arith.constant 0 : i32
    %c0_i32_0 = arith.constant 0 : i32
    %c0_i32_1 = arith.constant 0 : i32
    return %arg0, %c0_i32, %c0_i32_0 : i32, i32, i32
  }
}

module attributes {stable_mosaic.version = 11 : i64} {
  func.func @_s2_layer_kernel(%arg0: i32, %arg1: memref<1x32x30xbf16, #tpu.memory_space<vmem>>, %arg2: memref<9x16x8xbf16, #tpu.memory_space<vmem>>, %arg3: memref<16x2xf32, #tpu.memory_space<vmem>>, %arg4: memref<1x16x20xbf16, #tpu.memory_space<vmem>>) attributes {dimension_semantics = [#tpu.dimension_semantics<parallel>], iteration_bounds = array<i64: 2>, scalar_prefetch = 0 : i64, scratch_operands = 0 : i64, tpu.core_type = #tpu.core_type<tc>, window_params = [{transform_indices = @transform_0, window_bounds = array<i64: 1, 32, 30>}, {pipeline_mode = #tpu.pipeline_mode<synchronous>, transform_indices = @transform_1, window_bounds = array<i64: 9, 16, 8>}, {pipeline_mode = #tpu.pipeline_mode<synchronous>, transform_indices = @transform_2, window_bounds = array<i64: 16, 2>}, {transform_indices = @transform_3, window_bounds = array<i64: 1, 16, 20>}]} {
    %c0 = arith.constant 0 : index
    %c0_0 = arith.constant 0 : index
    %c0_1 = arith.constant 0 : index
    %0 = vector.load %arg1[%c0, %c0_0, %c0_1] : memref<1x32x30xbf16, #tpu.memory_space<vmem>>, vector<1x32x30xbf16>
    %1 = vector.shape_cast %0 : vector<1x32x30xbf16> to vector<32x30xbf16>
    %cst = arith.constant 0.000000e+00 : f32
    %2 = vector.broadcast %cst : f32 to vector<16x20xf32>
    %3 = vector.extract_strided_slice %1 {offsets = [0, 0], sizes = [8, 20], strides = [1, 1]} : vector<32x30xbf16> to vector<8x20xbf16>
    %c0_2 = arith.constant 0 : index
    %c0_3 = arith.constant 0 : index
    %c0_4 = arith.constant 0 : index
    %4 = vector.load %arg2[%c0_2, %c0_3, %c0_4] : memref<9x16x8xbf16, #tpu.memory_space<vmem>>, vector<1x16x8xbf16>
    %5 = vector.shape_cast %4 : vector<1x16x8xbf16> to vector<16x8xbf16>
    %cst_5 = arith.constant dense<0.000000e+00> : vector<16x20xf32>
    %6 = tpu.matmul %5, %3, %cst_5 {dimension_numbers = #tpu.dot_dimension_numbers<[1], [0], [0], [1], [0, 0, 1, 1], [], []>} : vector<16x8xbf16>, vector<8x20xbf16>, vector<16x20xf32> -> vector<16x20xf32>
    %7 = arith.addf %2, %6 : vector<16x20xf32>
    %8 = vector.extract_strided_slice %1 {offsets = [8, 0], sizes = [8, 20], strides = [1, 1]} : vector<32x30xbf16> to vector<8x20xbf16>
    %c1 = arith.constant 1 : index
    %c0_6 = arith.constant 0 : index
    %c0_7 = arith.constant 0 : index
    %9 = vector.load %arg2[%c1, %c0_6, %c0_7] : memref<9x16x8xbf16, #tpu.memory_space<vmem>>, vector<1x16x8xbf16>
    %10 = vector.shape_cast %9 : vector<1x16x8xbf16> to vector<16x8xbf16>
    %cst_8 = arith.constant dense<0.000000e+00> : vector<16x20xf32>
    %11 = tpu.matmul %10, %8, %cst_8 {dimension_numbers = #tpu.dot_dimension_numbers<[1], [0], [0], [1], [0, 0, 1, 1], [], []>} : vector<16x8xbf16>, vector<8x20xbf16>, vector<16x20xf32> -> vector<16x20xf32>
    %12 = arith.addf %7, %11 : vector<16x20xf32>
    %13 = vector.extract_strided_slice %1 {offsets = [0, 1], sizes = [8, 20], strides = [1, 1]} : vector<32x30xbf16> to vector<8x20xbf16>
    %c2 = arith.constant 2 : index
    %c0_9 = arith.constant 0 : index
    %c0_10 = arith.constant 0 : index
    %14 = vector.load %arg2[%c2, %c0_9, %c0_10] : memref<9x16x8xbf16, #tpu.memory_space<vmem>>, vector<1x16x8xbf16>
    %15 = vector.shape_cast %14 : vector<1x16x8xbf16> to vector<16x8xbf16>
    %cst_11 = arith.constant dense<0.000000e+00> : vector<16x20xf32>
    %16 = tpu.matmul %15, %13, %cst_11 {dimension_numbers = #tpu.dot_dimension_numbers<[1], [0], [0], [1], [0, 0, 1, 1], [], []>} : vector<16x8xbf16>, vector<8x20xbf16>, vector<16x20xf32> -> vector<16x20xf32>
    %17 = arith.addf %12, %16 : vector<16x20xf32>
    %18 = vector.extract_strided_slice %1 {offsets = [16, 0], sizes = [8, 20], strides = [1, 1]} : vector<32x30xbf16> to vector<8x20xbf16>
    %c3 = arith.constant 3 : index
    %c0_12 = arith.constant 0 : index
    %c0_13 = arith.constant 0 : index
    %19 = vector.load %arg2[%c3, %c0_12, %c0_13] : memref<9x16x8xbf16, #tpu.memory_space<vmem>>, vector<1x16x8xbf16>
    %20 = vector.shape_cast %19 : vector<1x16x8xbf16> to vector<16x8xbf16>
    %cst_14 = arith.constant dense<0.000000e+00> : vector<16x20xf32>
    %21 = tpu.matmul %20, %18, %cst_14 {dimension_numbers = #tpu.dot_dimension_numbers<[1], [0], [0], [1], [0, 0, 1, 1], [], []>} : vector<16x8xbf16>, vector<8x20xbf16>, vector<16x20xf32> -> vector<16x20xf32>
    %22 = arith.addf %17, %21 : vector<16x20xf32>
    %23 = vector.extract_strided_slice %1 {offsets = [24, 0], sizes = [8, 20], strides = [1, 1]} : vector<32x30xbf16> to vector<8x20xbf16>
    %c4 = arith.constant 4 : index
    %c0_15 = arith.constant 0 : index
    %c0_16 = arith.constant 0 : index
    %24 = vector.load %arg2[%c4, %c0_15, %c0_16] : memref<9x16x8xbf16, #tpu.memory_space<vmem>>, vector<1x16x8xbf16>
    %25 = vector.shape_cast %24 : vector<1x16x8xbf16> to vector<16x8xbf16>
    %cst_17 = arith.constant dense<0.000000e+00> : vector<16x20xf32>
    %26 = tpu.matmul %25, %23, %cst_17 {dimension_numbers = #tpu.dot_dimension_numbers<[1], [0], [0], [1], [0, 0, 1, 1], [], []>} : vector<16x8xbf16>, vector<8x20xbf16>, vector<16x20xf32> -> vector<16x20xf32>
    %27 = arith.addf %22, %26 : vector<16x20xf32>
    %28 = vector.extract_strided_slice %1 {offsets = [16, 1], sizes = [8, 20], strides = [1, 1]} : vector<32x30xbf16> to vector<8x20xbf16>
    %c5 = arith.constant 5 : index
    %c0_18 = arith.constant 0 : index
    %c0_19 = arith.constant 0 : index
    %29 = vector.load %arg2[%c5, %c0_18, %c0_19] : memref<9x16x8xbf16, #tpu.memory_space<vmem>>, vector<1x16x8xbf16>
    %30 = vector.shape_cast %29 : vector<1x16x8xbf16> to vector<16x8xbf16>
    %cst_20 = arith.constant dense<0.000000e+00> : vector<16x20xf32>
    %31 = tpu.matmul %30, %28, %cst_20 {dimension_numbers = #tpu.dot_dimension_numbers<[1], [0], [0], [1], [0, 0, 1, 1], [], []>} : vector<16x8xbf16>, vector<8x20xbf16>, vector<16x20xf32> -> vector<16x20xf32>
    %32 = arith.addf %27, %31 : vector<16x20xf32>
    %33 = vector.extract_strided_slice %1 {offsets = [0, 5], sizes = [8, 20], strides = [1, 1]} : vector<32x30xbf16> to vector<8x20xbf16>
    %c6 = arith.constant 6 : index
    %c0_21 = arith.constant 0 : index
    %c0_22 = arith.constant 0 : index
    %34 = vector.load %arg2[%c6, %c0_21, %c0_22] : memref<9x16x8xbf16, #tpu.memory_space<vmem>>, vector<1x16x8xbf16>
    %35 = vector.shape_cast %34 : vector<1x16x8xbf16> to vector<16x8xbf16>
    %cst_23 = arith.constant dense<0.000000e+00> : vector<16x20xf32>
    %36 = tpu.matmul %35, %33, %cst_23 {dimension_numbers = #tpu.dot_dimension_numbers<[1], [0], [0], [1], [0, 0, 1, 1], [], []>} : vector<16x8xbf16>, vector<8x20xbf16>, vector<16x20xf32> -> vector<16x20xf32>
    %37 = arith.addf %32, %36 : vector<16x20xf32>
    %38 = vector.extract_strided_slice %1 {offsets = [8, 5], sizes = [8, 20], strides = [1, 1]} : vector<32x30xbf16> to vector<8x20xbf16>
    %c7 = arith.constant 7 : index
    %c0_24 = arith.constant 0 : index
    %c0_25 = arith.constant 0 : index
    %39 = vector.load %arg2[%c7, %c0_24, %c0_25] : memref<9x16x8xbf16, #tpu.memory_space<vmem>>, vector<1x16x8xbf16>
    %40 = vector.shape_cast %39 : vector<1x16x8xbf16> to vector<16x8xbf16>
    %cst_26 = arith.constant dense<0.000000e+00> : vector<16x20xf32>
    %41 = tpu.matmul %40, %38, %cst_26 {dimension_numbers = #tpu.dot_dimension_numbers<[1], [0], [0], [1], [0, 0, 1, 1], [], []>} : vector<16x8xbf16>, vector<8x20xbf16>, vector<16x20xf32> -> vector<16x20xf32>
    %42 = arith.addf %37, %41 : vector<16x20xf32>
    %43 = vector.extract_strided_slice %1 {offsets = [0, 6], sizes = [8, 20], strides = [1, 1]} : vector<32x30xbf16> to vector<8x20xbf16>
    %c8 = arith.constant 8 : index
    %c0_27 = arith.constant 0 : index
    %c0_28 = arith.constant 0 : index
    %44 = vector.load %arg2[%c8, %c0_27, %c0_28] : memref<9x16x8xbf16, #tpu.memory_space<vmem>>, vector<1x16x8xbf16>
    %45 = vector.shape_cast %44 : vector<1x16x8xbf16> to vector<16x8xbf16>
    %cst_29 = arith.constant dense<0.000000e+00> : vector<16x20xf32>
    %46 = tpu.matmul %45, %43, %cst_29 {dimension_numbers = #tpu.dot_dimension_numbers<[1], [0], [0], [1], [0, 0, 1, 1], [], []>} : vector<16x8xbf16>, vector<8x20xbf16>, vector<16x20xf32> -> vector<16x20xf32>
    %47 = arith.addf %42, %46 : vector<16x20xf32>
    %c0_30 = arith.constant 0 : index
    %c0_31 = arith.constant 0 : index
    %48 = vector.load %arg3[%c0_30, %c0_31] : memref<16x2xf32, #tpu.memory_space<vmem>>, vector<16x2xf32>
    %49 = vector.extract_strided_slice %48 {offsets = [0, 0], sizes = [16, 1], strides = [1, 1]} : vector<16x2xf32> to vector<16x1xf32>
    %50 = vector.broadcast %49 : vector<16x1xf32> to vector<16x20xf32>
    %51 = arith.mulf %47, %50 : vector<16x20xf32>
    %52 = vector.extract_strided_slice %48 {offsets = [0, 1], sizes = [16, 1], strides = [1, 1]} : vector<16x2xf32> to vector<16x1xf32>
    %53 = vector.broadcast %52 : vector<16x1xf32> to vector<16x20xf32>
    %54 = arith.addf %51, %53 : vector<16x20xf32>
    %cst_32 = arith.constant 0.000000e+00 : f32
    %55 = vector.broadcast %cst_32 : f32 to vector<16x20xf32>
    %56 = arith.cmpf ogt, %54, %55 : vector<16x20xf32>
    %cst_33 = arith.constant 2.000000e-01 : f32
    %57 = vector.broadcast %cst_33 : f32 to vector<16x20xf32>
    %58 = arith.mulf %57, %54 : vector<16x20xf32>
    %59 = arith.select %56, %54, %58 : vector<16x20xi1>, vector<16x20xf32>
    %60 = arith.truncf %59 : vector<16x20xf32> to vector<16x20xbf16>
    %c0_34 = arith.constant 0 : index
    %c0_35 = arith.constant 0 : index
    %c0_36 = arith.constant 0 : index
    %61 = vector.load %arg4[%c0_34, %c0_35, %c0_36] : memref<1x16x20xbf16, #tpu.memory_space<vmem>>, vector<1x16x20xbf16>
    %62 = vector.shape_cast %61 : vector<1x16x20xbf16> to vector<16x20xbf16>
    %63 = vector.shape_cast %60 : vector<16x20xbf16> to vector<1x16x20xbf16>
    tpu.vector_store %arg4[%c0_34, %c0_35, %c0_36], %63 {strides = array<i32>} : memref<1x16x20xbf16, #tpu.memory_space<vmem>>, vector<1x16x20xbf16>,
    return
  }
  func.func @transform_0(%arg0: i32) -> (i32, i32, i32) {
    %c0_i32 = arith.constant 0 : i32
    %c0_i32_0 = arith.constant 0 : i32
    %c0_i32_1 = arith.constant 0 : i32
    return %arg0, %c0_i32, %c0_i32_0 : i32, i32, i32
  }
  func.func @transform_1(%arg0: i32) -> (i32, i32, i32) {
    %c0_i32 = arith.constant 0 : i32
    %c0_i32_0 = arith.constant 0 : i32
    %c0_i32_1 = arith.constant 0 : i32
    %c0_i32_2 = arith.constant 0 : i32
    return %c0_i32, %c0_i32_0, %c0_i32_1 : i32, i32, i32
  }
  func.func @transform_2(%arg0: i32) -> (i32, i32) {
    %c0_i32 = arith.constant 0 : i32
    %c0_i32_0 = arith.constant 0 : i32
    %c0_i32_1 = arith.constant 0 : i32
    return %c0_i32, %c0_i32_0 : i32, i32
  }
  func.func @transform_3(%arg0: i32) -> (i32, i32, i32) {
    %c0_i32 = arith.constant 0 : i32
    %c0_i32_0 = arith.constant 0 : i32
    %c0_i32_1 = arith.constant 0 : i32
    return %arg0, %c0_i32, %c0_i32_0 : i32, i32, i32
  }
}

module attributes {stable_mosaic.version = 11 : i64} {
  func.func @_s2_layer_kernel(%arg0: i32, %arg1: memref<1x64x12xbf16, #tpu.memory_space<vmem>>, %arg2: memref<9x32x16xbf16, #tpu.memory_space<vmem>>, %arg3: memref<32x2xf32, #tpu.memory_space<vmem>>, %arg4: memref<1x32x6xbf16, #tpu.memory_space<vmem>>) attributes {dimension_semantics = [#tpu.dimension_semantics<parallel>], iteration_bounds = array<i64: 2>, scalar_prefetch = 0 : i64, scratch_operands = 0 : i64, tpu.core_type = #tpu.core_type<tc>, window_params = [{transform_indices = @transform_0, window_bounds = array<i64: 1, 64, 12>}, {pipeline_mode = #tpu.pipeline_mode<synchronous>, transform_indices = @transform_1, window_bounds = array<i64: 9, 32, 16>}, {pipeline_mode = #tpu.pipeline_mode<synchronous>, transform_indices = @transform_2, window_bounds = array<i64: 32, 2>}, {transform_indices = @transform_3, window_bounds = array<i64: 1, 32, 6>}]} {
    %c0 = arith.constant 0 : index
    %c0_0 = arith.constant 0 : index
    %c0_1 = arith.constant 0 : index
    %0 = vector.load %arg1[%c0, %c0_0, %c0_1] : memref<1x64x12xbf16, #tpu.memory_space<vmem>>, vector<1x64x12xbf16>
    %1 = vector.shape_cast %0 : vector<1x64x12xbf16> to vector<64x12xbf16>
    %cst = arith.constant 0.000000e+00 : f32
    %2 = vector.broadcast %cst : f32 to vector<32x6xf32>
    %3 = vector.extract_strided_slice %1 {offsets = [0, 0], sizes = [16, 6], strides = [1, 1]} : vector<64x12xbf16> to vector<16x6xbf16>
    %c0_2 = arith.constant 0 : index
    %c0_3 = arith.constant 0 : index
    %c0_4 = arith.constant 0 : index
    %4 = vector.load %arg2[%c0_2, %c0_3, %c0_4] : memref<9x32x16xbf16, #tpu.memory_space<vmem>>, vector<1x32x16xbf16>
    %5 = vector.shape_cast %4 : vector<1x32x16xbf16> to vector<32x16xbf16>
    %cst_5 = arith.constant dense<0.000000e+00> : vector<32x6xf32>
    %6 = tpu.matmul %5, %3, %cst_5 {dimension_numbers = #tpu.dot_dimension_numbers<[1], [0], [0], [1], [0, 0, 1, 1], [], []>} : vector<32x16xbf16>, vector<16x6xbf16>, vector<32x6xf32> -> vector<32x6xf32>
    %7 = arith.addf %2, %6 : vector<32x6xf32>
    %8 = vector.extract_strided_slice %1 {offsets = [16, 0], sizes = [16, 6], strides = [1, 1]} : vector<64x12xbf16> to vector<16x6xbf16>
    %c1 = arith.constant 1 : index
    %c0_6 = arith.constant 0 : index
    %c0_7 = arith.constant 0 : index
    %9 = vector.load %arg2[%c1, %c0_6, %c0_7] : memref<9x32x16xbf16, #tpu.memory_space<vmem>>, vector<1x32x16xbf16>
    %10 = vector.shape_cast %9 : vector<1x32x16xbf16> to vector<32x16xbf16>
    %cst_8 = arith.constant dense<0.000000e+00> : vector<32x6xf32>
    %11 = tpu.matmul %10, %8, %cst_8 {dimension_numbers = #tpu.dot_dimension_numbers<[1], [0], [0], [1], [0, 0, 1, 1], [], []>} : vector<32x16xbf16>, vector<16x6xbf16>, vector<32x6xf32> -> vector<32x6xf32>
    %12 = arith.addf %7, %11 : vector<32x6xf32>
    %13 = vector.extract_strided_slice %1 {offsets = [0, 1], sizes = [16, 6], strides = [1, 1]} : vector<64x12xbf16> to vector<16x6xbf16>
    %c2 = arith.constant 2 : index
    %c0_9 = arith.constant 0 : index
    %c0_10 = arith.constant 0 : index
    %14 = vector.load %arg2[%c2, %c0_9, %c0_10] : memref<9x32x16xbf16, #tpu.memory_space<vmem>>, vector<1x32x16xbf16>
    %15 = vector.shape_cast %14 : vector<1x32x16xbf16> to vector<32x16xbf16>
    %cst_11 = arith.constant dense<0.000000e+00> : vector<32x6xf32>
    %16 = tpu.matmul %15, %13, %cst_11 {dimension_numbers = #tpu.dot_dimension_numbers<[1], [0], [0], [1], [0, 0, 1, 1], [], []>} : vector<32x16xbf16>, vector<16x6xbf16>, vector<32x6xf32> -> vector<32x6xf32>
    %17 = arith.addf %12, %16 : vector<32x6xf32>
    %18 = vector.extract_strided_slice %1 {offsets = [32, 0], sizes = [16, 6], strides = [1, 1]} : vector<64x12xbf16> to vector<16x6xbf16>
    %c3 = arith.constant 3 : index
    %c0_12 = arith.constant 0 : index
    %c0_13 = arith.constant 0 : index
    %19 = vector.load %arg2[%c3, %c0_12, %c0_13] : memref<9x32x16xbf16, #tpu.memory_space<vmem>>, vector<1x32x16xbf16>
    %20 = vector.shape_cast %19 : vector<1x32x16xbf16> to vector<32x16xbf16>
    %cst_14 = arith.constant dense<0.000000e+00> : vector<32x6xf32>
    %21 = tpu.matmul %20, %18, %cst_14 {dimension_numbers = #tpu.dot_dimension_numbers<[1], [0], [0], [1], [0, 0, 1, 1], [], []>} : vector<32x16xbf16>, vector<16x6xbf16>, vector<32x6xf32> -> vector<32x6xf32>
    %22 = arith.addf %17, %21 : vector<32x6xf32>
    %23 = vector.extract_strided_slice %1 {offsets = [48, 0], sizes = [16, 6], strides = [1, 1]} : vector<64x12xbf16> to vector<16x6xbf16>
    %c4 = arith.constant 4 : index
    %c0_15 = arith.constant 0 : index
    %c0_16 = arith.constant 0 : index
    %24 = vector.load %arg2[%c4, %c0_15, %c0_16] : memref<9x32x16xbf16, #tpu.memory_space<vmem>>, vector<1x32x16xbf16>
    %25 = vector.shape_cast %24 : vector<1x32x16xbf16> to vector<32x16xbf16>
    %cst_17 = arith.constant dense<0.000000e+00> : vector<32x6xf32>
    %26 = tpu.matmul %25, %23, %cst_17 {dimension_numbers = #tpu.dot_dimension_numbers<[1], [0], [0], [1], [0, 0, 1, 1], [], []>} : vector<32x16xbf16>, vector<16x6xbf16>, vector<32x6xf32> -> vector<32x6xf32>
    %27 = arith.addf %22, %26 : vector<32x6xf32>
    %28 = vector.extract_strided_slice %1 {offsets = [32, 1], sizes = [16, 6], strides = [1, 1]} : vector<64x12xbf16> to vector<16x6xbf16>
    %c5 = arith.constant 5 : index
    %c0_18 = arith.constant 0 : index
    %c0_19 = arith.constant 0 : index
    %29 = vector.load %arg2[%c5, %c0_18, %c0_19] : memref<9x32x16xbf16, #tpu.memory_space<vmem>>, vector<1x32x16xbf16>
    %30 = vector.shape_cast %29 : vector<1x32x16xbf16> to vector<32x16xbf16>
    %cst_20 = arith.constant dense<0.000000e+00> : vector<32x6xf32>
    %31 = tpu.matmul %30, %28, %cst_20 {dimension_numbers = #tpu.dot_dimension_numbers<[1], [0], [0], [1], [0, 0, 1, 1], [], []>} : vector<32x16xbf16>, vector<16x6xbf16>, vector<32x6xf32> -> vector<32x6xf32>
    %32 = arith.addf %27, %31 : vector<32x6xf32>
    %33 = vector.extract_strided_slice %1 {offsets = [0, 3], sizes = [16, 6], strides = [1, 1]} : vector<64x12xbf16> to vector<16x6xbf16>
    %c6 = arith.constant 6 : index
    %c0_21 = arith.constant 0 : index
    %c0_22 = arith.constant 0 : index
    %34 = vector.load %arg2[%c6, %c0_21, %c0_22] : memref<9x32x16xbf16, #tpu.memory_space<vmem>>, vector<1x32x16xbf16>
    %35 = vector.shape_cast %34 : vector<1x32x16xbf16> to vector<32x16xbf16>
    %cst_23 = arith.constant dense<0.000000e+00> : vector<32x6xf32>
    %36 = tpu.matmul %35, %33, %cst_23 {dimension_numbers = #tpu.dot_dimension_numbers<[1], [0], [0], [1], [0, 0, 1, 1], [], []>} : vector<32x16xbf16>, vector<16x6xbf16>, vector<32x6xf32> -> vector<32x6xf32>
    %37 = arith.addf %32, %36 : vector<32x6xf32>
    %38 = vector.extract_strided_slice %1 {offsets = [16, 3], sizes = [16, 6], strides = [1, 1]} : vector<64x12xbf16> to vector<16x6xbf16>
    %c7 = arith.constant 7 : index
    %c0_24 = arith.constant 0 : index
    %c0_25 = arith.constant 0 : index
    %39 = vector.load %arg2[%c7, %c0_24, %c0_25] : memref<9x32x16xbf16, #tpu.memory_space<vmem>>, vector<1x32x16xbf16>
    %40 = vector.shape_cast %39 : vector<1x32x16xbf16> to vector<32x16xbf16>
    %cst_26 = arith.constant dense<0.000000e+00> : vector<32x6xf32>
    %41 = tpu.matmul %40, %38, %cst_26 {dimension_numbers = #tpu.dot_dimension_numbers<[1], [0], [0], [1], [0, 0, 1, 1], [], []>} : vector<32x16xbf16>, vector<16x6xbf16>, vector<32x6xf32> -> vector<32x6xf32>
    %42 = arith.addf %37, %41 : vector<32x6xf32>
    %43 = vector.extract_strided_slice %1 {offsets = [0, 4], sizes = [16, 6], strides = [1, 1]} : vector<64x12xbf16> to vector<16x6xbf16>
    %c8 = arith.constant 8 : index
    %c0_27 = arith.constant 0 : index
    %c0_28 = arith.constant 0 : index
    %44 = vector.load %arg2[%c8, %c0_27, %c0_28] : memref<9x32x16xbf16, #tpu.memory_space<vmem>>, vector<1x32x16xbf16>
    %45 = vector.shape_cast %44 : vector<1x32x16xbf16> to vector<32x16xbf16>
    %cst_29 = arith.constant dense<0.000000e+00> : vector<32x6xf32>
    %46 = tpu.matmul %45, %43, %cst_29 {dimension_numbers = #tpu.dot_dimension_numbers<[1], [0], [0], [1], [0, 0, 1, 1], [], []>} : vector<32x16xbf16>, vector<16x6xbf16>, vector<32x6xf32> -> vector<32x6xf32>
    %47 = arith.addf %42, %46 : vector<32x6xf32>
    %c0_30 = arith.constant 0 : index
    %c0_31 = arith.constant 0 : index
    %48 = vector.load %arg3[%c0_30, %c0_31] : memref<32x2xf32, #tpu.memory_space<vmem>>, vector<32x2xf32>
    %49 = vector.extract_strided_slice %48 {offsets = [0, 0], sizes = [32, 1], strides = [1, 1]} : vector<32x2xf32> to vector<32x1xf32>
    %50 = vector.broadcast %49 : vector<32x1xf32> to vector<32x6xf32>
    %51 = arith.mulf %47, %50 : vector<32x6xf32>
    %52 = vector.extract_strided_slice %48 {offsets = [0, 1], sizes = [32, 1], strides = [1, 1]} : vector<32x2xf32> to vector<32x1xf32>
    %53 = vector.broadcast %52 : vector<32x1xf32> to vector<32x6xf32>
    %54 = arith.addf %51, %53 : vector<32x6xf32>
    %cst_32 = arith.constant 0.000000e+00 : f32
    %55 = vector.broadcast %cst_32 : f32 to vector<32x6xf32>
    %56 = arith.cmpf ogt, %54, %55 : vector<32x6xf32>
    %cst_33 = arith.constant 2.000000e-01 : f32
    %57 = vector.broadcast %cst_33 : f32 to vector<32x6xf32>
    %58 = arith.mulf %57, %54 : vector<32x6xf32>
    %59 = arith.select %56, %54, %58 : vector<32x6xi1>, vector<32x6xf32>
    %60 = arith.truncf %59 : vector<32x6xf32> to vector<32x6xbf16>
    %c0_34 = arith.constant 0 : index
    %c0_35 = arith.constant 0 : index
    %c0_36 = arith.constant 0 : index
    %61 = vector.load %arg4[%c0_34, %c0_35, %c0_36] : memref<1x32x6xbf16, #tpu.memory_space<vmem>>, vector<1x32x6xbf16>
    %62 = vector.shape_cast %61 : vector<1x32x6xbf16> to vector<32x6xbf16>
    %63 = vector.shape_cast %60 : vector<32x6xbf16> to vector<1x32x6xbf16>
    tpu.vector_store %arg4[%c0_34, %c0_35, %c0_36], %63 {strides = array<i32>} : memref<1x32x6xbf16, #tpu.memory_space<vmem>>, vector<1x32x6xbf16>,
    return
  }
  func.func @transform_0(%arg0: i32) -> (i32, i32, i32) {
    %c0_i32 = arith.constant 0 : i32
    %c0_i32_0 = arith.constant 0 : i32
    %c0_i32_1 = arith.constant 0 : i32
    return %arg0, %c0_i32, %c0_i32_0 : i32, i32, i32
  }
  func.func @transform_1(%arg0: i32) -> (i32, i32, i32) {
    %c0_i32 = arith.constant 0 : i32
    %c0_i32_0 = arith.constant 0 : i32
    %c0_i32_1 = arith.constant 0 : i32
    %c0_i32_2 = arith.constant 0 : i32
    return %c0_i32, %c0_i32_0, %c0_i32_1 : i32, i32, i32
  }
  func.func @transform_2(%arg0: i32) -> (i32, i32) {
    %c0_i32 = arith.constant 0 : i32
    %c0_i32_0 = arith.constant 0 : i32
    %c0_i32_1 = arith.constant 0 : i32
    return %c0_i32, %c0_i32_0 : i32, i32
  }
  func.func @transform_3(%arg0: i32) -> (i32, i32, i32) {
    %c0_i32 = arith.constant 0 : i32
    %c0_i32_0 = arith.constant 0 : i32
    %c0_i32_1 = arith.constant 0 : i32
    return %arg0, %c0_i32, %c0_i32_0 : i32, i32, i32
  }
}

</mosaic_0001>

<llo_original>
// kernel: self_embedding_block.5
$region0: #{self_embedding_block.5}
  #allocation0 [shape = 'u32[]', space=smem, size = 0x4, offset = 0x4, fixed_abs, tag = 'smem constant byte address 0x4 - core index']
  #allocation1 [shape = 'u32[144,128]{1,0:T(1,128)}', space=vmem, size = 0x12000, scoped, tag = 'internal scratch']
  %s0 = inlined_call_operand.vmem [shape: bf16[2,12,90], index: 0, kind: input, shape index: {}]
  %s1 = inlined_call_operand.vmem [shape: bf16[9,8,3], index: 1, kind: input, shape index: {}]
  %s2 = inlined_call_operand.vmem [shape: f32[8,2], index: 2, kind: input, shape index: {}]
  %s3 = inlined_call_operand.vmem [shape: bf16[2,8,72], index: 3, kind: output, shape index: {}]
  %s4 = sld [smem:[#allocation0]]
  $region45: #{self_embedding_block.5} parent=0
    _
  %s6 = ssub.s32 1, %s4
  %s7 = scalar_select 0, %s6, %s4
  loop: start=0, step=1, limit=4
  $region2: #{self_embedding_block.5} parent=0 // loop_pre_header
    _
  $region3: #{self_embedding_block.5} parent=0 // loop_header
    %s9 = sphi 0, %s13
    %p10 = scmp.ge.s32.totalorder %s9, 4
    %s19 = sphi 0, %s21
    %s22 = sphi 0, %s19
    %s23 = sphi 0, %s22
    %s39 = sphi 0, %s23
    %s43 = sphi 0, %s43
    %s45 = sphi 0, %s43
    %s46 = sphi 0, %s45
    %s60 = sphi 0, %s46
    %s64 = sphi 0, %s64
    %s66 = sphi 0, %s64
    %s67 = sphi 0, %s66
    %s81 = sphi 0, %s67
    %s87 = sphi 0, %s89
    %s90 = sphi 0, %s87
    %s91 = sphi 0, %s90
    %s107 = sphi 0, %s91
  $region4: #{self_embedding_block.5} parent=0 // loop_header_branch
    %12 = sbr.rel (%p10) target = $region8
  $region5: #{self_embedding_block.5} parent=0 // loop_body
    %s14 = ssub.s32 %s9, 1
    %s15 = ssub.s32 %s9, 2
    %s16 = sadd.s32 %s9, 1
    %s17 = ssub.s32 %s9, %s16
    %p18 = scmp.eq.s32.totalorder %s17, 0
    %s20 = sadd.s32 %s19, 1
    %s21 = scalar_select %p18, %s19, %s20
    %p24 = pneg %p18
    %p25 = scmp.eq.s32.totalorder %s9, 1
    %p26 = por %p24, %p25
    %p27 = scmp.ne.s32.totalorder %s19, %s22
    %p28 = scmp.eq.s32.totalorder %s9, 0
    %p29 = por %p27, %p28
    %p30 = scmp.ne.s32.totalorder %s19, %s22
    %p31 = scmp.eq.s32.totalorder %s14, 1
    %p32 = por %p30, %p31
    %p33 = scmp.ne.s32.totalorder %s22, %s23
    %p34 = scmp.eq.s32.totalorder %s14, 0
    %p35 = por %p33, %p34
    %p36 = scmp.ne.s32.totalorder %s22, %s23
    %p37 = scmp.eq.s32.totalorder %s15, 1
    %p38 = por %p36, %p37
    %p40 = scmp.ne.s32.totalorder %s23, %s39
    %p41 = scmp.eq.s32.totalorder %s15, 0
    %p42 = por %p40, %p41
    %s44 = sadd.s32 %s43, 1
    %p47 = scmp.eq.s32.totalorder %s9, 1
    %p48 = scmp.ne.s32.totalorder %s43, %s45
    %p49 = scmp.eq.s32.totalorder %s9, 0
    %p50 = por %p48, %p49
    %p51 = scmp.ne.s32.totalorder %s43, %s45
    %p52 = scmp.eq.s32.totalorder %s14, 1
    %p53 = por %p51, %p52
    %p54 = scmp.ne.s32.totalorder %s45, %s46
    %p55 = scmp.eq.s32.totalorder %s14, 0
    %p56 = por %p54, %p55
    %p57 = scmp.ne.s32.totalorder %s45, %s46
    %p58 = scmp.eq.s32.totalorder %s15, 1
    %p59 = por %p57, %p58
    %p61 = scmp.ne.s32.totalorder %s46, %s60
    %p62 = scmp.eq.s32.totalorder %s15, 0
    %p63 = por %p61, %p62
    %s65 = sadd.s32 %s64, 1
    %p68 = scmp.eq.s32.totalorder %s9, 1
    %p69 = scmp.ne.s32.totalorder %s64, %s66
    %p70 = scmp.eq.s32.totalorder %s9, 0
    %p71 = por %p69, %p70
    %p72 = scmp.ne.s32.totalorder %s64, %s66
    %p73 = scmp.eq.s32.totalorder %s14, 1
    %p74 = por %p72, %p73
    %p75 = scmp.ne.s32.totalorder %s66, %s67
    %p76 = scmp.eq.s32.totalorder %s14, 0
    %p77 = por %p75, %p76
    %p78 = scmp.ne.s32.totalorder %s66, %s67
    %p79 = scmp.eq.s32.totalorder %s15, 1
    %p80 = por %p78, %p79
    %p82 = scmp.ne.s32.totalorder %s67, %s81
    %p83 = scmp.eq.s32.totalorder %s15, 0
    %p84 = por %p82, %p83
    %s85 = ssub.s32 %s9, %s16
    %p86 = scmp.eq.s32.totalorder %s85, 0
    %s88 = sadd.s32 %s87, 1
    %s89 = scalar_select %p86, %s87, %s88
    %p92 = pneg %p86
    %p93 = scmp.eq.s32.totalorder %s9, 1
    %p94 = por %p92, %p93
    %p95 = scmp.ne.s32.totalorder %s87, %s90
    %p96 = scmp.eq.s32.totalorder %s9, 0
    %p97 = por %p95, %p96
    %p98 = scmp.ne.s32.totalorder %s87, %s90
    %p99 = scmp.eq.s32.totalorder %s14, 1
    %p100 = por %p98, %p99
    %p101 = scmp.ne.s32.totalorder %s90, %s91
    %p102 = scmp.eq.s32.totalorder %s14, 0
    %p103 = por %p101, %p102
    %p104 = scmp.ne.s32.totalorder %s90, %s91
    %p105 = scmp.eq.s32.totalorder %s15, 1
    %p106 = por %p104, %p105
    %p108 = scmp.ne.s32.totalorder %s91, %s107
    %p109 = scmp.eq.s32.totalorder %s15, 0
    %p110 = por %p108, %p109
    %p111 = scmp.le.s32.totalorder 1, %s9
    %p112 = scmp.lt.s32.totalorder %s9, 3
    %p113 = pnand %p111, %p112
    %p114 = pneg %p113
    // Predicated region
    $region9: #{self_embedding_block.5} parent=5 // pred_check
      _
    $region10: #{self_embedding_block.5} parent=5 // pred_check_branch
      %116 = sbr.rel (%p113) target = $region12
    $region11: #{self_embedding_block.5} parent=5 // pred_region
      %s117 = ssub.s32 %s9, 1
      // Predicated region
      $region13: #{self_embedding_block.5} parent=11 // pred_check
        %p118 = pneg %p56
      $region14: #{self_embedding_block.5} parent=11 // pred_check_branch
        %120 = sbr.rel (%p118) target = $region16
      $region15: #{self_embedding_block.5} parent=11 // pred_region
        _
      $region16: #{self_embedding_block.5} parent=11 // pred_fallthru
        _
      // Predicated region
      $region17: #{self_embedding_block.5} parent=11 // pred_check
        %p121 = pneg %p77
      $region18: #{self_embedding_block.5} parent=11 // pred_check_branch
        %123 = sbr.rel (%p121) target = $region20
      $region19: #{self_embedding_block.5} parent=11 // pred_region
        _
      $region20: #{self_embedding_block.5} parent=11 // pred_fallthru
        _
    $region12: #{self_embedding_block.5} parent=5 // pred_fallthru
      _
    %p124 = scmp.lt.s32.totalorder %s9, 2
    // Predicated region
    $region21: #{self_embedding_block.5} parent=5 // pred_check
      %p125 = pneg %p124
    $region22: #{self_embedding_block.5} parent=5 // pred_check_branch
      %127 = sbr.rel (%p125) target = $region24
    $region23: #{self_embedding_block.5} parent=5 // pred_region
      // Predicated region
      $region25: #{self_embedding_block.5} parent=23 // pred_check
        %p128 = pneg %p29
      $region26: #{self_embedding_block.5} parent=23 // pred_check_branch
        %130 = sbr.rel (%p128) target = $region28
      $region27: #{self_embedding_block.5} parent=23 // pred_region
        %p131 = scmp.lt.s32.totalorder %s9, 1
        %s132 = scalar_select %p131, %s9, 1
        %s133 = smul.addr %s132, 2
        %s134 = smul.addr %s133, 4
        %s135 = scalar_lea.vmem %s0, %s134
      $region28: #{self_embedding_block.5} parent=23 // pred_fallthru
        _
    $region24: #{self_embedding_block.5} parent=5 // pred_fallthru
      _
    %p136 = scmp.le.s32.totalorder 1, %s9
    %p137 = scmp.lt.s32.totalorder %s9, 3
    %p138 = pnand %p136, %p137
    %p139 = pneg %p138
    // Predicated region
    $region29: #{self_embedding_block.5} parent=5 // pred_check
      _
    $region30: #{self_embedding_block.5} parent=5 // pred_check_branch
      %141 = sbr.rel (%p138) target = $region32
    $region31: #{self_embedding_block.5} parent=5 // pred_region
      %s142 = ssub.s32 %s9, 1
      %p143 = scmp.lt.s32.totalorder %s14, 1
      %s144 = scalar_select %p143, %s14, 1
      %s145 = smul.addr %s144, 2
      %s146 = smul.addr %s145, 4
      %s147 = scalar_lea.vmem %s0, %s146
      %p148 = pneg %p35
      %p149 = pneg %p32
      %p150 = pneg %p56
      %p151 = pneg %p53
      %p152 = pneg %p77
      %p153 = pneg %p74
      %p154 = pneg %p103
      %p155 = pneg %p100
      %p156 = scmp.lt.s32.totalorder %s14, 1
      %s157 = scalar_select %p156, %s14, 1
      %s158 = smul.addr %s157, 4
      %s159 = scalar_lea.vmem %s3, %s158
      %p160 = scmp.lt.s32.totalorder %s14, 1
      %s161 = scalar_select %p160, %s14, 1
      %s162 = smul.addr %s161, 2
      %s163 = smul.addr %s162, 4
      %s164 = scalar_lea.vmem %s0, %s163
      %p165 = scmp.lt.s32.totalorder %s14, 1
      %s166 = scalar_select %p165, %s14, 1
      %s167 = smul.addr %s166, 4
      %s168 = scalar_lea.vmem %s3, %s167
      %v170 = vld [vmem:[%s164] sm:$0xf]
      %v171 = vld [vmem:[%s164 + $0x4] sm:$0x3]
      %v172 = vld [vmem:[%s1] sm:$0xf]
      %s173 = scalar_lea.vmem %s1, 4
      %v174 = vld [vmem:[%s173] sm:$0xf]
      %v176 = vunpack.c.l.b16 %v170
      %v177 = vpack.c.b16 %v176, %v176
      %v179 = vshrl.u32 %v177, 16
      %v181 = vrot.slane %v179, 1
      %v182 = vshll.u32 %v177, 16
      %v184 = vrot.slane %v182, 2
      %v185 = vor.u32 %v181, %v184
      %vm186 = vcmask 23552
      %v188 = vsel %vm186, %v174, 0
      %vm190 = vcmask 1040384
      %vm191 = vcmask 1041408
      %v192 = vsel %vm190, 4294967295, 65535
      %v193 = vsel %vm191, %v192, 0
      %v195 = vand.u32 %v185, %v193
      %197 = vmatprep.subr.bf16.mxu0 0
      %198 = vmatpush1.bf16.msra.mxu0 %v195
      %199 = vmatprep.subr.bf16.mxu0 0
      %200 = vmatpush1.bf16.msra.mxu0 0
      %201 = vmatprep.subr.bf16.mxu0 0
      %202 = vmatpush1.bf16.msra.mxu0 0
      %203 = vmatprep.subr.bf16.mxu0 0
      %204 = vmatpush1.bf16.msra.mxu0 0
      %205 = vmatprep.subr.bf16.mxu0 0
      %206 = vmatpush1.bf16.msra.mxu0 0
      %207 = vmatprep.subr.bf16.mxu0 0
      %208 = vmatpush1.bf16.msra.mxu0 0
      %209 = vmatprep.subr.bf16.mxu0 0
      %210 = vmatpush1.bf16.msra.mxu0 0
      %211 = vmatprep.subr.bf16.mxu0 0
      %212 = vmatpush1.bf16.msra.mxu0 0
      %213 = vmatprep.subr.bf16.mxu0 0
      %214 = vmatpush1.bf16.msra.mxu0 0
      %215 = vmatprep.subr.bf16.mxu0 0
      %216 = vmatpush1.bf16.msra.mxu0 0
      %217 = vmatprep.subr.bf16.mxu0 0
      %218 = vmatpush1.bf16.msra.mxu0 0
      %219 = vmatprep.subr.bf16.mxu0 0
      %220 = vmatpush1.bf16.msra.mxu0 0
      %221 = vmatprep.subr.bf16.mxu0 0
      %222 = vmatpush1.bf16.msra.mxu0 0
      %223 = vmatprep.subr.bf16.mxu0 0
      %224 = vmatpush1.bf16.msra.mxu0 0
      %225 = vmatprep.subr.bf16.mxu0 0
      %226 = vmatpush1.bf16.msra.mxu0 0
      %227 = vmatprep.subr.bf16.mxu0 0
      %228 = vmatpush1.bf16.msra.mxu0 0
      %229 = vmatprep.mubr.bf16.mxu0 0
      %230 = vmatmul.mubr.bf16.gmra.mrb[0].mxu0 %v188
      %v231 = vpop.f32.mrb[0].mxu0
      %v232 = vadd.f32 0.0, %v231
      %v233 = vpop.f32.mrb[0].mxu0
      %v234 = vpop.f32.mrb[0].mxu0
      %v235 = vpop.f32.mrb[0].mxu0
      %236 = vdwg.mxu0
      %v238 = vsel %vm186, %v172, 0
      %v241 = vand.u32 %v170, %v193
      %243 = vmatprep.subr.bf16.mxu0 0
      %244 = vmatpush1.bf16.msra.mxu0 %v241
      %245 = vmatprep.subr.bf16.mxu0 0
      %246 = vmatpush1.bf16.msra.mxu0 0
      %247 = vmatprep.subr.bf16.mxu0 0
      %248 = vmatpush1.bf16.msra.mxu0 0
      %249 = vmatprep.subr.bf16.mxu0 0
      %250 = vmatpush1.bf16.msra.mxu0 0
      %251 = vmatprep.subr.bf16.mxu0 0
      %252 = vmatpush1.bf16.msra.mxu0 0
      %253 = vmatprep.subr.bf16.mxu0 0
      %254 = vmatpush1.bf16.msra.mxu0 0
      %255 = vmatprep.subr.bf16.mxu0 0
      %256 = vmatpush1.bf16.msra.mxu0 0
      %257 = vmatprep.subr.bf16.mxu0 0
      %258 = vmatpush1.bf16.msra.mxu0 0
      %259 = vmatprep.subr.bf16.mxu0 0
      %260 = vmatpush1.bf16.msra.mxu0 0
      %261 = vmatprep.subr.bf16.mxu0 0
      %262 = vmatpush1.bf16.msra.mxu0 0
      %263 = vmatprep.subr.bf16.mxu0 0
      %264 = vmatpush1.bf16.msra.mxu0 0
      %265 = vmatprep.subr.bf16.mxu0 0
      %266 = vmatpush1.bf16.msra.mxu0 0
      %267 = vmatprep.subr.bf16.mxu0 0
      %268 = vmatpush1.bf16.msra.mxu0 0
      %269 = vmatprep.subr.bf16.mxu0 0
      %270 = vmatpush1.bf16.msra.mxu0 0
      %271 = vmatprep.subr.bf16.mxu0 0
      %272 = vmatpush1.bf16.msra.mxu0 0
      %273 = vmatprep.subr.bf16.mxu0 0
      %274 = vmatpush1.bf16.msra.mxu0 0
      %275 = vmatprep.mubr.bf16.mxu0 0
      %276 = vmatmul.mubr.bf16.gmra.mrb[0].mxu0 %v238
      %v277 = vpop.f32.mrb[0].mxu0
      %v278 = vadd.f32 %v232, %v277
      %v279 = vpop.f32.mrb[0].mxu0
      %v280 = vpop.f32.mrb[0].mxu0
      %v281 = vpop.f32.mrb[0].mxu0
      %282 = vdwg.mxu0
      %s283 = scalar_lea.vmem %s1, 8
      %v284 = vld [vmem:[%s283] sm:$0xf]
      %285 = vrot.lane.b32.xlu0 %v177, 127
      %v286 = vpop.permute.xlu0 %285
      %v288 = vsel %vm186, %v284, 0
      %v291 = vand.u32 %v286, %v193
      %293 = vmatprep.subr.bf16.mxu0 0
      %294 = vmatpush1.bf16.msra.mxu0 %v291
      %295 = vmatprep.subr.bf16.mxu0 0
      %296 = vmatpush1.bf16.msra.mxu0 0
      %297 = vmatprep.subr.bf16.mxu0 0
      %298 = vmatpush1.bf16.msra.mxu0 0
      %299 = vmatprep.subr.bf16.mxu0 0
      %300 = vmatpush1.bf16.msra.mxu0 0
      %301 = vmatprep.subr.bf16.mxu0 0
      %302 = vmatpush1.bf16.msra.mxu0 0
      %303 = vmatprep.subr.bf16.mxu0 0
      %304 = vmatpush1.bf16.msra.mxu0 0
      %305 = vmatprep.subr.bf16.mxu0 0
      %306 = vmatpush1.bf16.msra.mxu0 0
      %307 = vmatprep.subr.bf16.mxu0 0
      %308 = vmatpush1.bf16.msra.mxu0 0
      %309 = vmatprep.subr.bf16.mxu0 0
      %310 = vmatpush1.bf16.msra.mxu0 0
      %311 = vmatprep.subr.bf16.mxu0 0
      %312 = vmatpush1.bf16.msra.mxu0 0
      %313 = vmatprep.subr.bf16.mxu0 0
      %314 = vmatpush1.bf16.msra.mxu0 0
      %315 = vmatprep.subr.bf16.mxu0 0
      %316 = vmatpush1.bf16.msra.mxu0 0
      %317 = vmatprep.subr.bf16.mxu0 0
      %318 = vmatpush1.bf16.msra.mxu0 0
      %319 = vmatprep.subr.bf16.mxu0 0
      %320 = vmatpush1.bf16.msra.mxu0 0
      %321 = vmatprep.subr.bf16.mxu0 0
      %322 = vmatpush1.bf16.msra.mxu0 0
      %323 = vmatprep.subr.bf16.mxu0 0
      %324 = vmatpush1.bf16.msra.mxu0 0
      %325 = vmatprep.mubr.bf16.mxu0 0
      %326 = vmatmul.mubr.bf16.gmra.mrb[0].mxu0 %v288
      %v327 = vpop.f32.mrb[0].mxu0
      %v328 = vadd.f32 0.0, %v327
      %v329 = vpop.f32.mrb[0].mxu0
      %v330 = vpop.f32.mrb[0].mxu0
      %v331 = vpop.f32.mrb[0].mxu0
      %332 = vdwg.mxu0
      %v333 = vadd.f32 %v278, %v328
      %s334 = scalar_lea.vmem %s1, 12
      %v335 = vld [vmem:[%s334] sm:$0xf]
      %v337 = vunpack.c.l.b16 %v171
      %v338 = vpack.c.b16 %v337, %v176
      %v339 = vrot.slane %v338, 3
      %v341 = vsel %vm186, %v335, 0
      %v344 = vand.u32 %v339, %v193
      %346 = vmatprep.subr.bf16.mxu0 0
      %347 = vmatpush1.bf16.msra.mxu0 %v344
      %348 = vmatprep.subr.bf16.mxu0 0
      %349 = vmatpush1.bf16.msra.mxu0 0
      %350 = vmatprep.subr.bf16.mxu0 0
      %351 = vmatpush1.bf16.msra.mxu0 0
      %352 = vmatprep.subr.bf16.mxu0 0
      %353 = vmatpush1.bf16.msra.mxu0 0
      %354 = vmatprep.subr.bf16.mxu0 0
      %355 = vmatpush1.bf16.msra.mxu0 0
      %356 = vmatprep.subr.bf16.mxu0 0
      %357 = vmatpush1.bf16.msra.mxu0 0
      %358 = vmatprep.subr.bf16.mxu0 0
      %359 = vmatpush1.bf16.msra.mxu0 0
      %360 = vmatprep.subr.bf16.mxu0 0
      %361 = vmatpush1.bf16.msra.mxu0 0
      %362 = vmatprep.subr.bf16.mxu0 0
      %363 = vmatpush1.bf16.msra.mxu0 0
      %364 = vmatprep.subr.bf16.mxu0 0
      %365 = vmatpush1.bf16.msra.mxu0 0
      %366 = vmatprep.subr.bf16.mxu0 0
      %367 = vmatpush1.bf16.msra.mxu0 0
      %368 = vmatprep.subr.bf16.mxu0 0
      %369 = vmatpush1.bf16.msra.mxu0 0
      %370 = vmatprep.subr.bf16.mxu0 0
      %371 = vmatpush1.bf16.msra.mxu0 0
      %372 = vmatprep.subr.bf16.mxu0 0
      %373 = vmatpush1.bf16.msra.mxu0 0
      %374 = vmatprep.subr.bf16.mxu0 0
      %375 = vmatpush1.bf16.msra.mxu0 0
      %376 = vmatprep.subr.bf16.mxu0 0
      %377 = vmatpush1.bf16.msra.mxu0 0
      %378 = vmatprep.mubr.bf16.mxu0 0
      %379 = vmatmul.mubr.bf16.gmra.mrb[0].mxu0 %v341
      %v380 = vpop.f32.mrb[0].mxu0
      %v381 = vadd.f32 0.0, %v380
      %v382 = vpop.f32.mrb[0].mxu0
      %v383 = vpop.f32.mrb[0].mxu0
      %v384 = vpop.f32.mrb[0].mxu0
      %385 = vdwg.mxu0
      %v386 = vadd.f32 %v333, %v381
      %s387 = scalar_lea.vmem %s1, 16
      %v388 = vld [vmem:[%s387] sm:$0xf]
      %v389 = vpack.c.b16 %v337, %v337
      %v391 = vshrl.u32 %v389, 16
      %v393 = vshll.u32 %v389, 16
      %v395 = vrot.slane %v393, 1
      %v396 = vor.u32 %v391, %v395
      %v398 = vsel %vm186, %v388, 0
      %v401 = vand.u32 %v396, %v193
      %403 = vmatprep.subr.bf16.mxu0 0
      %404 = vmatpush1.bf16.msra.mxu0 %v401
      %405 = vmatprep.subr.bf16.mxu0 0
      %406 = vmatpush1.bf16.msra.mxu0 0
      %407 = vmatprep.subr.bf16.mxu0 0
      %408 = vmatpush1.bf16.msra.mxu0 0
      %409 = vmatprep.subr.bf16.mxu0 0
      %410 = vmatpush1.bf16.msra.mxu0 0
      %411 = vmatprep.subr.bf16.mxu0 0
      %412 = vmatpush1.bf16.msra.mxu0 0
      %413 = vmatprep.subr.bf16.mxu0 0
      %414 = vmatpush1.bf16.msra.mxu0 0
      %415 = vmatprep.subr.bf16.mxu0 0
      %416 = vmatpush1.bf16.msra.mxu0 0
      %417 = vmatprep.subr.bf16.mxu0 0
      %418 = vmatpush1.bf16.msra.mxu0 0
      %419 = vmatprep.subr.bf16.mxu0 0
      %420 = vmatpush1.bf16.msra.mxu0 0
      %421 = vmatprep.subr.bf16.mxu0 0
      %422 = vmatpush1.bf16.msra.mxu0 0
      %423 = vmatprep.subr.bf16.mxu0 0
      %424 = vmatpush1.bf16.msra.mxu0 0
      %425 = vmatprep.subr.bf16.mxu0 0
      %426 = vmatpush1.bf16.msra.mxu0 0
      %427 = vmatprep.subr.bf16.mxu0 0
      %428 = vmatpush1.bf16.msra.mxu0 0
      %429 = vmatprep.subr.bf16.mxu0 0
      %430 = vmatpush1.bf16.msra.mxu0 0
      %431 = vmatprep.subr.bf16.mxu0 0
      %432 = vmatpush1.bf16.msra.mxu0 0
      %433 = vmatprep.subr.bf16.mxu0 0
      %434 = vmatpush1.bf16.msra.mxu0 0
      %435 = vmatprep.mubr.bf16.mxu0 0
      %436 = vmatmul.mubr.bf16.gmra.mrb[0].mxu0 %v398
      %v437 = vpop.f32.mrb[0].mxu0
      %v438 = vadd.f32 0.0, %v437
      %v439 = vpop.f32.mrb[0].mxu0
      %v440 = vpop.f32.mrb[0].mxu0
      %v441 = vpop.f32.mrb[0].mxu0
      %442 = vdwg.mxu0
      %v443 = vadd.f32 %v386, %v438
      %s444 = scalar_lea.vmem %s1, 20
      %v445 = vld [vmem:[%s444] sm:$0xf]
      %446 = vrot.lane.b32.xlu0 %v339, 127
      %v447 = vpop.permute.xlu0 %446
      %v449 = vsel %vm186, %v445, 0
      %v452 = vand.u32 %v447, %v193
      %454 = vmatprep.subr.bf16.mxu0 0
      %455 = vmatpush1.bf16.msra.mxu0 %v452
      %456 = vmatprep.subr.bf16.mxu0 0
      %457 = vmatpush1.bf16.msra.mxu0 0
      %458 = vmatprep.subr.bf16.mxu0 0
      %459 = vmatpush1.bf16.msra.mxu0 0
      %460 = vmatprep.subr.bf16.mxu0 0
      %461 = vmatpush1.bf16.msra.mxu0 0
      %462 = vmatprep.subr.bf16.mxu0 0
      %463 = vmatpush1.bf16.msra.mxu0 0
      %464 = vmatprep.subr.bf16.mxu0 0
      %465 = vmatpush1.bf16.msra.mxu0 0
      %466 = vmatprep.subr.bf16.mxu0 0
      %467 = vmatpush1.bf16.msra.mxu0 0
      %468 = vmatprep.subr.bf16.mxu0 0
      %469 = vmatpush1.bf16.msra.mxu0 0
      %470 = vmatprep.subr.bf16.mxu0 0
      %471 = vmatpush1.bf16.msra.mxu0 0
      %472 = vmatprep.subr.bf16.mxu0 0
      %473 = vmatpush1.bf16.msra.mxu0 0
      %474 = vmatprep.subr.bf16.mxu0 0
      %475 = vmatpush1.bf16.msra.mxu0 0
      %476 = vmatprep.subr.bf16.mxu0 0
      %477 = vmatpush1.bf16.msra.mxu0 0
      %478 = vmatprep.subr.bf16.mxu0 0
      %479 = vmatpush1.bf16.msra.mxu0 0
      %480 = vmatprep.subr.bf16.mxu0 0
      %481 = vmatpush1.bf16.msra.mxu0 0
      %482 = vmatprep.subr.bf16.mxu0 0
      %483 = vmatpush1.bf16.msra.mxu0 0
      %484 = vmatprep.subr.bf16.mxu0 0
      %485 = vmatpush1.bf16.msra.mxu0 0
      %486 = vmatprep.mubr.bf16.mxu0 0
      %487 = vmatmul.mubr.bf16.gmra.mrb[0].mxu0 %v449
      %v488 = vpop.f32.mrb[0].mxu0
      %v489 = vadd.f32 0.0, %v488
      %v490 = vpop.f32.mrb[0].mxu0
      %v491 = vpop.f32.mrb[0].mxu0
      %v492 = vpop.f32.mrb[0].mxu0
      %493 = vdwg.mxu0
      %v494 = vadd.f32 %v443, %v489
      %s495 = scalar_lea.vmem %s1, 24
      %v496 = vld [vmem:[%s495] sm:$0xf]
      %497 = vrot.lane.b32.xlu0 %v177, 119
      %v498 = vpop.permute.xlu0 %497
      %v500 = vsel %vm186, %v496, 0
      %v503 = vand.u32 %v498, %v193
      %505 = vmatprep.subr.bf16.mxu0 0
      %506 = vmatpush1.bf16.msra.mxu0 %v503
      %507 = vmatprep.subr.bf16.mxu0 0
      %508 = vmatpush1.bf16.msra.mxu0 0
      %509 = vmatprep.subr.bf16.mxu0 0
      %510 = vmatpush1.bf16.msra.mxu0 0
      %511 = vmatprep.subr.bf16.mxu0 0
      %512 = vmatpush1.bf16.msra.mxu0 0
      %513 = vmatprep.subr.bf16.mxu0 0
      %514 = vmatpush1.bf16.msra.mxu0 0
      %515 = vmatprep.subr.bf16.mxu0 0
      %516 = vmatpush1.bf16.msra.mxu0 0
      %517 = vmatprep.subr.bf16.mxu0 0
      %518 = vmatpush1.bf16.msra.mxu0 0
      %519 = vmatprep.subr.bf16.mxu0 0
      %520 = vmatpush1.bf16.msra.mxu0 0
      %521 = vmatprep.subr.bf16.mxu0 0
      %522 = vmatpush1.bf16.msra.mxu0 0
      %523 = vmatprep.subr.bf16.mxu0 0
      %524 = vmatpush1.bf16.msra.mxu0 0
      %525 = vmatprep.subr.bf16.mxu0 0
      %526 = vmatpush1.bf16.msra.mxu0 0
      %527 = vmatprep.subr.bf16.mxu0 0
      %528 = vmatpush1.bf16.msra.mxu0 0
      %529 = vmatprep.subr.bf16.mxu0 0
      %530 = vmatpush1.bf16.msra.mxu0 0
      %531 = vmatprep.subr.bf16.mxu0 0
      %532 = vmatpush1.bf16.msra.mxu0 0
      %533 = vmatprep.subr.bf16.mxu0 0
      %534 = vmatpush1.bf16.msra.mxu0 0
      %535 = vmatprep.subr.bf16.mxu0 0
      %536 = vmatpush1.bf16.msra.mxu0 0
      %537 = vmatprep.mubr.bf16.mxu0 0
      %538 = vmatmul.mubr.bf16.gmra.mrb[0].mxu0 %v500
      %v539 = vpop.f32.mrb[0].mxu0
      %v540 = vadd.f32 0.0, %v539
      %v541 = vpop.f32.mrb[0].mxu0
      %v542 = vpop.f32.mrb[0].mxu0
      %v543 = vpop.f32.mrb[0].mxu0
      %544 = vdwg.mxu0
      %v545 = vadd.f32 %v494, %v540
      %s546 = scalar_lea.vmem %s1, 28
      %v547 = vld [vmem:[%s546] sm:$0xf]
      %548 = vrot.lane.b32.xlu0 %v185, 119
      %v549 = vpop.permute.xlu0 %548
      %v551 = vsel %vm186, %v547, 0
      %v554 = vand.u32 %v549, %v193
      %556 = vmatprep.subr.bf16.mxu0 0
      %557 = vmatpush1.bf16.msra.mxu0 %v554
      %558 = vmatprep.subr.bf16.mxu0 0
      %559 = vmatpush1.bf16.msra.mxu0 0
      %560 = vmatprep.subr.bf16.mxu0 0
      %561 = vmatpush1.bf16.msra.mxu0 0
      %562 = vmatprep.subr.bf16.mxu0 0
      %563 = vmatpush1.bf16.msra.mxu0 0
      %564 = vmatprep.subr.bf16.mxu0 0
      %565 = vmatpush1.bf16.msra.mxu0 0
      %566 = vmatprep.subr.bf16.mxu0 0
      %567 = vmatpush1.bf16.msra.mxu0 0
      %568 = vmatprep.subr.bf16.mxu0 0
      %569 = vmatpush1.bf16.msra.mxu0 0
      %570 = vmatprep.subr.bf16.mxu0 0
      %571 = vmatpush1.bf16.msra.mxu0 0
      %572 = vmatprep.subr.bf16.mxu0 0
      %573 = vmatpush1.bf16.msra.mxu0 0
      %574 = vmatprep.subr.bf16.mxu0 0
      %575 = vmatpush1.bf16.msra.mxu0 0
      %576 = vmatprep.subr.bf16.mxu0 0
      %577 = vmatpush1.bf16.msra.mxu0 0
      %578 = vmatprep.subr.bf16.mxu0 0
      %579 = vmatpush1.bf16.msra.mxu0 0
      %580 = vmatprep.subr.bf16.mxu0 0
      %581 = vmatpush1.bf16.msra.mxu0 0
      %582 = vmatprep.subr.bf16.mxu0 0
      %583 = vmatpush1.bf16.msra.mxu0 0
      %584 = vmatprep.subr.bf16.mxu0 0
      %585 = vmatpush1.bf16.msra.mxu0 0
      %586 = vmatprep.subr.bf16.mxu0 0
      %587 = vmatpush1.bf16.msra.mxu0 0
      %588 = vmatprep.mubr.bf16.mxu0 0
      %589 = vmatmul.mubr.bf16.gmra.mrb[0].mxu0 %v551
      %v590 = vpop.f32.mrb[0].mxu0
      %v591 = vadd.f32 0.0, %v590
      %v592 = vpop.f32.mrb[0].mxu0
      %v593 = vpop.f32.mrb[0].mxu0
      %v594 = vpop.f32.mrb[0].mxu0
      %595 = vdwg.mxu0
      %v596 = vadd.f32 %v545, %v591
      %s597 = scalar_lea.vmem %s1, 32
      %v598 = vld [vmem:[%s597] sm:$0xf]
      %599 = vrot.lane.b32.xlu0 %v177, 118
      %v600 = vpop.permute.xlu0 %599
      %v602 = vsel %vm186, %v598, 0
      %v605 = vand.u32 %v600, %v193
      %607 = vmatprep.subr.bf16.mxu0 0
      %608 = vmatpush1.bf16.msra.mxu0 %v605
      %609 = vmatprep.subr.bf16.mxu0 0
      %610 = vmatpush1.bf16.msra.mxu0 0
      %611 = vmatprep.subr.bf16.mxu0 0
      %612 = vmatpush1.bf16.msra.mxu0 0
      %613 = vmatprep.subr.bf16.mxu0 0
      %614 = vmatpush1.bf16.msra.mxu0 0
      %615 = vmatprep.subr.bf16.mxu0 0
      %616 = vmatpush1.bf16.msra.mxu0 0
      %617 = vmatprep.subr.bf16.mxu0 0
      %618 = vmatpush1.bf16.msra.mxu0 0
      %619 = vmatprep.subr.bf16.mxu0 0
      %620 = vmatpush1.bf16.msra.mxu0 0
      %621 = vmatprep.subr.bf16.mxu0 0
      %622 = vmatpush1.bf16.msra.mxu0 0
      %623 = vmatprep.subr.bf16.mxu0 0
      %624 = vmatpush1.bf16.msra.mxu0 0
      %625 = vmatprep.subr.bf16.mxu0 0
      %626 = vmatpush1.bf16.msra.mxu0 0
      %627 = vmatprep.subr.bf16.mxu0 0
      %628 = vmatpush1.bf16.msra.mxu0 0
      %629 = vmatprep.subr.bf16.mxu0 0
      %630 = vmatpush1.bf16.msra.mxu0 0
      %631 = vmatprep.subr.bf16.mxu0 0
      %632 = vmatpush1.bf16.msra.mxu0 0
      %633 = vmatprep.subr.bf16.mxu0 0
      %634 = vmatpush1.bf16.msra.mxu0 0
      %635 = vmatprep.subr.bf16.mxu0 0
      %636 = vmatpush1.bf16.msra.mxu0 0
      %637 = vmatprep.subr.bf16.mxu0 0
      %638 = vmatpush1.bf16.msra.mxu0 0
      %639 = vmatprep.mubr.bf16.mxu0 0
      %640 = vmatmul.mubr.bf16.gmra.mrb[0].mxu0 %v602
      %v641 = vpop.f32.mrb[0].mxu0
      %v642 = vadd.f32 0.0, %v641
      %v643 = vpop.f32.mrb[0].mxu0
      %v644 = vpop.f32.mrb[0].mxu0
      %v645 = vpop.f32.mrb[0].mxu0
      %646 = vdwg.mxu0
      %v647 = vadd.f32 %v596, %v642
      %v648 = vld [vmem:[%s2] sm:$0xff]
      %650 = vset.pattern.permute.xlu0 0
      %651 = vperm.xlu0 %650, %v648
      %v652 = vpop.permute.xlu0 %651
      %v654 = vmul.f32 %v647, %v652
      %655 = vset.pattern.permute.xlu0 1
      %656 = vperm.xlu0 %655, %v648
      %v657 = vpop.permute.xlu0 %656
      %v659 = vadd.f32 %v654, %v657
      %vm660 = vcmp.gt.f32.partialorder %v659, 0.0
      %v661 = vmul.f32 %v659, 0.2
      %v662 = vsel %vm660, %v659, %v661
      %v663 = vpack.c.bf16 %v662, %v662
      %vm664 = vcmask 584704
      %665 = vst.msk [vmem:[%s168] sm:$0xf] %vm664, %v663
      %p666 = scmp.lt.s32.totalorder %s14, 1
      %s667 = scalar_select %p666, %s14, 1
      %s668 = smul.addr %s667, 4
      %s669 = scalar_lea.vmem %s3, %s668
      // Predicated region
      $region33: #{self_embedding_block.5} parent=31 // pred_check
        %p670 = pneg %p100
      $region34: #{self_embedding_block.5} parent=31 // pred_check_branch
        %672 = sbr.rel (%p670) target = $region36
      $region35: #{self_embedding_block.5} parent=31 // pred_region
        _
      $region36: #{self_embedding_block.5} parent=31 // pred_fallthru
        _
    $region32: #{self_embedding_block.5} parent=5 // pred_fallthru
      _
    %p673 = scmp.le.s32.totalorder 2, %s9
    // Predicated region
    $region37: #{self_embedding_block.5} parent=5 // pred_check
      %p674 = pneg %p673
    $region38: #{self_embedding_block.5} parent=5 // pred_check_branch
      %676 = sbr.rel (%p674) target = $region40
    $region39: #{self_embedding_block.5} parent=5 // pred_region
      %s677 = ssub.s32 %s9, 2
      // Predicated region
      $region41: #{self_embedding_block.5} parent=39 // pred_check
        %p678 = pneg %p106
      $region42: #{self_embedding_block.5} parent=39 // pred_check_branch
        %680 = sbr.rel (%p678) target = $region44
      $region43: #{self_embedding_block.5} parent=39 // pred_region
        %p681 = scmp.lt.s32.totalorder %s15, 1
        %s682 = scalar_select %p681, %s15, 1
        %s683 = smul.addr %s682, 4
        %s684 = scalar_lea.vmem %s3, %s683
      $region44: #{self_embedding_block.5} parent=39 // pred_fallthru
        _
    $region40: #{self_embedding_block.5} parent=5 // pred_fallthru
      _
  $region6: #{self_embedding_block.5} parent=0 // loop_footer
    %s13 = sadd.s32 1, %s9
  $region7: #{self_embedding_block.5} parent=0 // loop_footer_branch
    %8 = sbr.rel target = $region3
  $region8: #{self_embedding_block.5} parent=0 // loop_exit
    _

// kernel: self_embedding_block.4
$region0: #{self_embedding_block.4}
  #allocation0 [shape = 'u32[]', space=smem, size = 0x4, offset = 0x4, fixed_abs, tag = 'smem constant byte address 0x4 - core index']
  #allocation1 [shape = 'u32[144,128]{1,0:T(1,128)}', space=vmem, size = 0x12000, scoped, tag = 'internal scratch']
  #allocation2 [shape = 'bf16[3,324]{1,0:T(4,128)(2,1)}', space=vmem, size = 0xc00, scoped, tag = 'scratch operand']
  %s0 = inlined_call_operand.vmem [shape: bf16[2,3,324], index: 0, kind: input, shape index: {}]
  %s1 = inlined_call_operand.vmem [shape: bf16[3,9,3,3], index: 1, kind: input, shape index: {}]
  %s2 = inlined_call_operand.vmem [shape: f32[3,3,2], index: 2, kind: input, shape index: {}]
  %s3 = inlined_call_operand.vmem [shape: f32[1,286], index: 3, kind: input, shape index: {}]
  %s4 = inlined_call_operand.vmem [shape: bf16[2,3,324], index: 4, kind: output, shape index: {}]
  %s5 = sld [smem:[#allocation0]]
  $region49: #{self_embedding_block.4} parent=0
    _
  %s7 = ssub.s32 1, %s5
  %s8 = scalar_select 0, %s7, %s5
  loop: start=0, step=1, limit=4
  $region2: #{self_embedding_block.4} parent=0 // loop_pre_header
    _
  $region3: #{self_embedding_block.4} parent=0 // loop_header
    %s10 = sphi 0, %s14
    %p11 = scmp.ge.s32.totalorder %s10, 4
    %s20 = sphi 0, %s22
    %s23 = sphi 0, %s20
    %s24 = sphi 0, %s23
    %s40 = sphi 0, %s24
    %s44 = sphi 0, %s44
    %s46 = sphi 0, %s44
    %s47 = sphi 0, %s46
    %s61 = sphi 0, %s47
    %s65 = sphi 0, %s65
    %s67 = sphi 0, %s65
    %s68 = sphi 0, %s67
    %s82 = sphi 0, %s68
    %s86 = sphi 0, %s86
    %s88 = sphi 0, %s86
    %s89 = sphi 0, %s88
    %s103 = sphi 0, %s89
    %s109 = sphi 0, %s111
    %s112 = sphi 0, %s109
    %s113 = sphi 0, %s112
    %s129 = sphi 0, %s113
  $region4: #{self_embedding_block.4} parent=0 // loop_header_branch
    %13 = sbr.rel (%p11) target = $region8
  $region5: #{self_embedding_block.4} parent=0 // loop_body
    %s15 = ssub.s32 %s10, 1
    %s16 = ssub.s32 %s10, 2
    %s17 = sadd.s32 %s10, 1
    %s18 = ssub.s32 %s10, %s17
    %p19 = scmp.eq.s32.totalorder %s18, 0
    %s21 = sadd.s32 %s20, 1
    %s22 = scalar_select %p19, %s20, %s21
    %p25 = pneg %p19
    %p26 = scmp.eq.s32.totalorder %s10, 1
    %p27 = por %p25, %p26
    %p28 = scmp.ne.s32.totalorder %s20, %s23
    %p29 = scmp.eq.s32.totalorder %s10, 0
    %p30 = por %p28, %p29
    %p31 = scmp.ne.s32.totalorder %s20, %s23
    %p32 = scmp.eq.s32.totalorder %s15, 1
    %p33 = por %p31, %p32
    %p34 = scmp.ne.s32.totalorder %s23, %s24
    %p35 = scmp.eq.s32.totalorder %s15, 0
    %p36 = por %p34, %p35
    %p37 = scmp.ne.s32.totalorder %s23, %s24
    %p38 = scmp.eq.s32.totalorder %s16, 1
    %p39 = por %p37, %p38
    %p41 = scmp.ne.s32.totalorder %s24, %s40
    %p42 = scmp.eq.s32.totalorder %s16, 0
    %p43 = por %p41, %p42
    %s45 = sadd.s32 %s44, 1
    %p48 = scmp.eq.s32.totalorder %s10, 1
    %p49 = scmp.ne.s32.totalorder %s44, %s46
    %p50 = scmp.eq.s32.totalorder %s10, 0
    %p51 = por %p49, %p50
    %p52 = scmp.ne.s32.totalorder %s44, %s46
    %p53 = scmp.eq.s32.totalorder %s15, 1
    %p54 = por %p52, %p53
    %p55 = scmp.ne.s32.totalorder %s46, %s47
    %p56 = scmp.eq.s32.totalorder %s15, 0
    %p57 = por %p55, %p56
    %p58 = scmp.ne.s32.totalorder %s46, %s47
    %p59 = scmp.eq.s32.totalorder %s16, 1
    %p60 = por %p58, %p59
    %p62 = scmp.ne.s32.totalorder %s47, %s61
    %p63 = scmp.eq.s32.totalorder %s16, 0
    %p64 = por %p62, %p63
    %s66 = sadd.s32 %s65, 1
    %p69 = scmp.eq.s32.totalorder %s10, 1
    %p70 = scmp.ne.s32.totalorder %s65, %s67
    %p71 = scmp.eq.s32.totalorder %s10, 0
    %p72 = por %p70, %p71
    %p73 = scmp.ne.s32.totalorder %s65, %s67
    %p74 = scmp.eq.s32.totalorder %s15, 1
    %p75 = por %p73, %p74
    %p76 = scmp.ne.s32.totalorder %s67, %s68
    %p77 = scmp.eq.s32.totalorder %s15, 0
    %p78 = por %p76, %p77
    %p79 = scmp.ne.s32.totalorder %s67, %s68
    %p80 = scmp.eq.s32.totalorder %s16, 1
    %p81 = por %p79, %p80
    %p83 = scmp.ne.s32.totalorder %s68, %s82
    %p84 = scmp.eq.s32.totalorder %s16, 0
    %p85 = por %p83, %p84
    %s87 = sadd.s32 %s86, 1
    %p90 = scmp.eq.s32.totalorder %s10, 1
    %p91 = scmp.ne.s32.totalorder %s86, %s88
    %p92 = scmp.eq.s32.totalorder %s10, 0
    %p93 = por %p91, %p92
    %p94 = scmp.ne.s32.totalorder %s86, %s88
    %p95 = scmp.eq.s32.totalorder %s15, 1
    %p96 = por %p94, %p95
    %p97 = scmp.ne.s32.totalorder %s88, %s89
    %p98 = scmp.eq.s32.totalorder %s15, 0
    %p99 = por %p97, %p98
    %p100 = scmp.ne.s32.totalorder %s88, %s89
    %p101 = scmp.eq.s32.totalorder %s16, 1
    %p102 = por %p100, %p101
    %p104 = scmp.ne.s32.totalorder %s89, %s103
    %p105 = scmp.eq.s32.totalorder %s16, 0
    %p106 = por %p104, %p105
    %s107 = ssub.s32 %s10, %s17
    %p108 = scmp.eq.s32.totalorder %s107, 0
    %s110 = sadd.s32 %s109, 1
    %s111 = scalar_select %p108, %s109, %s110
    %p114 = pneg %p108
    %p115 = scmp.eq.s32.totalorder %s10, 1
    %p116 = por %p114, %p115
    %p117 = scmp.ne.s32.totalorder %s109, %s112
    %p118 = scmp.eq.s32.totalorder %s10, 0
    %p119 = por %p117, %p118
    %p120 = scmp.ne.s32.totalorder %s109, %s112
    %p121 = scmp.eq.s32.totalorder %s15, 1
    %p122 = por %p120, %p121
    %p123 = scmp.ne.s32.totalorder %s112, %s113
    %p124 = scmp.eq.s32.totalorder %s15, 0
    %p125 = por %p123, %p124
    %p126 = scmp.ne.s32.totalorder %s112, %s113
    %p127 = scmp.eq.s32.totalorder %s16, 1
    %p128 = por %p126, %p127
    %p130 = scmp.ne.s32.totalorder %s113, %s129
    %p131 = scmp.eq.s32.totalorder %s16, 0
    %p132 = por %p130, %p131
    %p133 = scmp.le.s32.totalorder 1, %s10
    %p134 = scmp.lt.s32.totalorder %s10, 3
    %p135 = pnand %p133, %p134
    %p136 = pneg %p135
    // Predicated region
    $region9: #{self_embedding_block.4} parent=5 // pred_check
      _
    $region10: #{self_embedding_block.4} parent=5 // pred_check_branch
      %138 = sbr.rel (%p135) target = $region12
    $region11: #{self_embedding_block.4} parent=5 // pred_region
      %s139 = ssub.s32 %s10, 1
      // Predicated region
      $region13: #{self_embedding_block.4} parent=11 // pred_check
        %p140 = pneg %p57
      $region14: #{self_embedding_block.4} parent=11 // pred_check_branch
        %142 = sbr.rel (%p140) target = $region16
      $region15: #{self_embedding_block.4} parent=11 // pred_region
        _
      $region16: #{self_embedding_block.4} parent=11 // pred_fallthru
        _
      // Predicated region
      $region17: #{self_embedding_block.4} parent=11 // pred_check
        %p143 = pneg %p78
      $region18: #{self_embedding_block.4} parent=11 // pred_check_branch
        %145 = sbr.rel (%p143) target = $region20
      $region19: #{self_embedding_block.4} parent=11 // pred_region
        _
      $region20: #{self_embedding_block.4} parent=11 // pred_fallthru
        _
      // Predicated region
      $region21: #{self_embedding_block.4} parent=11 // pred_check
        %p146 = pneg %p99
      $region22: #{self_embedding_block.4} parent=11 // pred_check_branch
        %148 = sbr.rel (%p146) target = $region24
      $region23: #{self_embedding_block.4} parent=11 // pred_region
        _
      $region24: #{self_embedding_block.4} parent=11 // pred_fallthru
        _
    $region12: #{self_embedding_block.4} parent=5 // pred_fallthru
      _
    %p149 = scmp.lt.s32.totalorder %s10, 2
    // Predicated region
    $region25: #{self_embedding_block.4} parent=5 // pred_check
      %p150 = pneg %p149
    $region26: #{self_embedding_block.4} parent=5 // pred_check_branch
      %152 = sbr.rel (%p150) target = $region28
    $region27: #{self_embedding_block.4} parent=5 // pred_region
      // Predicated region
      $region29: #{self_embedding_block.4} parent=27 // pred_check
        %p153 = pneg %p30
      $region30: #{self_embedding_block.4} parent=27 // pred_check_branch
        %155 = sbr.rel (%p153) target = $region32
      $region31: #{self_embedding_block.4} parent=27 // pred_region
        %p156 = scmp.lt.s32.totalorder %s10, 1
        %s157 = scalar_select %p156, %s10, 1
        %s158 = smul.addr %s157, 3
        %s159 = smul.addr %s158, 2
        %s160 = scalar_lea.vmem %s0, %s159
      $region32: #{self_embedding_block.4} parent=27 // pred_fallthru
        _
    $region28: #{self_embedding_block.4} parent=5 // pred_fallthru
      _
    %p161 = scmp.le.s32.totalorder 1, %s10
    %p162 = scmp.lt.s32.totalorder %s10, 3
    %p163 = pnand %p161, %p162
    %p164 = pneg %p163
    // Predicated region
    $region33: #{self_embedding_block.4} parent=5 // pred_check
      _
    $region34: #{self_embedding_block.4} parent=5 // pred_check_branch
      %166 = sbr.rel (%p163) target = $region36
    $region35: #{self_embedding_block.4} parent=5 // pred_region
      %s167 = ssub.s32 %s10, 1
      %p168 = scmp.lt.s32.totalorder %s15, 1
      %s169 = scalar_select %p168, %s15, 1
      %s170 = smul.addr %s169, 3
      %s171 = smul.addr %s170, 2
      %s172 = scalar_lea.vmem %s0, %s171
      %p173 = pneg %p36
      %p174 = pneg %p33
      %p175 = pneg %p57
      %p176 = pneg %p54
      %p177 = pneg %p78
      %p178 = pneg %p75
      %p179 = pneg %p99
      %p180 = pneg %p96
      %p181 = pneg %p125
      %p182 = pneg %p122
      %p183 = scmp.lt.s32.totalorder %s15, 1
      %s184 = scalar_select %p183, %s15, 1
      %s185 = smul.addr %s184, 3
      %s186 = smul.addr %s185, 2
      %s187 = scalar_lea.vmem %s4, %s186
      %p188 = scmp.lt.s32.totalorder %s15, 1
      %s189 = scalar_select %p188, %s15, 1
      %s190 = smul.addr %s189, 3
      %s191 = smul.addr %s190, 2
      %s192 = scalar_lea.vmem %s0, %s191
      %p193 = scmp.lt.s32.totalorder %s15, 1
      %s194 = scalar_select %p193, %s15, 1
      %s195 = smul.addr %s194, 3
      %s196 = smul.addr %s195, 2
      %s197 = scalar_lea.vmem %s4, %s196
      %v199 = vld [vmem:[%s3] sm:$0x7]
      %vm200 = vcmask 1041408
      %vm201 = vsmask.f32 1280
      %vm202 = vmand %vm200, %vm201
      %vm203 = vcmask 1043458
      %vm204 = vsmask.f32 3328
      %vm205 = vmand %vm203, %vm204
      %vm206 = vmor %vm205, %vm202
      %vm207 = vcmask 553988
      %vm208 = vsmask.f32 5376
      %vm209 = vmand %vm207, %vm208
      %vm210 = vmor %vm209, %vm206
      %v211 = vld [vmem:[#allocation2] sm:$0x3f]
      %v212 = vsel %vm210, 0, %v211
      %213 = vst [vmem:[#allocation2] sm:$0x3f] %v212
      %v214 = vld [vmem:[%s192] sm:$0x3f]
      %v215 = vld [vmem:[%s1] sm:$0x3]
      %s216 = scalar_lea.vmem %s1, 2
      %v217 = vld [vmem:[%s216] sm:$0x3]
      %v219 = vcombine.high %v214, %v214
      %v221 = vunpack.c.l.s4 1983009808
      %v222 = vunpack.c.0.s8 %v221
      %v223 = vlaneseq
      %v224 = vshrl.u32 %v223, 7
      %v225 = vsub.s32 %v222, %v224
      %v226 = vrot.slane %v214, %v225
      %v228 = vunpack.c.l.s4 1983009808
      %v229 = vunpack.c.0.s8 %v228
      %v230 = vlaneseq
      %v231 = vshrl.u32 %v230, 7
      %v232 = vsub.s32 %v229, %v231
      %v233 = vrot.slane %v219, %v232
      %v234 = vcombine.high %v226, %v226
      %235 = vrot.lane.b32.xlu0 %v226, 127
      %v236 = vpop.permute.xlu0 %235
      %237 = vrot.lane.b32.xlu0 %v234, 127
      %v238 = vpop.permute.xlu0 %237
      %239 = vrot.lane.b32.xlu0 %v233, 127
      %v240 = vpop.permute.xlu0 %239
      %vm241 = vcmask 1039360
      %v242 = vsel %vm241, %v236, %v238
      %v243 = vsel %vm241, %v238, %v240
      %vm244 = vcmask 23552
      %v246 = vsel %vm244, %v217, 0
      %vm248 = vcmask 1040384
      %vm249 = vcmask 1041408
      %v250 = vsel %vm248, 4294967295, 65535
      %v251 = vsel %vm249, %v250, 0
      %v253 = vand.u32 %v242, %v251
      %v256 = vand.u32 %v243, %v251
      %v259 = vand.u32 %v240, %v251
      %261 = vmatprep.subr.bf16.mxu0 %v256
      %262 = vmatpush1.bf16.msra.mxu0 %v253
      %263 = vmatprep.subr.bf16.mxu0 0
      %264 = vmatpush1.bf16.msra.mxu0 0
      %265 = vmatprep.subr.bf16.mxu0 0
      %266 = vmatpush1.bf16.msra.mxu0 0
      %267 = vmatprep.subr.bf16.mxu0 0
      %268 = vmatpush1.bf16.msra.mxu0 0
      %269 = vmatprep.subr.bf16.mxu0 0
      %270 = vmatpush1.bf16.msra.mxu0 0
      %271 = vmatprep.subr.bf16.mxu0 0
      %272 = vmatpush1.bf16.msra.mxu0 0
      %273 = vmatprep.subr.bf16.mxu0 0
      %274 = vmatpush1.bf16.msra.mxu0 0
      %275 = vmatprep.subr.bf16.mxu0 0
      %276 = vmatpush1.bf16.msra.mxu0 0
      %277 = vmatprep.subr.bf16.mxu0 0
      %278 = vmatpush1.bf16.msra.mxu0 0
      %279 = vmatprep.subr.bf16.mxu0 0
      %280 = vmatpush1.bf16.msra.mxu0 0
      %281 = vmatprep.subr.bf16.mxu0 0
      %282 = vmatpush1.bf16.msra.mxu0 0
      %283 = vmatprep.subr.bf16.mxu0 0
      %284 = vmatpush1.bf16.msra.mxu0 0
      %285 = vmatprep.subr.bf16.mxu0 0
      %286 = vmatpush1.bf16.msra.mxu0 0
      %287 = vmatprep.subr.bf16.mxu0 0
      %288 = vmatpush1.bf16.msra.mxu0 0
      %289 = vmatprep.subr.bf16.mxu0 0
      %290 = vmatpush1.bf16.msra.mxu0 0
      %291 = vmatprep.subr.bf16.mxu0 0
      %292 = vmatpush1.bf16.msra.mxu0 0
      %293 = vmatprep.mubr.bf16.mxu0 0
      %294 = vmatmul.mubr.bf16.gmra.mrb[0].mxu0 %v246
      %v295 = vpop.f32.mrb[0].mxu0
      %v296 = vadd.f32 0.0, %v295
      %v297 = vpop.f32.mrb[0].mxu0
      %v298 = vadd.f32 0.0, %v297
      %v299 = vpop.f32.mrb[0].mxu0
      %v300 = vpop.f32.mrb[0].mxu0
      %301 = vdwg.mxu0
      %302 = vmatprep.subr.bf16.mxu0 0
      %303 = vmatpush1.bf16.msra.mxu0 %v259
      %304 = vmatprep.subr.bf16.mxu0 0
      %305 = vmatpush1.bf16.msra.mxu0 0
      %306 = vmatprep.subr.bf16.mxu0 0
      %307 = vmatpush1.bf16.msra.mxu0 0
      %308 = vmatprep.subr.bf16.mxu0 0
      %309 = vmatpush1.bf16.msra.mxu0 0
      %310 = vmatprep.subr.bf16.mxu0 0
      %311 = vmatpush1.bf16.msra.mxu0 0
      %312 = vmatprep.subr.bf16.mxu0 0
      %313 = vmatpush1.bf16.msra.mxu0 0
      %314 = vmatprep.subr.bf16.mxu0 0
      %315 = vmatpush1.bf16.msra.mxu0 0
      %316 = vmatprep.subr.bf16.mxu0 0
      %317 = vmatpush1.bf16.msra.mxu0 0
      %318 = vmatprep.subr.bf16.mxu0 0
      %319 = vmatpush1.bf16.msra.mxu0 0
      %320 = vmatprep.subr.bf16.mxu0 0
      %321 = vmatpush1.bf16.msra.mxu0 0
      %322 = vmatprep.subr.bf16.mxu0 0
      %323 = vmatpush1.bf16.msra.mxu0 0
      %324 = vmatprep.subr.bf16.mxu0 0
      %325 = vmatpush1.bf16.msra.mxu0 0
      %326 = vmatprep.subr.bf16.mxu0 0
      %327 = vmatpush1.bf16.msra.mxu0 0
      %328 = vmatprep.subr.bf16.mxu0 0
      %329 = vmatpush1.bf16.msra.mxu0 0
      %330 = vmatprep.subr.bf16.mxu0 0
      %331 = vmatpush1.bf16.msra.mxu0 0
      %332 = vmatprep.subr.bf16.mxu0 0
      %333 = vmatpush1.bf16.msra.mxu0 0
      %334 = vmatprep.mubr.bf16.mxu0 0
      %335 = vmatmul.mubr.bf16.gmra.mrb[0].mxu0 %v246
      %v336 = vpop.f32.mrb[0].mxu0
      %v337 = vadd.f32 0.0, %v336
      %v338 = vpop.f32.mrb[0].mxu0
      %v339 = vpop.f32.mrb[0].mxu0
      %v340 = vpop.f32.mrb[0].mxu0
      %341 = vdwg.mxu0
      %v343 = vsel %vm244, %v215, 0
      %v346 = vand.u32 %v226, %v251
      %v349 = vand.u32 %v234, %v251
      %v352 = vand.u32 %v233, %v251
      %354 = vmatprep.subr.bf16.mxu0 %v349
      %355 = vmatpush1.bf16.msra.mxu0 %v346
      %356 = vmatprep.subr.bf16.mxu0 0
      %357 = vmatpush1.bf16.msra.mxu0 0
      %358 = vmatprep.subr.bf16.mxu0 0
      %359 = vmatpush1.bf16.msra.mxu0 0
      %360 = vmatprep.subr.bf16.mxu0 0
      %361 = vmatpush1.bf16.msra.mxu0 0
      %362 = vmatprep.subr.bf16.mxu0 0
      %363 = vmatpush1.bf16.msra.mxu0 0
      %364 = vmatprep.subr.bf16.mxu0 0
      %365 = vmatpush1.bf16.msra.mxu0 0
      %366 = vmatprep.subr.bf16.mxu0 0
      %367 = vmatpush1.bf16.msra.mxu0 0
      %368 = vmatprep.subr.bf16.mxu0 0
      %369 = vmatpush1.bf16.msra.mxu0 0
      %370 = vmatprep.subr.bf16.mxu0 0
      %371 = vmatpush1.bf16.msra.mxu0 0
      %372 = vmatprep.subr.bf16.mxu0 0
      %373 = vmatpush1.bf16.msra.mxu0 0
      %374 = vmatprep.subr.bf16.mxu0 0
      %375 = vmatpush1.bf16.msra.mxu0 0
      %376 = vmatprep.subr.bf16.mxu0 0
      %377 = vmatpush1.bf16.msra.mxu0 0
      %378 = vmatprep.subr.bf16.mxu0 0
      %379 = vmatpush1.bf16.msra.mxu0 0
      %380 = vmatprep.subr.bf16.mxu0 0
      %381 = vmatpush1.bf16.msra.mxu0 0
      %382 = vmatprep.subr.bf16.mxu0 0
      %383 = vmatpush1.bf16.msra.mxu0 0
      %384 = vmatprep.subr.bf16.mxu0 0
      %385 = vmatpush1.bf16.msra.mxu0 0
      %386 = vmatprep.mubr.bf16.mxu0 0
      %387 = vmatmul.mubr.bf16.gmra.mrb[0].mxu0 %v343
      %v388 = vpop.f32.mrb[0].mxu0
      %v389 = vadd.f32 %v296, %v388
      %v390 = vpop.f32.mrb[0].mxu0
      %v391 = vadd.f32 %v298, %v390
      %v392 = vpop.f32.mrb[0].mxu0
      %v393 = vpop.f32.mrb[0].mxu0
      %394 = vdwg.mxu0
      %395 = vmatprep.subr.bf16.mxu0 0
      %396 = vmatpush1.bf16.msra.mxu0 %v352
      %397 = vmatprep.subr.bf16.mxu0 0
      %398 = vmatpush1.bf16.msra.mxu0 0
      %399 = vmatprep.subr.bf16.mxu0 0
      %400 = vmatpush1.bf16.msra.mxu0 0
      %401 = vmatprep.subr.bf16.mxu0 0
      %402 = vmatpush1.bf16.msra.mxu0 0
      %403 = vmatprep.subr.bf16.mxu0 0
      %404 = vmatpush1.bf16.msra.mxu0 0
      %405 = vmatprep.subr.bf16.mxu0 0
      %406 = vmatpush1.bf16.msra.mxu0 0
      %407 = vmatprep.subr.bf16.mxu0 0
      %408 = vmatpush1.bf16.msra.mxu0 0
      %409 = vmatprep.subr.bf16.mxu0 0
      %410 = vmatpush1.bf16.msra.mxu0 0
      %411 = vmatprep.subr.bf16.mxu0 0
      %412 = vmatpush1.bf16.msra.mxu0 0
      %413 = vmatprep.subr.bf16.mxu0 0
      %414 = vmatpush1.bf16.msra.mxu0 0
      %415 = vmatprep.subr.bf16.mxu0 0
      %416 = vmatpush1.bf16.msra.mxu0 0
      %417 = vmatprep.subr.bf16.mxu0 0
      %418 = vmatpush1.bf16.msra.mxu0 0
      %419 = vmatprep.subr.bf16.mxu0 0
      %420 = vmatpush1.bf16.msra.mxu0 0
      %421 = vmatprep.subr.bf16.mxu0 0
      %422 = vmatpush1.bf16.msra.mxu0 0
      %423 = vmatprep.subr.bf16.mxu0 0
      %424 = vmatpush1.bf16.msra.mxu0 0
      %425 = vmatprep.subr.bf16.mxu0 0
      %426 = vmatpush1.bf16.msra.mxu0 0
      %427 = vmatprep.mubr.bf16.mxu0 0
      %428 = vmatmul.mubr.bf16.gmra.mrb[0].mxu0 %v343
      %v429 = vpop.f32.mrb[0].mxu0
      %v430 = vadd.f32 %v337, %v429
      %v431 = vpop.f32.mrb[0].mxu0
      %v432 = vpop.f32.mrb[0].mxu0
      %v433 = vpop.f32.mrb[0].mxu0
      %434 = vdwg.mxu0
      %s435 = scalar_lea.vmem %s1, 4
      %v436 = vld [vmem:[%s435] sm:$0x3]
      %437 = vrot.lane.b32.xlu0 %v226, 126
      %v438 = vpop.permute.xlu0 %437
      %439 = vrot.lane.b32.xlu0 %v234, 126
      %v440 = vpop.permute.xlu0 %439
      %441 = vrot.lane.b32.xlu0 %v233, 126
      %v442 = vpop.permute.xlu0 %441
      %vm443 = vcmask 1031168
      %v444 = vsel %vm443, %v438, %v440
      %v445 = vsel %vm443, %v440, %v442
      %v447 = vsel %vm244, %v436, 0
      %v450 = vand.u32 %v444, %v251
      %v453 = vand.u32 %v445, %v251
      %v456 = vand.u32 %v442, %v251
      %458 = vmatprep.subr.bf16.mxu0 %v453
      %459 = vmatpush1.bf16.msra.mxu0 %v450
      %460 = vmatprep.subr.bf16.mxu0 0
      %461 = vmatpush1.bf16.msra.mxu0 0
      %462 = vmatprep.subr.bf16.mxu0 0
      %463 = vmatpush1.bf16.msra.mxu0 0
      %464 = vmatprep.subr.bf16.mxu0 0
      %465 = vmatpush1.bf16.msra.mxu0 0
      %466 = vmatprep.subr.bf16.mxu0 0
      %467 = vmatpush1.bf16.msra.mxu0 0
      %468 = vmatprep.subr.bf16.mxu0 0
      %469 = vmatpush1.bf16.msra.mxu0 0
      %470 = vmatprep.subr.bf16.mxu0 0
      %471 = vmatpush1.bf16.msra.mxu0 0
      %472 = vmatprep.subr.bf16.mxu0 0
      %473 = vmatpush1.bf16.msra.mxu0 0
      %474 = vmatprep.subr.bf16.mxu0 0
      %475 = vmatpush1.bf16.msra.mxu0 0
      %476 = vmatprep.subr.bf16.mxu0 0
      %477 = vmatpush1.bf16.msra.mxu0 0
      %478 = vmatprep.subr.bf16.mxu0 0
      %479 = vmatpush1.bf16.msra.mxu0 0
      %480 = vmatprep.subr.bf16.mxu0 0
      %481 = vmatpush1.bf16.msra.mxu0 0
      %482 = vmatprep.subr.bf16.mxu0 0
      %483 = vmatpush1.bf16.msra.mxu0 0
      %484 = vmatprep.subr.bf16.mxu0 0
      %485 = vmatpush1.bf16.msra.mxu0 0
      %486 = vmatprep.subr.bf16.mxu0 0
      %487 = vmatpush1.bf16.msra.mxu0 0
      %488 = vmatprep.subr.bf16.mxu0 0
      %489 = vmatpush1.bf16.msra.mxu0 0
      %490 = vmatprep.mubr.bf16.mxu0 0
      %491 = vmatmul.mubr.bf16.gmra.mrb[0].mxu0 %v447
      %v492 = vpop.f32.mrb[0].mxu0
      %v493 = vadd.f32 0.0, %v492
      %v494 = vpop.f32.mrb[0].mxu0
      %v495 = vadd.f32 0.0, %v494
      %v496 = vpop.f32.mrb[0].mxu0
      %v497 = vpop.f32.mrb[0].mxu0
      %498 = vdwg.mxu0
      %499 = vmatprep.subr.bf16.mxu0 0
      %500 = vmatpush1.bf16.msra.mxu0 %v456
      %501 = vmatprep.subr.bf16.mxu0 0
      %502 = vmatpush1.bf16.msra.mxu0 0
      %503 = vmatprep.subr.bf16.mxu0 0
      %504 = vmatpush1.bf16.msra.mxu0 0
      %505 = vmatprep.subr.bf16.mxu0 0
      %506 = vmatpush1.bf16.msra.mxu0 0
      %507 = vmatprep.subr.bf16.mxu0 0
      %508 = vmatpush1.bf16.msra.mxu0 0
      %509 = vmatprep.subr.bf16.mxu0 0
      %510 = vmatpush1.bf16.msra.mxu0 0
      %511 = vmatprep.subr.bf16.mxu0 0
      %512 = vmatpush1.bf16.msra.mxu0 0
      %513 = vmatprep.subr.bf16.mxu0 0
      %514 = vmatpush1.bf16.msra.mxu0 0
      %515 = vmatprep.subr.bf16.mxu0 0
      %516 = vmatpush1.bf16.msra.mxu0 0
      %517 = vmatprep.subr.bf16.mxu0 0
      %518 = vmatpush1.bf16.msra.mxu0 0
      %519 = vmatprep.subr.bf16.mxu0 0
      %520 = vmatpush1.bf16.msra.mxu0 0
      %521 = vmatprep.subr.bf16.mxu0 0
      %522 = vmatpush1.bf16.msra.mxu0 0
      %523 = vmatprep.subr.bf16.mxu0 0
      %524 = vmatpush1.bf16.msra.mxu0 0
      %525 = vmatprep.subr.bf16.mxu0 0
      %526 = vmatpush1.bf16.msra.mxu0 0
      %527 = vmatprep.subr.bf16.mxu0 0
      %528 = vmatpush1.bf16.msra.mxu0 0
      %529 = vmatprep.subr.bf16.mxu0 0
      %530 = vmatpush1.bf16.msra.mxu0 0
      %531 = vmatprep.mubr.bf16.mxu0 0
      %532 = vmatmul.mubr.bf16.gmra.mrb[0].mxu0 %v447
      %v533 = vpop.f32.mrb[0].mxu0
      %v534 = vadd.f32 0.0, %v533
      %v535 = vpop.f32.mrb[0].mxu0
      %v536 = vpop.f32.mrb[0].mxu0
      %v537 = vpop.f32.mrb[0].mxu0
      %538 = vdwg.mxu0
      %v539 = vadd.f32 %v389, %v493
      %v540 = vadd.f32 %v391, %v495
      %v541 = vadd.f32 %v430, %v534
      %s542 = scalar_lea.vmem %s1, 6
      %v543 = vld [vmem:[%s542] sm:$0x3]
      %544 = vrot.lane.b32.xlu0 %v226, 110
      %v545 = vpop.permute.xlu0 %544
      %546 = vrot.lane.b32.xlu0 %v234, 110
      %v547 = vpop.permute.xlu0 %546
      %548 = vrot.lane.b32.xlu0 %v233, 110
      %v549 = vpop.permute.xlu0 %548
      %vm550 = vcmask 900096
      %v551 = vsel %vm550, %v545, %v547
      %v552 = vsel %vm550, %v547, %v549
      %v554 = vsel %vm244, %v543, 0
      %v557 = vand.u32 %v551, %v251
      %v560 = vand.u32 %v552, %v251
      %v563 = vand.u32 %v549, %v251
      %565 = vmatprep.subr.bf16.mxu0 %v560
      %566 = vmatpush1.bf16.msra.mxu0 %v557
      %567 = vmatprep.subr.bf16.mxu0 0
      %568 = vmatpush1.bf16.msra.mxu0 0
      %569 = vmatprep.subr.bf16.mxu0 0
      %570 = vmatpush1.bf16.msra.mxu0 0
      %571 = vmatprep.subr.bf16.mxu0 0
      %572 = vmatpush1.bf16.msra.mxu0 0
      %573 = vmatprep.subr.bf16.mxu0 0
      %574 = vmatpush1.bf16.msra.mxu0 0
      %575 = vmatprep.subr.bf16.mxu0 0
      %576 = vmatpush1.bf16.msra.mxu0 0
      %577 = vmatprep.subr.bf16.mxu0 0
      %578 = vmatpush1.bf16.msra.mxu0 0
      %579 = vmatprep.subr.bf16.mxu0 0
      %580 = vmatpush1.bf16.msra.mxu0 0
      %581 = vmatprep.subr.bf16.mxu0 0
      %582 = vmatpush1.bf16.msra.mxu0 0
      %583 = vmatprep.subr.bf16.mxu0 0
      %584 = vmatpush1.bf16.msra.mxu0 0
      %585 = vmatprep.subr.bf16.mxu0 0
      %586 = vmatpush1.bf16.msra.mxu0 0
      %587 = vmatprep.subr.bf16.mxu0 0
      %588 = vmatpush1.bf16.msra.mxu0 0
      %589 = vmatprep.subr.bf16.mxu0 0
      %590 = vmatpush1.bf16.msra.mxu0 0
      %591 = vmatprep.subr.bf16.mxu0 0
      %592 = vmatpush1.bf16.msra.mxu0 0
      %593 = vmatprep.subr.bf16.mxu0 0
      %594 = vmatpush1.bf16.msra.mxu0 0
      %595 = vmatprep.subr.bf16.mxu0 0
      %596 = vmatpush1.bf16.msra.mxu0 0
      %597 = vmatprep.mubr.bf16.mxu0 0
      %598 = vmatmul.mubr.bf16.gmra.mrb[0].mxu0 %v554
      %v599 = vpop.f32.mrb[0].mxu0
      %v600 = vadd.f32 0.0, %v599
      %v601 = vpop.f32.mrb[0].mxu0
      %v602 = vadd.f32 0.0, %v601
      %v603 = vpop.f32.mrb[0].mxu0
      %v604 = vpop.f32.mrb[0].mxu0
      %605 = vdwg.mxu0
      %606 = vmatprep.subr.bf16.mxu0 0
      %607 = vmatpush1.bf16.msra.mxu0 %v563
      %608 = vmatprep.subr.bf16.mxu0 0
      %609 = vmatpush1.bf16.msra.mxu0 0
      %610 = vmatprep.subr.bf16.mxu0 0
      %611 = vmatpush1.bf16.msra.mxu0 0
      %612 = vmatprep.subr.bf16.mxu0 0
      %613 = vmatpush1.bf16.msra.mxu0 0
      %614 = vmatprep.subr.bf16.mxu0 0
      %615 = vmatpush1.bf16.msra.mxu0 0
      %616 = vmatprep.subr.bf16.mxu0 0
      %617 = vmatpush1.bf16.msra.mxu0 0
      %618 = vmatprep.subr.bf16.mxu0 0
      %619 = vmatpush1.bf16.msra.mxu0 0
      %620 = vmatprep.subr.bf16.mxu0 0
      %621 = vmatpush1.bf16.msra.mxu0 0
      %622 = vmatprep.subr.bf16.mxu0 0
      %623 = vmatpush1.bf16.msra.mxu0 0
      %624 = vmatprep.subr.bf16.mxu0 0
      %625 = vmatpush1.bf16.msra.mxu0 0
      %626 = vmatprep.subr.bf16.mxu0 0
      %627 = vmatpush1.bf16.msra.mxu0 0
      %628 = vmatprep.subr.bf16.mxu0 0
      %629 = vmatpush1.bf16.msra.mxu0 0
      %630 = vmatprep.subr.bf16.mxu0 0
      %631 = vmatpush1.bf16.msra.mxu0 0
      %632 = vmatprep.subr.bf16.mxu0 0
      %633 = vmatpush1.bf16.msra.mxu0 0
      %634 = vmatprep.subr.bf16.mxu0 0
      %635 = vmatpush1.bf16.msra.mxu0 0
      %636 = vmatprep.subr.bf16.mxu0 0
      %637 = vmatpush1.bf16.msra.mxu0 0
      %638 = vmatprep.mubr.bf16.mxu0 0
      %639 = vmatmul.mubr.bf16.gmra.mrb[0].mxu0 %v554
      %v640 = vpop.f32.mrb[0].mxu0
      %v641 = vadd.f32 0.0, %v640
      %v642 = vpop.f32.mrb[0].mxu0
      %v643 = vpop.f32.mrb[0].mxu0
      %v644 = vpop.f32.mrb[0].mxu0
      %645 = vdwg.mxu0
      %v646 = vadd.f32 %v539, %v600
      %v647 = vadd.f32 %v540, %v602
      %v648 = vadd.f32 %v541, %v641
      %s649 = scalar_lea.vmem %s1, 8
      %v650 = vld [vmem:[%s649] sm:$0x3]
      %651 = vrot.lane.b32.xlu0 %v226, 109
      %v652 = vpop.permute.xlu0 %651
      %653 = vrot.lane.b32.xlu0 %v234, 109
      %v654 = vpop.permute.xlu0 %653
      %655 = vrot.lane.b32.xlu0 %v233, 109
      %v656 = vpop.permute.xlu0 %655
      %vm657 = vcmask 891904
      %v658 = vsel %vm657, %v652, %v654
      %v659 = vsel %vm657, %v654, %v656
      %v661 = vsel %vm244, %v650, 0
      %v664 = vand.u32 %v658, %v251
      %v667 = vand.u32 %v659, %v251
      %v670 = vand.u32 %v656, %v251
      %672 = vmatprep.subr.bf16.mxu0 %v667
      %673 = vmatpush1.bf16.msra.mxu0 %v664
      %674 = vmatprep.subr.bf16.mxu0 0
      %675 = vmatpush1.bf16.msra.mxu0 0
      %676 = vmatprep.subr.bf16.mxu0 0
      %677 = vmatpush1.bf16.msra.mxu0 0
      %678 = vmatprep.subr.bf16.mxu0 0
      %679 = vmatpush1.bf16.msra.mxu0 0
      %680 = vmatprep.subr.bf16.mxu0 0
      %681 = vmatpush1.bf16.msra.mxu0 0
      %682 = vmatprep.subr.bf16.mxu0 0
      %683 = vmatpush1.bf16.msra.mxu0 0
      %684 = vmatprep.subr.bf16.mxu0 0
      %685 = vmatpush1.bf16.msra.mxu0 0
      %686 = vmatprep.subr.bf16.mxu0 0
      %687 = vmatpush1.bf16.msra.mxu0 0
      %688 = vmatprep.subr.bf16.mxu0 0
      %689 = vmatpush1.bf16.msra.mxu0 0
      %690 = vmatprep.subr.bf16.mxu0 0
      %691 = vmatpush1.bf16.msra.mxu0 0
      %692 = vmatprep.subr.bf16.mxu0 0
      %693 = vmatpush1.bf16.msra.mxu0 0
      %694 = vmatprep.subr.bf16.mxu0 0
      %695 = vmatpush1.bf16.msra.mxu0 0
      %696 = vmatprep.subr.bf16.mxu0 0
      %697 = vmatpush1.bf16.msra.mxu0 0
      %698 = vmatprep.subr.bf16.mxu0 0
      %699 = vmatpush1.bf16.msra.mxu0 0
      %700 = vmatprep.subr.bf16.mxu0 0
      %701 = vmatpush1.bf16.msra.mxu0 0
      %702 = vmatprep.subr.bf16.mxu0 0
      %703 = vmatpush1.bf16.msra.mxu0 0
      %704 = vmatprep.mubr.bf16.mxu0 0
      %705 = vmatmul.mubr.bf16.gmra.mrb[0].mxu0 %v661
      %v706 = vpop.f32.mrb[0].mxu0
      %v707 = vadd.f32 0.0, %v706
      %v708 = vpop.f32.mrb[0].mxu0
      %v709 = vadd.f32 0.0, %v708
      %v710 = vpop.f32.mrb[0].mxu0
      %v711 = vpop.f32.mrb[0].mxu0
      %712 = vdwg.mxu0
      %713 = vmatprep.subr.bf16.mxu0 0
      %714 = vmatpush1.bf16.msra.mxu0 %v670
      %715 = vmatprep.subr.bf16.mxu0 0
      %716 = vmatpush1.bf16.msra.mxu0 0
      %717 = vmatprep.subr.bf16.mxu0 0
      %718 = vmatpush1.bf16.msra.mxu0 0
      %719 = vmatprep.subr.bf16.mxu0 0
      %720 = vmatpush1.bf16.msra.mxu0 0
      %721 = vmatprep.subr.bf16.mxu0 0
      %722 = vmatpush1.bf16.msra.mxu0 0
      %723 = vmatprep.subr.bf16.mxu0 0
      %724 = vmatpush1.bf16.msra.mxu0 0
      %725 = vmatprep.subr.bf16.mxu0 0
      %726 = vmatpush1.bf16.msra.mxu0 0
      %727 = vmatprep.subr.bf16.mxu0 0
      %728 = vmatpush1.bf16.msra.mxu0 0
      %729 = vmatprep.subr.bf16.mxu0 0
      %730 = vmatpush1.bf16.msra.mxu0 0
      %731 = vmatprep.subr.bf16.mxu0 0
      %732 = vmatpush1.bf16.msra.mxu0 0
      %733 = vmatprep.subr.bf16.mxu0 0
      %734 = vmatpush1.bf16.msra.mxu0 0
      %735 = vmatprep.subr.bf16.mxu0 0
      %736 = vmatpush1.bf16.msra.mxu0 0
      %737 = vmatprep.subr.bf16.mxu0 0
      %738 = vmatpush1.bf16.msra.mxu0 0
      %739 = vmatprep.subr.bf16.mxu0 0
      %740 = vmatpush1.bf16.msra.mxu0 0
      %741 = vmatprep.subr.bf16.mxu0 0
      %742 = vmatpush1.bf16.msra.mxu0 0
      %743 = vmatprep.subr.bf16.mxu0 0
      %744 = vmatpush1.bf16.msra.mxu0 0
      %745 = vmatprep.mubr.bf16.mxu0 0
      %746 = vmatmul.mubr.bf16.gmra.mrb[0].mxu0 %v661
      %v747 = vpop.f32.mrb[0].mxu0
      %v748 = vadd.f32 0.0, %v747
      %v749 = vpop.f32.mrb[0].mxu0
      %v750 = vpop.f32.mrb[0].mxu0
      %v751 = vpop.f32.mrb[0].mxu0
      %752 = vdwg.mxu0
      %v753 = vadd.f32 %v646, %v707
      %v754 = vadd.f32 %v647, %v709
      %v755 = vadd.f32 %v648, %v748
      %s756 = scalar_lea.vmem %s1, 10
      %v757 = vld [vmem:[%s756] sm:$0x3]
      %758 = vrot.lane.b32.xlu0 %v226, 108
      %v759 = vpop.permute.xlu0 %758
      %760 = vrot.lane.b32.xlu0 %v234, 108
      %v761 = vpop.permute.xlu0 %760
      %762 = vrot.lane.b32.xlu0 %v233, 108
      %v763 = vpop.permute.xlu0 %762
      %vm764 = vcmask 883712
      %v765 = vsel %vm764, %v759, %v761
      %v766 = vsel %vm764, %v761, %v763
      %v768 = vsel %vm244, %v757, 0
      %v771 = vand.u32 %v765, %v251
      %v774 = vand.u32 %v766, %v251
      %v777 = vand.u32 %v763, %v251
      %779 = vmatprep.subr.bf16.mxu0 %v774
      %780 = vmatpush1.bf16.msra.mxu0 %v771
      %781 = vmatprep.subr.bf16.mxu0 0
      %782 = vmatpush1.bf16.msra.mxu0 0
      %783 = vmatprep.subr.bf16.mxu0 0
      %784 = vmatpush1.bf16.msra.mxu0 0
      %785 = vmatprep.subr.bf16.mxu0 0
      %786 = vmatpush1.bf16.msra.mxu0 0
      %787 = vmatprep.subr.bf16.mxu0 0
      %788 = vmatpush1.bf16.msra.mxu0 0
      %789 = vmatprep.subr.bf16.mxu0 0
      %790 = vmatpush1.bf16.msra.mxu0 0
      %791 = vmatprep.subr.bf16.mxu0 0
      %792 = vmatpush1.bf16.msra.mxu0 0
      %793 = vmatprep.subr.bf16.mxu0 0
      %794 = vmatpush1.bf16.msra.mxu0 0
      %795 = vmatprep.subr.bf16.mxu0 0
      %796 = vmatpush1.bf16.msra.mxu0 0
      %797 = vmatprep.subr.bf16.mxu0 0
      %798 = vmatpush1.bf16.msra.mxu0 0
      %799 = vmatprep.subr.bf16.mxu0 0
      %800 = vmatpush1.bf16.msra.mxu0 0
      %801 = vmatprep.subr.bf16.mxu0 0
      %802 = vmatpush1.bf16.msra.mxu0 0
      %803 = vmatprep.subr.bf16.mxu0 0
      %804 = vmatpush1.bf16.msra.mxu0 0
      %805 = vmatprep.subr.bf16.mxu0 0
      %806 = vmatpush1.bf16.msra.mxu0 0
      %807 = vmatprep.subr.bf16.mxu0 0
      %808 = vmatpush1.bf16.msra.mxu0 0
      %809 = vmatprep.subr.bf16.mxu0 0
      %810 = vmatpush1.bf16.msra.mxu0 0
      %811 = vmatprep.mubr.bf16.mxu0 0
      %812 = vmatmul.mubr.bf16.gmra.mrb[0].mxu0 %v768
      %v813 = vpop.f32.mrb[0].mxu0
      %v814 = vadd.f32 0.0, %v813
      %v815 = vpop.f32.mrb[0].mxu0
      %v816 = vadd.f32 0.0, %v815
      %v817 = vpop.f32.mrb[0].mxu0
      %v818 = vpop.f32.mrb[0].mxu0
      %819 = vdwg.mxu0
      %820 = vmatprep.subr.bf16.mxu0 0
      %821 = vmatpush1.bf16.msra.mxu0 %v777
      %822 = vmatprep.subr.bf16.mxu0 0
      %823 = vmatpush1.bf16.msra.mxu0 0
      %824 = vmatprep.subr.bf16.mxu0 0
      %825 = vmatpush1.bf16.msra.mxu0 0
      %826 = vmatprep.subr.bf16.mxu0 0
      %827 = vmatpush1.bf16.msra.mxu0 0
      %828 = vmatprep.subr.bf16.mxu0 0
      %829 = vmatpush1.bf16.msra.mxu0 0
      %830 = vmatprep.subr.bf16.mxu0 0
      %831 = vmatpush1.bf16.msra.mxu0 0
      %832 = vmatprep.subr.bf16.mxu0 0
      %833 = vmatpush1.bf16.msra.mxu0 0
      %834 = vmatprep.subr.bf16.mxu0 0
      %835 = vmatpush1.bf16.msra.mxu0 0
      %836 = vmatprep.subr.bf16.mxu0 0
      %837 = vmatpush1.bf16.msra.mxu0 0
      %838 = vmatprep.subr.bf16.mxu0 0
      %839 = vmatpush1.bf16.msra.mxu0 0
      %840 = vmatprep.subr.bf16.mxu0 0
      %841 = vmatpush1.bf16.msra.mxu0 0
      %842 = vmatprep.subr.bf16.mxu0 0
      %843 = vmatpush1.bf16.msra.mxu0 0
      %844 = vmatprep.subr.bf16.mxu0 0
      %845 = vmatpush1.bf16.msra.mxu0 0
      %846 = vmatprep.subr.bf16.mxu0 0
      %847 = vmatpush1.bf16.msra.mxu0 0
      %848 = vmatprep.subr.bf16.mxu0 0
      %849 = vmatpush1.bf16.msra.mxu0 0
      %850 = vmatprep.subr.bf16.mxu0 0
      %851 = vmatpush1.bf16.msra.mxu0 0
      %852 = vmatprep.mubr.bf16.mxu0 0
      %853 = vmatmul.mubr.bf16.gmra.mrb[0].mxu0 %v768
      %v854 = vpop.f32.mrb[0].mxu0
      %v855 = vadd.f32 0.0, %v854
      %v856 = vpop.f32.mrb[0].mxu0
      %v857 = vpop.f32.mrb[0].mxu0
      %v858 = vpop.f32.mrb[0].mxu0
      %859 = vdwg.mxu0
      %v860 = vadd.f32 %v753, %v814
      %v861 = vadd.f32 %v754, %v816
      %v862 = vadd.f32 %v755, %v855
      %s863 = scalar_lea.vmem %s1, 12
      %v864 = vld [vmem:[%s863] sm:$0x3]
      %865 = vrot.lane.b32.xlu0 %v226, 92
      %v866 = vpop.permute.xlu0 %865
      %867 = vrot.lane.b32.xlu0 %v234, 92
      %v868 = vpop.permute.xlu0 %867
      %869 = vrot.lane.b32.xlu0 %v233, 92
      %v870 = vpop.permute.xlu0 %869
      %vm871 = vcmask 752640
      %v872 = vsel %vm871, %v866, %v868
      %v873 = vsel %vm871, %v868, %v870
      %v875 = vsel %vm244, %v864, 0
      %v878 = vand.u32 %v872, %v251
      %v881 = vand.u32 %v873, %v251
      %v884 = vand.u32 %v870, %v251
      %886 = vmatprep.subr.bf16.mxu0 %v881
      %887 = vmatpush1.bf16.msra.mxu0 %v878
      %888 = vmatprep.subr.bf16.mxu0 0
      %889 = vmatpush1.bf16.msra.mxu0 0
      %890 = vmatprep.subr.bf16.mxu0 0
      %891 = vmatpush1.bf16.msra.mxu0 0
      %892 = vmatprep.subr.bf16.mxu0 0
      %893 = vmatpush1.bf16.msra.mxu0 0
      %894 = vmatprep.subr.bf16.mxu0 0
      %895 = vmatpush1.bf16.msra.mxu0 0
      %896 = vmatprep.subr.bf16.mxu0 0
      %897 = vmatpush1.bf16.msra.mxu0 0
      %898 = vmatprep.subr.bf16.mxu0 0
      %899 = vmatpush1.bf16.msra.mxu0 0
      %900 = vmatprep.subr.bf16.mxu0 0
      %901 = vmatpush1.bf16.msra.mxu0 0
      %902 = vmatprep.subr.bf16.mxu0 0
      %903 = vmatpush1.bf16.msra.mxu0 0
      %904 = vmatprep.subr.bf16.mxu0 0
      %905 = vmatpush1.bf16.msra.mxu0 0
      %906 = vmatprep.subr.bf16.mxu0 0
      %907 = vmatpush1.bf16.msra.mxu0 0
      %908 = vmatprep.subr.bf16.mxu0 0
      %909 = vmatpush1.bf16.msra.mxu0 0
      %910 = vmatprep.subr.bf16.mxu0 0
      %911 = vmatpush1.bf16.msra.mxu0 0
      %912 = vmatprep.subr.bf16.mxu0 0
      %913 = vmatpush1.bf16.msra.mxu0 0
      %914 = vmatprep.subr.bf16.mxu0 0
      %915 = vmatpush1.bf16.msra.mxu0 0
      %916 = vmatprep.subr.bf16.mxu0 0
      %917 = vmatpush1.bf16.msra.mxu0 0
      %918 = vmatprep.mubr.bf16.mxu0 0
      %919 = vmatmul.mubr.bf16.gmra.mrb[0].mxu0 %v875
      %v920 = vpop.f32.mrb[0].mxu0
      %v921 = vadd.f32 0.0, %v920
      %v922 = vpop.f32.mrb[0].mxu0
      %v923 = vadd.f32 0.0, %v922
      %v924 = vpop.f32.mrb[0].mxu0
      %v925 = vpop.f32.mrb[0].mxu0
      %926 = vdwg.mxu0
      %927 = vmatprep.subr.bf16.mxu0 0
      %928 = vmatpush1.bf16.msra.mxu0 %v884
      %929 = vmatprep.subr.bf16.mxu0 0
      %930 = vmatpush1.bf16.msra.mxu0 0
      %931 = vmatprep.subr.bf16.mxu0 0
      %932 = vmatpush1.bf16.msra.mxu0 0
      %933 = vmatprep.subr.bf16.mxu0 0
      %934 = vmatpush1.bf16.msra.mxu0 0
      %935 = vmatprep.subr.bf16.mxu0 0
      %936 = vmatpush1.bf16.msra.mxu0 0
      %937 = vmatprep.subr.bf16.mxu0 0
      %938 = vmatpush1.bf16.msra.mxu0 0
      %939 = vmatprep.subr.bf16.mxu0 0
      %940 = vmatpush1.bf16.msra.mxu0 0
      %941 = vmatprep.subr.bf16.mxu0 0
      %942 = vmatpush1.bf16.msra.mxu0 0
      %943 = vmatprep.subr.bf16.mxu0 0
      %944 = vmatpush1.bf16.msra.mxu0 0
      %945 = vmatprep.subr.bf16.mxu0 0
      %946 = vmatpush1.bf16.msra.mxu0 0
      %947 = vmatprep.subr.bf16.mxu0 0
      %948 = vmatpush1.bf16.msra.mxu0 0
      %949 = vmatprep.subr.bf16.mxu0 0
      %950 = vmatpush1.bf16.msra.mxu0 0
      %951 = vmatprep.subr.bf16.mxu0 0
      %952 = vmatpush1.bf16.msra.mxu0 0
      %953 = vmatprep.subr.bf16.mxu0 0
      %954 = vmatpush1.bf16.msra.mxu0 0
      %955 = vmatprep.subr.bf16.mxu0 0
      %956 = vmatpush1.bf16.msra.mxu0 0
      %957 = vmatprep.subr.bf16.mxu0 0
      %958 = vmatpush1.bf16.msra.mxu0 0
      %959 = vmatprep.mubr.bf16.mxu0 0
      %960 = vmatmul.mubr.bf16.gmra.mrb[0].mxu0 %v875
      %v961 = vpop.f32.mrb[0].mxu0
      %v962 = vadd.f32 0.0, %v961
      %v963 = vpop.f32.mrb[0].mxu0
      %v964 = vpop.f32.mrb[0].mxu0
      %v965 = vpop.f32.mrb[0].mxu0
      %966 = vdwg.mxu0
      %v967 = vadd.f32 %v860, %v921
      %v968 = vadd.f32 %v861, %v923
      %v969 = vadd.f32 %v862, %v962
      %s970 = scalar_lea.vmem %s1, 14
      %v971 = vld [vmem:[%s970] sm:$0x3]
      %972 = vrot.lane.b32.xlu0 %v226, 91
      %v973 = vpop.permute.xlu0 %972
      %974 = vrot.lane.b32.xlu0 %v234, 91
      %v975 = vpop.permute.xlu0 %974
      %976 = vrot.lane.b32.xlu0 %v233, 91
      %v977 = vpop.permute.xlu0 %976
      %vm978 = vcmask 744448
      %v979 = vsel %vm978, %v973, %v975
      %v980 = vsel %vm978, %v975, %v977
      %v982 = vsel %vm244, %v971, 0
      %v985 = vand.u32 %v979, %v251
      %v988 = vand.u32 %v980, %v251
      %v991 = vand.u32 %v977, %v251
      %993 = vmatprep.subr.bf16.mxu0 %v988
      %994 = vmatpush1.bf16.msra.mxu0 %v985
      %995 = vmatprep.subr.bf16.mxu0 0
      %996 = vmatpush1.bf16.msra.mxu0 0
      %997 = vmatprep.subr.bf16.mxu0 0
      %998 = vmatpush1.bf16.msra.mxu0 0
      %999 = vmatprep.subr.bf16.mxu0 0
      %1000 = vmatpush1.bf16.msra.mxu0 0
      %1001 = vmatprep.subr.bf16.mxu0 0
      %1002 = vmatpush1.bf16.msra.mxu0 0
      %1003 = vmatprep.subr.bf16.mxu0 0
      %1004 = vmatpush1.bf16.msra.mxu0 0
      %1005 = vmatprep.subr.bf16.mxu0 0
      %1006 = vmatpush1.bf16.msra.mxu0 0
      %1007 = vmatprep.subr.bf16.mxu0 0
      %1008 = vmatpush1.bf16.msra.mxu0 0
      %1009 = vmatprep.subr.bf16.mxu0 0
      %1010 = vmatpush1.bf16.msra.mxu0 0
      %1011 = vmatprep.subr.bf16.mxu0 0
      %1012 = vmatpush1.bf16.msra.mxu0 0
      %1013 = vmatprep.subr.bf16.mxu0 0
      %1014 = vmatpush1.bf16.msra.mxu0 0
      %1015 = vmatprep.subr.bf16.mxu0 0
      %1016 = vmatpush1.bf16.msra.mxu0 0
      %1017 = vmatprep.subr.bf16.mxu0 0
      %1018 = vmatpush1.bf16.msra.mxu0 0
      %1019 = vmatprep.subr.bf16.mxu0 0
      %1020 = vmatpush1.bf16.msra.mxu0 0
      %1021 = vmatprep.subr.bf16.mxu0 0
      %1022 = vmatpush1.bf16.msra.mxu0 0
      %1023 = vmatprep.subr.bf16.mxu0 0
      %1024 = vmatpush1.bf16.msra.mxu0 0
      %1025 = vmatprep.mubr.bf16.mxu0 0
      %1026 = vmatmul.mubr.bf16.gmra.mrb[0].mxu0 %v982
      %v1027 = vpop.f32.mrb[0].mxu0
      %v1028 = vadd.f32 0.0, %v1027
      %v1029 = vpop.f32.mrb[0].mxu0
      %v1030 = vadd.f32 0.0, %v1029
      %v1031 = vpop.f32.mrb[0].mxu0
      %v1032 = vpop.f32.mrb[0].mxu0
      %1033 = vdwg.mxu0
      %1034 = vmatprep.subr.bf16.mxu0 0
      %1035 = vmatpush1.bf16.msra.mxu0 %v991
      %1036 = vmatprep.subr.bf16.mxu0 0
      %1037 = vmatpush1.bf16.msra.mxu0 0
      %1038 = vmatprep.subr.bf16.mxu0 0
      %1039 = vmatpush1.bf16.msra.mxu0 0
      %1040 = vmatprep.subr.bf16.mxu0 0
      %1041 = vmatpush1.bf16.msra.mxu0 0
      %1042 = vmatprep.subr.bf16.mxu0 0
      %1043 = vmatpush1.bf16.msra.mxu0 0
      %1044 = vmatprep.subr.bf16.mxu0 0
      %1045 = vmatpush1.bf16.msra.mxu0 0
      %1046 = vmatprep.subr.bf16.mxu0 0
      %1047 = vmatpush1.bf16.msra.mxu0 0
      %1048 = vmatprep.subr.bf16.mxu0 0
      %1049 = vmatpush1.bf16.msra.mxu0 0
      %1050 = vmatprep.subr.bf16.mxu0 0
      %1051 = vmatpush1.bf16.msra.mxu0 0
      %1052 = vmatprep.subr.bf16.mxu0 0
      %1053 = vmatpush1.bf16.msra.mxu0 0
      %1054 = vmatprep.subr.bf16.mxu0 0
      %1055 = vmatpush1.bf16.msra.mxu0 0
      %1056 = vmatprep.subr.bf16.mxu0 0
      %1057 = vmatpush1.bf16.msra.mxu0 0
      %1058 = vmatprep.subr.bf16.mxu0 0
      %1059 = vmatpush1.bf16.msra.mxu0 0
      %1060 = vmatprep.subr.bf16.mxu0 0
      %1061 = vmatpush1.bf16.msra.mxu0 0
      %1062 = vmatprep.subr.bf16.mxu0 0
      %1063 = vmatpush1.bf16.msra.mxu0 0
      %1064 = vmatprep.subr.bf16.mxu0 0
      %1065 = vmatpush1.bf16.msra.mxu0 0
      %1066 = vmatprep.mubr.bf16.mxu0 0
      %1067 = vmatmul.mubr.bf16.gmra.mrb[0].mxu0 %v982
      %v1068 = vpop.f32.mrb[0].mxu0
      %v1069 = vadd.f32 0.0, %v1068
      %v1070 = vpop.f32.mrb[0].mxu0
      %v1071 = vpop.f32.mrb[0].mxu0
      %v1072 = vpop.f32.mrb[0].mxu0
      %1073 = vdwg.mxu0
      %v1074 = vadd.f32 %v967, %v1028
      %v1075 = vadd.f32 %v968, %v1030
      %v1076 = vadd.f32 %v969, %v1069
      %s1077 = scalar_lea.vmem %s1, 16
      %v1078 = vld [vmem:[%s1077] sm:$0x3]
      %1079 = vrot.lane.b32.xlu0 %v226, 90
      %v1080 = vpop.permute.xlu0 %1079
      %1081 = vrot.lane.b32.xlu0 %v234, 90
      %v1082 = vpop.permute.xlu0 %1081
      %1083 = vrot.lane.b32.xlu0 %v233, 90
      %v1084 = vpop.permute.xlu0 %1083
      %vm1085 = vcmask 736256
      %v1086 = vsel %vm1085, %v1080, %v1082
      %v1087 = vsel %vm1085, %v1082, %v1084
      %v1089 = vsel %vm244, %v1078, 0
      %v1092 = vand.u32 %v1086, %v251
      %v1095 = vand.u32 %v1087, %v251
      %v1098 = vand.u32 %v1084, %v251
      %1100 = vmatprep.subr.bf16.mxu0 %v1095
      %1101 = vmatpush1.bf16.msra.mxu0 %v1092
      %1102 = vmatprep.subr.bf16.mxu0 0
      %1103 = vmatpush1.bf16.msra.mxu0 0
      %1104 = vmatprep.subr.bf16.mxu0 0
      %1105 = vmatpush1.bf16.msra.mxu0 0
      %1106 = vmatprep.subr.bf16.mxu0 0
      %1107 = vmatpush1.bf16.msra.mxu0 0
      %1108 = vmatprep.subr.bf16.mxu0 0
      %1109 = vmatpush1.bf16.msra.mxu0 0
      %1110 = vmatprep.subr.bf16.mxu0 0
      %1111 = vmatpush1.bf16.msra.mxu0 0
      %1112 = vmatprep.subr.bf16.mxu0 0
      %1113 = vmatpush1.bf16.msra.mxu0 0
      %1114 = vmatprep.subr.bf16.mxu0 0
      %1115 = vmatpush1.bf16.msra.mxu0 0
      %1116 = vmatprep.subr.bf16.mxu0 0
      %1117 = vmatpush1.bf16.msra.mxu0 0
      %1118 = vmatprep.subr.bf16.mxu0 0
      %1119 = vmatpush1.bf16.msra.mxu0 0
      %1120 = vmatprep.subr.bf16.mxu0 0
      %1121 = vmatpush1.bf16.msra.mxu0 0
      %1122 = vmatprep.subr.bf16.mxu0 0
      %1123 = vmatpush1.bf16.msra.mxu0 0
      %1124 = vmatprep.subr.bf16.mxu0 0
      %1125 = vmatpush1.bf16.msra.mxu0 0
      %1126 = vmatprep.subr.bf16.mxu0 0
      %1127 = vmatpush1.bf16.msra.mxu0 0
      %1128 = vmatprep.subr.bf16.mxu0 0
      %1129 = vmatpush1.bf16.msra.mxu0 0
      %1130 = vmatprep.subr.bf16.mxu0 0
      %1131 = vmatpush1.bf16.msra.mxu0 0
      %1132 = vmatprep.mubr.bf16.mxu0 0
      %1133 = vmatmul.mubr.bf16.gmra.mrb[0].mxu0 %v1089
      %v1134 = vpop.f32.mrb[0].mxu0
      %v1135 = vadd.f32 0.0, %v1134
      %v1136 = vpop.f32.mrb[0].mxu0
      %v1137 = vadd.f32 0.0, %v1136
      %v1138 = vpop.f32.mrb[0].mxu0
      %v1139 = vpop.f32.mrb[0].mxu0
      %1140 = vdwg.mxu0
      %1141 = vmatprep.subr.bf16.mxu0 0
      %1142 = vmatpush1.bf16.msra.mxu0 %v1098
      %1143 = vmatprep.subr.bf16.mxu0 0
      %1144 = vmatpush1.bf16.msra.mxu0 0
      %1145 = vmatprep.subr.bf16.mxu0 0
      %1146 = vmatpush1.bf16.msra.mxu0 0
      %1147 = vmatprep.subr.bf16.mxu0 0
      %1148 = vmatpush1.bf16.msra.mxu0 0
      %1149 = vmatprep.subr.bf16.mxu0 0
      %1150 = vmatpush1.bf16.msra.mxu0 0
      %1151 = vmatprep.subr.bf16.mxu0 0
      %1152 = vmatpush1.bf16.msra.mxu0 0
      %1153 = vmatprep.subr.bf16.mxu0 0
      %1154 = vmatpush1.bf16.msra.mxu0 0
      %1155 = vmatprep.subr.bf16.mxu0 0
      %1156 = vmatpush1.bf16.msra.mxu0 0
      %1157 = vmatprep.subr.bf16.mxu0 0
      %1158 = vmatpush1.bf16.msra.mxu0 0
      %1159 = vmatprep.subr.bf16.mxu0 0
      %1160 = vmatpush1.bf16.msra.mxu0 0
      %1161 = vmatprep.subr.bf16.mxu0 0
      %1162 = vmatpush1.bf16.msra.mxu0 0
      %1163 = vmatprep.subr.bf16.mxu0 0
      %1164 = vmatpush1.bf16.msra.mxu0 0
      %1165 = vmatprep.subr.bf16.mxu0 0
      %1166 = vmatpush1.bf16.msra.mxu0 0
      %1167 = vmatprep.subr.bf16.mxu0 0
      %1168 = vmatpush1.bf16.msra.mxu0 0
      %1169 = vmatprep.subr.bf16.mxu0 0
      %1170 = vmatpush1.bf16.msra.mxu0 0
      %1171 = vmatprep.subr.bf16.mxu0 0
      %1172 = vmatpush1.bf16.msra.mxu0 0
      %1173 = vmatprep.mubr.bf16.mxu0 0
      %1174 = vmatmul.mubr.bf16.gmra.mrb[0].mxu0 %v1089
      %v1175 = vpop.f32.mrb[0].mxu0
      %v1176 = vadd.f32 0.0, %v1175
      %v1177 = vpop.f32.mrb[0].mxu0
      %v1178 = vpop.f32.mrb[0].mxu0
      %v1179 = vpop.f32.mrb[0].mxu0
      %1180 = vdwg.mxu0
      %v1181 = vadd.f32 %v1074, %v1135
      %v1182 = vadd.f32 %v1075, %v1137
      %v1183 = vadd.f32 %v1076, %v1176
      %v1184 = vld [vmem:[%s2] sm:$0x7]
      %1186 = vset.pattern.permute.xlu0 0
      %1187 = vperm.xlu0 %1186, %v1184
      %v1188 = vpop.permute.xlu0 %1187
      %v1190 = vmul.f32 %v1181, %v1188
      %v1191 = vmul.f32 %v1182, %v1188
      %v1192 = vmul.f32 %v1183, %v1188
      %1193 = vset.pattern.permute.xlu0 1
      %1194 = vperm.xlu0 %1193, %v1184
      %v1195 = vpop.permute.xlu0 %1194
      %v1197 = vadd.f32 %v1190, %v1195
      %v1198 = vadd.f32 %v1191, %v1195
      %v1199 = vadd.f32 %v1192, %v1195
      %vm1200 = vcmp.gt.f32.partialorder %v1197, 0.0
      %vm1201 = vcmp.gt.f32.partialorder %v1198, 0.0
      %vm1202 = vcmp.gt.f32.partialorder %v1199, 0.0
      %v1203 = vmul.f32 %v1197, 0.2
      %v1204 = vmul.f32 %v1198, 0.2
      %v1205 = vmul.f32 %v1199, 0.2
      %v1206 = vsel %vm1200, %v1197, %v1203
      %v1207 = vsel %vm1201, %v1198, %v1204
      %v1208 = vsel %vm1202, %v1199, %v1205
      %v1210 = vlaneseq
      %v1211 = vshrl.u32 %v1210, 7
      %v1212 = vsub.s32 0, %v1211
      %v1213 = vrot.slane %v199, %v1212
      %v1214 = vlaneseq
      %v1215 = vshrl.u32 %v1214, 7
      %v1216 = vsub.s32 1, %v1215
      %v1217 = vrot.slane %v199, %v1216
      %v1218 = vlaneseq
      %v1219 = vshrl.u32 %v1218, 7
      %v1220 = vsub.s32 2, %v1219
      %v1221 = vrot.slane %v199, %v1220
      %v1225 = vmul.f32 %v1206, %v1213
      %v1226 = vmul.f32 %v1207, %v1217
      %v1227 = vmul.f32 %v1208, %v1221
      %v1228 = vpack.c.bf16 %v1225, %v1225
      %v1229 = vpack.c.bf16 %v1226, %v1226
      %v1230 = vpack.c.bf16 %v1227, %v1227
      %v1234 = vcombine.low %v1228, %v1229
      %v1236 = vunpack.c.l.s4 1983009808
      %v1237 = vunpack.c.0.s8 %v1236
      %v1238 = vlaneseq
      %v1239 = vshrl.u32 %v1238, 7
      %v1240 = vsub.s32 %v1237, %v1239
      %v1241 = vrot.slane %v1234, %v1240
      %v1243 = vunpack.c.l.s4 1983009808
      %v1244 = vunpack.c.0.s8 %v1243
      %v1245 = vlaneseq
      %v1246 = vshrl.u32 %v1245, 7
      %v1247 = vsub.s32 %v1244, %v1246
      %v1248 = vrot.slane %v1230, %v1247
      %v1249 = vcombine.low %v1241, %v1248
      %1250 = vrot.lane.b32.xlu0 %v1249, 19
      %v1251 = vpop.permute.xlu0 %1250
      %v1252 = vrot.slane %v1251, 6
      %vm1253 = vcmask 154624
      %v1254 = vsel %vm1253, %v1252, %v1251
      %vm1256 = vcmask 1041560
      %vm1257 = vmand %vm1256, %vm201
      %vm1258 = vmor %vm205, %vm1257
      %vm1259 = vcmask 398340
      %vm1260 = vmand %vm1259, %vm208
      %vm1261 = vmor %vm1260, %vm1258
      %v1262 = vld [vmem:[#allocation2] sm:$0x3f]
      %v1263 = vsel %vm1261, %v1254, %v1262
      %1264 = vst [vmem:[#allocation2] sm:$0x3f] %v1263
      %v1265 = vld [vmem:[#allocation2] sm:$0x3f]
      %s1266 = scalar_lea.vmem %s1, 18
      %v1267 = vld [vmem:[%s1266] sm:$0x3]
      %s1268 = scalar_lea.vmem %s1, 20
      %v1269 = vld [vmem:[%s1268] sm:$0x3]
      %v1271 = vcombine.high %v1265, %v1265
      %v1273 = vunpack.c.l.s4 1983009808
      %v1274 = vunpack.c.0.s8 %v1273
      %v1275 = vlaneseq
      %v1276 = vshrl.u32 %v1275, 7
      %v1277 = vsub.s32 %v1274, %v1276
      %v1278 = vrot.slane %v1265, %v1277
      %v1280 = vunpack.c.l.s4 1983009808
      %v1281 = vunpack.c.0.s8 %v1280
      %v1282 = vlaneseq
      %v1283 = vshrl.u32 %v1282, 7
      %v1284 = vsub.s32 %v1281, %v1283
      %v1285 = vrot.slane %v1271, %v1284
      %v1286 = vcombine.high %v1278, %v1278
      %1287 = vrot.lane.b32.xlu0 %v1278, 127
      %v1288 = vpop.permute.xlu0 %1287
      %1289 = vrot.lane.b32.xlu0 %v1286, 127
      %v1290 = vpop.permute.xlu0 %1289
      %1291 = vrot.lane.b32.xlu0 %v1285, 127
      %v1292 = vpop.permute.xlu0 %1291
      %v1293 = vsel %vm241, %v1288, %v1290
      %v1294 = vsel %vm241, %v1290, %v1292
      %v1296 = vsel %vm244, %v1269, 0
      %v1299 = vand.u32 %v1293, %v251
      %v1302 = vand.u32 %v1294, %v251
      %v1305 = vand.u32 %v1292, %v251
      %1307 = vmatprep.subr.bf16.mxu0 %v1302
      %1308 = vmatpush1.bf16.msra.mxu0 %v1299
      %1309 = vmatprep.subr.bf16.mxu0 0
      %1310 = vmatpush1.bf16.msra.mxu0 0
      %1311 = vmatprep.subr.bf16.mxu0 0
      %1312 = vmatpush1.bf16.msra.mxu0 0
      %1313 = vmatprep.subr.bf16.mxu0 0
      %1314 = vmatpush1.bf16.msra.mxu0 0
      %1315 = vmatprep.subr.bf16.mxu0 0
      %1316 = vmatpush1.bf16.msra.mxu0 0
      %1317 = vmatprep.subr.bf16.mxu0 0
      %1318 = vmatpush1.bf16.msra.mxu0 0
      %1319 = vmatprep.subr.bf16.mxu0 0
      %1320 = vmatpush1.bf16.msra.mxu0 0
      %1321 = vmatprep.subr.bf16.mxu0 0
      %1322 = vmatpush1.bf16.msra.mxu0 0
      %1323 = vmatprep.subr.bf16.mxu0 0
      %1324 = vmatpush1.bf16.msra.mxu0 0
      %1325 = vmatprep.subr.bf16.mxu0 0
      %1326 = vmatpush1.bf16.msra.mxu0 0
      %1327 = vmatprep.subr.bf16.mxu0 0
      %1328 = vmatpush1.bf16.msra.mxu0 0
      %1329 = vmatprep.subr.bf16.mxu0 0
      %1330 = vmatpush1.bf16.msra.mxu0 0
      %1331 = vmatprep.subr.bf16.mxu0 0
      %1332 = vmatpush1.bf16.msra.mxu0 0
      %1333 = vmatprep.subr.bf16.mxu0 0
      %1334 = vmatpush1.bf16.msra.mxu0 0
      %1335 = vmatprep.subr.bf16.mxu0 0
      %1336 = vmatpush1.bf16.msra.mxu0 0
      %1337 = vmatprep.subr.bf16.mxu0 0
      %1338 = vmatpush1.bf16.msra.mxu0 0
      %1339 = vmatprep.mubr.bf16.mxu0 0
      %1340 = vmatmul.mubr.bf16.gmra.mrb[0].mxu0 %v1296
      %v1341 = vpop.f32.mrb[0].mxu0
      %v1342 = vadd.f32 0.0, %v1341
      %v1343 = vpop.f32.mrb[0].mxu0
      %v1344 = vadd.f32 0.0, %v1343
      %v1345 = vpop.f32.mrb[0].mxu0
      %v1346 = vpop.f32.mrb[0].mxu0
      %1347 = vdwg.mxu0
      %1348 = vmatprep.subr.bf16.mxu0 0
      %1349 = vmatpush1.bf16.msra.mxu0 %v1305
      %1350 = vmatprep.subr.bf16.mxu0 0
      %1351 = vmatpush1.bf16.msra.mxu0 0
      %1352 = vmatprep.subr.bf16.mxu0 0
      %1353 = vmatpush1.bf16.msra.mxu0 0
      %1354 = vmatprep.subr.bf16.mxu0 0
      %1355 = vmatpush1.bf16.msra.mxu0 0
      %1356 = vmatprep.subr.bf16.mxu0 0
      %1357 = vmatpush1.bf16.msra.mxu0 0
      %1358 = vmatprep.subr.bf16.mxu0 0
      %1359 = vmatpush1.bf16.msra.mxu0 0
      %1360 = vmatprep.subr.bf16.mxu0 0
      %1361 = vmatpush1.bf16.msra.mxu0 0
      %1362 = vmatprep.subr.bf16.mxu0 0
      %1363 = vmatpush1.bf16.msra.mxu0 0
      %1364 = vmatprep.subr.bf16.mxu0 0
      %1365 = vmatpush1.bf16.msra.mxu0 0
      %1366 = vmatprep.subr.bf16.mxu0 0
      %1367 = vmatpush1.bf16.msra.mxu0 0
      %1368 = vmatprep.subr.bf16.mxu0 0
      %1369 = vmatpush1.bf16.msra.mxu0 0
      %1370 = vmatprep.subr.bf16.mxu0 0
      %1371 = vmatpush1.bf16.msra.mxu0 0
      %1372 = vmatprep.subr.bf16.mxu0 0
      %1373 = vmatpush1.bf16.msra.mxu0 0
      %1374 = vmatprep.subr.bf16.mxu0 0
      %1375 = vmatpush1.bf16.msra.mxu0 0
      %1376 = vmatprep.subr.bf16.mxu0 0
      %1377 = vmatpush1.bf16.msra.mxu0 0
      %1378 = vmatprep.subr.bf16.mxu0 0
      %1379 = vmatpush1.bf16.msra.mxu0 0
      %1380 = vmatprep.mubr.bf16.mxu0 0
      %1381 = vmatmul.mubr.bf16.gmra.mrb[0].mxu0 %v1296
      %v1382 = vpop.f32.mrb[0].mxu0
      %v1383 = vadd.f32 0.0, %v1382
      %v1384 = vpop.f32.mrb[0].mxu0
      %v1385 = vpop.f32.mrb[0].mxu0
      %v1386 = vpop.f32.mrb[0].mxu0
      %1387 = vdwg.mxu0
      %v1389 = vsel %vm244, %v1267, 0
      %v1392 = vand.u32 %v1278, %v251
      %v1395 = vand.u32 %v1286, %v251
      %v1398 = vand.u32 %v1285, %v251
      %1400 = vmatprep.subr.bf16.mxu0 %v1395
      %1401 = vmatpush1.bf16.msra.mxu0 %v1392
      %1402 = vmatprep.subr.bf16.mxu0 0
      %1403 = vmatpush1.bf16.msra.mxu0 0
      %1404 = vmatprep.subr.bf16.mxu0 0
      %1405 = vmatpush1.bf16.msra.mxu0 0
      %1406 = vmatprep.subr.bf16.mxu0 0
      %1407 = vmatpush1.bf16.msra.mxu0 0
      %1408 = vmatprep.subr.bf16.mxu0 0
      %1409 = vmatpush1.bf16.msra.mxu0 0
      %1410 = vmatprep.subr.bf16.mxu0 0
      %1411 = vmatpush1.bf16.msra.mxu0 0
      %1412 = vmatprep.subr.bf16.mxu0 0
      %1413 = vmatpush1.bf16.msra.mxu0 0
      %1414 = vmatprep.subr.bf16.mxu0 0
      %1415 = vmatpush1.bf16.msra.mxu0 0
      %1416 = vmatprep.subr.bf16.mxu0 0
      %1417 = vmatpush1.bf16.msra.mxu0 0
      %1418 = vmatprep.subr.bf16.mxu0 0
      %1419 = vmatpush1.bf16.msra.mxu0 0
      %1420 = vmatprep.subr.bf16.mxu0 0
      %1421 = vmatpush1.bf16.msra.mxu0 0
      %1422 = vmatprep.subr.bf16.mxu0 0
      %1423 = vmatpush1.bf16.msra.mxu0 0
      %1424 = vmatprep.subr.bf16.mxu0 0
      %1425 = vmatpush1.bf16.msra.mxu0 0
      %1426 = vmatprep.subr.bf16.mxu0 0
      %1427 = vmatpush1.bf16.msra.mxu0 0
      %1428 = vmatprep.subr.bf16.mxu0 0
      %1429 = vmatpush1.bf16.msra.mxu0 0
      %1430 = vmatprep.subr.bf16.mxu0 0
      %1431 = vmatpush1.bf16.msra.mxu0 0
      %1432 = vmatprep.mubr.bf16.mxu0 0
      %1433 = vmatmul.mubr.bf16.gmra.mrb[0].mxu0 %v1389
      %v1434 = vpop.f32.mrb[0].mxu0
      %v1435 = vadd.f32 %v1342, %v1434
      %v1436 = vpop.f32.mrb[0].mxu0
      %v1437 = vadd.f32 %v1344, %v1436
      %v1438 = vpop.f32.mrb[0].mxu0
      %v1439 = vpop.f32.mrb[0].mxu0
      %1440 = vdwg.mxu0
      %1441 = vmatprep.subr.bf16.mxu0 0
      %1442 = vmatpush1.bf16.msra.mxu0 %v1398
      %1443 = vmatprep.subr.bf16.mxu0 0
      %1444 = vmatpush1.bf16.msra.mxu0 0
      %1445 = vmatprep.subr.bf16.mxu0 0
      %1446 = vmatpush1.bf16.msra.mxu0 0
      %1447 = vmatprep.subr.bf16.mxu0 0
      %1448 = vmatpush1.bf16.msra.mxu0 0
      %1449 = vmatprep.subr.bf16.mxu0 0
      %1450 = vmatpush1.bf16.msra.mxu0 0
      %1451 = vmatprep.subr.bf16.mxu0 0
      %1452 = vmatpush1.bf16.msra.mxu0 0
      %1453 = vmatprep.subr.bf16.mxu0 0
      %1454 = vmatpush1.bf16.msra.mxu0 0
      %1455 = vmatprep.subr.bf16.mxu0 0
      %1456 = vmatpush1.bf16.msra.mxu0 0
      %1457 = vmatprep.subr.bf16.mxu0 0
      %1458 = vmatpush1.bf16.msra.mxu0 0
      %1459 = vmatprep.subr.bf16.mxu0 0
      %1460 = vmatpush1.bf16.msra.mxu0 0
      %1461 = vmatprep.subr.bf16.mxu0 0
      %1462 = vmatpush1.bf16.msra.mxu0 0
      %1463 = vmatprep.subr.bf16.mxu0 0
      %1464 = vmatpush1.bf16.msra.mxu0 0
      %1465 = vmatprep.subr.bf16.mxu0 0
      %1466 = vmatpush1.bf16.msra.mxu0 0
      %1467 = vmatprep.subr.bf16.mxu0 0
      %1468 = vmatpush1.bf16.msra.mxu0 0
      %1469 = vmatprep.subr.bf16.mxu0 0
      %1470 = vmatpush1.bf16.msra.mxu0 0
      %1471 = vmatprep.subr.bf16.mxu0 0
      %1472 = vmatpush1.bf16.msra.mxu0 0
      %1473 = vmatprep.mubr.bf16.mxu0 0
      %1474 = vmatmul.mubr.bf16.gmra.mrb[0].mxu0 %v1389
      %v1475 = vpop.f32.mrb[0].mxu0
      %v1476 = vadd.f32 %v1383, %v1475
      %v1477 = vpop.f32.mrb[0].mxu0
      %v1478 = vpop.f32.mrb[0].mxu0
      %v1479 = vpop.f32.mrb[0].mxu0
      %1480 = vdwg.mxu0
      %s1481 = scalar_lea.vmem %s1, 22
      %v1482 = vld [vmem:[%s1481] sm:$0x3]
      %1483 = vrot.lane.b32.xlu0 %v1278, 126
      %v1484 = vpop.permute.xlu0 %1483
      %1485 = vrot.lane.b32.xlu0 %v1286, 126
      %v1486 = vpop.permute.xlu0 %1485
      %1487 = vrot.lane.b32.xlu0 %v1285, 126
      %v1488 = vpop.permute.xlu0 %1487
      %v1489 = vsel %vm443, %v1484, %v1486
      %v1490 = vsel %vm443, %v1486, %v1488
      %v1492 = vsel %vm244, %v1482, 0
      %v1495 = vand.u32 %v1489, %v251
      %v1498 = vand.u32 %v1490, %v251
      %v1501 = vand.u32 %v1488, %v251
      %1503 = vmatprep.subr.bf16.mxu0 %v1498
      %1504 = vmatpush1.bf16.msra.mxu0 %v1495
      %1505 = vmatprep.subr.bf16.mxu0 0
      %1506 = vmatpush1.bf16.msra.mxu0 0
      %1507 = vmatprep.subr.bf16.mxu0 0
      %1508 = vmatpush1.bf16.msra.mxu0 0
      %1509 = vmatprep.subr.bf16.mxu0 0
      %1510 = vmatpush1.bf16.msra.mxu0 0
      %1511 = vmatprep.subr.bf16.mxu0 0
      %1512 = vmatpush1.bf16.msra.mxu0 0
      %1513 = vmatprep.subr.bf16.mxu0 0
      %1514 = vmatpush1.bf16.msra.mxu0 0
      %1515 = vmatprep.subr.bf16.mxu0 0
      %1516 = vmatpush1.bf16.msra.mxu0 0
      %1517 = vmatprep.subr.bf16.mxu0 0
      %1518 = vmatpush1.bf16.msra.mxu0 0
      %1519 = vmatprep.subr.bf16.mxu0 0
      %1520 = vmatpush1.bf16.msra.mxu0 0
      %1521 = vmatprep.subr.bf16.mxu0 0
      %1522 = vmatpush1.bf16.msra.mxu0 0
      %1523 = vmatprep.subr.bf16.mxu0 0
      %1524 = vmatpush1.bf16.msra.mxu0 0
      %1525 = vmatprep.subr.bf16.mxu0 0
      %1526 = vmatpush1.bf16.msra.mxu0 0
      %1527 = vmatprep.subr.bf16.mxu0 0
      %1528 = vmatpush1.bf16.msra.mxu0 0
      %1529 = vmatprep.subr.bf16.mxu0 0
      %1530 = vmatpush1.bf16.msra.mxu0 0
      %1531 = vmatprep.subr.bf16.mxu0 0
      %1532 = vmatpush1.bf16.msra.mxu0 0
      %1533 = vmatprep.subr.bf16.mxu0 0
      %1534 = vmatpush1.bf16.msra.mxu0 0
      %1535 = vmatprep.mubr.bf16.mxu0 0
      %1536 = vmatmul.mubr.bf16.gmra.mrb[0].mxu0 %v1492
      %v1537 = vpop.f32.mrb[0].mxu0
      %v1538 = vadd.f32 0.0, %v1537
      %v1539 = vpop.f32.mrb[0].mxu0
      %v1540 = vadd.f32 0.0, %v1539
      %v1541 = vpop.f32.mrb[0].mxu0
      %v1542 = vpop.f32.mrb[0].mxu0
      %1543 = vdwg.mxu0
      %1544 = vmatprep.subr.bf16.mxu0 0
      %1545 = vmatpush1.bf16.msra.mxu0 %v1501
      %1546 = vmatprep.subr.bf16.mxu0 0
      %1547 = vmatpush1.bf16.msra.mxu0 0
      %1548 = vmatprep.subr.bf16.mxu0 0
      %1549 = vmatpush1.bf16.msra.mxu0 0
      %1550 = vmatprep.subr.bf16.mxu0 0
      %1551 = vmatpush1.bf16.msra.mxu0 0
      %1552 = vmatprep.subr.bf16.mxu0 0
      %1553 = vmatpush1.bf16.msra.mxu0 0
      %1554 = vmatprep.subr.bf16.mxu0 0
      %1555 = vmatpush1.bf16.msra.mxu0 0
      %1556 = vmatprep.subr.bf16.mxu0 0
      %1557 = vmatpush1.bf16.msra.mxu0 0
      %1558 = vmatprep.subr.bf16.mxu0 0
      %1559 = vmatpush1.bf16.msra.mxu0 0
      %1560 = vmatprep.subr.bf16.mxu0 0
      %1561 = vmatpush1.bf16.msra.mxu0 0
      %1562 = vmatprep.subr.bf16.mxu0 0
      %1563 = vmatpush1.bf16.msra.mxu0 0
      %1564 = vmatprep.subr.bf16.mxu0 0
      %1565 = vmatpush1.bf16.msra.mxu0 0
      %1566 = vmatprep.subr.bf16.mxu0 0
      %1567 = vmatpush1.bf16.msra.mxu0 0
      %1568 = vmatprep.subr.bf16.mxu0 0
      %1569 = vmatpush1.bf16.msra.mxu0 0
      %1570 = vmatprep.subr.bf16.mxu0 0
      %1571 = vmatpush1.bf16.msra.mxu0 0
      %1572 = vmatprep.subr.bf16.mxu0 0
      %1573 = vmatpush1.bf16.msra.mxu0 0
      %1574 = vmatprep.subr.bf16.mxu0 0
      %1575 = vmatpush1.bf16.msra.mxu0 0
      %1576 = vmatprep.mubr.bf16.mxu0 0
      %1577 = vmatmul.mubr.bf16.gmra.mrb[0].mxu0 %v1492
      %v1578 = vpop.f32.mrb[0].mxu0
      %v1579 = vadd.f32 0.0, %v1578
      %v1580 = vpop.f32.mrb[0].mxu0
      %v1581 = vpop.f32.mrb[0].mxu0
      %v1582 = vpop.f32.mrb[0].mxu0
      %1583 = vdwg.mxu0
      %v1584 = vadd.f32 %v1435, %v1538
      %v1585 = vadd.f32 %v1437, %v1540
      %v1586 = vadd.f32 %v1476, %v1579
      %s1587 = scalar_lea.vmem %s1, 24
      %v1588 = vld [vmem:[%s1587] sm:$0x3]
      %1589 = vrot.lane.b32.xlu0 %v1278, 110
      %v1590 = vpop.permute.xlu0 %1589
      %1591 = vrot.lane.b32.xlu0 %v1286, 110
      %v1592 = vpop.permute.xlu0 %1591
      %1593 = vrot.lane.b32.xlu0 %v1285, 110
      %v1594 = vpop.permute.xlu0 %1593
      %v1595 = vsel %vm550, %v1590, %v1592
      %v1596 = vsel %vm550, %v1592, %v1594
      %v1598 = vsel %vm244, %v1588, 0
      %v1601 = vand.u32 %v1595, %v251
      %v1604 = vand.u32 %v1596, %v251
      %v1607 = vand.u32 %v1594, %v251
      %1609 = vmatprep.subr.bf16.mxu0 %v1604
      %1610 = vmatpush1.bf16.msra.mxu0 %v1601
      %1611 = vmatprep.subr.bf16.mxu0 0
      %1612 = vmatpush1.bf16.msra.mxu0 0
      %1613 = vmatprep.subr.bf16.mxu0 0
      %1614 = vmatpush1.bf16.msra.mxu0 0
      %1615 = vmatprep.subr.bf16.mxu0 0
      %1616 = vmatpush1.bf16.msra.mxu0 0
      %1617 = vmatprep.subr.bf16.mxu0 0
      %1618 = vmatpush1.bf16.msra.mxu0 0
      %1619 = vmatprep.subr.bf16.mxu0 0
      %1620 = vmatpush1.bf16.msra.mxu0 0
      %1621 = vmatprep.subr.bf16.mxu0 0
      %1622 = vmatpush1.bf16.msra.mxu0 0
      %1623 = vmatprep.subr.bf16.mxu0 0
      %1624 = vmatpush1.bf16.msra.mxu0 0
      %1625 = vmatprep.subr.bf16.mxu0 0
      %1626 = vmatpush1.bf16.msra.mxu0 0
      %1627 = vmatprep.subr.bf16.mxu0 0
      %1628 = vmatpush1.bf16.msra.mxu0 0
      %1629 = vmatprep.subr.bf16.mxu0 0
      %1630 = vmatpush1.bf16.msra.mxu0 0
      %1631 = vmatprep.subr.bf16.mxu0 0
      %1632 = vmatpush1.bf16.msra.mxu0 0
      %1633 = vmatprep.subr.bf16.mxu0 0
      %1634 = vmatpush1.bf16.msra.mxu0 0
      %1635 = vmatprep.subr.bf16.mxu0 0
      %1636 = vmatpush1.bf16.msra.mxu0 0
      %1637 = vmatprep.subr.bf16.mxu0 0
      %1638 = vmatpush1.bf16.msra.mxu0 0
      %1639 = vmatprep.subr.bf16.mxu0 0
      %1640 = vmatpush1.bf16.msra.mxu0 0
      %1641 = vmatprep.mubr.bf16.mxu0 0
      %1642 = vmatmul.mubr.bf16.gmra.mrb[0].mxu0 %v1598
      %v1643 = vpop.f32.mrb[0].mxu0
      %v1644 = vadd.f32 0.0, %v1643
      %v1645 = vpop.f32.mrb[0].mxu0
      %v1646 = vadd.f32 0.0, %v1645
      %v1647 = vpop.f32.mrb[0].mxu0
      %v1648 = vpop.f32.mrb[0].mxu0
      %1649 = vdwg.mxu0
      %1650 = vmatprep.subr.bf16.mxu0 0
      %1651 = vmatpush1.bf16.msra.mxu0 %v1607
      %1652 = vmatprep.subr.bf16.mxu0 0
      %1653 = vmatpush1.bf16.msra.mxu0 0
      %1654 = vmatprep.subr.bf16.mxu0 0
      %1655 = vmatpush1.bf16.msra.mxu0 0
      %1656 = vmatprep.subr.bf16.mxu0 0
      %1657 = vmatpush1.bf16.msra.mxu0 0
      %1658 = vmatprep.subr.bf16.mxu0 0
      %1659 = vmatpush1.bf16.msra.mxu0 0
      %1660 = vmatprep.subr.bf16.mxu0 0
      %1661 = vmatpush1.bf16.msra.mxu0 0
      %1662 = vmatprep.subr.bf16.mxu0 0
      %1663 = vmatpush1.bf16.msra.mxu0 0
      %1664 = vmatprep.subr.bf16.mxu0 0
      %1665 = vmatpush1.bf16.msra.mxu0 0
      %1666 = vmatprep.subr.bf16.mxu0 0
      %1667 = vmatpush1.bf16.msra.mxu0 0
      %1668 = vmatprep.subr.bf16.mxu0 0
      %1669 = vmatpush1.bf16.msra.mxu0 0
      %1670 = vmatprep.subr.bf16.mxu0 0
      %1671 = vmatpush1.bf16.msra.mxu0 0
      %1672 = vmatprep.subr.bf16.mxu0 0
      %1673 = vmatpush1.bf16.msra.mxu0 0
      %1674 = vmatprep.subr.bf16.mxu0 0
      %1675 = vmatpush1.bf16.msra.mxu0 0
      %1676 = vmatprep.subr.bf16.mxu0 0
      %1677 = vmatpush1.bf16.msra.mxu0 0
      %1678 = vmatprep.subr.bf16.mxu0 0
      %1679 = vmatpush1.bf16.msra.mxu0 0
      %1680 = vmatprep.subr.bf16.mxu0 0
      %1681 = vmatpush1.bf16.msra.mxu0 0
      %1682 = vmatprep.mubr.bf16.mxu0 0
      %1683 = vmatmul.mubr.bf16.gmra.mrb[0].mxu0 %v1598
      %v1684 = vpop.f32.mrb[0].mxu0
      %v1685 = vadd.f32 0.0, %v1684
      %v1686 = vpop.f32.mrb[0].mxu0
      %v1687 = vpop.f32.mrb[0].mxu0
      %v1688 = vpop.f32.mrb[0].mxu0
      %1689 = vdwg.mxu0
      %v1690 = vadd.f32 %v1584, %v1644
      %v1691 = vadd.f32 %v1585, %v1646
      %v1692 = vadd.f32 %v1586, %v1685
      %s1693 = scalar_lea.vmem %s1, 26
      %v1694 = vld [vmem:[%s1693] sm:$0x3]
      %1695 = vrot.lane.b32.xlu0 %v1278, 109
      %v1696 = vpop.permute.xlu0 %1695
      %1697 = vrot.lane.b32.xlu0 %v1286, 109
      %v1698 = vpop.permute.xlu0 %1697
      %1699 = vrot.lane.b32.xlu0 %v1285, 109
      %v1700 = vpop.permute.xlu0 %1699
      %v1701 = vsel %vm657, %v1696, %v1698
      %v1702 = vsel %vm657, %v1698, %v1700
      %v1704 = vsel %vm244, %v1694, 0
      %v1707 = vand.u32 %v1701, %v251
      %v1710 = vand.u32 %v1702, %v251
      %v1713 = vand.u32 %v1700, %v251
      %1715 = vmatprep.subr.bf16.mxu0 %v1710
      %1716 = vmatpush1.bf16.msra.mxu0 %v1707
      %1717 = vmatprep.subr.bf16.mxu0 0
      %1718 = vmatpush1.bf16.msra.mxu0 0
      %1719 = vmatprep.subr.bf16.mxu0 0
      %1720 = vmatpush1.bf16.msra.mxu0 0
      %1721 = vmatprep.subr.bf16.mxu0 0
      %1722 = vmatpush1.bf16.msra.mxu0 0
      %1723 = vmatprep.subr.bf16.mxu0 0
      %1724 = vmatpush1.bf16.msra.mxu0 0
      %1725 = vmatprep.subr.bf16.mxu0 0
      %1726 = vmatpush1.bf16.msra.mxu0 0
      %1727 = vmatprep.subr.bf16.mxu0 0
      %1728 = vmatpush1.bf16.msra.mxu0 0
      %1729 = vmatprep.subr.bf16.mxu0 0
      %1730 = vmatpush1.bf16.msra.mxu0 0
      %1731 = vmatprep.subr.bf16.mxu0 0
      %1732 = vmatpush1.bf16.msra.mxu0 0
      %1733 = vmatprep.subr.bf16.mxu0 0
      %1734 = vmatpush1.bf16.msra.mxu0 0
      %1735 = vmatprep.subr.bf16.mxu0 0
      %1736 = vmatpush1.bf16.msra.mxu0 0
      %1737 = vmatprep.subr.bf16.mxu0 0
      %1738 = vmatpush1.bf16.msra.mxu0 0
      %1739 = vmatprep.subr.bf16.mxu0 0
      %1740 = vmatpush1.bf16.msra.mxu0 0
      %1741 = vmatprep.subr.bf16.mxu0 0
      %1742 = vmatpush1.bf16.msra.mxu0 0
      %1743 = vmatprep.subr.bf16.mxu0 0
      %1744 = vmatpush1.bf16.msra.mxu0 0
      %1745 = vmatprep.subr.bf16.mxu0 0
      %1746 = vmatpush1.bf16.msra.mxu0 0
      %1747 = vmatprep.mubr.bf16.mxu0 0
      %1748 = vmatmul.mubr.bf16.gmra.mrb[0].mxu0 %v1704
      %v1749 = vpop.f32.mrb[0].mxu0
      %v1750 = vadd.f32 0.0, %v1749
      %v1751 = vpop.f32.mrb[0].mxu0
      %v1752 = vadd.f32 0.0, %v1751
      %v1753 = vpop.f32.mrb[0].mxu0
      %v1754 = vpop.f32.mrb[0].mxu0
      %1755 = vdwg.mxu0
      %1756 = vmatprep.subr.bf16.mxu0 0
      %1757 = vmatpush1.bf16.msra.mxu0 %v1713
      %1758 = vmatprep.subr.bf16.mxu0 0
      %1759 = vmatpush1.bf16.msra.mxu0 0
      %1760 = vmatprep.subr.bf16.mxu0 0
      %1761 = vmatpush1.bf16.msra.mxu0 0
      %1762 = vmatprep.subr.bf16.mxu0 0
      %1763 = vmatpush1.bf16.msra.mxu0 0
      %1764 = vmatprep.subr.bf16.mxu0 0
      %1765 = vmatpush1.bf16.msra.mxu0 0
      %1766 = vmatprep.subr.bf16.mxu0 0
      %1767 = vmatpush1.bf16.msra.mxu0 0
      %1768 = vmatprep.subr.bf16.mxu0 0
      %1769 = vmatpush1.bf16.msra.mxu0 0
      %1770 = vmatprep.subr.bf16.mxu0 0
      %1771 = vmatpush1.bf16.msra.mxu0 0
      %1772 = vmatprep.subr.bf16.mxu0 0
      %1773 = vmatpush1.bf16.msra.mxu0 0
      %1774 = vmatprep.subr.bf16.mxu0 0
      %1775 = vmatpush1.bf16.msra.mxu0 0
      %1776 = vmatprep.subr.bf16.mxu0 0
      %1777 = vmatpush1.bf16.msra.mxu0 0
      %1778 = vmatprep.subr.bf16.mxu0 0
      %1779 = vmatpush1.bf16.msra.mxu0 0
      %1780 = vmatprep.subr.bf16.mxu0 0
      %1781 = vmatpush1.bf16.msra.mxu0 0
      %1782 = vmatprep.subr.bf16.mxu0 0
      %1783 = vmatpush1.bf16.msra.mxu0 0
      %1784 = vmatprep.subr.bf16.mxu0 0
      %1785 = vmatpush1.bf16.msra.mxu0 0
      %1786 = vmatprep.subr.bf16.mxu0 0
      %1787 = vmatpush1.bf16.msra.mxu0 0
      %1788 = vmatprep.mubr.bf16.mxu0 0
      %1789 = vmatmul.mubr.bf16.gmra.mrb[0].mxu0 %v1704
      %v1790 = vpop.f32.mrb[0].mxu0
      %v1791 = vadd.f32 0.0, %v1790
      %v1792 = vpop.f32.mrb[0].mxu0
      %v1793 = vpop.f32.mrb[0].mxu0
      %v1794 = vpop.f32.mrb[0].mxu0
      %1795 = vdwg.mxu0
      %v1796 = vadd.f32 %v1690, %v1750
      %v1797 = vadd.f32 %v1691, %v1752
      %v1798 = vadd.f32 %v1692, %v1791
      %s1799 = scalar_lea.vmem %s1, 28
      %v1800 = vld [vmem:[%s1799] sm:$0x3]
      %1801 = vrot.lane.b32.xlu0 %v1278, 108
      %v1802 = vpop.permute.xlu0 %1801
      %1803 = vrot.lane.b32.xlu0 %v1286, 108
      %v1804 = vpop.permute.xlu0 %1803
      %1805 = vrot.lane.b32.xlu0 %v1285, 108
      %v1806 = vpop.permute.xlu0 %1805
      %v1807 = vsel %vm764, %v1802, %v1804
      %v1808 = vsel %vm764, %v1804, %v1806
      %v1810 = vsel %vm244, %v1800, 0
      %v1813 = vand.u32 %v1807, %v251
      %v1816 = vand.u32 %v1808, %v251
      %v1819 = vand.u32 %v1806, %v251
      %1821 = vmatprep.subr.bf16.mxu0 %v1816
      %1822 = vmatpush1.bf16.msra.mxu0 %v1813
      %1823 = vmatprep.subr.bf16.mxu0 0
      %1824 = vmatpush1.bf16.msra.mxu0 0
      %1825 = vmatprep.subr.bf16.mxu0 0
      %1826 = vmatpush1.bf16.msra.mxu0 0
      %1827 = vmatprep.subr.bf16.mxu0 0
      %1828 = vmatpush1.bf16.msra.mxu0 0
      %1829 = vmatprep.subr.bf16.mxu0 0
      %1830 = vmatpush1.bf16.msra.mxu0 0
      %1831 = vmatprep.subr.bf16.mxu0 0
      %1832 = vmatpush1.bf16.msra.mxu0 0
      %1833 = vmatprep.subr.bf16.mxu0 0
      %1834 = vmatpush1.bf16.msra.mxu0 0
      %1835 = vmatprep.subr.bf16.mxu0 0
      %1836 = vmatpush1.bf16.msra.mxu0 0
      %1837 = vmatprep.subr.bf16.mxu0 0
      %1838 = vmatpush1.bf16.msra.mxu0 0
      %1839 = vmatprep.subr.bf16.mxu0 0
      %1840 = vmatpush1.bf16.msra.mxu0 0
      %1841 = vmatprep.subr.bf16.mxu0 0
      %1842 = vmatpush1.bf16.msra.mxu0 0
      %1843 = vmatprep.subr.bf16.mxu0 0
      %1844 = vmatpush1.bf16.msra.mxu0 0
      %1845 = vmatprep.subr.bf16.mxu0 0
      %1846 = vmatpush1.bf16.msra.mxu0 0
      %1847 = vmatprep.subr.bf16.mxu0 0
      %1848 = vmatpush1.bf16.msra.mxu0 0
      %1849 = vmatprep.subr.bf16.mxu0 0
      %1850 = vmatpush1.bf16.msra.mxu0 0
      %1851 = vmatprep.subr.bf16.mxu0 0
      %1852 = vmatpush1.bf16.msra.mxu0 0
      %1853 = vmatprep.mubr.bf16.mxu0 0
      %1854 = vmatmul.mubr.bf16.gmra.mrb[0].mxu0 %v1810
      %v1855 = vpop.f32.mrb[0].mxu0
      %v1856 = vadd.f32 0.0, %v1855
      %v1857 = vpop.f32.mrb[0].mxu0
      %v1858 = vadd.f32 0.0, %v1857
      %v1859 = vpop.f32.mrb[0].mxu0
      %v1860 = vpop.f32.mrb[0].mxu0
      %1861 = vdwg.mxu0
      %1862 = vmatprep.subr.bf16.mxu0 0
      %1863 = vmatpush1.bf16.msra.mxu0 %v1819
      %1864 = vmatprep.subr.bf16.mxu0 0
      %1865 = vmatpush1.bf16.msra.mxu0 0
      %1866 = vmatprep.subr.bf16.mxu0 0
      %1867 = vmatpush1.bf16.msra.mxu0 0
      %1868 = vmatprep.subr.bf16.mxu0 0
      %1869 = vmatpush1.bf16.msra.mxu0 0
      %1870 = vmatprep.subr.bf16.mxu0 0
      %1871 = vmatpush1.bf16.msra.mxu0 0
      %1872 = vmatprep.subr.bf16.mxu0 0
      %1873 = vmatpush1.bf16.msra.mxu0 0
      %1874 = vmatprep.subr.bf16.mxu0 0
      %1875 = vmatpush1.bf16.msra.mxu0 0
      %1876 = vmatprep.subr.bf16.mxu0 0
      %1877 = vmatpush1.bf16.msra.mxu0 0
      %1878 = vmatprep.subr.bf16.mxu0 0
      %1879 = vmatpush1.bf16.msra.mxu0 0
      %1880 = vmatprep.subr.bf16.mxu0 0
      %1881 = vmatpush1.bf16.msra.mxu0 0
      %1882 = vmatprep.subr.bf16.mxu0 0
      %1883 = vmatpush1.bf16.msra.mxu0 0
      %1884 = vmatprep.subr.bf16.mxu0 0
      %1885 = vmatpush1.bf16.msra.mxu0 0
      %1886 = vmatprep.subr.bf16.mxu0 0
      %1887 = vmatpush1.bf16.msra.mxu0 0
      %1888 = vmatprep.subr.bf16.mxu0 0
      %1889 = vmatpush1.bf16.msra.mxu0 0
      %1890 = vmatprep.subr.bf16.mxu0 0
      %1891 = vmatpush1.bf16.msra.mxu0 0
      %1892 = vmatprep.subr.bf16.mxu0 0
      %1893 = vmatpush1.bf16.msra.mxu0 0
      %1894 = vmatprep.mubr.bf16.mxu0 0
      %1895 = vmatmul.mubr.bf16.gmra.mrb[0].mxu0 %v1810
      %v1896 = vpop.f32.mrb[0].mxu0
      %v1897 = vadd.f32 0.0, %v1896
      %v1898 = vpop.f32.mrb[0].mxu0
      %v1899 = vpop.f32.mrb[0].mxu0
      %v1900 = vpop.f32.mrb[0].mxu0
      %1901 = vdwg.mxu0
      %v1902 = vadd.f32 %v1796, %v1856
      %v1903 = vadd.f32 %v1797, %v1858
      %v1904 = vadd.f32 %v1798, %v1897
      %s1905 = scalar_lea.vmem %s1, 30
      %v1906 = vld [vmem:[%s1905] sm:$0x3]
      %1907 = vrot.lane.b32.xlu0 %v1278, 92
      %v1908 = vpop.permute.xlu0 %1907
      %1909 = vrot.lane.b32.xlu0 %v1286, 92
      %v1910 = vpop.permute.xlu0 %1909
      %1911 = vrot.lane.b32.xlu0 %v1285, 92
      %v1912 = vpop.permute.xlu0 %1911
      %v1913 = vsel %vm871, %v1908, %v1910
      %v1914 = vsel %vm871, %v1910, %v1912
      %v1916 = vsel %vm244, %v1906, 0
      %v1919 = vand.u32 %v1913, %v251
      %v1922 = vand.u32 %v1914, %v251
      %v1925 = vand.u32 %v1912, %v251
      %1927 = vmatprep.subr.bf16.mxu0 %v1922
      %1928 = vmatpush1.bf16.msra.mxu0 %v1919
      %1929 = vmatprep.subr.bf16.mxu0 0
      %1930 = vmatpush1.bf16.msra.mxu0 0
      %1931 = vmatprep.subr.bf16.mxu0 0
      %1932 = vmatpush1.bf16.msra.mxu0 0
      %1933 = vmatprep.subr.bf16.mxu0 0
      %1934 = vmatpush1.bf16.msra.mxu0 0
      %1935 = vmatprep.subr.bf16.mxu0 0
      %1936 = vmatpush1.bf16.msra.mxu0 0
      %1937 = vmatprep.subr.bf16.mxu0 0
      %1938 = vmatpush1.bf16.msra.mxu0 0
      %1939 = vmatprep.subr.bf16.mxu0 0
      %1940 = vmatpush1.bf16.msra.mxu0 0
      %1941 = vmatprep.subr.bf16.mxu0 0
      %1942 = vmatpush1.bf16.msra.mxu0 0
      %1943 = vmatprep.subr.bf16.mxu0 0
      %1944 = vmatpush1.bf16.msra.mxu0 0
      %1945 = vmatprep.subr.bf16.mxu0 0
      %1946 = vmatpush1.bf16.msra.mxu0 0
      %1947 = vmatprep.subr.bf16.mxu0 0
      %1948 = vmatpush1.bf16.msra.mxu0 0
      %1949 = vmatprep.subr.bf16.mxu0 0
      %1950 = vmatpush1.bf16.msra.mxu0 0
      %1951 = vmatprep.subr.bf16.mxu0 0
      %1952 = vmatpush1.bf16.msra.mxu0 0
      %1953 = vmatprep.subr.bf16.mxu0 0
      %1954 = vmatpush1.bf16.msra.mxu0 0
      %1955 = vmatprep.subr.bf16.mxu0 0
      %1956 = vmatpush1.bf16.msra.mxu0 0
      %1957 = vmatprep.subr.bf16.mxu0 0
      %1958 = vmatpush1.bf16.msra.mxu0 0
      %1959 = vmatprep.mubr.bf16.mxu0 0
      %1960 = vmatmul.mubr.bf16.gmra.mrb[0].mxu0 %v1916
      %v1961 = vpop.f32.mrb[0].mxu0
      %v1962 = vadd.f32 0.0, %v1961
      %v1963 = vpop.f32.mrb[0].mxu0
      %v1964 = vadd.f32 0.0, %v1963
      %v1965 = vpop.f32.mrb[0].mxu0
      %v1966 = vpop.f32.mrb[0].mxu0
      %1967 = vdwg.mxu0
      %1968 = vmatprep.subr.bf16.mxu0 0
      %1969 = vmatpush1.bf16.msra.mxu0 %v1925
      %1970 = vmatprep.subr.bf16.mxu0 0
      %1971 = vmatpush1.bf16.msra.mxu0 0
      %1972 = vmatprep.subr.bf16.mxu0 0
      %1973 = vmatpush1.bf16.msra.mxu0 0
      %1974 = vmatprep.subr.bf16.mxu0 0
      %1975 = vmatpush1.bf16.msra.mxu0 0
      %1976 = vmatprep.subr.bf16.mxu0 0
      %1977 = vmatpush1.bf16.msra.mxu0 0
      %1978 = vmatprep.subr.bf16.mxu0 0
      %1979 = vmatpush1.bf16.msra.mxu0 0
      %1980 = vmatprep.subr.bf16.mxu0 0
      %1981 = vmatpush1.bf16.msra.mxu0 0
      %1982 = vmatprep.subr.bf16.mxu0 0
      %1983 = vmatpush1.bf16.msra.mxu0 0
      %1984 = vmatprep.subr.bf16.mxu0 0
      %1985 = vmatpush1.bf16.msra.mxu0 0
      %1986 = vmatprep.subr.bf16.mxu0 0
      %1987 = vmatpush1.bf16.msra.mxu0 0
      %1988 = vmatprep.subr.bf16.mxu0 0
      %1989 = vmatpush1.bf16.msra.mxu0 0
      %1990 = vmatprep.subr.bf16.mxu0 0
      %1991 = vmatpush1.bf16.msra.mxu0 0
      %1992 = vmatprep.subr.bf16.mxu0 0
      %1993 = vmatpush1.bf16.msra.mxu0 0
      %1994 = vmatprep.subr.bf16.mxu0 0
      %1995 = vmatpush1.bf16.msra.mxu0 0
      %1996 = vmatprep.subr.bf16.mxu0 0
      %1997 = vmatpush1.bf16.msra.mxu0 0
      %1998 = vmatprep.subr.bf16.mxu0 0
      %1999 = vmatpush1.bf16.msra.mxu0 0
      %2000 = vmatprep.mubr.bf16.mxu0 0
      %2001 = vmatmul.mubr.bf16.gmra.mrb[0].mxu0 %v1916
      %v2002 = vpop.f32.mrb[0].mxu0
      %v2003 = vadd.f32 0.0, %v2002
      %v2004 = vpop.f32.mrb[0].mxu0
      %v2005 = vpop.f32.mrb[0].mxu0
      %v2006 = vpop.f32.mrb[0].mxu0
      %2007 = vdwg.mxu0
      %v2008 = vadd.f32 %v1902, %v1962
      %v2009 = vadd.f32 %v1903, %v1964
      %v2010 = vadd.f32 %v1904, %v2003
      %s2011 = scalar_lea.vmem %s1, 32
      %v2012 = vld [vmem:[%s2011] sm:$0x3]
      %2013 = vrot.lane.b32.xlu0 %v1278, 91
      %v2014 = vpop.permute.xlu0 %2013
      %2015 = vrot.lane.b32.xlu0 %v1286, 91
      %v2016 = vpop.permute.xlu0 %2015
      %2017 = vrot.lane.b32.xlu0 %v1285, 91
      %v2018 = vpop.permute.xlu0 %2017
      %v2019 = vsel %vm978, %v2014, %v2016
      %v2020 = vsel %vm978, %v2016, %v2018
      %v2022 = vsel %vm244, %v2012, 0
      %v2025 = vand.u32 %v2019, %v251
      %v2028 = vand.u32 %v2020, %v251
      %v2031 = vand.u32 %v2018, %v251
      %2033 = vmatprep.subr.bf16.mxu0 %v2028
      %2034 = vmatpush1.bf16.msra.mxu0 %v2025
      %2035 = vmatprep.subr.bf16.mxu0 0
      %2036 = vmatpush1.bf16.msra.mxu0 0
      %2037 = vmatprep.subr.bf16.mxu0 0
      %2038 = vmatpush1.bf16.msra.mxu0 0
      %2039 = vmatprep.subr.bf16.mxu0 0
      %2040 = vmatpush1.bf16.msra.mxu0 0
      %2041 = vmatprep.subr.bf16.mxu0 0
      %2042 = vmatpush1.bf16.msra.mxu0 0
      %2043 = vmatprep.subr.bf16.mxu0 0
      %2044 = vmatpush1.bf16.msra.mxu0 0
      %2045 = vmatprep.subr.bf16.mxu0 0
      %2046 = vmatpush1.bf16.msra.mxu0 0
      %2047 = vmatprep.subr.bf16.mxu0 0
      %2048 = vmatpush1.bf16.msra.mxu0 0
      %2049 = vmatprep.subr.bf16.mxu0 0
      %2050 = vmatpush1.bf16.msra.mxu0 0
      %2051 = vmatprep.subr.bf16.mxu0 0
      %2052 = vmatpush1.bf16.msra.mxu0 0
      %2053 = vmatprep.subr.bf16.mxu0 0
      %2054 = vmatpush1.bf16.msra.mxu0 0
      %2055 = vmatprep.subr.bf16.mxu0 0
      %2056 = vmatpush1.bf16.msra.mxu0 0
      %2057 = vmatprep.subr.bf16.mxu0 0
      %2058 = vmatpush1.bf16.msra.mxu0 0
      %2059 = vmatprep.subr.bf16.mxu0 0
      %2060 = vmatpush1.bf16.msra.mxu0 0
      %2061 = vmatprep.subr.bf16.mxu0 0
      %2062 = vmatpush1.bf16.msra.mxu0 0
      %2063 = vmatprep.subr.bf16.mxu0 0
      %2064 = vmatpush1.bf16.msra.mxu0 0
      %2065 = vmatprep.mubr.bf16.mxu0 0
      %2066 = vmatmul.mubr.bf16.gmra.mrb[0].mxu0 %v2022
      %v2067 = vpop.f32.mrb[0].mxu0
      %v2068 = vadd.f32 0.0, %v2067
      %v2069 = vpop.f32.mrb[0].mxu0
      %v2070 = vadd.f32 0.0, %v2069
      %v2071 = vpop.f32.mrb[0].mxu0
      %v2072 = vpop.f32.mrb[0].mxu0
      %2073 = vdwg.mxu0
      %2074 = vmatprep.subr.bf16.mxu0 0
      %2075 = vmatpush1.bf16.msra.mxu0 %v2031
      %2076 = vmatprep.subr.bf16.mxu0 0
      %2077 = vmatpush1.bf16.msra.mxu0 0
      %2078 = vmatprep.subr.bf16.mxu0 0
      %2079 = vmatpush1.bf16.msra.mxu0 0
      %2080 = vmatprep.subr.bf16.mxu0 0
      %2081 = vmatpush1.bf16.msra.mxu0 0
      %2082 = vmatprep.subr.bf16.mxu0 0
      %2083 = vmatpush1.bf16.msra.mxu0 0
      %2084 = vmatprep.subr.bf16.mxu0 0
      %2085 = vmatpush1.bf16.msra.mxu0 0
      %2086 = vmatprep.subr.bf16.mxu0 0
      %2087 = vmatpush1.bf16.msra.mxu0 0
      %2088 = vmatprep.subr.bf16.mxu0 0
      %2089 = vmatpush1.bf16.msra.mxu0 0
      %2090 = vmatprep.subr.bf16.mxu0 0
      %2091 = vmatpush1.bf16.msra.mxu0 0
      %2092 = vmatprep.subr.bf16.mxu0 0
      %2093 = vmatpush1.bf16.msra.mxu0 0
      %2094 = vmatprep.subr.bf16.mxu0 0
      %2095 = vmatpush1.bf16.msra.mxu0 0
      %2096 = vmatprep.subr.bf16.mxu0 0
      %2097 = vmatpush1.bf16.msra.mxu0 0
      %2098 = vmatprep.subr.bf16.mxu0 0
      %2099 = vmatpush1.bf16.msra.mxu0 0
      %2100 = vmatprep.subr.bf16.mxu0 0
      %2101 = vmatpush1.bf16.msra.mxu0 0
      %2102 = vmatprep.subr.bf16.mxu0 0
      %2103 = vmatpush1.bf16.msra.mxu0 0
      %2104 = vmatprep.subr.bf16.mxu0 0
      %2105 = vmatpush1.bf16.msra.mxu0 0
      %2106 = vmatprep.mubr.bf16.mxu0 0
      %2107 = vmatmul.mubr.bf16.gmra.mrb[0].mxu0 %v2022
      %v2108 = vpop.f32.mrb[0].mxu0
      %v2109 = vadd.f32 0.0, %v2108
      %v2110 = vpop.f32.mrb[0].mxu0
      %v2111 = vpop.f32.mrb[0].mxu0
      %v2112 = vpop.f32.mrb[0].mxu0
      %2113 = vdwg.mxu0
      %v2114 = vadd.f32 %v2008, %v2068
      %v2115 = vadd.f32 %v2009, %v2070
      %v2116 = vadd.f32 %v2010, %v2109
      %s2117 = scalar_lea.vmem %s1, 34
      %v2118 = vld [vmem:[%s2117] sm:$0x3]
      %2119 = vrot.lane.b32.xlu0 %v1278, 90
      %v2120 = vpop.permute.xlu0 %2119
      %2121 = vrot.lane.b32.xlu0 %v1286, 90
      %v2122 = vpop.permute.xlu0 %2121
      %2123 = vrot.lane.b32.xlu0 %v1285, 90
      %v2124 = vpop.permute.xlu0 %2123
      %v2125 = vsel %vm1085, %v2120, %v2122
      %v2126 = vsel %vm1085, %v2122, %v2124
      %v2128 = vsel %vm244, %v2118, 0
      %v2131 = vand.u32 %v2125, %v251
      %v2134 = vand.u32 %v2126, %v251
      %v2137 = vand.u32 %v2124, %v251
      %2139 = vmatprep.subr.bf16.mxu0 %v2134
      %2140 = vmatpush1.bf16.msra.mxu0 %v2131
      %2141 = vmatprep.subr.bf16.mxu0 0
      %2142 = vmatpush1.bf16.msra.mxu0 0
      %2143 = vmatprep.subr.bf16.mxu0 0
      %2144 = vmatpush1.bf16.msra.mxu0 0
      %2145 = vmatprep.subr.bf16.mxu0 0
      %2146 = vmatpush1.bf16.msra.mxu0 0
      %2147 = vmatprep.subr.bf16.mxu0 0
      %2148 = vmatpush1.bf16.msra.mxu0 0
      %2149 = vmatprep.subr.bf16.mxu0 0
      %2150 = vmatpush1.bf16.msra.mxu0 0
      %2151 = vmatprep.subr.bf16.mxu0 0
      %2152 = vmatpush1.bf16.msra.mxu0 0
      %2153 = vmatprep.subr.bf16.mxu0 0
      %2154 = vmatpush1.bf16.msra.mxu0 0
      %2155 = vmatprep.subr.bf16.mxu0 0
      %2156 = vmatpush1.bf16.msra.mxu0 0
      %2157 = vmatprep.subr.bf16.mxu0 0
      %2158 = vmatpush1.bf16.msra.mxu0 0
      %2159 = vmatprep.subr.bf16.mxu0 0
      %2160 = vmatpush1.bf16.msra.mxu0 0
      %2161 = vmatprep.subr.bf16.mxu0 0
      %2162 = vmatpush1.bf16.msra.mxu0 0
      %2163 = vmatprep.subr.bf16.mxu0 0
      %2164 = vmatpush1.bf16.msra.mxu0 0
      %2165 = vmatprep.subr.bf16.mxu0 0
      %2166 = vmatpush1.bf16.msra.mxu0 0
      %2167 = vmatprep.subr.bf16.mxu0 0
      %2168 = vmatpush1.bf16.msra.mxu0 0
      %2169 = vmatprep.subr.bf16.mxu0 0
      %2170 = vmatpush1.bf16.msra.mxu0 0
      %2171 = vmatprep.mubr.bf16.mxu0 0
      %2172 = vmatmul.mubr.bf16.gmra.mrb[0].mxu0 %v2128
      %v2173 = vpop.f32.mrb[0].mxu0
      %v2174 = vadd.f32 0.0, %v2173
      %v2175 = vpop.f32.mrb[0].mxu0
      %v2176 = vadd.f32 0.0, %v2175
      %v2177 = vpop.f32.mrb[0].mxu0
      %v2178 = vpop.f32.mrb[0].mxu0
      %2179 = vdwg.mxu0
      %2180 = vmatprep.subr.bf16.mxu0 0
      %2181 = vmatpush1.bf16.msra.mxu0 %v2137
      %2182 = vmatprep.subr.bf16.mxu0 0
      %2183 = vmatpush1.bf16.msra.mxu0 0
      %2184 = vmatprep.subr.bf16.mxu0 0
      %2185 = vmatpush1.bf16.msra.mxu0 0
      %2186 = vmatprep.subr.bf16.mxu0 0
      %2187 = vmatpush1.bf16.msra.mxu0 0
      %2188 = vmatprep.subr.bf16.mxu0 0
      %2189 = vmatpush1.bf16.msra.mxu0 0
      %2190 = vmatprep.subr.bf16.mxu0 0
      %2191 = vmatpush1.bf16.msra.mxu0 0
      %2192 = vmatprep.subr.bf16.mxu0 0
      %2193 = vmatpush1.bf16.msra.mxu0 0
      %2194 = vmatprep.subr.bf16.mxu0 0
      %2195 = vmatpush1.bf16.msra.mxu0 0
      %2196 = vmatprep.subr.bf16.mxu0 0
      %2197 = vmatpush1.bf16.msra.mxu0 0
      %2198 = vmatprep.subr.bf16.mxu0 0
      %2199 = vmatpush1.bf16.msra.mxu0 0
      %2200 = vmatprep.subr.bf16.mxu0 0
      %2201 = vmatpush1.bf16.msra.mxu0 0
      %2202 = vmatprep.subr.bf16.mxu0 0
      %2203 = vmatpush1.bf16.msra.mxu0 0
      %2204 = vmatprep.subr.bf16.mxu0 0
      %2205 = vmatpush1.bf16.msra.mxu0 0
      %2206 = vmatprep.subr.bf16.mxu0 0
      %2207 = vmatpush1.bf16.msra.mxu0 0
      %2208 = vmatprep.subr.bf16.mxu0 0
      %2209 = vmatpush1.bf16.msra.mxu0 0
      %2210 = vmatprep.subr.bf16.mxu0 0
      %2211 = vmatpush1.bf16.msra.mxu0 0
      %2212 = vmatprep.mubr.bf16.mxu0 0
      %2213 = vmatmul.mubr.bf16.gmra.mrb[0].mxu0 %v2128
      %v2214 = vpop.f32.mrb[0].mxu0
      %v2215 = vadd.f32 0.0, %v2214
      %v2216 = vpop.f32.mrb[0].mxu0
      %v2217 = vpop.f32.mrb[0].mxu0
      %v2218 = vpop.f32.mrb[0].mxu0
      %2219 = vdwg.mxu0
      %v2220 = vadd.f32 %v2114, %v2174
      %v2221 = vadd.f32 %v2115, %v2176
      %v2222 = vadd.f32 %v2116, %v2215
      %s2223 = scalar_lea.vmem %s2, 4
      %v2224 = vld [vmem:[%s2223] sm:$0x7]
      %2226 = vset.pattern.permute.xlu0 0
      %2227 = vperm.xlu0 %2226, %v2224
      %v2228 = vpop.permute.xlu0 %2227
      %v2230 = vmul.f32 %v2220, %v2228
      %v2231 = vmul.f32 %v2221, %v2228
      %v2232 = vmul.f32 %v2222, %v2228
      %2233 = vset.pattern.permute.xlu0 1
      %2234 = vperm.xlu0 %2233, %v2224
      %v2235 = vpop.permute.xlu0 %2234
      %v2237 = vadd.f32 %v2230, %v2235
      %v2238 = vadd.f32 %v2231, %v2235
      %v2239 = vadd.f32 %v2232, %v2235
      %vm2240 = vcmp.gt.f32.partialorder %v2237, 0.0
      %vm2241 = vcmp.gt.f32.partialorder %v2238, 0.0
      %vm2242 = vcmp.gt.f32.partialorder %v2239, 0.0
      %v2243 = vmul.f32 %v2237, 0.2
      %v2244 = vmul.f32 %v2238, 0.2
      %v2245 = vmul.f32 %v2239, 0.2
      %v2246 = vsel %vm2240, %v2237, %v2243
      %v2247 = vsel %vm2241, %v2238, %v2244
      %v2248 = vsel %vm2242, %v2239, %v2245
      %v2249 = vmul.f32 %v2246, %v1213
      %v2250 = vmul.f32 %v2247, %v1217
      %v2251 = vmul.f32 %v2248, %v1221
      %v2252 = vpack.c.bf16 %v2249, %v2249
      %v2253 = vpack.c.bf16 %v2250, %v2250
      %v2254 = vpack.c.bf16 %v2251, %v2251
      %v2258 = vcombine.low %v2252, %v2253
      %v2260 = vunpack.c.l.s4 1983009808
      %v2261 = vunpack.c.0.s8 %v2260
      %v2262 = vlaneseq
      %v2263 = vshrl.u32 %v2262, 7
      %v2264 = vsub.s32 %v2261, %v2263
      %v2265 = vrot.slane %v2258, %v2264
      %v2267 = vunpack.c.l.s4 1983009808
      %v2268 = vunpack.c.0.s8 %v2267
      %v2269 = vlaneseq
      %v2270 = vshrl.u32 %v2269, 7
      %v2271 = vsub.s32 %v2268, %v2270
      %v2272 = vrot.slane %v2254, %v2271
      %v2273 = vcombine.low %v2265, %v2272
      %2274 = vrot.lane.b32.xlu0 %v2273, 19
      %v2275 = vpop.permute.xlu0 %2274
      %v2276 = vrot.slane %v2275, 6
      %v2277 = vsel %vm1253, %v2276, %v2275
      %v2279 = vld [vmem:[#allocation2] sm:$0x3f]
      %v2280 = vsel %vm1261, %v2277, %v2279
      %2281 = vst [vmem:[#allocation2] sm:$0x3f] %v2280
      %v2282 = vld [vmem:[#allocation2] sm:$0x3f]
      %s2283 = scalar_lea.vmem %s1, 36
      %v2284 = vld [vmem:[%s2283] sm:$0x3]
      %s2285 = scalar_lea.vmem %s1, 38
      %v2286 = vld [vmem:[%s2285] sm:$0x3]
      %v2288 = vcombine.high %v2282, %v2282
      %v2290 = vunpack.c.l.s4 1983009808
      %v2291 = vunpack.c.0.s8 %v2290
      %v2292 = vlaneseq
      %v2293 = vshrl.u32 %v2292, 7
      %v2294 = vsub.s32 %v2291, %v2293
      %v2295 = vrot.slane %v2282, %v2294
      %v2297 = vunpack.c.l.s4 1983009808
      %v2298 = vunpack.c.0.s8 %v2297
      %v2299 = vlaneseq
      %v2300 = vshrl.u32 %v2299, 7
      %v2301 = vsub.s32 %v2298, %v2300
      %v2302 = vrot.slane %v2288, %v2301
      %v2303 = vcombine.high %v2295, %v2295
      %2304 = vrot.lane.b32.xlu0 %v2295, 127
      %v2305 = vpop.permute.xlu0 %2304
      %2306 = vrot.lane.b32.xlu0 %v2303, 127
      %v2307 = vpop.permute.xlu0 %2306
      %2308 = vrot.lane.b32.xlu0 %v2302, 127
      %v2309 = vpop.permute.xlu0 %2308
      %v2310 = vsel %vm241, %v2305, %v2307
      %v2311 = vsel %vm241, %v2307, %v2309
      %v2313 = vsel %vm244, %v2286, 0
      %v2316 = vand.u32 %v2310, %v251
      %v2319 = vand.u32 %v2311, %v251
      %v2322 = vand.u32 %v2309, %v251
      %2324 = vmatprep.subr.bf16.mxu0 %v2319
      %2325 = vmatpush1.bf16.msra.mxu0 %v2316
      %2326 = vmatprep.subr.bf16.mxu0 0
      %2327 = vmatpush1.bf16.msra.mxu0 0
      %2328 = vmatprep.subr.bf16.mxu0 0
      %2329 = vmatpush1.bf16.msra.mxu0 0
      %2330 = vmatprep.subr.bf16.mxu0 0
      %2331 = vmatpush1.bf16.msra.mxu0 0
      %2332 = vmatprep.subr.bf16.mxu0 0
      %2333 = vmatpush1.bf16.msra.mxu0 0
      %2334 = vmatprep.subr.bf16.mxu0 0
      %2335 = vmatpush1.bf16.msra.mxu0 0
      %2336 = vmatprep.subr.bf16.mxu0 0
      %2337 = vmatpush1.bf16.msra.mxu0 0
      %2338 = vmatprep.subr.bf16.mxu0 0
      %2339 = vmatpush1.bf16.msra.mxu0 0
      %2340 = vmatprep.subr.bf16.mxu0 0
      %2341 = vmatpush1.bf16.msra.mxu0 0
      %2342 = vmatprep.subr.bf16.mxu0 0
      %2343 = vmatpush1.bf16.msra.mxu0 0
      %2344 = vmatprep.subr.bf16.mxu0 0
      %2345 = vmatpush1.bf16.msra.mxu0 0
      %2346 = vmatprep.subr.bf16.mxu0 0
      %2347 = vmatpush1.bf16.msra.mxu0 0
      %2348 = vmatprep.subr.bf16.mxu0 0
      %2349 = vmatpush1.bf16.msra.mxu0 0
      %2350 = vmatprep.subr.bf16.mxu0 0
      %2351 = vmatpush1.bf16.msra.mxu0 0
      %2352 = vmatprep.subr.bf16.mxu0 0
      %2353 = vmatpush1.bf16.msra.mxu0 0
      %2354 = vmatprep.subr.bf16.mxu0 0
      %2355 = vmatpush1.bf16.msra.mxu0 0
      %2356 = vmatprep.mubr.bf16.mxu0 0
      %2357 = vmatmul.mubr.bf16.gmra.mrb[0].mxu0 %v2313
      %v2358 = vpop.f32.mrb[0].mxu0
      %v2359 = vadd.f32 0.0, %v2358
      %v2360 = vpop.f32.mrb[0].mxu0
      %v2361 = vadd.f32 0.0, %v2360
      %v2362 = vpop.f32.mrb[0].mxu0
      %v2363 = vpop.f32.mrb[0].mxu0
      %2364 = vdwg.mxu0
      %2365 = vmatprep.subr.bf16.mxu0 0
      %2366 = vmatpush1.bf16.msra.mxu0 %v2322
      %2367 = vmatprep.subr.bf16.mxu0 0
      %2368 = vmatpush1.bf16.msra.mxu0 0
      %2369 = vmatprep.subr.bf16.mxu0 0
      %2370 = vmatpush1.bf16.msra.mxu0 0
      %2371 = vmatprep.subr.bf16.mxu0 0
      %2372 = vmatpush1.bf16.msra.mxu0 0
      %2373 = vmatprep.subr.bf16.mxu0 0
      %2374 = vmatpush1.bf16.msra.mxu0 0
      %2375 = vmatprep.subr.bf16.mxu0 0
      %2376 = vmatpush1.bf16.msra.mxu0 0
      %2377 = vmatprep.subr.bf16.mxu0 0
      %2378 = vmatpush1.bf16.msra.mxu0 0
      %2379 = vmatprep.subr.bf16.mxu0 0
      %2380 = vmatpush1.bf16.msra.mxu0 0
      %2381 = vmatprep.subr.bf16.mxu0 0
      %2382 = vmatpush1.bf16.msra.mxu0 0
      %2383 = vmatprep.subr.bf16.mxu0 0
      %2384 = vmatpush1.bf16.msra.mxu0 0
      %2385 = vmatprep.subr.bf16.mxu0 0
      %2386 = vmatpush1.bf16.msra.mxu0 0
      %2387 = vmatprep.subr.bf16.mxu0 0
      %2388 = vmatpush1.bf16.msra.mxu0 0
      %2389 = vmatprep.subr.bf16.mxu0 0
      %2390 = vmatpush1.bf16.msra.mxu0 0
      %2391 = vmatprep.subr.bf16.mxu0 0
      %2392 = vmatpush1.bf16.msra.mxu0 0
      %2393 = vmatprep.subr.bf16.mxu0 0
      %2394 = vmatpush1.bf16.msra.mxu0 0
      %2395 = vmatprep.subr.bf16.mxu0 0
      %2396 = vmatpush1.bf16.msra.mxu0 0
      %2397 = vmatprep.mubr.bf16.mxu0 0
      %2398 = vmatmul.mubr.bf16.gmra.mrb[0].mxu0 %v2313
      %v2399 = vpop.f32.mrb[0].mxu0
      %v2400 = vadd.f32 0.0, %v2399
      %v2401 = vpop.f32.mrb[0].mxu0
      %v2402 = vpop.f32.mrb[0].mxu0
      %v2403 = vpop.f32.mrb[0].mxu0
      %2404 = vdwg.mxu0
      %v2406 = vsel %vm244, %v2284, 0
      %v2409 = vand.u32 %v2295, %v251
      %v2412 = vand.u32 %v2303, %v251
      %v2415 = vand.u32 %v2302, %v251
      %2417 = vmatprep.subr.bf16.mxu0 %v2412
      %2418 = vmatpush1.bf16.msra.mxu0 %v2409
      %2419 = vmatprep.subr.bf16.mxu0 0
      %2420 = vmatpush1.bf16.msra.mxu0 0
      %2421 = vmatprep.subr.bf16.mxu0 0
      %2422 = vmatpush1.bf16.msra.mxu0 0
      %2423 = vmatprep.subr.bf16.mxu0 0
      %2424 = vmatpush1.bf16.msra.mxu0 0
      %2425 = vmatprep.subr.bf16.mxu0 0
      %2426 = vmatpush1.bf16.msra.mxu0 0
      %2427 = vmatprep.subr.bf16.mxu0 0
      %2428 = vmatpush1.bf16.msra.mxu0 0
      %2429 = vmatprep.subr.bf16.mxu0 0
      %2430 = vmatpush1.bf16.msra.mxu0 0
      %2431 = vmatprep.subr.bf16.mxu0 0
      %2432 = vmatpush1.bf16.msra.mxu0 0
      %2433 = vmatprep.subr.bf16.mxu0 0
      %2434 = vmatpush1.bf16.msra.mxu0 0
      %2435 = vmatprep.subr.bf16.mxu0 0
      %2436 = vmatpush1.bf16.msra.mxu0 0
      %2437 = vmatprep.subr.bf16.mxu0 0
      %2438 = vmatpush1.bf16.msra.mxu0 0
      %2439 = vmatprep.subr.bf16.mxu0 0
      %2440 = vmatpush1.bf16.msra.mxu0 0
      %2441 = vmatprep.subr.bf16.mxu0 0
      %2442 = vmatpush1.bf16.msra.mxu0 0
      %2443 = vmatprep.subr.bf16.mxu0 0
      %2444 = vmatpush1.bf16.msra.mxu0 0
      %2445 = vmatprep.subr.bf16.mxu0 0
      %2446 = vmatpush1.bf16.msra.mxu0 0
      %2447 = vmatprep.subr.bf16.mxu0 0
      %2448 = vmatpush1.bf16.msra.mxu0 0
      %2449 = vmatprep.mubr.bf16.mxu0 0
      %2450 = vmatmul.mubr.bf16.gmra.mrb[0].mxu0 %v2406
      %v2451 = vpop.f32.mrb[0].mxu0
      %v2452 = vadd.f32 %v2359, %v2451
      %v2453 = vpop.f32.mrb[0].mxu0
      %v2454 = vadd.f32 %v2361, %v2453
      %v2455 = vpop.f32.mrb[0].mxu0
      %v2456 = vpop.f32.mrb[0].mxu0
      %2457 = vdwg.mxu0
      %2458 = vmatprep.subr.bf16.mxu0 0
      %2459 = vmatpush1.bf16.msra.mxu0 %v2415
      %2460 = vmatprep.subr.bf16.mxu0 0
      %2461 = vmatpush1.bf16.msra.mxu0 0
      %2462 = vmatprep.subr.bf16.mxu0 0
      %2463 = vmatpush1.bf16.msra.mxu0 0
      %2464 = vmatprep.subr.bf16.mxu0 0
      %2465 = vmatpush1.bf16.msra.mxu0 0
      %2466 = vmatprep.subr.bf16.mxu0 0
      %2467 = vmatpush1.bf16.msra.mxu0 0
      %2468 = vmatprep.subr.bf16.mxu0 0
      %2469 = vmatpush1.bf16.msra.mxu0 0
      %2470 = vmatprep.subr.bf16.mxu0 0
      %2471 = vmatpush1.bf16.msra.mxu0 0
      %2472 = vmatprep.subr.bf16.mxu0 0
      %2473 = vmatpush1.bf16.msra.mxu0 0
      %2474 = vmatprep.subr.bf16.mxu0 0
      %2475 = vmatpush1.bf16.msra.mxu0 0
      %2476 = vmatprep.subr.bf16.mxu0 0
      %2477 = vmatpush1.bf16.msra.mxu0 0
      %2478 = vmatprep.subr.bf16.mxu0 0
      %2479 = vmatpush1.bf16.msra.mxu0 0
      %2480 = vmatprep.subr.bf16.mxu0 0
      %2481 = vmatpush1.bf16.msra.mxu0 0
      %2482 = vmatprep.subr.bf16.mxu0 0
      %2483 = vmatpush1.bf16.msra.mxu0 0
      %2484 = vmatprep.subr.bf16.mxu0 0
      %2485 = vmatpush1.bf16.msra.mxu0 0
      %2486 = vmatprep.subr.bf16.mxu0 0
      %2487 = vmatpush1.bf16.msra.mxu0 0
      %2488 = vmatprep.subr.bf16.mxu0 0
      %2489 = vmatpush1.bf16.msra.mxu0 0
      %2490 = vmatprep.mubr.bf16.mxu0 0
      %2491 = vmatmul.mubr.bf16.gmra.mrb[0].mxu0 %v2406
      %v2492 = vpop.f32.mrb[0].mxu0
      %v2493 = vadd.f32 %v2400, %v2492
      %v2494 = vpop.f32.mrb[0].mxu0
      %v2495 = vpop.f32.mrb[0].mxu0
      %v2496 = vpop.f32.mrb[0].mxu0
      %2497 = vdwg.mxu0
      %s2498 = scalar_lea.vmem %s1, 40
      %v2499 = vld [vmem:[%s2498] sm:$0x3]
      %2500 = vrot.lane.b32.xlu0 %v2295, 126
      %v2501 = vpop.permute.xlu0 %2500
      %2502 = vrot.lane.b32.xlu0 %v2303, 126
      %v2503 = vpop.permute.xlu0 %2502
      %2504 = vrot.lane.b32.xlu0 %v2302, 126
      %v2505 = vpop.permute.xlu0 %2504
      %v2506 = vsel %vm443, %v2501, %v2503
      %v2507 = vsel %vm443, %v2503, %v2505
      %v2509 = vsel %vm244, %v2499, 0
      %v2512 = vand.u32 %v2506, %v251
      %v2515 = vand.u32 %v2507, %v251
      %v2518 = vand.u32 %v2505, %v251
      %2520 = vmatprep.subr.bf16.mxu0 %v2515
      %2521 = vmatpush1.bf16.msra.mxu0 %v2512
      %2522 = vmatprep.subr.bf16.mxu0 0
      %2523 = vmatpush1.bf16.msra.mxu0 0
      %2524 = vmatprep.subr.bf16.mxu0 0
      %2525 = vmatpush1.bf16.msra.mxu0 0
      %2526 = vmatprep.subr.bf16.mxu0 0
      %2527 = vmatpush1.bf16.msra.mxu0 0
      %2528 = vmatprep.subr.bf16.mxu0 0
      %2529 = vmatpush1.bf16.msra.mxu0 0
      %2530 = vmatprep.subr.bf16.mxu0 0
      %2531 = vmatpush1.bf16.msra.mxu0 0
      %2532 = vmatprep.subr.bf16.mxu0 0
      %2533 = vmatpush1.bf16.msra.mxu0 0
      %2534 = vmatprep.subr.bf16.mxu0 0
      %2535 = vmatpush1.bf16.msra.mxu0 0
      %2536 = vmatprep.subr.bf16.mxu0 0
      %2537 = vmatpush1.bf16.msra.mxu0 0
      %2538 = vmatprep.subr.bf16.mxu0 0
      %2539 = vmatpush1.bf16.msra.mxu0 0
      %2540 = vmatprep.subr.bf16.mxu0 0
      %2541 = vmatpush1.bf16.msra.mxu0 0
      %2542 = vmatprep.subr.bf16.mxu0 0
      %2543 = vmatpush1.bf16.msra.mxu0 0
      %2544 = vmatprep.subr.bf16.mxu0 0
      %2545 = vmatpush1.bf16.msra.mxu0 0
      %2546 = vmatprep.subr.bf16.mxu0 0
      %2547 = vmatpush1.bf16.msra.mxu0 0
      %2548 = vmatprep.subr.bf16.mxu0 0
      %2549 = vmatpush1.bf16.msra.mxu0 0
      %2550 = vmatprep.subr.bf16.mxu0 0
      %2551 = vmatpush1.bf16.msra.mxu0 0
      %2552 = vmatprep.mubr.bf16.mxu0 0
      %2553 = vmatmul.mubr.bf16.gmra.mrb[0].mxu0 %v2509
      %v2554 = vpop.f32.mrb[0].mxu0
      %v2555 = vadd.f32 0.0, %v2554
      %v2556 = vpop.f32.mrb[0].mxu0
      %v2557 = vadd.f32 0.0, %v2556
      %v2558 = vpop.f32.mrb[0].mxu0
      %v2559 = vpop.f32.mrb[0].mxu0
      %2560 = vdwg.mxu0
      %2561 = vmatprep.subr.bf16.mxu0 0
      %2562 = vmatpush1.bf16.msra.mxu0 %v2518
      %2563 = vmatprep.subr.bf16.mxu0 0
      %2564 = vmatpush1.bf16.msra.mxu0 0
      %2565 = vmatprep.subr.bf16.mxu0 0
      %2566 = vmatpush1.bf16.msra.mxu0 0
      %2567 = vmatprep.subr.bf16.mxu0 0
      %2568 = vmatpush1.bf16.msra.mxu0 0
      %2569 = vmatprep.subr.bf16.mxu0 0
      %2570 = vmatpush1.bf16.msra.mxu0 0
      %2571 = vmatprep.subr.bf16.mxu0 0
      %2572 = vmatpush1.bf16.msra.mxu0 0
      %2573 = vmatprep.subr.bf16.mxu0 0
      %2574 = vmatpush1.bf16.msra.mxu0 0
      %2575 = vmatprep.subr.bf16.mxu0 0
      %2576 = vmatpush1.bf16.msra.mxu0 0
      %2577 = vmatprep.subr.bf16.mxu0 0
      %2578 = vmatpush1.bf16.msra.mxu0 0
      %2579 = vmatprep.subr.bf16.mxu0 0
      %2580 = vmatpush1.bf16.msra.mxu0 0
      %2581 = vmatprep.subr.bf16.mxu0 0
      %2582 = vmatpush1.bf16.msra.mxu0 0
      %2583 = vmatprep.subr.bf16.mxu0 0
      %2584 = vmatpush1.bf16.msra.mxu0 0
      %2585 = vmatprep.subr.bf16.mxu0 0
      %2586 = vmatpush1.bf16.msra.mxu0 0
      %2587 = vmatprep.subr.bf16.mxu0 0
      %2588 = vmatpush1.bf16.msra.mxu0 0
      %2589 = vmatprep.subr.bf16.mxu0 0
      %2590 = vmatpush1.bf16.msra.mxu0 0
      %2591 = vmatprep.subr.bf16.mxu0 0
      %2592 = vmatpush1.bf16.msra.mxu0 0
      %2593 = vmatprep.mubr.bf16.mxu0 0
      %2594 = vmatmul.mubr.bf16.gmra.mrb[0].mxu0 %v2509
      %v2595 = vpop.f32.mrb[0].mxu0
      %v2596 = vadd.f32 0.0, %v2595
      %v2597 = vpop.f32.mrb[0].mxu0
      %v2598 = vpop.f32.mrb[0].mxu0
      %v2599 = vpop.f32.mrb[0].mxu0
      %2600 = vdwg.mxu0
      %v2601 = vadd.f32 %v2452, %v2555
      %v2602 = vadd.f32 %v2454, %v2557
      %v2603 = vadd.f32 %v2493, %v2596
      %s2604 = scalar_lea.vmem %s1, 42
      %v2605 = vld [vmem:[%s2604] sm:$0x3]
      %2606 = vrot.lane.b32.xlu0 %v2295, 110
      %v2607 = vpop.permute.xlu0 %2606
      %2608 = vrot.lane.b32.xlu0 %v2303, 110
      %v2609 = vpop.permute.xlu0 %2608
      %2610 = vrot.lane.b32.xlu0 %v2302, 110
      %v2611 = vpop.permute.xlu0 %2610
      %v2612 = vsel %vm550, %v2607, %v2609
      %v2613 = vsel %vm550, %v2609, %v2611
      %v2615 = vsel %vm244, %v2605, 0
      %v2618 = vand.u32 %v2612, %v251
      %v2621 = vand.u32 %v2613, %v251
      %v2624 = vand.u32 %v2611, %v251
      %2626 = vmatprep.subr.bf16.mxu0 %v2621
      %2627 = vmatpush1.bf16.msra.mxu0 %v2618
      %2628 = vmatprep.subr.bf16.mxu0 0
      %2629 = vmatpush1.bf16.msra.mxu0 0
      %2630 = vmatprep.subr.bf16.mxu0 0
      %2631 = vmatpush1.bf16.msra.mxu0 0
      %2632 = vmatprep.subr.bf16.mxu0 0
      %2633 = vmatpush1.bf16.msra.mxu0 0
      %2634 = vmatprep.subr.bf16.mxu0 0
      %2635 = vmatpush1.bf16.msra.mxu0 0
      %2636 = vmatprep.subr.bf16.mxu0 0
      %2637 = vmatpush1.bf16.msra.mxu0 0
      %2638 = vmatprep.subr.bf16.mxu0 0
      %2639 = vmatpush1.bf16.msra.mxu0 0
      %2640 = vmatprep.subr.bf16.mxu0 0
      %2641 = vmatpush1.bf16.msra.mxu0 0
      %2642 = vmatprep.subr.bf16.mxu0 0
      %2643 = vmatpush1.bf16.msra.mxu0 0
      %2644 = vmatprep.subr.bf16.mxu0 0
      %2645 = vmatpush1.bf16.msra.mxu0 0
      %2646 = vmatprep.subr.bf16.mxu0 0
      %2647 = vmatpush1.bf16.msra.mxu0 0
      %2648 = vmatprep.subr.bf16.mxu0 0
      %2649 = vmatpush1.bf16.msra.mxu0 0
      %2650 = vmatprep.subr.bf16.mxu0 0
      %2651 = vmatpush1.bf16.msra.mxu0 0
      %2652 = vmatprep.subr.bf16.mxu0 0
      %2653 = vmatpush1.bf16.msra.mxu0 0
      %2654 = vmatprep.subr.bf16.mxu0 0
      %2655 = vmatpush1.bf16.msra.mxu0 0
      %2656 = vmatprep.subr.bf16.mxu0 0
      %2657 = vmatpush1.bf16.msra.mxu0 0
      %2658 = vmatprep.mubr.bf16.mxu0 0
      %2659 = vmatmul.mubr.bf16.gmra.mrb[0].mxu0 %v2615
      %v2660 = vpop.f32.mrb[0].mxu0
      %v2661 = vadd.f32 0.0, %v2660
      %v2662 = vpop.f32.mrb[0].mxu0
      %v2663 = vadd.f32 0.0, %v2662
      %v2664 = vpop.f32.mrb[0].mxu0
      %v2665 = vpop.f32.mrb[0].mxu0
      %2666 = vdwg.mxu0
      %2667 = vmatprep.subr.bf16.mxu0 0
      %2668 = vmatpush1.bf16.msra.mxu0 %v2624
      %2669 = vmatprep.subr.bf16.mxu0 0
      %2670 = vmatpush1.bf16.msra.mxu0 0
      %2671 = vmatprep.subr.bf16.mxu0 0
      %2672 = vmatpush1.bf16.msra.mxu0 0
      %2673 = vmatprep.subr.bf16.mxu0 0
      %2674 = vmatpush1.bf16.msra.mxu0 0
      %2675 = vmatprep.subr.bf16.mxu0 0
      %2676 = vmatpush1.bf16.msra.mxu0 0
      %2677 = vmatprep.subr.bf16.mxu0 0
      %2678 = vmatpush1.bf16.msra.mxu0 0
      %2679 = vmatprep.subr.bf16.mxu0 0
      %2680 = vmatpush1.bf16.msra.mxu0 0
      %2681 = vmatprep.subr.bf16.mxu0 0
      %2682 = vmatpush1.bf16.msra.mxu0 0
      %2683 = vmatprep.subr.bf16.mxu0 0
      %2684 = vmatpush1.bf16.msra.mxu0 0
      %2685 = vmatprep.subr.bf16.mxu0 0
      %2686 = vmatpush1.bf16.msra.mxu0 0
      %2687 = vmatprep.subr.bf16.mxu0 0
      %2688 = vmatpush1.bf16.msra.mxu0 0
      %2689 = vmatprep.subr.bf16.mxu0 0
      %2690 = vmatpush1.bf16.msra.mxu0 0
      %2691 = vmatprep.subr.bf16.mxu0 0
      %2692 = vmatpush1.bf16.msra.mxu0 0
      %2693 = vmatprep.subr.bf16.mxu0 0
      %2694 = vmatpush1.bf16.msra.mxu0 0
      %2695 = vmatprep.subr.bf16.mxu0 0
      %2696 = vmatpush1.bf16.msra.mxu0 0
      %2697 = vmatprep.subr.bf16.mxu0 0
      %2698 = vmatpush1.bf16.msra.mxu0 0
      %2699 = vmatprep.mubr.bf16.mxu0 0
      %2700 = vmatmul.mubr.bf16.gmra.mrb[0].mxu0 %v2615
      %v2701 = vpop.f32.mrb[0].mxu0
      %v2702 = vadd.f32 0.0, %v2701
      %v2703 = vpop.f32.mrb[0].mxu0
      %v2704 = vpop.f32.mrb[0].mxu0
      %v2705 = vpop.f32.mrb[0].mxu0
      %2706 = vdwg.mxu0
      %v2707 = vadd.f32 %v2601, %v2661
      %v2708 = vadd.f32 %v2602, %v2663
      %v2709 = vadd.f32 %v2603, %v2702
      %s2710 = scalar_lea.vmem %s1, 44
      %v2711 = vld [vmem:[%s2710] sm:$0x3]
      %2712 = vrot.lane.b32.xlu0 %v2295, 109
      %v2713 = vpop.permute.xlu0 %2712
      %2714 = vrot.lane.b32.xlu0 %v2303, 109
      %v2715 = vpop.permute.xlu0 %2714
      %2716 = vrot.lane.b32.xlu0 %v2302, 109
      %v2717 = vpop.permute.xlu0 %2716
      %v2718 = vsel %vm657, %v2713, %v2715
      %v2719 = vsel %vm657, %v2715, %v2717
      %v2721 = vsel %vm244, %v2711, 0
      %v2724 = vand.u32 %v2718, %v251
      %v2727 = vand.u32 %v2719, %v251
      %v2730 = vand.u32 %v2717, %v251
      %2732 = vmatprep.subr.bf16.mxu0 %v2727
      %2733 = vmatpush1.bf16.msra.mxu0 %v2724
      %2734 = vmatprep.subr.bf16.mxu0 0
      %2735 = vmatpush1.bf16.msra.mxu0 0
      %2736 = vmatprep.subr.bf16.mxu0 0
      %2737 = vmatpush1.bf16.msra.mxu0 0
      %2738 = vmatprep.subr.bf16.mxu0 0
      %2739 = vmatpush1.bf16.msra.mxu0 0
      %2740 = vmatprep.subr.bf16.mxu0 0
      %2741 = vmatpush1.bf16.msra.mxu0 0
      %2742 = vmatprep.subr.bf16.mxu0 0
      %2743 = vmatpush1.bf16.msra.mxu0 0
      %2744 = vmatprep.subr.bf16.mxu0 0
      %2745 = vmatpush1.bf16.msra.mxu0 0
      %2746 = vmatprep.subr.bf16.mxu0 0
      %2747 = vmatpush1.bf16.msra.mxu0 0
      %2748 = vmatprep.subr.bf16.mxu0 0
      %2749 = vmatpush1.bf16.msra.mxu0 0
      %2750 = vmatprep.subr.bf16.mxu0 0
      %2751 = vmatpush1.bf16.msra.mxu0 0
      %2752 = vmatprep.subr.bf16.mxu0 0
      %2753 = vmatpush1.bf16.msra.mxu0 0
      %2754 = vmatprep.subr.bf16.mxu0 0
      %2755 = vmatpush1.bf16.msra.mxu0 0
      %2756 = vmatprep.subr.bf16.mxu0 0
      %2757 = vmatpush1.bf16.msra.mxu0 0
      %2758 = vmatprep.subr.bf16.mxu0 0
      %2759 = vmatpush1.bf16.msra.mxu0 0
      %2760 = vmatprep.subr.bf16.mxu0 0
      %2761 = vmatpush1.bf16.msra.mxu0 0
      %2762 = vmatprep.subr.bf16.mxu0 0
      %2763 = vmatpush1.bf16.msra.mxu0 0
      %2764 = vmatprep.mubr.bf16.mxu0 0
      %2765 = vmatmul.mubr.bf16.gmra.mrb[0].mxu0 %v2721
      %v2766 = vpop.f32.mrb[0].mxu0
      %v2767 = vadd.f32 0.0, %v2766
      %v2768 = vpop.f32.mrb[0].mxu0
      %v2769 = vadd.f32 0.0, %v2768
      %v2770 = vpop.f32.mrb[0].mxu0
      %v2771 = vpop.f32.mrb[0].mxu0
      %2772 = vdwg.mxu0
      %2773 = vmatprep.subr.bf16.mxu0 0
      %2774 = vmatpush1.bf16.msra.mxu0 %v2730
      %2775 = vmatprep.subr.bf16.mxu0 0
      %2776 = vmatpush1.bf16.msra.mxu0 0
      %2777 = vmatprep.subr.bf16.mxu0 0
      %2778 = vmatpush1.bf16.msra.mxu0 0
      %2779 = vmatprep.subr.bf16.mxu0 0
      %2780 = vmatpush1.bf16.msra.mxu0 0
      %2781 = vmatprep.subr.bf16.mxu0 0
      %2782 = vmatpush1.bf16.msra.mxu0 0
      %2783 = vmatprep.subr.bf16.mxu0 0
      %2784 = vmatpush1.bf16.msra.mxu0 0
      %2785 = vmatprep.subr.bf16.mxu0 0
      %2786 = vmatpush1.bf16.msra.mxu0 0
      %2787 = vmatprep.subr.bf16.mxu0 0
      %2788 = vmatpush1.bf16.msra.mxu0 0
      %2789 = vmatprep.subr.bf16.mxu0 0
      %2790 = vmatpush1.bf16.msra.mxu0 0
      %2791 = vmatprep.subr.bf16.mxu0 0
      %2792 = vmatpush1.bf16.msra.mxu0 0
      %2793 = vmatprep.subr.bf16.mxu0 0
      %2794 = vmatpush1.bf16.msra.mxu0 0
      %2795 = vmatprep.subr.bf16.mxu0 0
      %2796 = vmatpush1.bf16.msra.mxu0 0
      %2797 = vmatprep.subr.bf16.mxu0 0
      %2798 = vmatpush1.bf16.msra.mxu0 0
      %2799 = vmatprep.subr.bf16.mxu0 0
      %2800 = vmatpush1.bf16.msra.mxu0 0
      %2801 = vmatprep.subr.bf16.mxu0 0
      %2802 = vmatpush1.bf16.msra.mxu0 0
      %2803 = vmatprep.subr.bf16.mxu0 0
      %2804 = vmatpush1.bf16.msra.mxu0 0
      %2805 = vmatprep.mubr.bf16.mxu0 0
      %2806 = vmatmul.mubr.bf16.gmra.mrb[0].mxu0 %v2721
      %v2807 = vpop.f32.mrb[0].mxu0
      %v2808 = vadd.f32 0.0, %v2807
      %v2809 = vpop.f32.mrb[0].mxu0
      %v2810 = vpop.f32.mrb[0].mxu0
      %v2811 = vpop.f32.mrb[0].mxu0
      %2812 = vdwg.mxu0
      %v2813 = vadd.f32 %v2707, %v2767
      %v2814 = vadd.f32 %v2708, %v2769
      %v2815 = vadd.f32 %v2709, %v2808
      %s2816 = scalar_lea.vmem %s1, 46
      %v2817 = vld [vmem:[%s2816] sm:$0x3]
      %2818 = vrot.lane.b32.xlu0 %v2295, 108
      %v2819 = vpop.permute.xlu0 %2818
      %2820 = vrot.lane.b32.xlu0 %v2303, 108
      %v2821 = vpop.permute.xlu0 %2820
      %2822 = vrot.lane.b32.xlu0 %v2302, 108
      %v2823 = vpop.permute.xlu0 %2822
      %v2824 = vsel %vm764, %v2819, %v2821
      %v2825 = vsel %vm764, %v2821, %v2823
      %v2827 = vsel %vm244, %v2817, 0
      %v2830 = vand.u32 %v2824, %v251
      %v2833 = vand.u32 %v2825, %v251
      %v2836 = vand.u32 %v2823, %v251
      %2838 = vmatprep.subr.bf16.mxu0 %v2833
      %2839 = vmatpush1.bf16.msra.mxu0 %v2830
      %2840 = vmatprep.subr.bf16.mxu0 0
      %2841 = vmatpush1.bf16.msra.mxu0 0
      %2842 = vmatprep.subr.bf16.mxu0 0
      %2843 = vmatpush1.bf16.msra.mxu0 0
      %2844 = vmatprep.subr.bf16.mxu0 0
      %2845 = vmatpush1.bf16.msra.mxu0 0
      %2846 = vmatprep.subr.bf16.mxu0 0
      %2847 = vmatpush1.bf16.msra.mxu0 0
      %2848 = vmatprep.subr.bf16.mxu0 0
      %2849 = vmatpush1.bf16.msra.mxu0 0
      %2850 = vmatprep.subr.bf16.mxu0 0
      %2851 = vmatpush1.bf16.msra.mxu0 0
      %2852 = vmatprep.subr.bf16.mxu0 0
      %2853 = vmatpush1.bf16.msra.mxu0 0
      %2854 = vmatprep.subr.bf16.mxu0 0
      %2855 = vmatpush1.bf16.msra.mxu0 0
      %2856 = vmatprep.subr.bf16.mxu0 0
      %2857 = vmatpush1.bf16.msra.mxu0 0
      %2858 = vmatprep.subr.bf16.mxu0 0
      %2859 = vmatpush1.bf16.msra.mxu0 0
      %2860 = vmatprep.subr.bf16.mxu0 0
      %2861 = vmatpush1.bf16.msra.mxu0 0
      %2862 = vmatprep.subr.bf16.mxu0 0
      %2863 = vmatpush1.bf16.msra.mxu0 0
      %2864 = vmatprep.subr.bf16.mxu0 0
      %2865 = vmatpush1.bf16.msra.mxu0 0
      %2866 = vmatprep.subr.bf16.mxu0 0
      %2867 = vmatpush1.bf16.msra.mxu0 0
      %2868 = vmatprep.subr.bf16.mxu0 0
      %2869 = vmatpush1.bf16.msra.mxu0 0
      %2870 = vmatprep.mubr.bf16.mxu0 0
      %2871 = vmatmul.mubr.bf16.gmra.mrb[0].mxu0 %v2827
      %v2872 = vpop.f32.mrb[0].mxu0
      %v2873 = vadd.f32 0.0, %v2872
      %v2874 = vpop.f32.mrb[0].mxu0
      %v2875 = vadd.f32 0.0, %v2874
      %v2876 = vpop.f32.mrb[0].mxu0
      %v2877 = vpop.f32.mrb[0].mxu0
      %2878 = vdwg.mxu0
      %2879 = vmatprep.subr.bf16.mxu0 0
      %2880 = vmatpush1.bf16.msra.mxu0 %v2836
      %2881 = vmatprep.subr.bf16.mxu0 0
      %2882 = vmatpush1.bf16.msra.mxu0 0
      %2883 = vmatprep.subr.bf16.mxu0 0
      %2884 = vmatpush1.bf16.msra.mxu0 0
      %2885 = vmatprep.subr.bf16.mxu0 0
      %2886 = vmatpush1.bf16.msra.mxu0 0
      %2887 = vmatprep.subr.bf16.mxu0 0
      %2888 = vmatpush1.bf16.msra.mxu0 0
      %2889 = vmatprep.subr.bf16.mxu0 0
      %2890 = vmatpush1.bf16.msra.mxu0 0
      %2891 = vmatprep.subr.bf16.mxu0 0
      %2892 = vmatpush1.bf16.msra.mxu0 0
      %2893 = vmatprep.subr.bf16.mxu0 0
      %2894 = vmatpush1.bf16.msra.mxu0 0
      %2895 = vmatprep.subr.bf16.mxu0 0
      %2896 = vmatpush1.bf16.msra.mxu0 0
      %2897 = vmatprep.subr.bf16.mxu0 0
      %2898 = vmatpush1.bf16.msra.mxu0 0
      %2899 = vmatprep.subr.bf16.mxu0 0
      %2900 = vmatpush1.bf16.msra.mxu0 0
      %2901 = vmatprep.subr.bf16.mxu0 0
      %2902 = vmatpush1.bf16.msra.mxu0 0
      %2903 = vmatprep.subr.bf16.mxu0 0
      %2904 = vmatpush1.bf16.msra.mxu0 0
      %2905 = vmatprep.subr.bf16.mxu0 0
      %2906 = vmatpush1.bf16.msra.mxu0 0
      %2907 = vmatprep.subr.bf16.mxu0 0
      %2908 = vmatpush1.bf16.msra.mxu0 0
      %2909 = vmatprep.subr.bf16.mxu0 0
      %2910 = vmatpush1.bf16.msra.mxu0 0
      %2911 = vmatprep.mubr.bf16.mxu0 0
      %2912 = vmatmul.mubr.bf16.gmra.mrb[0].mxu0 %v2827
      %v2913 = vpop.f32.mrb[0].mxu0
      %v2914 = vadd.f32 0.0, %v2913
      %v2915 = vpop.f32.mrb[0].mxu0
      %v2916 = vpop.f32.mrb[0].mxu0
      %v2917 = vpop.f32.mrb[0].mxu0
      %2918 = vdwg.mxu0
      %v2919 = vadd.f32 %v2813, %v2873
      %v2920 = vadd.f32 %v2814, %v2875
      %v2921 = vadd.f32 %v2815, %v2914
      %s2922 = scalar_lea.vmem %s1, 48
      %v2923 = vld [vmem:[%s2922] sm:$0x3]
      %2924 = vrot.lane.b32.xlu0 %v2295, 92
      %v2925 = vpop.permute.xlu0 %2924
      %2926 = vrot.lane.b32.xlu0 %v2303, 92
      %v2927 = vpop.permute.xlu0 %2926
      %2928 = vrot.lane.b32.xlu0 %v2302, 92
      %v2929 = vpop.permute.xlu0 %2928
      %v2930 = vsel %vm871, %v2925, %v2927
      %v2931 = vsel %vm871, %v2927, %v2929
      %v2933 = vsel %vm244, %v2923, 0
      %v2936 = vand.u32 %v2930, %v251
      %v2939 = vand.u32 %v2931, %v251
      %v2942 = vand.u32 %v2929, %v251
      %2944 = vmatprep.subr.bf16.mxu0 %v2939
      %2945 = vmatpush1.bf16.msra.mxu0 %v2936
      %2946 = vmatprep.subr.bf16.mxu0 0
      %2947 = vmatpush1.bf16.msra.mxu0 0
      %2948 = vmatprep.subr.bf16.mxu0 0
      %2949 = vmatpush1.bf16.msra.mxu0 0
      %2950 = vmatprep.subr.bf16.mxu0 0
      %2951 = vmatpush1.bf16.msra.mxu0 0
      %2952 = vmatprep.subr.bf16.mxu0 0
      %2953 = vmatpush1.bf16.msra.mxu0 0
      %2954 = vmatprep.subr.bf16.mxu0 0
      %2955 = vmatpush1.bf16.msra.mxu0 0
      %2956 = vmatprep.subr.bf16.mxu0 0
      %2957 = vmatpush1.bf16.msra.mxu0 0
      %2958 = vmatprep.subr.bf16.mxu0 0
      %2959 = vmatpush1.bf16.msra.mxu0 0
      %2960 = vmatprep.subr.bf16.mxu0 0
      %2961 = vmatpush1.bf16.msra.mxu0 0
      %2962 = vmatprep.subr.bf16.mxu0 0
      %2963 = vmatpush1.bf16.msra.mxu0 0
      %2964 = vmatprep.subr.bf16.mxu0 0
      %2965 = vmatpush1.bf16.msra.mxu0 0
      %2966 = vmatprep.subr.bf16.mxu0 0
      %2967 = vmatpush1.bf16.msra.mxu0 0
      %2968 = vmatprep.subr.bf16.mxu0 0
      %2969 = vmatpush1.bf16.msra.mxu0 0
      %2970 = vmatprep.subr.bf16.mxu0 0
      %2971 = vmatpush1.bf16.msra.mxu0 0
      %2972 = vmatprep.subr.bf16.mxu0 0
      %2973 = vmatpush1.bf16.msra.mxu0 0
      %2974 = vmatprep.subr.bf16.mxu0 0
      %2975 = vmatpush1.bf16.msra.mxu0 0
      %2976 = vmatprep.mubr.bf16.mxu0 0
      %2977 = vmatmul.mubr.bf16.gmra.mrb[0].mxu0 %v2933
      %v2978 = vpop.f32.mrb[0].mxu0
      %v2979 = vadd.f32 0.0, %v2978
      %v2980 = vpop.f32.mrb[0].mxu0
      %v2981 = vadd.f32 0.0, %v2980
      %v2982 = vpop.f32.mrb[0].mxu0
      %v2983 = vpop.f32.mrb[0].mxu0
      %2984 = vdwg.mxu0
      %2985 = vmatprep.subr.bf16.mxu0 0
      %2986 = vmatpush1.bf16.msra.mxu0 %v2942
      %2987 = vmatprep.subr.bf16.mxu0 0
      %2988 = vmatpush1.bf16.msra.mxu0 0
      %2989 = vmatprep.subr.bf16.mxu0 0
      %2990 = vmatpush1.bf16.msra.mxu0 0
      %2991 = vmatprep.subr.bf16.mxu0 0
      %2992 = vmatpush1.bf16.msra.mxu0 0
      %2993 = vmatprep.subr.bf16.mxu0 0
      %2994 = vmatpush1.bf16.msra.mxu0 0
      %2995 = vmatprep.subr.bf16.mxu0 0
      %2996 = vmatpush1.bf16.msra.mxu0 0
      %2997 = vmatprep.subr.bf16.mxu0 0
      %2998 = vmatpush1.bf16.msra.mxu0 0
      %2999 = vmatprep.subr.bf16.mxu0 0
      %3000 = vmatpush1.bf16.msra.mxu0 0
      %3001 = vmatprep.subr.bf16.mxu0 0
      %3002 = vmatpush1.bf16.msra.mxu0 0
      %3003 = vmatprep.subr.bf16.mxu0 0
      %3004 = vmatpush1.bf16.msra.mxu0 0
      %3005 = vmatprep.subr.bf16.mxu0 0
      %3006 = vmatpush1.bf16.msra.mxu0 0
      %3007 = vmatprep.subr.bf16.mxu0 0
      %3008 = vmatpush1.bf16.msra.mxu0 0
      %3009 = vmatprep.subr.bf16.mxu0 0
      %3010 = vmatpush1.bf16.msra.mxu0 0
      %3011 = vmatprep.subr.bf16.mxu0 0
      %3012 = vmatpush1.bf16.msra.mxu0 0
      %3013 = vmatprep.subr.bf16.mxu0 0
      %3014 = vmatpush1.bf16.msra.mxu0 0
      %3015 = vmatprep.subr.bf16.mxu0 0
      %3016 = vmatpush1.bf16.msra.mxu0 0
      %3017 = vmatprep.mubr.bf16.mxu0 0
      %3018 = vmatmul.mubr.bf16.gmra.mrb[0].mxu0 %v2933
      %v3019 = vpop.f32.mrb[0].mxu0
      %v3020 = vadd.f32 0.0, %v3019
      %v3021 = vpop.f32.mrb[0].mxu0
      %v3022 = vpop.f32.mrb[0].mxu0
      %v3023 = vpop.f32.mrb[0].mxu0
      %3024 = vdwg.mxu0
      %v3025 = vadd.f32 %v2919, %v2979
      %v3026 = vadd.f32 %v2920, %v2981
      %v3027 = vadd.f32 %v2921, %v3020
      %s3028 = scalar_lea.vmem %s1, 50
      %v3029 = vld [vmem:[%s3028] sm:$0x3]
      %3030 = vrot.lane.b32.xlu0 %v2295, 91
      %v3031 = vpop.permute.xlu0 %3030
      %3032 = vrot.lane.b32.xlu0 %v2303, 91
      %v3033 = vpop.permute.xlu0 %3032
      %3034 = vrot.lane.b32.xlu0 %v2302, 91
      %v3035 = vpop.permute.xlu0 %3034
      %v3036 = vsel %vm978, %v3031, %v3033
      %v3037 = vsel %vm978, %v3033, %v3035
      %v3039 = vsel %vm244, %v3029, 0
      %v3042 = vand.u32 %v3036, %v251
      %v3045 = vand.u32 %v3037, %v251
      %v3048 = vand.u32 %v3035, %v251
      %3050 = vmatprep.subr.bf16.mxu0 %v3045
      %3051 = vmatpush1.bf16.msra.mxu0 %v3042
      %3052 = vmatprep.subr.bf16.mxu0 0
      %3053 = vmatpush1.bf16.msra.mxu0 0
      %3054 = vmatprep.subr.bf16.mxu0 0
      %3055 = vmatpush1.bf16.msra.mxu0 0
      %3056 = vmatprep.subr.bf16.mxu0 0
      %3057 = vmatpush1.bf16.msra.mxu0 0
      %3058 = vmatprep.subr.bf16.mxu0 0
      %3059 = vmatpush1.bf16.msra.mxu0 0
      %3060 = vmatprep.subr.bf16.mxu0 0
      %3061 = vmatpush1.bf16.msra.mxu0 0
      %3062 = vmatprep.subr.bf16.mxu0 0
      %3063 = vmatpush1.bf16.msra.mxu0 0
      %3064 = vmatprep.subr.bf16.mxu0 0
      %3065 = vmatpush1.bf16.msra.mxu0 0
      %3066 = vmatprep.subr.bf16.mxu0 0
      %3067 = vmatpush1.bf16.msra.mxu0 0
      %3068 = vmatprep.subr.bf16.mxu0 0
      %3069 = vmatpush1.bf16.msra.mxu0 0
      %3070 = vmatprep.subr.bf16.mxu0 0
      %3071 = vmatpush1.bf16.msra.mxu0 0
      %3072 = vmatprep.subr.bf16.mxu0 0
      %3073 = vmatpush1.bf16.msra.mxu0 0
      %3074 = vmatprep.subr.bf16.mxu0 0
      %3075 = vmatpush1.bf16.msra.mxu0 0
      %3076 = vmatprep.subr.bf16.mxu0 0
      %3077 = vmatpush1.bf16.msra.mxu0 0
      %3078 = vmatprep.subr.bf16.mxu0 0
      %3079 = vmatpush1.bf16.msra.mxu0 0
      %3080 = vmatprep.subr.bf16.mxu0 0
      %3081 = vmatpush1.bf16.msra.mxu0 0
      %3082 = vmatprep.mubr.bf16.mxu0 0
      %3083 = vmatmul.mubr.bf16.gmra.mrb[0].mxu0 %v3039
      %v3084 = vpop.f32.mrb[0].mxu0
      %v3085 = vadd.f32 0.0, %v3084
      %v3086 = vpop.f32.mrb[0].mxu0
      %v3087 = vadd.f32 0.0, %v3086
      %v3088 = vpop.f32.mrb[0].mxu0
      %v3089 = vpop.f32.mrb[0].mxu0
      %3090 = vdwg.mxu0
      %3091 = vmatprep.subr.bf16.mxu0 0
      %3092 = vmatpush1.bf16.msra.mxu0 %v3048
      %3093 = vmatprep.subr.bf16.mxu0 0
      %3094 = vmatpush1.bf16.msra.mxu0 0
      %3095 = vmatprep.subr.bf16.mxu0 0
      %3096 = vmatpush1.bf16.msra.mxu0 0
      %3097 = vmatprep.subr.bf16.mxu0 0
      %3098 = vmatpush1.bf16.msra.mxu0 0
      %3099 = vmatprep.subr.bf16.mxu0 0
      %3100 = vmatpush1.bf16.msra.mxu0 0
      %3101 = vmatprep.subr.bf16.mxu0 0
      %3102 = vmatpush1.bf16.msra.mxu0 0
      %3103 = vmatprep.subr.bf16.mxu0 0
      %3104 = vmatpush1.bf16.msra.mxu0 0
      %3105 = vmatprep.subr.bf16.mxu0 0
      %3106 = vmatpush1.bf16.msra.mxu0 0
      %3107 = vmatprep.subr.bf16.mxu0 0
      %3108 = vmatpush1.bf16.msra.mxu0 0
      %3109 = vmatprep.subr.bf16.mxu0 0
      %3110 = vmatpush1.bf16.msra.mxu0 0
      %3111 = vmatprep.subr.bf16.mxu0 0
      %3112 = vmatpush1.bf16.msra.mxu0 0
      %3113 = vmatprep.subr.bf16.mxu0 0
      %3114 = vmatpush1.bf16.msra.mxu0 0
      %3115 = vmatprep.subr.bf16.mxu0 0
      %3116 = vmatpush1.bf16.msra.mxu0 0
      %3117 = vmatprep.subr.bf16.mxu0 0
      %3118 = vmatpush1.bf16.msra.mxu0 0
      %3119 = vmatprep.subr.bf16.mxu0 0
      %3120 = vmatpush1.bf16.msra.mxu0 0
      %3121 = vmatprep.subr.bf16.mxu0 0
      %3122 = vmatpush1.bf16.msra.mxu0 0
      %3123 = vmatprep.mubr.bf16.mxu0 0
      %3124 = vmatmul.mubr.bf16.gmra.mrb[0].mxu0 %v3039
      %v3125 = vpop.f32.mrb[0].mxu0
      %v3126 = vadd.f32 0.0, %v3125
      %v3127 = vpop.f32.mrb[0].mxu0
      %v3128 = vpop.f32.mrb[0].mxu0
      %v3129 = vpop.f32.mrb[0].mxu0
      %3130 = vdwg.mxu0
      %v3131 = vadd.f32 %v3025, %v3085
      %v3132 = vadd.f32 %v3026, %v3087
      %v3133 = vadd.f32 %v3027, %v3126
      %s3134 = scalar_lea.vmem %s1, 52
      %v3135 = vld [vmem:[%s3134] sm:$0x3]
      %3136 = vrot.lane.b32.xlu0 %v2295, 90
      %v3137 = vpop.permute.xlu0 %3136
      %3138 = vrot.lane.b32.xlu0 %v2303, 90
      %v3139 = vpop.permute.xlu0 %3138
      %3140 = vrot.lane.b32.xlu0 %v2302, 90
      %v3141 = vpop.permute.xlu0 %3140
      %v3142 = vsel %vm1085, %v3137, %v3139
      %v3143 = vsel %vm1085, %v3139, %v3141
      %v3145 = vsel %vm244, %v3135, 0
      %v3148 = vand.u32 %v3142, %v251
      %v3151 = vand.u32 %v3143, %v251
      %v3154 = vand.u32 %v3141, %v251
      %3156 = vmatprep.subr.bf16.mxu0 %v3151
      %3157 = vmatpush1.bf16.msra.mxu0 %v3148
      %3158 = vmatprep.subr.bf16.mxu0 0
      %3159 = vmatpush1.bf16.msra.mxu0 0
      %3160 = vmatprep.subr.bf16.mxu0 0
      %3161 = vmatpush1.bf16.msra.mxu0 0
      %3162 = vmatprep.subr.bf16.mxu0 0
      %3163 = vmatpush1.bf16.msra.mxu0 0
      %3164 = vmatprep.subr.bf16.mxu0 0
      %3165 = vmatpush1.bf16.msra.mxu0 0
      %3166 = vmatprep.subr.bf16.mxu0 0
      %3167 = vmatpush1.bf16.msra.mxu0 0
      %3168 = vmatprep.subr.bf16.mxu0 0
      %3169 = vmatpush1.bf16.msra.mxu0 0
      %3170 = vmatprep.subr.bf16.mxu0 0
      %3171 = vmatpush1.bf16.msra.mxu0 0
      %3172 = vmatprep.subr.bf16.mxu0 0
      %3173 = vmatpush1.bf16.msra.mxu0 0
      %3174 = vmatprep.subr.bf16.mxu0 0
      %3175 = vmatpush1.bf16.msra.mxu0 0
      %3176 = vmatprep.subr.bf16.mxu0 0
      %3177 = vmatpush1.bf16.msra.mxu0 0
      %3178 = vmatprep.subr.bf16.mxu0 0
      %3179 = vmatpush1.bf16.msra.mxu0 0
      %3180 = vmatprep.subr.bf16.mxu0 0
      %3181 = vmatpush1.bf16.msra.mxu0 0
      %3182 = vmatprep.subr.bf16.mxu0 0
      %3183 = vmatpush1.bf16.msra.mxu0 0
      %3184 = vmatprep.subr.bf16.mxu0 0
      %3185 = vmatpush1.bf16.msra.mxu0 0
      %3186 = vmatprep.subr.bf16.mxu0 0
      %3187 = vmatpush1.bf16.msra.mxu0 0
      %3188 = vmatprep.mubr.bf16.mxu0 0
      %3189 = vmatmul.mubr.bf16.gmra.mrb[0].mxu0 %v3145
      %v3190 = vpop.f32.mrb[0].mxu0
      %v3191 = vadd.f32 0.0, %v3190
      %v3192 = vpop.f32.mrb[0].mxu0
      %v3193 = vadd.f32 0.0, %v3192
      %v3194 = vpop.f32.mrb[0].mxu0
      %v3195 = vpop.f32.mrb[0].mxu0
      %3196 = vdwg.mxu0
      %3197 = vmatprep.subr.bf16.mxu0 0
      %3198 = vmatpush1.bf16.msra.mxu0 %v3154
      %3199 = vmatprep.subr.bf16.mxu0 0
      %3200 = vmatpush1.bf16.msra.mxu0 0
      %3201 = vmatprep.subr.bf16.mxu0 0
      %3202 = vmatpush1.bf16.msra.mxu0 0
      %3203 = vmatprep.subr.bf16.mxu0 0
      %3204 = vmatpush1.bf16.msra.mxu0 0
      %3205 = vmatprep.subr.bf16.mxu0 0
      %3206 = vmatpush1.bf16.msra.mxu0 0
      %3207 = vmatprep.subr.bf16.mxu0 0
      %3208 = vmatpush1.bf16.msra.mxu0 0
      %3209 = vmatprep.subr.bf16.mxu0 0
      %3210 = vmatpush1.bf16.msra.mxu0 0
      %3211 = vmatprep.subr.bf16.mxu0 0
      %3212 = vmatpush1.bf16.msra.mxu0 0
      %3213 = vmatprep.subr.bf16.mxu0 0
      %3214 = vmatpush1.bf16.msra.mxu0 0
      %3215 = vmatprep.subr.bf16.mxu0 0
      %3216 = vmatpush1.bf16.msra.mxu0 0
      %3217 = vmatprep.subr.bf16.mxu0 0
      %3218 = vmatpush1.bf16.msra.mxu0 0
      %3219 = vmatprep.subr.bf16.mxu0 0
      %3220 = vmatpush1.bf16.msra.mxu0 0
      %3221 = vmatprep.subr.bf16.mxu0 0
      %3222 = vmatpush1.bf16.msra.mxu0 0
      %3223 = vmatprep.subr.bf16.mxu0 0
      %3224 = vmatpush1.bf16.msra.mxu0 0
      %3225 = vmatprep.subr.bf16.mxu0 0
      %3226 = vmatpush1.bf16.msra.mxu0 0
      %3227 = vmatprep.subr.bf16.mxu0 0
      %3228 = vmatpush1.bf16.msra.mxu0 0
      %3229 = vmatprep.mubr.bf16.mxu0 0
      %3230 = vmatmul.mubr.bf16.gmra.mrb[0].mxu0 %v3145
      %v3231 = vpop.f32.mrb[0].mxu0
      %v3232 = vadd.f32 0.0, %v3231
      %v3233 = vpop.f32.mrb[0].mxu0
      %v3234 = vpop.f32.mrb[0].mxu0
      %v3235 = vpop.f32.mrb[0].mxu0
      %3236 = vdwg.mxu0
      %v3237 = vadd.f32 %v3131, %v3191
      %v3238 = vadd.f32 %v3132, %v3193
      %v3239 = vadd.f32 %v3133, %v3232
      %s3240 = scalar_lea.vmem %s2, 8
      %v3241 = vld [vmem:[%s3240] sm:$0x7]
      %3243 = vset.pattern.permute.xlu0 0
      %3244 = vperm.xlu0 %3243, %v3241
      %v3245 = vpop.permute.xlu0 %3244
      %v3247 = vmul.f32 %v3237, %v3245
      %v3248 = vmul.f32 %v3238, %v3245
      %v3249 = vmul.f32 %v3239, %v3245
      %3250 = vset.pattern.permute.xlu0 1
      %3251 = vperm.xlu0 %3250, %v3241
      %v3252 = vpop.permute.xlu0 %3251
      %v3254 = vadd.f32 %v3247, %v3252
      %v3255 = vadd.f32 %v3248, %v3252
      %v3256 = vadd.f32 %v3249, %v3252
      %vm3257 = vcmp.gt.f32.partialorder %v3254, 0.0
      %vm3258 = vcmp.gt.f32.partialorder %v3255, 0.0
      %vm3259 = vcmp.gt.f32.partialorder %v3256, 0.0
      %v3260 = vmul.f32 %v3254, 0.2
      %v3261 = vmul.f32 %v3255, 0.2
      %v3262 = vmul.f32 %v3256, 0.2
      %v3263 = vsel %vm3257, %v3254, %v3260
      %v3264 = vsel %vm3258, %v3255, %v3261
      %v3265 = vsel %vm3259, %v3256, %v3262
      %v3266 = vmul.f32 %v3263, %v1213
      %v3267 = vmul.f32 %v3264, %v1217
      %v3268 = vmul.f32 %v3265, %v1221
      %v3269 = vpack.c.bf16 %v3266, %v3266
      %v3270 = vpack.c.bf16 %v3267, %v3267
      %v3271 = vpack.c.bf16 %v3268, %v3268
      %v3275 = vcombine.low %v3269, %v3270
      %v3277 = vunpack.c.l.s4 1983009808
      %v3278 = vunpack.c.0.s8 %v3277
      %v3279 = vlaneseq
      %v3280 = vshrl.u32 %v3279, 7
      %v3281 = vsub.s32 %v3278, %v3280
      %v3282 = vrot.slane %v3275, %v3281
      %v3284 = vunpack.c.l.s4 1983009808
      %v3285 = vunpack.c.0.s8 %v3284
      %v3286 = vlaneseq
      %v3287 = vshrl.u32 %v3286, 7
      %v3288 = vsub.s32 %v3285, %v3287
      %v3289 = vrot.slane %v3271, %v3288
      %v3290 = vcombine.low %v3282, %v3289
      %3291 = vrot.lane.b32.xlu0 %v3290, 19
      %v3292 = vpop.permute.xlu0 %3291
      %v3293 = vrot.slane %v3292, 6
      %v3294 = vsel %vm1253, %v3293, %v3292
      %v3296 = vld [vmem:[#allocation2] sm:$0x3f]
      %v3297 = vsel %vm1261, %v3294, %v3296
      %3298 = vst [vmem:[#allocation2] sm:$0x3f] %v3297
      %v3299 = vld [vmem:[#allocation2] sm:$0x3f]
      %v3300 = vld [vmem:[%s197] sm:$0x3f]
      %v3301 = vsel %vm210, %v3299, %v3300
      %3302 = vst [vmem:[%s197] sm:$0x3f] %v3301
      %p3303 = scmp.lt.s32.totalorder %s15, 1
      %s3304 = scalar_select %p3303, %s15, 1
      %s3305 = smul.addr %s3304, 3
      %s3306 = smul.addr %s3305, 2
      %s3307 = scalar_lea.vmem %s4, %s3306
      // Predicated region
      $region37: #{self_embedding_block.4} parent=35 // pred_check
        %p3308 = pneg %p122
      $region38: #{self_embedding_block.4} parent=35 // pred_check_branch
        %3310 = sbr.rel (%p3308) target = $region40
      $region39: #{self_embedding_block.4} parent=35 // pred_region
        _
      $region40: #{self_embedding_block.4} parent=35 // pred_fallthru
        _
    $region36: #{self_embedding_block.4} parent=5 // pred_fallthru
      _
    %p3311 = scmp.le.s32.totalorder 2, %s10
    // Predicated region
    $region41: #{self_embedding_block.4} parent=5 // pred_check
      %p3312 = pneg %p3311
    $region42: #{self_embedding_block.4} parent=5 // pred_check_branch
      %3314 = sbr.rel (%p3312) target = $region44
    $region43: #{self_embedding_block.4} parent=5 // pred_region
      %s3315 = ssub.s32 %s10, 2
      // Predicated region
      $region45: #{self_embedding_block.4} parent=43 // pred_check
        %p3316 = pneg %p128
      $region46: #{self_embedding_block.4} parent=43 // pred_check_branch
        %3318 = sbr.rel (%p3316) target = $region48
      $region47: #{self_embedding_block.4} parent=43 // pred_region
        %p3319 = scmp.lt.s32.totalorder %s16, 1
        %s3320 = scalar_select %p3319, %s16, 1
        %s3321 = smul.addr %s3320, 3
        %s3322 = smul.addr %s3321, 2
        %s3323 = scalar_lea.vmem %s4, %s3322
      $region48: #{self_embedding_block.4} parent=43 // pred_fallthru
        _
    $region44: #{self_embedding_block.4} parent=5 // pred_fallthru
      _
  $region6: #{self_embedding_block.4} parent=0 // loop_footer
    %s14 = sadd.s32 1, %s10
  $region7: #{self_embedding_block.4} parent=0 // loop_footer_branch
    %9 = sbr.rel target = $region3
  $region8: #{self_embedding_block.4} parent=0 // loop_exit
    _

// kernel: self_embedding_block.6
$region0: #{self_embedding_block.6}
  #allocation0 [shape = 'u32[]', space=smem, size = 0x4, offset = 0x4, fixed_abs, tag = 'smem constant byte address 0x4 - core index']
  #allocation1 [shape = 'u32[144,128]{1,0:T(1,128)}', space=vmem, size = 0x12000, scoped, tag = 'internal scratch']
  %s0 = inlined_call_operand.vmem [shape: bf16[2,32,30], index: 0, kind: input, shape index: {}]
  %s1 = inlined_call_operand.vmem [shape: bf16[9,16,8], index: 1, kind: input, shape index: {}]
  %s2 = inlined_call_operand.vmem [shape: f32[16,2], index: 2, kind: input, shape index: {}]
  %s3 = inlined_call_operand.vmem [shape: bf16[2,16,20], index: 3, kind: output, shape index: {}]
  %s4 = sld [smem:[#allocation0]]
  $region45: #{self_embedding_block.6} parent=0
    _
  %s6 = ssub.s32 1, %s4
  %s7 = scalar_select 0, %s6, %s4
  loop: start=0, step=1, limit=4
  $region2: #{self_embedding_block.6} parent=0 // loop_pre_header
    _
  $region3: #{self_embedding_block.6} parent=0 // loop_header
    %s9 = sphi 0, %s13
    %p10 = scmp.ge.s32.totalorder %s9, 4
    %s19 = sphi 0, %s21
    %s22 = sphi 0, %s19
    %s23 = sphi 0, %s22
    %s39 = sphi 0, %s23
    %s43 = sphi 0, %s43
    %s45 = sphi 0, %s43
    %s46 = sphi 0, %s45
    %s60 = sphi 0, %s46
    %s64 = sphi 0, %s64
    %s66 = sphi 0, %s64
    %s67 = sphi 0, %s66
    %s81 = sphi 0, %s67
    %s87 = sphi 0, %s89
    %s90 = sphi 0, %s87
    %s91 = sphi 0, %s90
    %s107 = sphi 0, %s91
  $region4: #{self_embedding_block.6} parent=0 // loop_header_branch
    %12 = sbr.rel (%p10) target = $region8
  $region5: #{self_embedding_block.6} parent=0 // loop_body
    %s14 = ssub.s32 %s9, 1
    %s15 = ssub.s32 %s9, 2
    %s16 = sadd.s32 %s9, 1
    %s17 = ssub.s32 %s9, %s16
    %p18 = scmp.eq.s32.totalorder %s17, 0
    %s20 = sadd.s32 %s19, 1
    %s21 = scalar_select %p18, %s19, %s20
    %p24 = pneg %p18
    %p25 = scmp.eq.s32.totalorder %s9, 1
    %p26 = por %p24, %p25
    %p27 = scmp.ne.s32.totalorder %s19, %s22
    %p28 = scmp.eq.s32.totalorder %s9, 0
    %p29 = por %p27, %p28
    %p30 = scmp.ne.s32.totalorder %s19, %s22
    %p31 = scmp.eq.s32.totalorder %s14, 1
    %p32 = por %p30, %p31
    %p33 = scmp.ne.s32.totalorder %s22, %s23
    %p34 = scmp.eq.s32.totalorder %s14, 0
    %p35 = por %p33, %p34
    %p36 = scmp.ne.s32.totalorder %s22, %s23
    %p37 = scmp.eq.s32.totalorder %s15, 1
    %p38 = por %p36, %p37
    %p40 = scmp.ne.s32.totalorder %s23, %s39
    %p41 = scmp.eq.s32.totalorder %s15, 0
    %p42 = por %p40, %p41
    %s44 = sadd.s32 %s43, 1
    %p47 = scmp.eq.s32.totalorder %s9, 1
    %p48 = scmp.ne.s32.totalorder %s43, %s45
    %p49 = scmp.eq.s32.totalorder %s9, 0
    %p50 = por %p48, %p49
    %p51 = scmp.ne.s32.totalorder %s43, %s45
    %p52 = scmp.eq.s32.totalorder %s14, 1
    %p53 = por %p51, %p52
    %p54 = scmp.ne.s32.totalorder %s45, %s46
    %p55 = scmp.eq.s32.totalorder %s14, 0
    %p56 = por %p54, %p55
    %p57 = scmp.ne.s32.totalorder %s45, %s46
    %p58 = scmp.eq.s32.totalorder %s15, 1
    %p59 = por %p57, %p58
    %p61 = scmp.ne.s32.totalorder %s46, %s60
    %p62 = scmp.eq.s32.totalorder %s15, 0
    %p63 = por %p61, %p62
    %s65 = sadd.s32 %s64, 1
    %p68 = scmp.eq.s32.totalorder %s9, 1
    %p69 = scmp.ne.s32.totalorder %s64, %s66
    %p70 = scmp.eq.s32.totalorder %s9, 0
    %p71 = por %p69, %p70
    %p72 = scmp.ne.s32.totalorder %s64, %s66
    %p73 = scmp.eq.s32.totalorder %s14, 1
    %p74 = por %p72, %p73
    %p75 = scmp.ne.s32.totalorder %s66, %s67
    %p76 = scmp.eq.s32.totalorder %s14, 0
    %p77 = por %p75, %p76
    %p78 = scmp.ne.s32.totalorder %s66, %s67
    %p79 = scmp.eq.s32.totalorder %s15, 1
    %p80 = por %p78, %p79
    %p82 = scmp.ne.s32.totalorder %s67, %s81
    %p83 = scmp.eq.s32.totalorder %s15, 0
    %p84 = por %p82, %p83
    %s85 = ssub.s32 %s9, %s16
    %p86 = scmp.eq.s32.totalorder %s85, 0
    %s88 = sadd.s32 %s87, 1
    %s89 = scalar_select %p86, %s87, %s88
    %p92 = pneg %p86
    %p93 = scmp.eq.s32.totalorder %s9, 1
    %p94 = por %p92, %p93
    %p95 = scmp.ne.s32.totalorder %s87, %s90
    %p96 = scmp.eq.s32.totalorder %s9, 0
    %p97 = por %p95, %p96
    %p98 = scmp.ne.s32.totalorder %s87, %s90
    %p99 = scmp.eq.s32.totalorder %s14, 1
    %p100 = por %p98, %p99
    %p101 = scmp.ne.s32.totalorder %s90, %s91
    %p102 = scmp.eq.s32.totalorder %s14, 0
    %p103 = por %p101, %p102
    %p104 = scmp.ne.s32.totalorder %s90, %s91
    %p105 = scmp.eq.s32.totalorder %s15, 1
    %p106 = por %p104, %p105
    %p108 = scmp.ne.s32.totalorder %s91, %s107
    %p109 = scmp.eq.s32.totalorder %s15, 0
    %p110 = por %p108, %p109
    %p111 = scmp.le.s32.totalorder 1, %s9
    %p112 = scmp.lt.s32.totalorder %s9, 3
    %p113 = pnand %p111, %p112
    %p114 = pneg %p113
    // Predicated region
    $region9: #{self_embedding_block.6} parent=5 // pred_check
      _
    $region10: #{self_embedding_block.6} parent=5 // pred_check_branch
      %116 = sbr.rel (%p113) target = $region12
    $region11: #{self_embedding_block.6} parent=5 // pred_region
      %s117 = ssub.s32 %s9, 1
      // Predicated region
      $region13: #{self_embedding_block.6} parent=11 // pred_check
        %p118 = pneg %p56
      $region14: #{self_embedding_block.6} parent=11 // pred_check_branch
        %120 = sbr.rel (%p118) target = $region16
      $region15: #{self_embedding_block.6} parent=11 // pred_region
        _
      $region16: #{self_embedding_block.6} parent=11 // pred_fallthru
        _
      // Predicated region
      $region17: #{self_embedding_block.6} parent=11 // pred_check
        %p121 = pneg %p77
      $region18: #{self_embedding_block.6} parent=11 // pred_check_branch
        %123 = sbr.rel (%p121) target = $region20
      $region19: #{self_embedding_block.6} parent=11 // pred_region
        _
      $region20: #{self_embedding_block.6} parent=11 // pred_fallthru
        _
    $region12: #{self_embedding_block.6} parent=5 // pred_fallthru
      _
    %p124 = scmp.lt.s32.totalorder %s9, 2
    // Predicated region
    $region21: #{self_embedding_block.6} parent=5 // pred_check
      %p125 = pneg %p124
    $region22: #{self_embedding_block.6} parent=5 // pred_check_branch
      %127 = sbr.rel (%p125) target = $region24
    $region23: #{self_embedding_block.6} parent=5 // pred_region
      // Predicated region
      $region25: #{self_embedding_block.6} parent=23 // pred_check
        %p128 = pneg %p29
      $region26: #{self_embedding_block.6} parent=23 // pred_check_branch
        %130 = sbr.rel (%p128) target = $region28
      $region27: #{self_embedding_block.6} parent=23 // pred_region
        %p131 = scmp.lt.s32.totalorder %s9, 1
        %s132 = scalar_select %p131, %s9, 1
        %s133 = smul.addr %s132, 4
        %s134 = smul.addr %s133, 4
        %s135 = scalar_lea.vmem %s0, %s134
      $region28: #{self_embedding_block.6} parent=23 // pred_fallthru
        _
    $region24: #{self_embedding_block.6} parent=5 // pred_fallthru
      _
    %p136 = scmp.le.s32.totalorder 1, %s9
    %p137 = scmp.lt.s32.totalorder %s9, 3
    %p138 = pnand %p136, %p137
    %p139 = pneg %p138
    // Predicated region
    $region29: #{self_embedding_block.6} parent=5 // pred_check
      _
    $region30: #{self_embedding_block.6} parent=5 // pred_check_branch
      %141 = sbr.rel (%p138) target = $region32
    $region31: #{self_embedding_block.6} parent=5 // pred_region
      %s142 = ssub.s32 %s9, 1
      %p143 = scmp.lt.s32.totalorder %s14, 1
      %s144 = scalar_select %p143, %s14, 1
      %s145 = smul.addr %s144, 4
      %s146 = smul.addr %s145, 4
      %s147 = scalar_lea.vmem %s0, %s146
      %p148 = pneg %p35
      %p149 = pneg %p32
      %p150 = pneg %p56
      %p151 = pneg %p53
      %p152 = pneg %p77
      %p153 = pneg %p74
      %p154 = pneg %p103
      %p155 = pneg %p100
      %p156 = scmp.lt.s32.totalorder %s14, 1
      %s157 = scalar_select %p156, %s14, 1
      %s158 = smul.addr %s157, 2
      %s159 = smul.addr %s158, 4
      %s160 = scalar_lea.vmem %s3, %s159
      %p161 = scmp.lt.s32.totalorder %s14, 1
      %s162 = scalar_select %p161, %s14, 1
      %s163 = smul.addr %s162, 4
      %s164 = smul.addr %s163, 4
      %s165 = scalar_lea.vmem %s0, %s164
      %p166 = scmp.lt.s32.totalorder %s14, 1
      %s167 = scalar_select %p166, %s14, 1
      %s168 = smul.addr %s167, 2
      %s169 = smul.addr %s168, 4
      %s170 = scalar_lea.vmem %s3, %s169
      %v172 = vld [vmem:[%s165] sm:$0xf]
      %v173 = vld [vmem:[%s165 + $0x4] sm:$0xf]
      %v174 = vld [vmem:[%s165 + $0x8] sm:$0xf]
      %v175 = vld [vmem:[%s165 + $0xc] sm:$0xf]
      %v176 = vld [vmem:[%s1] sm:$0xf]
      %v177 = vld [vmem:[%s1 + $0x4] sm:$0xf]
      %s178 = scalar_lea.vmem %s1, 8
      %v179 = vld [vmem:[%s178] sm:$0xf]
      %v180 = vld [vmem:[%s178 + $0x4] sm:$0xf]
      %v183 = vunpack.c.l.b16 %v179
      %v184 = vunpack.c.l.b16 %v180
      %v185 = vpack.c.b16 %v184, %v183
      %vm186 = vcmask 64512
      %v188 = vsel %vm186, %v185, 0
      %vm190 = vcmask 1043456
      %v192 = vsel %vm190, %v173, 0
      %194 = vmatprep.subr.bf16.mxu0 0
      %195 = vmatpush1.bf16.msra.mxu0 %v192
      %196 = vmatprep.subr.bf16.mxu0 0
      %197 = vmatpush1.bf16.msra.mxu0 0
      %198 = vmatprep.subr.bf16.mxu0 0
      %199 = vmatpush1.bf16.msra.mxu0 0
      %200 = vmatprep.subr.bf16.mxu0 0
      %201 = vmatpush1.bf16.msra.mxu0 0
      %202 = vmatprep.subr.bf16.mxu0 0
      %203 = vmatpush1.bf16.msra.mxu0 0
      %204 = vmatprep.subr.bf16.mxu0 0
      %205 = vmatpush1.bf16.msra.mxu0 0
      %206 = vmatprep.subr.bf16.mxu0 0
      %207 = vmatpush1.bf16.msra.mxu0 0
      %208 = vmatprep.subr.bf16.mxu0 0
      %209 = vmatpush1.bf16.msra.mxu0 0
      %210 = vmatprep.subr.bf16.mxu0 0
      %211 = vmatpush1.bf16.msra.mxu0 0
      %212 = vmatprep.subr.bf16.mxu0 0
      %213 = vmatpush1.bf16.msra.mxu0 0
      %214 = vmatprep.subr.bf16.mxu0 0
      %215 = vmatpush1.bf16.msra.mxu0 0
      %216 = vmatprep.subr.bf16.mxu0 0
      %217 = vmatpush1.bf16.msra.mxu0 0
      %218 = vmatprep.subr.bf16.mxu0 0
      %219 = vmatpush1.bf16.msra.mxu0 0
      %220 = vmatprep.subr.bf16.mxu0 0
      %221 = vmatpush1.bf16.msra.mxu0 0
      %222 = vmatprep.subr.bf16.mxu0 0
      %223 = vmatpush1.bf16.msra.mxu0 0
      %224 = vmatprep.subr.bf16.mxu0 0
      %225 = vmatpush1.bf16.msra.mxu0 0
      %226 = vmatprep.mubr.bf16.mxu0 0
      %227 = vmatmul.mubr.bf16.gmra.mrb[0].mxu0 %v188
      %v228 = vpop.f32.mrb[0].mxu0
      %v229 = vadd.f32 0.0, %v228
      %v230 = vpop.f32.mrb[0].mxu0
      %v231 = vpop.f32.mrb[0].mxu0
      %v232 = vadd.f32 0.0, %v231
      %v233 = vpop.f32.mrb[0].mxu0
      %234 = vdwg.mxu0
      %v237 = vunpack.c.l.b16 %v176
      %v238 = vunpack.c.l.b16 %v177
      %v239 = vpack.c.b16 %v238, %v237
      %v241 = vsel %vm186, %v239, 0
      %v244 = vsel %vm190, %v172, 0
      %246 = vmatprep.subr.bf16.mxu0 0
      %247 = vmatpush1.bf16.msra.mxu0 %v244
      %248 = vmatprep.subr.bf16.mxu0 0
      %249 = vmatpush1.bf16.msra.mxu0 0
      %250 = vmatprep.subr.bf16.mxu0 0
      %251 = vmatpush1.bf16.msra.mxu0 0
      %252 = vmatprep.subr.bf16.mxu0 0
      %253 = vmatpush1.bf16.msra.mxu0 0
      %254 = vmatprep.subr.bf16.mxu0 0
      %255 = vmatpush1.bf16.msra.mxu0 0
      %256 = vmatprep.subr.bf16.mxu0 0
      %257 = vmatpush1.bf16.msra.mxu0 0
      %258 = vmatprep.subr.bf16.mxu0 0
      %259 = vmatpush1.bf16.msra.mxu0 0
      %260 = vmatprep.subr.bf16.mxu0 0
      %261 = vmatpush1.bf16.msra.mxu0 0
      %262 = vmatprep.subr.bf16.mxu0 0
      %263 = vmatpush1.bf16.msra.mxu0 0
      %264 = vmatprep.subr.bf16.mxu0 0
      %265 = vmatpush1.bf16.msra.mxu0 0
      %266 = vmatprep.subr.bf16.mxu0 0
      %267 = vmatpush1.bf16.msra.mxu0 0
      %268 = vmatprep.subr.bf16.mxu0 0
      %269 = vmatpush1.bf16.msra.mxu0 0
      %270 = vmatprep.subr.bf16.mxu0 0
      %271 = vmatpush1.bf16.msra.mxu0 0
      %272 = vmatprep.subr.bf16.mxu0 0
      %273 = vmatpush1.bf16.msra.mxu0 0
      %274 = vmatprep.subr.bf16.mxu0 0
      %275 = vmatpush1.bf16.msra.mxu0 0
      %276 = vmatprep.subr.bf16.mxu0 0
      %277 = vmatpush1.bf16.msra.mxu0 0
      %278 = vmatprep.mubr.bf16.mxu0 0
      %279 = vmatmul.mubr.bf16.gmra.mrb[0].mxu0 %v241
      %v280 = vpop.f32.mrb[0].mxu0
      %v281 = vadd.f32 %v229, %v280
      %v282 = vpop.f32.mrb[0].mxu0
      %v283 = vpop.f32.mrb[0].mxu0
      %v284 = vadd.f32 %v232, %v283
      %v285 = vpop.f32.mrb[0].mxu0
      %286 = vdwg.mxu0
      %s287 = scalar_lea.vmem %s1, 16
      %v288 = vld [vmem:[%s287] sm:$0xf]
      %v289 = vld [vmem:[%s287 + $0x4] sm:$0xf]
      %v292 = vunpack.c.l.b16 %v288
      %v293 = vunpack.c.l.b16 %v289
      %v294 = vpack.c.b16 %v293, %v292
      %v296 = vunpack.c.l.b16 %v172
      %v297 = vpack.c.b16 %v296, %v296
      %298 = vrot.lane.b32.xlu0 %v297, 127
      %v299 = vpop.permute.xlu0 %298
      %v301 = vsel %vm186, %v294, 0
      %v304 = vsel %vm190, %v299, 0
      %306 = vmatprep.subr.bf16.mxu0 0
      %307 = vmatpush1.bf16.msra.mxu0 %v304
      %308 = vmatprep.subr.bf16.mxu0 0
      %309 = vmatpush1.bf16.msra.mxu0 0
      %310 = vmatprep.subr.bf16.mxu0 0
      %311 = vmatpush1.bf16.msra.mxu0 0
      %312 = vmatprep.subr.bf16.mxu0 0
      %313 = vmatpush1.bf16.msra.mxu0 0
      %314 = vmatprep.subr.bf16.mxu0 0
      %315 = vmatpush1.bf16.msra.mxu0 0
      %316 = vmatprep.subr.bf16.mxu0 0
      %317 = vmatpush1.bf16.msra.mxu0 0
      %318 = vmatprep.subr.bf16.mxu0 0
      %319 = vmatpush1.bf16.msra.mxu0 0
      %320 = vmatprep.subr.bf16.mxu0 0
      %321 = vmatpush1.bf16.msra.mxu0 0
      %322 = vmatprep.subr.bf16.mxu0 0
      %323 = vmatpush1.bf16.msra.mxu0 0
      %324 = vmatprep.subr.bf16.mxu0 0
      %325 = vmatpush1.bf16.msra.mxu0 0
      %326 = vmatprep.subr.bf16.mxu0 0
      %327 = vmatpush1.bf16.msra.mxu0 0
      %328 = vmatprep.subr.bf16.mxu0 0
      %329 = vmatpush1.bf16.msra.mxu0 0
      %330 = vmatprep.subr.bf16.mxu0 0
      %331 = vmatpush1.bf16.msra.mxu0 0
      %332 = vmatprep.subr.bf16.mxu0 0
      %333 = vmatpush1.bf16.msra.mxu0 0
      %334 = vmatprep.subr.bf16.mxu0 0
      %335 = vmatpush1.bf16.msra.mxu0 0
      %336 = vmatprep.subr.bf16.mxu0 0
      %337 = vmatpush1.bf16.msra.mxu0 0
      %338 = vmatprep.mubr.bf16.mxu0 0
      %339 = vmatmul.mubr.bf16.gmra.mrb[0].mxu0 %v301
      %v340 = vpop.f32.mrb[0].mxu0
      %v341 = vadd.f32 0.0, %v340
      %v342 = vpop.f32.mrb[0].mxu0
      %v343 = vpop.f32.mrb[0].mxu0
      %v344 = vadd.f32 0.0, %v343
      %v345 = vpop.f32.mrb[0].mxu0
      %346 = vdwg.mxu0
      %v347 = vadd.f32 %v281, %v341
      %v348 = vadd.f32 %v284, %v344
      %s349 = scalar_lea.vmem %s1, 24
      %v350 = vld [vmem:[%s349] sm:$0xf]
      %v351 = vld [vmem:[%s349 + $0x4] sm:$0xf]
      %v354 = vunpack.c.l.b16 %v350
      %v355 = vunpack.c.l.b16 %v351
      %v356 = vpack.c.b16 %v355, %v354
      %v358 = vsel %vm186, %v356, 0
      %v361 = vsel %vm190, %v174, 0
      %363 = vmatprep.subr.bf16.mxu0 0
      %364 = vmatpush1.bf16.msra.mxu0 %v361
      %365 = vmatprep.subr.bf16.mxu0 0
      %366 = vmatpush1.bf16.msra.mxu0 0
      %367 = vmatprep.subr.bf16.mxu0 0
      %368 = vmatpush1.bf16.msra.mxu0 0
      %369 = vmatprep.subr.bf16.mxu0 0
      %370 = vmatpush1.bf16.msra.mxu0 0
      %371 = vmatprep.subr.bf16.mxu0 0
      %372 = vmatpush1.bf16.msra.mxu0 0
      %373 = vmatprep.subr.bf16.mxu0 0
      %374 = vmatpush1.bf16.msra.mxu0 0
      %375 = vmatprep.subr.bf16.mxu0 0
      %376 = vmatpush1.bf16.msra.mxu0 0
      %377 = vmatprep.subr.bf16.mxu0 0
      %378 = vmatpush1.bf16.msra.mxu0 0
      %379 = vmatprep.subr.bf16.mxu0 0
      %380 = vmatpush1.bf16.msra.mxu0 0
      %381 = vmatprep.subr.bf16.mxu0 0
      %382 = vmatpush1.bf16.msra.mxu0 0
      %383 = vmatprep.subr.bf16.mxu0 0
      %384 = vmatpush1.bf16.msra.mxu0 0
      %385 = vmatprep.subr.bf16.mxu0 0
      %386 = vmatpush1.bf16.msra.mxu0 0
      %387 = vmatprep.subr.bf16.mxu0 0
      %388 = vmatpush1.bf16.msra.mxu0 0
      %389 = vmatprep.subr.bf16.mxu0 0
      %390 = vmatpush1.bf16.msra.mxu0 0
      %391 = vmatprep.subr.bf16.mxu0 0
      %392 = vmatpush1.bf16.msra.mxu0 0
      %393 = vmatprep.subr.bf16.mxu0 0
      %394 = vmatpush1.bf16.msra.mxu0 0
      %395 = vmatprep.mubr.bf16.mxu0 0
      %396 = vmatmul.mubr.bf16.gmra.mrb[0].mxu0 %v358
      %v397 = vpop.f32.mrb[0].mxu0
      %v398 = vadd.f32 0.0, %v397
      %v399 = vpop.f32.mrb[0].mxu0
      %v400 = vpop.f32.mrb[0].mxu0
      %v401 = vadd.f32 0.0, %v400
      %v402 = vpop.f32.mrb[0].mxu0
      %403 = vdwg.mxu0
      %v404 = vadd.f32 %v347, %v398
      %v405 = vadd.f32 %v348, %v401
      %s406 = scalar_lea.vmem %s1, 32
      %v407 = vld [vmem:[%s406] sm:$0xf]
      %v408 = vld [vmem:[%s406 + $0x4] sm:$0xf]
      %v411 = vunpack.c.l.b16 %v407
      %v412 = vunpack.c.l.b16 %v408
      %v413 = vpack.c.b16 %v412, %v411
      %v415 = vsel %vm186, %v413, 0
      %v418 = vsel %vm190, %v175, 0
      %420 = vmatprep.subr.bf16.mxu0 0
      %421 = vmatpush1.bf16.msra.mxu0 %v418
      %422 = vmatprep.subr.bf16.mxu0 0
      %423 = vmatpush1.bf16.msra.mxu0 0
      %424 = vmatprep.subr.bf16.mxu0 0
      %425 = vmatpush1.bf16.msra.mxu0 0
      %426 = vmatprep.subr.bf16.mxu0 0
      %427 = vmatpush1.bf16.msra.mxu0 0
      %428 = vmatprep.subr.bf16.mxu0 0
      %429 = vmatpush1.bf16.msra.mxu0 0
      %430 = vmatprep.subr.bf16.mxu0 0
      %431 = vmatpush1.bf16.msra.mxu0 0
      %432 = vmatprep.subr.bf16.mxu0 0
      %433 = vmatpush1.bf16.msra.mxu0 0
      %434 = vmatprep.subr.bf16.mxu0 0
      %435 = vmatpush1.bf16.msra.mxu0 0
      %436 = vmatprep.subr.bf16.mxu0 0
      %437 = vmatpush1.bf16.msra.mxu0 0
      %438 = vmatprep.subr.bf16.mxu0 0
      %439 = vmatpush1.bf16.msra.mxu0 0
      %440 = vmatprep.subr.bf16.mxu0 0
      %441 = vmatpush1.bf16.msra.mxu0 0
      %442 = vmatprep.subr.bf16.mxu0 0
      %443 = vmatpush1.bf16.msra.mxu0 0
      %444 = vmatprep.subr.bf16.mxu0 0
      %445 = vmatpush1.bf16.msra.mxu0 0
      %446 = vmatprep.subr.bf16.mxu0 0
      %447 = vmatpush1.bf16.msra.mxu0 0
      %448 = vmatprep.subr.bf16.mxu0 0
      %449 = vmatpush1.bf16.msra.mxu0 0
      %450 = vmatprep.subr.bf16.mxu0 0
      %451 = vmatpush1.bf16.msra.mxu0 0
      %452 = vmatprep.mubr.bf16.mxu0 0
      %453 = vmatmul.mubr.bf16.gmra.mrb[0].mxu0 %v415
      %v454 = vpop.f32.mrb[0].mxu0
      %v455 = vadd.f32 0.0, %v454
      %v456 = vpop.f32.mrb[0].mxu0
      %v457 = vpop.f32.mrb[0].mxu0
      %v458 = vadd.f32 0.0, %v457
      %v459 = vpop.f32.mrb[0].mxu0
      %460 = vdwg.mxu0
      %v461 = vadd.f32 %v404, %v455
      %v462 = vadd.f32 %v405, %v458
      %s463 = scalar_lea.vmem %s1, 40
      %v464 = vld [vmem:[%s463] sm:$0xf]
      %v465 = vld [vmem:[%s463 + $0x4] sm:$0xf]
      %v468 = vunpack.c.l.b16 %v464
      %v469 = vunpack.c.l.b16 %v465
      %v470 = vpack.c.b16 %v469, %v468
      %v472 = vunpack.c.l.b16 %v174
      %v473 = vpack.c.b16 %v472, %v472
      %474 = vrot.lane.b32.xlu0 %v473, 127
      %v475 = vpop.permute.xlu0 %474
      %v477 = vsel %vm186, %v470, 0
      %v480 = vsel %vm190, %v475, 0
      %482 = vmatprep.subr.bf16.mxu0 0
      %483 = vmatpush1.bf16.msra.mxu0 %v480
      %484 = vmatprep.subr.bf16.mxu0 0
      %485 = vmatpush1.bf16.msra.mxu0 0
      %486 = vmatprep.subr.bf16.mxu0 0
      %487 = vmatpush1.bf16.msra.mxu0 0
      %488 = vmatprep.subr.bf16.mxu0 0
      %489 = vmatpush1.bf16.msra.mxu0 0
      %490 = vmatprep.subr.bf16.mxu0 0
      %491 = vmatpush1.bf16.msra.mxu0 0
      %492 = vmatprep.subr.bf16.mxu0 0
      %493 = vmatpush1.bf16.msra.mxu0 0
      %494 = vmatprep.subr.bf16.mxu0 0
      %495 = vmatpush1.bf16.msra.mxu0 0
      %496 = vmatprep.subr.bf16.mxu0 0
      %497 = vmatpush1.bf16.msra.mxu0 0
      %498 = vmatprep.subr.bf16.mxu0 0
      %499 = vmatpush1.bf16.msra.mxu0 0
      %500 = vmatprep.subr.bf16.mxu0 0
      %501 = vmatpush1.bf16.msra.mxu0 0
      %502 = vmatprep.subr.bf16.mxu0 0
      %503 = vmatpush1.bf16.msra.mxu0 0
      %504 = vmatprep.subr.bf16.mxu0 0
      %505 = vmatpush1.bf16.msra.mxu0 0
      %506 = vmatprep.subr.bf16.mxu0 0
      %507 = vmatpush1.bf16.msra.mxu0 0
      %508 = vmatprep.subr.bf16.mxu0 0
      %509 = vmatpush1.bf16.msra.mxu0 0
      %510 = vmatprep.subr.bf16.mxu0 0
      %511 = vmatpush1.bf16.msra.mxu0 0
      %512 = vmatprep.subr.bf16.mxu0 0
      %513 = vmatpush1.bf16.msra.mxu0 0
      %514 = vmatprep.mubr.bf16.mxu0 0
      %515 = vmatmul.mubr.bf16.gmra.mrb[0].mxu0 %v477
      %v516 = vpop.f32.mrb[0].mxu0
      %v517 = vadd.f32 0.0, %v516
      %v518 = vpop.f32.mrb[0].mxu0
      %v519 = vpop.f32.mrb[0].mxu0
      %v520 = vadd.f32 0.0, %v519
      %v521 = vpop.f32.mrb[0].mxu0
      %522 = vdwg.mxu0
      %v523 = vadd.f32 %v461, %v517
      %v524 = vadd.f32 %v462, %v520
      %s525 = scalar_lea.vmem %s1, 48
      %v526 = vld [vmem:[%s525] sm:$0xf]
      %v527 = vld [vmem:[%s525 + $0x4] sm:$0xf]
      %v530 = vunpack.c.l.b16 %v526
      %v531 = vunpack.c.l.b16 %v527
      %v532 = vpack.c.b16 %v531, %v530
      %533 = vrot.lane.b32.xlu0 %v297, 123
      %v534 = vpop.permute.xlu0 %533
      %v536 = vsel %vm186, %v532, 0
      %v539 = vsel %vm190, %v534, 0
      %541 = vmatprep.subr.bf16.mxu0 0
      %542 = vmatpush1.bf16.msra.mxu0 %v539
      %543 = vmatprep.subr.bf16.mxu0 0
      %544 = vmatpush1.bf16.msra.mxu0 0
      %545 = vmatprep.subr.bf16.mxu0 0
      %546 = vmatpush1.bf16.msra.mxu0 0
      %547 = vmatprep.subr.bf16.mxu0 0
      %548 = vmatpush1.bf16.msra.mxu0 0
      %549 = vmatprep.subr.bf16.mxu0 0
      %550 = vmatpush1.bf16.msra.mxu0 0
      %551 = vmatprep.subr.bf16.mxu0 0
      %552 = vmatpush1.bf16.msra.mxu0 0
      %553 = vmatprep.subr.bf16.mxu0 0
      %554 = vmatpush1.bf16.msra.mxu0 0
      %555 = vmatprep.subr.bf16.mxu0 0
      %556 = vmatpush1.bf16.msra.mxu0 0
      %557 = vmatprep.subr.bf16.mxu0 0
      %558 = vmatpush1.bf16.msra.mxu0 0
      %559 = vmatprep.subr.bf16.mxu0 0
      %560 = vmatpush1.bf16.msra.mxu0 0
      %561 = vmatprep.subr.bf16.mxu0 0
      %562 = vmatpush1.bf16.msra.mxu0 0
      %563 = vmatprep.subr.bf16.mxu0 0
      %564 = vmatpush1.bf16.msra.mxu0 0
      %565 = vmatprep.subr.bf16.mxu0 0
      %566 = vmatpush1.bf16.msra.mxu0 0
      %567 = vmatprep.subr.bf16.mxu0 0
      %568 = vmatpush1.bf16.msra.mxu0 0
      %569 = vmatprep.subr.bf16.mxu0 0
      %570 = vmatpush1.bf16.msra.mxu0 0
      %571 = vmatprep.subr.bf16.mxu0 0
      %572 = vmatpush1.bf16.msra.mxu0 0
      %573 = vmatprep.mubr.bf16.mxu0 0
      %574 = vmatmul.mubr.bf16.gmra.mrb[0].mxu0 %v536
      %v575 = vpop.f32.mrb[0].mxu0
      %v576 = vadd.f32 0.0, %v575
      %v577 = vpop.f32.mrb[0].mxu0
      %v578 = vpop.f32.mrb[0].mxu0
      %v579 = vadd.f32 0.0, %v578
      %v580 = vpop.f32.mrb[0].mxu0
      %581 = vdwg.mxu0
      %v582 = vadd.f32 %v523, %v576
      %v583 = vadd.f32 %v524, %v579
      %s584 = scalar_lea.vmem %s1, 56
      %v585 = vld [vmem:[%s584] sm:$0xf]
      %v586 = vld [vmem:[%s584 + $0x4] sm:$0xf]
      %v589 = vunpack.c.l.b16 %v585
      %v590 = vunpack.c.l.b16 %v586
      %v591 = vpack.c.b16 %v590, %v589
      %v593 = vunpack.c.l.b16 %v173
      %v594 = vpack.c.b16 %v593, %v593
      %595 = vrot.lane.b32.xlu0 %v594, 123
      %v596 = vpop.permute.xlu0 %595
      %v598 = vsel %vm186, %v591, 0
      %v601 = vsel %vm190, %v596, 0
      %603 = vmatprep.subr.bf16.mxu0 0
      %604 = vmatpush1.bf16.msra.mxu0 %v601
      %605 = vmatprep.subr.bf16.mxu0 0
      %606 = vmatpush1.bf16.msra.mxu0 0
      %607 = vmatprep.subr.bf16.mxu0 0
      %608 = vmatpush1.bf16.msra.mxu0 0
      %609 = vmatprep.subr.bf16.mxu0 0
      %610 = vmatpush1.bf16.msra.mxu0 0
      %611 = vmatprep.subr.bf16.mxu0 0
      %612 = vmatpush1.bf16.msra.mxu0 0
      %613 = vmatprep.subr.bf16.mxu0 0
      %614 = vmatpush1.bf16.msra.mxu0 0
      %615 = vmatprep.subr.bf16.mxu0 0
      %616 = vmatpush1.bf16.msra.mxu0 0
      %617 = vmatprep.subr.bf16.mxu0 0
      %618 = vmatpush1.bf16.msra.mxu0 0
      %619 = vmatprep.subr.bf16.mxu0 0
      %620 = vmatpush1.bf16.msra.mxu0 0
      %621 = vmatprep.subr.bf16.mxu0 0
      %622 = vmatpush1.bf16.msra.mxu0 0
      %623 = vmatprep.subr.bf16.mxu0 0
      %624 = vmatpush1.bf16.msra.mxu0 0
      %625 = vmatprep.subr.bf16.mxu0 0
      %626 = vmatpush1.bf16.msra.mxu0 0
      %627 = vmatprep.subr.bf16.mxu0 0
      %628 = vmatpush1.bf16.msra.mxu0 0
      %629 = vmatprep.subr.bf16.mxu0 0
      %630 = vmatpush1.bf16.msra.mxu0 0
      %631 = vmatprep.subr.bf16.mxu0 0
      %632 = vmatpush1.bf16.msra.mxu0 0
      %633 = vmatprep.subr.bf16.mxu0 0
      %634 = vmatpush1.bf16.msra.mxu0 0
      %635 = vmatprep.mubr.bf16.mxu0 0
      %636 = vmatmul.mubr.bf16.gmra.mrb[0].mxu0 %v598
      %v637 = vpop.f32.mrb[0].mxu0
      %v638 = vadd.f32 0.0, %v637
      %v639 = vpop.f32.mrb[0].mxu0
      %v640 = vpop.f32.mrb[0].mxu0
      %v641 = vadd.f32 0.0, %v640
      %v642 = vpop.f32.mrb[0].mxu0
      %643 = vdwg.mxu0
      %v644 = vadd.f32 %v582, %v638
      %v645 = vadd.f32 %v583, %v641
      %s646 = scalar_lea.vmem %s1, 64
      %v647 = vld [vmem:[%s646] sm:$0xf]
      %v648 = vld [vmem:[%s646 + $0x4] sm:$0xf]
      %v651 = vunpack.c.l.b16 %v647
      %v652 = vunpack.c.l.b16 %v648
      %v653 = vpack.c.b16 %v652, %v651
      %654 = vrot.lane.b32.xlu0 %v297, 122
      %v655 = vpop.permute.xlu0 %654
      %v657 = vsel %vm186, %v653, 0
      %v660 = vsel %vm190, %v655, 0
      %662 = vmatprep.subr.bf16.mxu0 0
      %663 = vmatpush1.bf16.msra.mxu0 %v660
      %664 = vmatprep.subr.bf16.mxu0 0
      %665 = vmatpush1.bf16.msra.mxu0 0
      %666 = vmatprep.subr.bf16.mxu0 0
      %667 = vmatpush1.bf16.msra.mxu0 0
      %668 = vmatprep.subr.bf16.mxu0 0
      %669 = vmatpush1.bf16.msra.mxu0 0
      %670 = vmatprep.subr.bf16.mxu0 0
      %671 = vmatpush1.bf16.msra.mxu0 0
      %672 = vmatprep.subr.bf16.mxu0 0
      %673 = vmatpush1.bf16.msra.mxu0 0
      %674 = vmatprep.subr.bf16.mxu0 0
      %675 = vmatpush1.bf16.msra.mxu0 0
      %676 = vmatprep.subr.bf16.mxu0 0
      %677 = vmatpush1.bf16.msra.mxu0 0
      %678 = vmatprep.subr.bf16.mxu0 0
      %679 = vmatpush1.bf16.msra.mxu0 0
      %680 = vmatprep.subr.bf16.mxu0 0
      %681 = vmatpush1.bf16.msra.mxu0 0
      %682 = vmatprep.subr.bf16.mxu0 0
      %683 = vmatpush1.bf16.msra.mxu0 0
      %684 = vmatprep.subr.bf16.mxu0 0
      %685 = vmatpush1.bf16.msra.mxu0 0
      %686 = vmatprep.subr.bf16.mxu0 0
      %687 = vmatpush1.bf16.msra.mxu0 0
      %688 = vmatprep.subr.bf16.mxu0 0
      %689 = vmatpush1.bf16.msra.mxu0 0
      %690 = vmatprep.subr.bf16.mxu0 0
      %691 = vmatpush1.bf16.msra.mxu0 0
      %692 = vmatprep.subr.bf16.mxu0 0
      %693 = vmatpush1.bf16.msra.mxu0 0
      %694 = vmatprep.mubr.bf16.mxu0 0
      %695 = vmatmul.mubr.bf16.gmra.mrb[0].mxu0 %v657
      %v696 = vpop.f32.mrb[0].mxu0
      %v697 = vadd.f32 0.0, %v696
      %v698 = vpop.f32.mrb[0].mxu0
      %v699 = vpop.f32.mrb[0].mxu0
      %v700 = vadd.f32 0.0, %v699
      %v701 = vpop.f32.mrb[0].mxu0
      %702 = vdwg.mxu0
      %v703 = vadd.f32 %v644, %v697
      %v704 = vadd.f32 %v645, %v700
      %v705 = vld [vmem:[%s2] sm:$0xff]
      %v706 = vld [vmem:[%s2 + $0x8] sm:$0xff]
      %708 = vset.pattern.permute.xlu0 0
      %709 = vperm.xlu0 %708, %v705
      %v710 = vpop.permute.xlu0 %709
      %713 = vset.pattern.permute.xlu0 0
      %714 = vperm.xlu0 %713, %v706
      %v715 = vpop.permute.xlu0 %714
      %v717 = vmul.f32 %v703, %v710
      %v718 = vmul.f32 %v704, %v715
      %719 = vset.pattern.permute.xlu0 1
      %720 = vperm.xlu0 %719, %v705
      %v721 = vpop.permute.xlu0 %720
      %723 = vset.pattern.permute.xlu0 1
      %724 = vperm.xlu0 %723, %v706
      %v725 = vpop.permute.xlu0 %724
      %v727 = vadd.f32 %v717, %v721
      %v728 = vadd.f32 %v718, %v725
      %vm729 = vcmp.gt.f32.partialorder %v727, 0.0
      %vm730 = vcmp.gt.f32.partialorder %v728, 0.0
      %v731 = vmul.f32 %v727, 0.2
      %v732 = vmul.f32 %v728, 0.2
      %v733 = vsel %vm729, %v727, %v731
      %v734 = vsel %vm730, %v728, %v732
      %v735 = vpack.c.bf16 %v734, %v733
      %v737 = vunpack.c.l.b16 %v735
      %v738 = vunpack.c.h.b16 %v735
      %v739 = vpack.c.b16 %v737, %v737
      %v740 = vpack.c.b16 %v738, %v738
      %vm743 = vcmask 158720
      %744 = vst.msk [vmem:[%s170] sm:$0xf] %vm743, %v739
      %745 = vst.msk [vmem:[%s170 + $0x4] sm:$0xf] %vm743, %v740
      %p746 = scmp.lt.s32.totalorder %s14, 1
      %s747 = scalar_select %p746, %s14, 1
      %s748 = smul.addr %s747, 2
      %s749 = smul.addr %s748, 4
      %s750 = scalar_lea.vmem %s3, %s749
      // Predicated region
      $region33: #{self_embedding_block.6} parent=31 // pred_check
        %p751 = pneg %p100
      $region34: #{self_embedding_block.6} parent=31 // pred_check_branch
        %753 = sbr.rel (%p751) target = $region36
      $region35: #{self_embedding_block.6} parent=31 // pred_region
        _
      $region36: #{self_embedding_block.6} parent=31 // pred_fallthru
        _
    $region32: #{self_embedding_block.6} parent=5 // pred_fallthru
      _
    %p754 = scmp.le.s32.totalorder 2, %s9
    // Predicated region
    $region37: #{self_embedding_block.6} parent=5 // pred_check
      %p755 = pneg %p754
    $region38: #{self_embedding_block.6} parent=5 // pred_check_branch
      %757 = sbr.rel (%p755) target = $region40
    $region39: #{self_embedding_block.6} parent=5 // pred_region
      %s758 = ssub.s32 %s9, 2
      // Predicated region
      $region41: #{self_embedding_block.6} parent=39 // pred_check
        %p759 = pneg %p106
      $region42: #{self_embedding_block.6} parent=39 // pred_check_branch
        %761 = sbr.rel (%p759) target = $region44
      $region43: #{self_embedding_block.6} parent=39 // pred_region
        %p762 = scmp.lt.s32.totalorder %s15, 1
        %s763 = scalar_select %p762, %s15, 1
        %s764 = smul.addr %s763, 2
        %s765 = smul.addr %s764, 4
        %s766 = scalar_lea.vmem %s3, %s765
      $region44: #{self_embedding_block.6} parent=39 // pred_fallthru
        _
    $region40: #{self_embedding_block.6} parent=5 // pred_fallthru
      _
  $region6: #{self_embedding_block.6} parent=0 // loop_footer
    %s13 = sadd.s32 1, %s9
  $region7: #{self_embedding_block.6} parent=0 // loop_footer_branch
    %8 = sbr.rel target = $region3
  $region8: #{self_embedding_block.6} parent=0 // loop_exit
    _

// kernel: self_embedding_block.7
$region0: #{self_embedding_block.7}
  #allocation0 [shape = 'u32[]', space=smem, size = 0x4, offset = 0x4, fixed_abs, tag = 'smem constant byte address 0x4 - core index']
  #allocation1 [shape = 'u32[144,128]{1,0:T(1,128)}', space=vmem, size = 0x12000, scoped, tag = 'internal scratch']
  %s0 = inlined_call_operand.vmem [shape: bf16[2,64,12], index: 0, kind: input, shape index: {}]
  %s1 = inlined_call_operand.vmem [shape: bf16[9,32,16], index: 1, kind: input, shape index: {}]
  %s2 = inlined_call_operand.vmem [shape: f32[32,2], index: 2, kind: input, shape index: {}]
  %s3 = inlined_call_operand.vmem [shape: bf16[2,32,6], index: 3, kind: output, shape index: {}]
  %s4 = sld [smem:[#allocation0]]
  $region45: #{self_embedding_block.7} parent=0
    _
  %s6 = ssub.s32 1, %s4
  %s7 = scalar_select 0, %s6, %s4
  loop: start=0, step=1, limit=4
  $region2: #{self_embedding_block.7} parent=0 // loop_pre_header
    _
  $region3: #{self_embedding_block.7} parent=0 // loop_header
    %s9 = sphi 0, %s13
    %p10 = scmp.ge.s32.totalorder %s9, 4
    %s19 = sphi 0, %s21
    %s22 = sphi 0, %s19
    %s23 = sphi 0, %s22
    %s39 = sphi 0, %s23
    %s43 = sphi 0, %s43
    %s45 = sphi 0, %s43
    %s46 = sphi 0, %s45
    %s60 = sphi 0, %s46
    %s64 = sphi 0, %s64
    %s66 = sphi 0, %s64
    %s67 = sphi 0, %s66
    %s81 = sphi 0, %s67
    %s87 = sphi 0, %s89
    %s90 = sphi 0, %s87
    %s91 = sphi 0, %s90
    %s107 = sphi 0, %s91
  $region4: #{self_embedding_block.7} parent=0 // loop_header_branch
    %12 = sbr.rel (%p10) target = $region8
  $region5: #{self_embedding_block.7} parent=0 // loop_body
    %s14 = ssub.s32 %s9, 1
    %s15 = ssub.s32 %s9, 2
    %s16 = sadd.s32 %s9, 1
    %s17 = ssub.s32 %s9, %s16
    %p18 = scmp.eq.s32.totalorder %s17, 0
    %s20 = sadd.s32 %s19, 1
    %s21 = scalar_select %p18, %s19, %s20
    %p24 = pneg %p18
    %p25 = scmp.eq.s32.totalorder %s9, 1
    %p26 = por %p24, %p25
    %p27 = scmp.ne.s32.totalorder %s19, %s22
    %p28 = scmp.eq.s32.totalorder %s9, 0
    %p29 = por %p27, %p28
    %p30 = scmp.ne.s32.totalorder %s19, %s22
    %p31 = scmp.eq.s32.totalorder %s14, 1
    %p32 = por %p30, %p31
    %p33 = scmp.ne.s32.totalorder %s22, %s23
    %p34 = scmp.eq.s32.totalorder %s14, 0
    %p35 = por %p33, %p34
    %p36 = scmp.ne.s32.totalorder %s22, %s23
    %p37 = scmp.eq.s32.totalorder %s15, 1
    %p38 = por %p36, %p37
    %p40 = scmp.ne.s32.totalorder %s23, %s39
    %p41 = scmp.eq.s32.totalorder %s15, 0
    %p42 = por %p40, %p41
    %s44 = sadd.s32 %s43, 1
    %p47 = scmp.eq.s32.totalorder %s9, 1
    %p48 = scmp.ne.s32.totalorder %s43, %s45
    %p49 = scmp.eq.s32.totalorder %s9, 0
    %p50 = por %p48, %p49
    %p51 = scmp.ne.s32.totalorder %s43, %s45
    %p52 = scmp.eq.s32.totalorder %s14, 1
    %p53 = por %p51, %p52
    %p54 = scmp.ne.s32.totalorder %s45, %s46
    %p55 = scmp.eq.s32.totalorder %s14, 0
    %p56 = por %p54, %p55
    %p57 = scmp.ne.s32.totalorder %s45, %s46
    %p58 = scmp.eq.s32.totalorder %s15, 1
    %p59 = por %p57, %p58
    %p61 = scmp.ne.s32.totalorder %s46, %s60
    %p62 = scmp.eq.s32.totalorder %s15, 0
    %p63 = por %p61, %p62
    %s65 = sadd.s32 %s64, 1
    %p68 = scmp.eq.s32.totalorder %s9, 1
    %p69 = scmp.ne.s32.totalorder %s64, %s66
    %p70 = scmp.eq.s32.totalorder %s9, 0
    %p71 = por %p69, %p70
    %p72 = scmp.ne.s32.totalorder %s64, %s66
    %p73 = scmp.eq.s32.totalorder %s14, 1
    %p74 = por %p72, %p73
    %p75 = scmp.ne.s32.totalorder %s66, %s67
    %p76 = scmp.eq.s32.totalorder %s14, 0
    %p77 = por %p75, %p76
    %p78 = scmp.ne.s32.totalorder %s66, %s67
    %p79 = scmp.eq.s32.totalorder %s15, 1
    %p80 = por %p78, %p79
    %p82 = scmp.ne.s32.totalorder %s67, %s81
    %p83 = scmp.eq.s32.totalorder %s15, 0
    %p84 = por %p82, %p83
    %s85 = ssub.s32 %s9, %s16
    %p86 = scmp.eq.s32.totalorder %s85, 0
    %s88 = sadd.s32 %s87, 1
    %s89 = scalar_select %p86, %s87, %s88
    %p92 = pneg %p86
    %p93 = scmp.eq.s32.totalorder %s9, 1
    %p94 = por %p92, %p93
    %p95 = scmp.ne.s32.totalorder %s87, %s90
    %p96 = scmp.eq.s32.totalorder %s9, 0
    %p97 = por %p95, %p96
    %p98 = scmp.ne.s32.totalorder %s87, %s90
    %p99 = scmp.eq.s32.totalorder %s14, 1
    %p100 = por %p98, %p99
    %p101 = scmp.ne.s32.totalorder %s90, %s91
    %p102 = scmp.eq.s32.totalorder %s14, 0
    %p103 = por %p101, %p102
    %p104 = scmp.ne.s32.totalorder %s90, %s91
    %p105 = scmp.eq.s32.totalorder %s15, 1
    %p106 = por %p104, %p105
    %p108 = scmp.ne.s32.totalorder %s91, %s107
    %p109 = scmp.eq.s32.totalorder %s15, 0
    %p110 = por %p108, %p109
    %p111 = scmp.le.s32.totalorder 1, %s9
    %p112 = scmp.lt.s32.totalorder %s9, 3
    %p113 = pnand %p111, %p112
    %p114 = pneg %p113
    // Predicated region
    $region9: #{self_embedding_block.7} parent=5 // pred_check
      _
    $region10: #{self_embedding_block.7} parent=5 // pred_check_branch
      %116 = sbr.rel (%p113) target = $region12
    $region11: #{self_embedding_block.7} parent=5 // pred_region
      %s117 = ssub.s32 %s9, 1
      // Predicated region
      $region13: #{self_embedding_block.7} parent=11 // pred_check
        %p118 = pneg %p56
      $region14: #{self_embedding_block.7} parent=11 // pred_check_branch
        %120 = sbr.rel (%p118) target = $region16
      $region15: #{self_embedding_block.7} parent=11 // pred_region
        _
      $region16: #{self_embedding_block.7} parent=11 // pred_fallthru
        _
      // Predicated region
      $region17: #{self_embedding_block.7} parent=11 // pred_check
        %p121 = pneg %p77
      $region18: #{self_embedding_block.7} parent=11 // pred_check_branch
        %123 = sbr.rel (%p121) target = $region20
      $region19: #{self_embedding_block.7} parent=11 // pred_region
        _
      $region20: #{self_embedding_block.7} parent=11 // pred_fallthru
        _
    $region12: #{self_embedding_block.7} parent=5 // pred_fallthru
      _
    %p124 = scmp.lt.s32.totalorder %s9, 2
    // Predicated region
    $region21: #{self_embedding_block.7} parent=5 // pred_check
      %p125 = pneg %p124
    $region22: #{self_embedding_block.7} parent=5 // pred_check_branch
      %127 = sbr.rel (%p125) target = $region24
    $region23: #{self_embedding_block.7} parent=5 // pred_region
      // Predicated region
      $region25: #{self_embedding_block.7} parent=23 // pred_check
        %p128 = pneg %p29
      $region26: #{self_embedding_block.7} parent=23 // pred_check_branch
        %130 = sbr.rel (%p128) target = $region28
      $region27: #{self_embedding_block.7} parent=23 // pred_region
        %p131 = scmp.lt.s32.totalorder %s9, 1
        %s132 = scalar_select %p131, %s9, 1
        %s133 = smul.addr %s132, 8
        %s134 = smul.addr %s133, 4
        %s135 = scalar_lea.vmem %s0, %s134
      $region28: #{self_embedding_block.7} parent=23 // pred_fallthru
        _
    $region24: #{self_embedding_block.7} parent=5 // pred_fallthru
      _
    %p136 = scmp.le.s32.totalorder 1, %s9
    %p137 = scmp.lt.s32.totalorder %s9, 3
    %p138 = pnand %p136, %p137
    %p139 = pneg %p138
    // Predicated region
    $region29: #{self_embedding_block.7} parent=5 // pred_check
      _
    $region30: #{self_embedding_block.7} parent=5 // pred_check_branch
      %141 = sbr.rel (%p138) target = $region32
    $region31: #{self_embedding_block.7} parent=5 // pred_region
      %s142 = ssub.s32 %s9, 1
      %p143 = scmp.lt.s32.totalorder %s14, 1
      %s144 = scalar_select %p143, %s14, 1
      %s145 = smul.addr %s144, 8
      %s146 = smul.addr %s145, 4
      %s147 = scalar_lea.vmem %s0, %s146
      %p148 = pneg %p35
      %p149 = pneg %p32
      %p150 = pneg %p56
      %p151 = pneg %p53
      %p152 = pneg %p77
      %p153 = pneg %p74
      %p154 = pneg %p103
      %p155 = pneg %p100
      %p156 = scmp.lt.s32.totalorder %s14, 1
      %s157 = scalar_select %p156, %s14, 1
      %s158 = smul.addr %s157, 4
      %s159 = smul.addr %s158, 4
      %s160 = scalar_lea.vmem %s3, %s159
      %p161 = scmp.lt.s32.totalorder %s14, 1
      %s162 = scalar_select %p161, %s14, 1
      %s163 = smul.addr %s162, 8
      %s164 = smul.addr %s163, 4
      %s165 = scalar_lea.vmem %s0, %s164
      %p166 = scmp.lt.s32.totalorder %s14, 1
      %s167 = scalar_select %p166, %s14, 1
      %s168 = smul.addr %s167, 4
      %s169 = smul.addr %s168, 4
      %s170 = scalar_lea.vmem %s3, %s169
      %v172 = vld [vmem:[%s165] sm:$0xf]
      %v173 = vld [vmem:[%s165 + $0x4] sm:$0xf]
      %v174 = vld [vmem:[%s165 + $0x8] sm:$0xf]
      %v175 = vld [vmem:[%s165 + $0xc] sm:$0xf]
      %v176 = vld [vmem:[%s165 + $0x10] sm:$0xf]
      %v177 = vld [vmem:[%s165 + $0x14] sm:$0xf]
      %v178 = vld [vmem:[%s165 + $0x18] sm:$0xf]
      %v179 = vld [vmem:[%s165 + $0x1c] sm:$0xf]
      %v180 = vld [vmem:[%s1] sm:$0xf]
      %v181 = vld [vmem:[%s1 + $0x4] sm:$0xf]
      %v182 = vld [vmem:[%s1 + $0x8] sm:$0xf]
      %v183 = vld [vmem:[%s1 + $0xc] sm:$0xf]
      %s184 = scalar_lea.vmem %s1, 16
      %v185 = vld [vmem:[%s184] sm:$0xf]
      %v186 = vld [vmem:[%s184 + $0x4] sm:$0xf]
      %v187 = vld [vmem:[%s184 + $0x8] sm:$0xf]
      %v188 = vld [vmem:[%s184 + $0xc] sm:$0xf]
      %v193 = vunpack.c.l.b16 %v185
      %v194 = vunpack.c.l.b16 %v186
      %v195 = vunpack.c.l.b16 %v187
      %v196 = vunpack.c.l.b16 %v188
      %v197 = vpack.c.b16 %v194, %v193
      %v198 = vpack.c.b16 %v196, %v195
      %v201 = vunpack.c.l.b16 %v174
      %v202 = vunpack.c.l.b16 %v175
      %v203 = vpack.c.b16 %v202, %v201
      %vm205 = vcmask 130048
      %v207 = vsel %vm205, %v197, 0
      %v210 = vsel %vm205, %v198, 0
      %212 = vmatprep.subr.bf16.mxu0 0
      %213 = vmatpush1.bf16.msra.mxu0 %v203
      %214 = vmatprep.subr.bf16.mxu0 0
      %215 = vmatpush1.bf16.msra.mxu0 0
      %216 = vmatprep.subr.bf16.mxu0 0
      %217 = vmatpush1.bf16.msra.mxu0 0
      %218 = vmatprep.subr.bf16.mxu0 0
      %219 = vmatpush1.bf16.msra.mxu0 0
      %220 = vmatprep.subr.bf16.mxu0 0
      %221 = vmatpush1.bf16.msra.mxu0 0
      %222 = vmatprep.subr.bf16.mxu0 0
      %223 = vmatpush1.bf16.msra.mxu0 0
      %224 = vmatprep.subr.bf16.mxu0 0
      %225 = vmatpush1.bf16.msra.mxu0 0
      %226 = vmatprep.subr.bf16.mxu0 0
      %227 = vmatpush1.bf16.msra.mxu0 0
      %228 = vmatprep.subr.bf16.mxu0 0
      %229 = vmatpush1.bf16.msra.mxu0 0
      %230 = vmatprep.subr.bf16.mxu0 0
      %231 = vmatpush1.bf16.msra.mxu0 0
      %232 = vmatprep.subr.bf16.mxu0 0
      %233 = vmatpush1.bf16.msra.mxu0 0
      %234 = vmatprep.subr.bf16.mxu0 0
      %235 = vmatpush1.bf16.msra.mxu0 0
      %236 = vmatprep.subr.bf16.mxu0 0
      %237 = vmatpush1.bf16.msra.mxu0 0
      %238 = vmatprep.subr.bf16.mxu0 0
      %239 = vmatpush1.bf16.msra.mxu0 0
      %240 = vmatprep.subr.bf16.mxu0 0
      %241 = vmatpush1.bf16.msra.mxu0 0
      %242 = vmatprep.subr.bf16.mxu0 0
      %243 = vmatpush1.bf16.msra.mxu0 0
      %244 = vmatprep.mubr.bf16.mxu0 0
      %245 = vmatmul.mubr.bf16.gmra.mrb[0].mxu0 %v207
      %v246 = vpop.f32.mrb[0].mxu0
      %v247 = vadd.f32 0.0, %v246
      %v248 = vpop.f32.mrb[0].mxu0
      %v249 = vpop.f32.mrb[0].mxu0
      %v250 = vadd.f32 0.0, %v249
      %v251 = vpop.f32.mrb[0].mxu0
      %252 = vmatprep.mubr.bf16.mxu0 0
      %253 = vmatmul.mubr.bf16.gmra.mrb[0].mxu0 %v210
      %v254 = vpop.f32.mrb[0].mxu0
      %v255 = vadd.f32 0.0, %v254
      %v256 = vpop.f32.mrb[0].mxu0
      %v257 = vpop.f32.mrb[0].mxu0
      %v258 = vadd.f32 0.0, %v257
      %v259 = vpop.f32.mrb[0].mxu0
      %260 = vdwg.mxu0
      %v265 = vunpack.c.l.b16 %v180
      %v266 = vunpack.c.l.b16 %v181
      %v267 = vunpack.c.l.b16 %v182
      %v268 = vunpack.c.l.b16 %v183
      %v269 = vpack.c.b16 %v266, %v265
      %v270 = vpack.c.b16 %v268, %v267
      %v273 = vunpack.c.l.b16 %v172
      %v274 = vunpack.c.l.b16 %v173
      %v275 = vpack.c.b16 %v274, %v273
      %v278 = vsel %vm205, %v269, 0
      %v281 = vsel %vm205, %v270, 0
      %283 = vmatprep.subr.bf16.mxu0 0
      %284 = vmatpush1.bf16.msra.mxu0 %v275
      %285 = vmatprep.subr.bf16.mxu0 0
      %286 = vmatpush1.bf16.msra.mxu0 0
      %287 = vmatprep.subr.bf16.mxu0 0
      %288 = vmatpush1.bf16.msra.mxu0 0
      %289 = vmatprep.subr.bf16.mxu0 0
      %290 = vmatpush1.bf16.msra.mxu0 0
      %291 = vmatprep.subr.bf16.mxu0 0
      %292 = vmatpush1.bf16.msra.mxu0 0
      %293 = vmatprep.subr.bf16.mxu0 0
      %294 = vmatpush1.bf16.msra.mxu0 0
      %295 = vmatprep.subr.bf16.mxu0 0
      %296 = vmatpush1.bf16.msra.mxu0 0
      %297 = vmatprep.subr.bf16.mxu0 0
      %298 = vmatpush1.bf16.msra.mxu0 0
      %299 = vmatprep.subr.bf16.mxu0 0
      %300 = vmatpush1.bf16.msra.mxu0 0
      %301 = vmatprep.subr.bf16.mxu0 0
      %302 = vmatpush1.bf16.msra.mxu0 0
      %303 = vmatprep.subr.bf16.mxu0 0
      %304 = vmatpush1.bf16.msra.mxu0 0
      %305 = vmatprep.subr.bf16.mxu0 0
      %306 = vmatpush1.bf16.msra.mxu0 0
      %307 = vmatprep.subr.bf16.mxu0 0
      %308 = vmatpush1.bf16.msra.mxu0 0
      %309 = vmatprep.subr.bf16.mxu0 0
      %310 = vmatpush1.bf16.msra.mxu0 0
      %311 = vmatprep.subr.bf16.mxu0 0
      %312 = vmatpush1.bf16.msra.mxu0 0
      %313 = vmatprep.subr.bf16.mxu0 0
      %314 = vmatpush1.bf16.msra.mxu0 0
      %315 = vmatprep.mubr.bf16.mxu0 0
      %316 = vmatmul.mubr.bf16.gmra.mrb[0].mxu0 %v278
      %v317 = vpop.f32.mrb[0].mxu0
      %v318 = vadd.f32 %v247, %v317
      %v319 = vpop.f32.mrb[0].mxu0
      %v320 = vpop.f32.mrb[0].mxu0
      %v321 = vadd.f32 %v250, %v320
      %v322 = vpop.f32.mrb[0].mxu0
      %323 = vmatprep.mubr.bf16.mxu0 0
      %324 = vmatmul.mubr.bf16.gmra.mrb[0].mxu0 %v281
      %v325 = vpop.f32.mrb[0].mxu0
      %v326 = vadd.f32 %v255, %v325
      %v327 = vpop.f32.mrb[0].mxu0
      %v328 = vpop.f32.mrb[0].mxu0
      %v329 = vadd.f32 %v258, %v328
      %v330 = vpop.f32.mrb[0].mxu0
      %331 = vdwg.mxu0
      %s332 = scalar_lea.vmem %s1, 32
      %v333 = vld [vmem:[%s332] sm:$0xf]
      %v334 = vld [vmem:[%s332 + $0x4] sm:$0xf]
      %v335 = vld [vmem:[%s332 + $0x8] sm:$0xf]
      %v336 = vld [vmem:[%s332 + $0xc] sm:$0xf]
      %v341 = vunpack.c.l.b16 %v333
      %v342 = vunpack.c.l.b16 %v334
      %v343 = vunpack.c.l.b16 %v335
      %v344 = vunpack.c.l.b16 %v336
      %v345 = vpack.c.b16 %v342, %v341
      %v346 = vpack.c.b16 %v344, %v343
      %347 = vrot.lane.b32.xlu0 %v275, 127
      %v348 = vpop.permute.xlu0 %347
      %v351 = vsel %vm205, %v345, 0
      %v354 = vsel %vm205, %v346, 0
      %356 = vmatprep.subr.bf16.mxu0 0
      %357 = vmatpush1.bf16.msra.mxu0 %v348
      %358 = vmatprep.subr.bf16.mxu0 0
      %359 = vmatpush1.bf16.msra.mxu0 0
      %360 = vmatprep.subr.bf16.mxu0 0
      %361 = vmatpush1.bf16.msra.mxu0 0
      %362 = vmatprep.subr.bf16.mxu0 0
      %363 = vmatpush1.bf16.msra.mxu0 0
      %364 = vmatprep.subr.bf16.mxu0 0
      %365 = vmatpush1.bf16.msra.mxu0 0
      %366 = vmatprep.subr.bf16.mxu0 0
      %367 = vmatpush1.bf16.msra.mxu0 0
      %368 = vmatprep.subr.bf16.mxu0 0
      %369 = vmatpush1.bf16.msra.mxu0 0
      %370 = vmatprep.subr.bf16.mxu0 0
      %371 = vmatpush1.bf16.msra.mxu0 0
      %372 = vmatprep.subr.bf16.mxu0 0
      %373 = vmatpush1.bf16.msra.mxu0 0
      %374 = vmatprep.subr.bf16.mxu0 0
      %375 = vmatpush1.bf16.msra.mxu0 0
      %376 = vmatprep.subr.bf16.mxu0 0
      %377 = vmatpush1.bf16.msra.mxu0 0
      %378 = vmatprep.subr.bf16.mxu0 0
      %379 = vmatpush1.bf16.msra.mxu0 0
      %380 = vmatprep.subr.bf16.mxu0 0
      %381 = vmatpush1.bf16.msra.mxu0 0
      %382 = vmatprep.subr.bf16.mxu0 0
      %383 = vmatpush1.bf16.msra.mxu0 0
      %384 = vmatprep.subr.bf16.mxu0 0
      %385 = vmatpush1.bf16.msra.mxu0 0
      %386 = vmatprep.subr.bf16.mxu0 0
      %387 = vmatpush1.bf16.msra.mxu0 0
      %388 = vmatprep.mubr.bf16.mxu0 0
      %389 = vmatmul.mubr.bf16.gmra.mrb[0].mxu0 %v351
      %v390 = vpop.f32.mrb[0].mxu0
      %v391 = vadd.f32 0.0, %v390
      %v392 = vpop.f32.mrb[0].mxu0
      %v393 = vpop.f32.mrb[0].mxu0
      %v394 = vadd.f32 0.0, %v393
      %v395 = vpop.f32.mrb[0].mxu0
      %396 = vmatprep.mubr.bf16.mxu0 0
      %397 = vmatmul.mubr.bf16.gmra.mrb[0].mxu0 %v354
      %v398 = vpop.f32.mrb[0].mxu0
      %v399 = vadd.f32 0.0, %v398
      %v400 = vpop.f32.mrb[0].mxu0
      %v401 = vpop.f32.mrb[0].mxu0
      %v402 = vadd.f32 0.0, %v401
      %v403 = vpop.f32.mrb[0].mxu0
      %404 = vdwg.mxu0
      %v405 = vadd.f32 %v318, %v391
      %v406 = vadd.f32 %v321, %v394
      %v407 = vadd.f32 %v326, %v399
      %v408 = vadd.f32 %v329, %v402
      %s409 = scalar_lea.vmem %s1, 48
      %v410 = vld [vmem:[%s409] sm:$0xf]
      %v411 = vld [vmem:[%s409 + $0x4] sm:$0xf]
      %v412 = vld [vmem:[%s409 + $0x8] sm:$0xf]
      %v413 = vld [vmem:[%s409 + $0xc] sm:$0xf]
      %v418 = vunpack.c.l.b16 %v410
      %v419 = vunpack.c.l.b16 %v411
      %v420 = vunpack.c.l.b16 %v412
      %v421 = vunpack.c.l.b16 %v413
      %v422 = vpack.c.b16 %v419, %v418
      %v423 = vpack.c.b16 %v421, %v420
      %v426 = vunpack.c.l.b16 %v176
      %v427 = vunpack.c.l.b16 %v177
      %v428 = vpack.c.b16 %v427, %v426
      %v431 = vsel %vm205, %v422, 0
      %v434 = vsel %vm205, %v423, 0
      %436 = vmatprep.subr.bf16.mxu0 0
      %437 = vmatpush1.bf16.msra.mxu0 %v428
      %438 = vmatprep.subr.bf16.mxu0 0
      %439 = vmatpush1.bf16.msra.mxu0 0
      %440 = vmatprep.subr.bf16.mxu0 0
      %441 = vmatpush1.bf16.msra.mxu0 0
      %442 = vmatprep.subr.bf16.mxu0 0
      %443 = vmatpush1.bf16.msra.mxu0 0
      %444 = vmatprep.subr.bf16.mxu0 0
      %445 = vmatpush1.bf16.msra.mxu0 0
      %446 = vmatprep.subr.bf16.mxu0 0
      %447 = vmatpush1.bf16.msra.mxu0 0
      %448 = vmatprep.subr.bf16.mxu0 0
      %449 = vmatpush1.bf16.msra.mxu0 0
      %450 = vmatprep.subr.bf16.mxu0 0
      %451 = vmatpush1.bf16.msra.mxu0 0
      %452 = vmatprep.subr.bf16.mxu0 0
      %453 = vmatpush1.bf16.msra.mxu0 0
      %454 = vmatprep.subr.bf16.mxu0 0
      %455 = vmatpush1.bf16.msra.mxu0 0
      %456 = vmatprep.subr.bf16.mxu0 0
      %457 = vmatpush1.bf16.msra.mxu0 0
      %458 = vmatprep.subr.bf16.mxu0 0
      %459 = vmatpush1.bf16.msra.mxu0 0
      %460 = vmatprep.subr.bf16.mxu0 0
      %461 = vmatpush1.bf16.msra.mxu0 0
      %462 = vmatprep.subr.bf16.mxu0 0
      %463 = vmatpush1.bf16.msra.mxu0 0
      %464 = vmatprep.subr.bf16.mxu0 0
      %465 = vmatpush1.bf16.msra.mxu0 0
      %466 = vmatprep.subr.bf16.mxu0 0
      %467 = vmatpush1.bf16.msra.mxu0 0
      %468 = vmatprep.mubr.bf16.mxu0 0
      %469 = vmatmul.mubr.bf16.gmra.mrb[0].mxu0 %v431
      %v470 = vpop.f32.mrb[0].mxu0
      %v471 = vadd.f32 0.0, %v470
      %v472 = vpop.f32.mrb[0].mxu0
      %v473 = vpop.f32.mrb[0].mxu0
      %v474 = vadd.f32 0.0, %v473
      %v475 = vpop.f32.mrb[0].mxu0
      %476 = vmatprep.mubr.bf16.mxu0 0
      %477 = vmatmul.mubr.bf16.gmra.mrb[0].mxu0 %v434
      %v478 = vpop.f32.mrb[0].mxu0
      %v479 = vadd.f32 0.0, %v478
      %v480 = vpop.f32.mrb[0].mxu0
      %v481 = vpop.f32.mrb[0].mxu0
      %v482 = vadd.f32 0.0, %v481
      %v483 = vpop.f32.mrb[0].mxu0
      %484 = vdwg.mxu0
      %v485 = vadd.f32 %v405, %v471
      %v486 = vadd.f32 %v406, %v474
      %v487 = vadd.f32 %v407, %v479
      %v488 = vadd.f32 %v408, %v482
      %s489 = scalar_lea.vmem %s1, 64
      %v490 = vld [vmem:[%s489] sm:$0xf]
      %v491 = vld [vmem:[%s489 + $0x4] sm:$0xf]
      %v492 = vld [vmem:[%s489 + $0x8] sm:$0xf]
      %v493 = vld [vmem:[%s489 + $0xc] sm:$0xf]
      %v498 = vunpack.c.l.b16 %v490
      %v499 = vunpack.c.l.b16 %v491
      %v500 = vunpack.c.l.b16 %v492
      %v501 = vunpack.c.l.b16 %v493
      %v502 = vpack.c.b16 %v499, %v498
      %v503 = vpack.c.b16 %v501, %v500
      %v506 = vunpack.c.l.b16 %v178
      %v507 = vunpack.c.l.b16 %v179
      %v508 = vpack.c.b16 %v507, %v506
      %v511 = vsel %vm205, %v502, 0
      %v514 = vsel %vm205, %v503, 0
      %516 = vmatprep.subr.bf16.mxu0 0
      %517 = vmatpush1.bf16.msra.mxu0 %v508
      %518 = vmatprep.subr.bf16.mxu0 0
      %519 = vmatpush1.bf16.msra.mxu0 0
      %520 = vmatprep.subr.bf16.mxu0 0
      %521 = vmatpush1.bf16.msra.mxu0 0
      %522 = vmatprep.subr.bf16.mxu0 0
      %523 = vmatpush1.bf16.msra.mxu0 0
      %524 = vmatprep.subr.bf16.mxu0 0
      %525 = vmatpush1.bf16.msra.mxu0 0
      %526 = vmatprep.subr.bf16.mxu0 0
      %527 = vmatpush1.bf16.msra.mxu0 0
      %528 = vmatprep.subr.bf16.mxu0 0
      %529 = vmatpush1.bf16.msra.mxu0 0
      %530 = vmatprep.subr.bf16.mxu0 0
      %531 = vmatpush1.bf16.msra.mxu0 0
      %532 = vmatprep.subr.bf16.mxu0 0
      %533 = vmatpush1.bf16.msra.mxu0 0
      %534 = vmatprep.subr.bf16.mxu0 0
      %535 = vmatpush1.bf16.msra.mxu0 0
      %536 = vmatprep.subr.bf16.mxu0 0
      %537 = vmatpush1.bf16.msra.mxu0 0
      %538 = vmatprep.subr.bf16.mxu0 0
      %539 = vmatpush1.bf16.msra.mxu0 0
      %540 = vmatprep.subr.bf16.mxu0 0
      %541 = vmatpush1.bf16.msra.mxu0 0
      %542 = vmatprep.subr.bf16.mxu0 0
      %543 = vmatpush1.bf16.msra.mxu0 0
      %544 = vmatprep.subr.bf16.mxu0 0
      %545 = vmatpush1.bf16.msra.mxu0 0
      %546 = vmatprep.subr.bf16.mxu0 0
      %547 = vmatpush1.bf16.msra.mxu0 0
      %548 = vmatprep.mubr.bf16.mxu0 0
      %549 = vmatmul.mubr.bf16.gmra.mrb[0].mxu0 %v511
      %v550 = vpop.f32.mrb[0].mxu0
      %v551 = vadd.f32 0.0, %v550
      %v552 = vpop.f32.mrb[0].mxu0
      %v553 = vpop.f32.mrb[0].mxu0
      %v554 = vadd.f32 0.0, %v553
      %v555 = vpop.f32.mrb[0].mxu0
      %556 = vmatprep.mubr.bf16.mxu0 0
      %557 = vmatmul.mubr.bf16.gmra.mrb[0].mxu0 %v514
      %v558 = vpop.f32.mrb[0].mxu0
      %v559 = vadd.f32 0.0, %v558
      %v560 = vpop.f32.mrb[0].mxu0
      %v561 = vpop.f32.mrb[0].mxu0
      %v562 = vadd.f32 0.0, %v561
      %v563 = vpop.f32.mrb[0].mxu0
      %564 = vdwg.mxu0
      %v565 = vadd.f32 %v485, %v551
      %v566 = vadd.f32 %v486, %v554
      %v567 = vadd.f32 %v487, %v559
      %v568 = vadd.f32 %v488, %v562
      %s569 = scalar_lea.vmem %s1, 80
      %v570 = vld [vmem:[%s569] sm:$0xf]
      %v571 = vld [vmem:[%s569 + $0x4] sm:$0xf]
      %v572 = vld [vmem:[%s569 + $0x8] sm:$0xf]
      %v573 = vld [vmem:[%s569 + $0xc] sm:$0xf]
      %v578 = vunpack.c.l.b16 %v570
      %v579 = vunpack.c.l.b16 %v571
      %v580 = vunpack.c.l.b16 %v572
      %v581 = vunpack.c.l.b16 %v573
      %v582 = vpack.c.b16 %v579, %v578
      %v583 = vpack.c.b16 %v581, %v580
      %584 = vrot.lane.b32.xlu0 %v428, 127
      %v585 = vpop.permute.xlu0 %584
      %v588 = vsel %vm205, %v582, 0
      %v591 = vsel %vm205, %v583, 0
      %593 = vmatprep.subr.bf16.mxu0 0
      %594 = vmatpush1.bf16.msra.mxu0 %v585
      %595 = vmatprep.subr.bf16.mxu0 0
      %596 = vmatpush1.bf16.msra.mxu0 0
      %597 = vmatprep.subr.bf16.mxu0 0
      %598 = vmatpush1.bf16.msra.mxu0 0
      %599 = vmatprep.subr.bf16.mxu0 0
      %600 = vmatpush1.bf16.msra.mxu0 0
      %601 = vmatprep.subr.bf16.mxu0 0
      %602 = vmatpush1.bf16.msra.mxu0 0
      %603 = vmatprep.subr.bf16.mxu0 0
      %604 = vmatpush1.bf16.msra.mxu0 0
      %605 = vmatprep.subr.bf16.mxu0 0
      %606 = vmatpush1.bf16.msra.mxu0 0
      %607 = vmatprep.subr.bf16.mxu0 0
      %608 = vmatpush1.bf16.msra.mxu0 0
      %609 = vmatprep.subr.bf16.mxu0 0
      %610 = vmatpush1.bf16.msra.mxu0 0
      %611 = vmatprep.subr.bf16.mxu0 0
      %612 = vmatpush1.bf16.msra.mxu0 0
      %613 = vmatprep.subr.bf16.mxu0 0
      %614 = vmatpush1.bf16.msra.mxu0 0
      %615 = vmatprep.subr.bf16.mxu0 0
      %616 = vmatpush1.bf16.msra.mxu0 0
      %617 = vmatprep.subr.bf16.mxu0 0
      %618 = vmatpush1.bf16.msra.mxu0 0
      %619 = vmatprep.subr.bf16.mxu0 0
      %620 = vmatpush1.bf16.msra.mxu0 0
      %621 = vmatprep.subr.bf16.mxu0 0
      %622 = vmatpush1.bf16.msra.mxu0 0
      %623 = vmatprep.subr.bf16.mxu0 0
      %624 = vmatpush1.bf16.msra.mxu0 0
      %625 = vmatprep.mubr.bf16.mxu0 0
      %626 = vmatmul.mubr.bf16.gmra.mrb[0].mxu0 %v588
      %v627 = vpop.f32.mrb[0].mxu0
      %v628 = vadd.f32 0.0, %v627
      %v629 = vpop.f32.mrb[0].mxu0
      %v630 = vpop.f32.mrb[0].mxu0
      %v631 = vadd.f32 0.0, %v630
      %v632 = vpop.f32.mrb[0].mxu0
      %633 = vmatprep.mubr.bf16.mxu0 0
      %634 = vmatmul.mubr.bf16.gmra.mrb[0].mxu0 %v591
      %v635 = vpop.f32.mrb[0].mxu0
      %v636 = vadd.f32 0.0, %v635
      %v637 = vpop.f32.mrb[0].mxu0
      %v638 = vpop.f32.mrb[0].mxu0
      %v639 = vadd.f32 0.0, %v638
      %v640 = vpop.f32.mrb[0].mxu0
      %641 = vdwg.mxu0
      %v642 = vadd.f32 %v565, %v628
      %v643 = vadd.f32 %v566, %v631
      %v644 = vadd.f32 %v567, %v636
      %v645 = vadd.f32 %v568, %v639
      %s646 = scalar_lea.vmem %s1, 96
      %v647 = vld [vmem:[%s646] sm:$0xf]
      %v648 = vld [vmem:[%s646 + $0x4] sm:$0xf]
      %v649 = vld [vmem:[%s646 + $0x8] sm:$0xf]
      %v650 = vld [vmem:[%s646 + $0xc] sm:$0xf]
      %v655 = vunpack.c.l.b16 %v647
      %v656 = vunpack.c.l.b16 %v648
      %v657 = vunpack.c.l.b16 %v649
      %v658 = vunpack.c.l.b16 %v650
      %v659 = vpack.c.b16 %v656, %v655
      %v660 = vpack.c.b16 %v658, %v657
      %661 = vrot.lane.b32.xlu0 %v275, 125
      %v662 = vpop.permute.xlu0 %661
      %v665 = vsel %vm205, %v659, 0
      %v668 = vsel %vm205, %v660, 0
      %670 = vmatprep.subr.bf16.mxu0 0
      %671 = vmatpush1.bf16.msra.mxu0 %v662
      %672 = vmatprep.subr.bf16.mxu0 0
      %673 = vmatpush1.bf16.msra.mxu0 0
      %674 = vmatprep.subr.bf16.mxu0 0
      %675 = vmatpush1.bf16.msra.mxu0 0
      %676 = vmatprep.subr.bf16.mxu0 0
      %677 = vmatpush1.bf16.msra.mxu0 0
      %678 = vmatprep.subr.bf16.mxu0 0
      %679 = vmatpush1.bf16.msra.mxu0 0
      %680 = vmatprep.subr.bf16.mxu0 0
      %681 = vmatpush1.bf16.msra.mxu0 0
      %682 = vmatprep.subr.bf16.mxu0 0
      %683 = vmatpush1.bf16.msra.mxu0 0
      %684 = vmatprep.subr.bf16.mxu0 0
      %685 = vmatpush1.bf16.msra.mxu0 0
      %686 = vmatprep.subr.bf16.mxu0 0
      %687 = vmatpush1.bf16.msra.mxu0 0
      %688 = vmatprep.subr.bf16.mxu0 0
      %689 = vmatpush1.bf16.msra.mxu0 0
      %690 = vmatprep.subr.bf16.mxu0 0
      %691 = vmatpush1.bf16.msra.mxu0 0
      %692 = vmatprep.subr.bf16.mxu0 0
      %693 = vmatpush1.bf16.msra.mxu0 0
      %694 = vmatprep.subr.bf16.mxu0 0
      %695 = vmatpush1.bf16.msra.mxu0 0
      %696 = vmatprep.subr.bf16.mxu0 0
      %697 = vmatpush1.bf16.msra.mxu0 0
      %698 = vmatprep.subr.bf16.mxu0 0
      %699 = vmatpush1.bf16.msra.mxu0 0
      %700 = vmatprep.subr.bf16.mxu0 0
      %701 = vmatpush1.bf16.msra.mxu0 0
      %702 = vmatprep.mubr.bf16.mxu0 0
      %703 = vmatmul.mubr.bf16.gmra.mrb[0].mxu0 %v665
      %v704 = vpop.f32.mrb[0].mxu0
      %v705 = vadd.f32 0.0, %v704
      %v706 = vpop.f32.mrb[0].mxu0
      %v707 = vpop.f32.mrb[0].mxu0
      %v708 = vadd.f32 0.0, %v707
      %v709 = vpop.f32.mrb[0].mxu0
      %710 = vmatprep.mubr.bf16.mxu0 0
      %711 = vmatmul.mubr.bf16.gmra.mrb[0].mxu0 %v668
      %v712 = vpop.f32.mrb[0].mxu0
      %v713 = vadd.f32 0.0, %v712
      %v714 = vpop.f32.mrb[0].mxu0
      %v715 = vpop.f32.mrb[0].mxu0
      %v716 = vadd.f32 0.0, %v715
      %v717 = vpop.f32.mrb[0].mxu0
      %718 = vdwg.mxu0
      %v719 = vadd.f32 %v642, %v705
      %v720 = vadd.f32 %v643, %v708
      %v721 = vadd.f32 %v644, %v713
      %v722 = vadd.f32 %v645, %v716
      %s723 = scalar_lea.vmem %s1, 112
      %v724 = vld [vmem:[%s723] sm:$0xf]
      %v725 = vld [vmem:[%s723 + $0x4] sm:$0xf]
      %v726 = vld [vmem:[%s723 + $0x8] sm:$0xf]
      %v727 = vld [vmem:[%s723 + $0xc] sm:$0xf]
      %v732 = vunpack.c.l.b16 %v724
      %v733 = vunpack.c.l.b16 %v725
      %v734 = vunpack.c.l.b16 %v726
      %v735 = vunpack.c.l.b16 %v727
      %v736 = vpack.c.b16 %v733, %v732
      %v737 = vpack.c.b16 %v735, %v734
      %738 = vrot.lane.b32.xlu0 %v203, 125
      %v739 = vpop.permute.xlu0 %738
      %v742 = vsel %vm205, %v736, 0
      %v745 = vsel %vm205, %v737, 0
      %747 = vmatprep.subr.bf16.mxu0 0
      %748 = vmatpush1.bf16.msra.mxu0 %v739
      %749 = vmatprep.subr.bf16.mxu0 0
      %750 = vmatpush1.bf16.msra.mxu0 0
      %751 = vmatprep.subr.bf16.mxu0 0
      %752 = vmatpush1.bf16.msra.mxu0 0
      %753 = vmatprep.subr.bf16.mxu0 0
      %754 = vmatpush1.bf16.msra.mxu0 0
      %755 = vmatprep.subr.bf16.mxu0 0
      %756 = vmatpush1.bf16.msra.mxu0 0
      %757 = vmatprep.subr.bf16.mxu0 0
      %758 = vmatpush1.bf16.msra.mxu0 0
      %759 = vmatprep.subr.bf16.mxu0 0
      %760 = vmatpush1.bf16.msra.mxu0 0
      %761 = vmatprep.subr.bf16.mxu0 0
      %762 = vmatpush1.bf16.msra.mxu0 0
      %763 = vmatprep.subr.bf16.mxu0 0
      %764 = vmatpush1.bf16.msra.mxu0 0
      %765 = vmatprep.subr.bf16.mxu0 0
      %766 = vmatpush1.bf16.msra.mxu0 0
      %767 = vmatprep.subr.bf16.mxu0 0
      %768 = vmatpush1.bf16.msra.mxu0 0
      %769 = vmatprep.subr.bf16.mxu0 0
      %770 = vmatpush1.bf16.msra.mxu0 0
      %771 = vmatprep.subr.bf16.mxu0 0
      %772 = vmatpush1.bf16.msra.mxu0 0
      %773 = vmatprep.subr.bf16.mxu0 0
      %774 = vmatpush1.bf16.msra.mxu0 0
      %775 = vmatprep.subr.bf16.mxu0 0
      %776 = vmatpush1.bf16.msra.mxu0 0
      %777 = vmatprep.subr.bf16.mxu0 0
      %778 = vmatpush1.bf16.msra.mxu0 0
      %779 = vmatprep.mubr.bf16.mxu0 0
      %780 = vmatmul.mubr.bf16.gmra.mrb[0].mxu0 %v742
      %v781 = vpop.f32.mrb[0].mxu0
      %v782 = vadd.f32 0.0, %v781
      %v783 = vpop.f32.mrb[0].mxu0
      %v784 = vpop.f32.mrb[0].mxu0
      %v785 = vadd.f32 0.0, %v784
      %v786 = vpop.f32.mrb[0].mxu0
      %787 = vmatprep.mubr.bf16.mxu0 0
      %788 = vmatmul.mubr.bf16.gmra.mrb[0].mxu0 %v745
      %v789 = vpop.f32.mrb[0].mxu0
      %v790 = vadd.f32 0.0, %v789
      %v791 = vpop.f32.mrb[0].mxu0
      %v792 = vpop.f32.mrb[0].mxu0
      %v793 = vadd.f32 0.0, %v792
      %v794 = vpop.f32.mrb[0].mxu0
      %795 = vdwg.mxu0
      %v796 = vadd.f32 %v719, %v782
      %v797 = vadd.f32 %v720, %v785
      %v798 = vadd.f32 %v721, %v790
      %v799 = vadd.f32 %v722, %v793
      %s800 = scalar_lea.vmem %s1, 128
      %v801 = vld [vmem:[%s800] sm:$0xf]
      %v802 = vld [vmem:[%s800 + $0x4] sm:$0xf]
      %v803 = vld [vmem:[%s800 + $0x8] sm:$0xf]
      %v804 = vld [vmem:[%s800 + $0xc] sm:$0xf]
      %v809 = vunpack.c.l.b16 %v801
      %v810 = vunpack.c.l.b16 %v802
      %v811 = vunpack.c.l.b16 %v803
      %v812 = vunpack.c.l.b16 %v804
      %v813 = vpack.c.b16 %v810, %v809
      %v814 = vpack.c.b16 %v812, %v811
      %815 = vrot.lane.b32.xlu0 %v275, 124
      %v816 = vpop.permute.xlu0 %815
      %v819 = vsel %vm205, %v813, 0
      %v822 = vsel %vm205, %v814, 0
      %824 = vmatprep.subr.bf16.mxu0 0
      %825 = vmatpush1.bf16.msra.mxu0 %v816
      %826 = vmatprep.subr.bf16.mxu0 0
      %827 = vmatpush1.bf16.msra.mxu0 0
      %828 = vmatprep.subr.bf16.mxu0 0
      %829 = vmatpush1.bf16.msra.mxu0 0
      %830 = vmatprep.subr.bf16.mxu0 0
      %831 = vmatpush1.bf16.msra.mxu0 0
      %832 = vmatprep.subr.bf16.mxu0 0
      %833 = vmatpush1.bf16.msra.mxu0 0
      %834 = vmatprep.subr.bf16.mxu0 0
      %835 = vmatpush1.bf16.msra.mxu0 0
      %836 = vmatprep.subr.bf16.mxu0 0
      %837 = vmatpush1.bf16.msra.mxu0 0
      %838 = vmatprep.subr.bf16.mxu0 0
      %839 = vmatpush1.bf16.msra.mxu0 0
      %840 = vmatprep.subr.bf16.mxu0 0
      %841 = vmatpush1.bf16.msra.mxu0 0
      %842 = vmatprep.subr.bf16.mxu0 0
      %843 = vmatpush1.bf16.msra.mxu0 0
      %844 = vmatprep.subr.bf16.mxu0 0
      %845 = vmatpush1.bf16.msra.mxu0 0
      %846 = vmatprep.subr.bf16.mxu0 0
      %847 = vmatpush1.bf16.msra.mxu0 0
      %848 = vmatprep.subr.bf16.mxu0 0
      %849 = vmatpush1.bf16.msra.mxu0 0
      %850 = vmatprep.subr.bf16.mxu0 0
      %851 = vmatpush1.bf16.msra.mxu0 0
      %852 = vmatprep.subr.bf16.mxu0 0
      %853 = vmatpush1.bf16.msra.mxu0 0
      %854 = vmatprep.subr.bf16.mxu0 0
      %855 = vmatpush1.bf16.msra.mxu0 0
      %856 = vmatprep.mubr.bf16.mxu0 0
      %857 = vmatmul.mubr.bf16.gmra.mrb[0].mxu0 %v819
      %v858 = vpop.f32.mrb[0].mxu0
      %v859 = vadd.f32 0.0, %v858
      %v860 = vpop.f32.mrb[0].mxu0
      %v861 = vpop.f32.mrb[0].mxu0
      %v862 = vadd.f32 0.0, %v861
      %v863 = vpop.f32.mrb[0].mxu0
      %864 = vmatprep.mubr.bf16.mxu0 0
      %865 = vmatmul.mubr.bf16.gmra.mrb[0].mxu0 %v822
      %v866 = vpop.f32.mrb[0].mxu0
      %v867 = vadd.f32 0.0, %v866
      %v868 = vpop.f32.mrb[0].mxu0
      %v869 = vpop.f32.mrb[0].mxu0
      %v870 = vadd.f32 0.0, %v869
      %v871 = vpop.f32.mrb[0].mxu0
      %872 = vdwg.mxu0
      %v873 = vadd.f32 %v796, %v859
      %v874 = vadd.f32 %v797, %v862
      %v875 = vadd.f32 %v798, %v867
      %v876 = vadd.f32 %v799, %v870
      %v877 = vld [vmem:[%s2] sm:$0xff]
      %v878 = vld [vmem:[%s2 + $0x8] sm:$0xff]
      %v879 = vld [vmem:[%s2 + $0x10] sm:$0xff]
      %v880 = vld [vmem:[%s2 + $0x18] sm:$0xff]
      %882 = vset.pattern.permute.xlu0 0
      %883 = vperm.xlu0 %882, %v877
      %v884 = vpop.permute.xlu0 %883
      %887 = vset.pattern.permute.xlu0 0
      %888 = vperm.xlu0 %887, %v878
      %v889 = vpop.permute.xlu0 %888
      %892 = vset.pattern.permute.xlu0 0
      %893 = vperm.xlu0 %892, %v879
      %v894 = vpop.permute.xlu0 %893
      %897 = vset.pattern.permute.xlu0 0
      %898 = vperm.xlu0 %897, %v880
      %v899 = vpop.permute.xlu0 %898
      %v901 = vmul.f32 %v873, %v884
      %v902 = vmul.f32 %v874, %v889
      %v903 = vmul.f32 %v875, %v894
      %v904 = vmul.f32 %v876, %v899
      %905 = vset.pattern.permute.xlu0 1
      %906 = vperm.xlu0 %905, %v877
      %v907 = vpop.permute.xlu0 %906
      %909 = vset.pattern.permute.xlu0 1
      %910 = vperm.xlu0 %909, %v878
      %v911 = vpop.permute.xlu0 %910
      %913 = vset.pattern.permute.xlu0 1
      %914 = vperm.xlu0 %913, %v879
      %v915 = vpop.permute.xlu0 %914
      %917 = vset.pattern.permute.xlu0 1
      %918 = vperm.xlu0 %917, %v880
      %v919 = vpop.permute.xlu0 %918
      %v921 = vadd.f32 %v901, %v907
      %v922 = vadd.f32 %v902, %v911
      %v923 = vadd.f32 %v903, %v915
      %v924 = vadd.f32 %v904, %v919
      %vm925 = vcmp.gt.f32.partialorder %v921, 0.0
      %vm926 = vcmp.gt.f32.partialorder %v922, 0.0
      %vm927 = vcmp.gt.f32.partialorder %v923, 0.0
      %vm928 = vcmp.gt.f32.partialorder %v924, 0.0
      %v929 = vmul.f32 %v921, 0.2
      %v930 = vmul.f32 %v922, 0.2
      %v931 = vmul.f32 %v923, 0.2
      %v932 = vmul.f32 %v924, 0.2
      %v933 = vsel %vm925, %v921, %v929
      %v934 = vsel %vm926, %v922, %v930
      %v935 = vsel %vm927, %v923, %v931
      %v936 = vsel %vm928, %v924, %v932
      %v937 = vpack.c.bf16 %v934, %v933
      %v938 = vpack.c.bf16 %v936, %v935
      %v941 = vunpack.c.l.b16 %v937
      %v942 = vunpack.c.h.b16 %v937
      %v943 = vunpack.c.l.b16 %v938
      %v944 = vunpack.c.h.b16 %v938
      %v945 = vpack.c.b16 %v941, %v941
      %v946 = vpack.c.b16 %v942, %v942
      %v947 = vpack.c.b16 %v943, %v943
      %v948 = vpack.c.b16 %v944, %v944
      %vm953 = vcmask 44032
      %954 = vst.msk [vmem:[%s170] sm:$0xf] %vm953, %v945
      %955 = vst.msk [vmem:[%s170 + $0x4] sm:$0xf] %vm953, %v946
      %956 = vst.msk [vmem:[%s170 + $0x8] sm:$0xf] %vm953, %v947
      %957 = vst.msk [vmem:[%s170 + $0xc] sm:$0xf] %vm953, %v948
      %p958 = scmp.lt.s32.totalorder %s14, 1
      %s959 = scalar_select %p958, %s14, 1
      %s960 = smul.addr %s959, 4
      %s961 = smul.addr %s960, 4
      %s962 = scalar_lea.vmem %s3, %s961
      // Predicated region
      $region33: #{self_embedding_block.7} parent=31 // pred_check
        %p963 = pneg %p100
      $region34: #{self_embedding_block.7} parent=31 // pred_check_branch
        %965 = sbr.rel (%p963) target = $region36
      $region35: #{self_embedding_block.7} parent=31 // pred_region
        _
      $region36: #{self_embedding_block.7} parent=31 // pred_fallthru
        _
    $region32: #{self_embedding_block.7} parent=5 // pred_fallthru
      _
    %p966 = scmp.le.s32.totalorder 2, %s9
    // Predicated region
    $region37: #{self_embedding_block.7} parent=5 // pred_check
      %p967 = pneg %p966
    $region38: #{self_embedding_block.7} parent=5 // pred_check_branch
      %969 = sbr.rel (%p967) target = $region40
    $region39: #{self_embedding_block.7} parent=5 // pred_region
      %s970 = ssub.s32 %s9, 2
      // Predicated region
      $region41: #{self_embedding_block.7} parent=39 // pred_check
        %p971 = pneg %p106
      $region42: #{self_embedding_block.7} parent=39 // pred_check_branch
        %973 = sbr.rel (%p971) target = $region44
      $region43: #{self_embedding_block.7} parent=39 // pred_region
        %p974 = scmp.lt.s32.totalorder %s15, 1
        %s975 = scalar_select %p974, %s15, 1
        %s976 = smul.addr %s975, 4
        %s977 = smul.addr %s976, 4
        %s978 = scalar_lea.vmem %s3, %s977
      $region44: #{self_embedding_block.7} parent=39 // pred_fallthru
        _
    $region40: #{self_embedding_block.7} parent=5 // pred_fallthru
      _
  $region6: #{self_embedding_block.7} parent=0 // loop_footer
    %s13 = sadd.s32 1, %s9
  $region7: #{self_embedding_block.7} parent=0 // loop_footer_branch
    %8 = sbr.rel target = $region3
  $region8: #{self_embedding_block.7} parent=0 // loop_exit
    _

</llo_original>
